<compile_context>
chip_gen: v7x
topology: tpu7x:2x2x1
jax: 0.10.0
libtpu: 0.0.40
codegen_flags: <defaults>
</compile_context>

<pallas_src>
import functools

import jax
import jax.numpy as jnp
from jax.experimental import pallas as pl
from jax.experimental.pallas import tpu as pltpu

C_S = 32        # node channel
C_Z = 16        # edge channel
LANE = 128
SUB = 8
CHUNK = SUB * LANE   # residues per geometry grid step (full [8,128] vregs)
TILE_M = 2048        # dense row tile; ~4 MiB double-buffered -> fits v7x 64 MiB


def _round_up(x, m):
    return ((x + m - 1) // m) * m


# ----------------------------------------------------------------------------
# Pallas dense kernel: out = act(x @ w + b)
# ----------------------------------------------------------------------------
def _dense_kernel(x_ref, w_ref, b_ref, o_ref, *, activation):
    y = jnp.dot(x_ref[...], w_ref[...], preferred_element_type=jnp.float32)
    y = y + b_ref[...]
    if activation == "relu":
        y = jnp.maximum(y, 0.0)
    o_ref[...] = y


def pallas_dense(x, w, b, activation=None):
    """act(x @ w + b), M tiled over a parallel grid.

    Small K/N layers fold `f` consecutive rows of x into the lane axis (with a
    block-diagonal weight), so the contraction dim is >= 8 and the output tile
    is lane-dense -- no padding of K/N to 128 in HBM.
    """
    M, K = x.shape
    N = w.shape[1]

    f = 1
    while f < 8 and (2 * f * N) <= LANE and M % (2 * f) == 0:
        f *= 2
    if f > 1:
        x = x.reshape(M // f, f * K)
        w = jnp.kron(jnp.eye(f, dtype=w.dtype), w)      # [f*K, f*N] block-diag
        b = jnp.tile(b, f)

    Mf, Kf = x.shape
    Nf = w.shape[1]

    xq = x.astype(jnp.bfloat16)      # halves HBM traffic; f32 accumulate on MXU
    wq = w.astype(jnp.bfloat16)
    bq = b.astype(jnp.float32).reshape(1, Nf)

    Mp = _round_up(Mf, 16)           # bf16 sublane tile
    if Mp != Mf:
        xq = jnp.pad(xq, ((0, Mp - Mf), (0, 0)))
    tm = min(TILE_M, Mp)

    out = pl.pallas_call(
        functools.partial(_dense_kernel, activation=activation),
        out_shape=jax.ShapeDtypeStruct((Mp, Nf), jnp.float32),
        grid=(pl.cdiv(Mp, tm),),
        in_specs=[
            pl.BlockSpec((tm, Kf), lambda i: (i, 0)),
            pl.BlockSpec((Kf, Nf), lambda i: (0, 0)),
            pl.BlockSpec((1, Nf), lambda i: (0, 0)),
        ],
        out_specs=pl.BlockSpec((tm, Nf), lambda i: (i, 0)),
        compiler_params=pltpu.CompilerParams(
            dimension_semantics=("parallel",)),
    )(xq, wq, bq)

    out = out[:Mf]
    if f > 1:
        out = out.reshape(M, N)
    return out


# ----------------------------------------------------------------------------
# Geometry kernel: torsion_angles_to_frames + atom14 placement.
# Layout: every input/output is [components, NB, 128]; each component slice is
# a full [8, 128] vreg covering 1024 residues per grid step.
#   def_ref    [ 96, 8, 128]  default frames (rows 0..2 of 4x4), row g*12+i*4+j
#   alpha_ref  [ 16, 8, 128]  8 torsions (bb rot prepended), row g*2+{sin,cos}
#   r_ref      [ 12, 8, 128]  backbone rigid rows 0..2 of 4x4, row i*4+j
#   oh_ref     [112, 8, 128]  atom14 -> rigid-group one-hot, row g*14+a
#   lit_ref    [ 42, 8, 128]  literature positions, row c*14+a
#   am_ref     [ 14, 8, 128]  atom14 mask, row a
#   frames_ref [128, 8, 128]  all_frames_to_global 4x4, row g*16+i*4+j
#   atom14_ref [ 42, 8, 128]  predicted positions, row c*14+a
# ----------------------------------------------------------------------------
def _geometry_kernel(def_ref, alpha_ref, r_ref, oh_ref, lit_ref, am_ref,
                     frames_ref, atom14_ref):
    tile = def_ref.shape[1:]                       # (8, 128)
    zero = jnp.zeros(tile, jnp.float32)
    one = jnp.ones(tile, jnp.float32)

    def compose(A, B):                             # A @ B for 12-component rigids
        out = []
        for i in range(3):
            a0, a1, a2, a3 = A[i * 4 + 0], A[i * 4 + 1], A[i * 4 + 2], A[i * 4 + 3]
            for j in range(3):
                out.append(a0 * B[j] + a1 * B[4 + j] + a2 * B[8 + j])
            out.append(a0 * B[3] + a1 * B[7] + a2 * B[11] + a3)
        return out

    def local_frame(g):                            # default_frame[g] @ Rx(alpha[g])
        s = alpha_ref[2 * g + 0]
        c = alpha_ref[2 * g + 1]
        F = []
        for i in range(3):                         # Rx structural zeros/ones specialized
            d0 = def_ref[g * 12 + i * 4 + 0]
            d1 = def_ref[g * 12 + i * 4 + 1]
            d2 = def_ref[g * 12 + i * 4 + 2]
            d3 = def_ref[g * 12 + i * 4 + 3]
            F += [d0, c * d1 + s * d2, c * d2 - s * d1, d3]
        return F

    R = [r_ref[m] for m in range(12)]              # backbone rigid, reused 8x
    lit_x = lit_ref[0:14]                          # [14, 8, 128]
    lit_y = lit_ref[14:28]
    lit_z = lit_ref[28:42]

    acc = [jnp.zeros((14,) + tile, jnp.float32) for _ in range(3)]

    prev_to_bb = None
    for g in range(8):
        F = local_frame(g)
        to_bb = F if g < 5 else compose(prev_to_bb, F)    # chi2..4 chain onto chi1
        if g >= 4:
            prev_to_bb = to_bb
        glob = compose(R, to_bb)                   # backbone rigid @ frame_to_bb

        for m in range(12):                        # direct row stores (no stack)
            frames_ref[g * 16 + m] = glob[m]
        frames_ref[g * 16 + 12] = zero
        frames_ref[g * 16 + 13] = zero
        frames_ref[g * 16 + 14] = zero
        frames_ref[g * 16 + 15] = one

        # Apply this group's frame to the literature positions, then blend with
        # the one-hot group mask (apply is linear in the frame components, so
        # this is identical to blending the frames first).
        oh_g = oh_ref[g * 14:(g + 1) * 14]         # [14, 8, 128]
        for c in range(3):
            p = (glob[c * 4 + 0][None] * lit_x
                 + glob[c * 4 + 1][None] * lit_y
                 + glob[c * 4 + 2][None] * lit_z
                 + glob[c * 4 + 3][None])
            acc[c] = acc[c] + oh_g * p

    am = am_ref[...]                               # [14, 8, 128]
    for c in range(3):
        atom14_ref[c * 14:(c + 1) * 14] = acc[c] * am


def pack_residue_constants(consts):
    """One-time re-layout of the rc.* tables into [components, 21] form so a
    single axis-1 gather yields the packed kernel layout directly."""
    default_frames, group_idx, atom_mask, lit_positions = consts
    def_T = default_frames[:, :, :3, :].reshape(21, 96).T.astype(jnp.float32)   # [96,21]
    oh = jax.nn.one_hot(group_idx, 8, dtype=jnp.float32)                        # [21,14,8]
    oh_T = jnp.transpose(oh, (2, 1, 0)).reshape(112, 21)                        # [112,21]
    lit_T = jnp.transpose(lit_positions, (2, 1, 0)).reshape(42, 21).astype(jnp.float32)
    am_T = atom_mask.T.astype(jnp.float32)                                      # [14,21]
    return def_T, oh_T, lit_T, am_T


def torsion_geometry(packed_consts, rigid_4x4, torsions, aatype):
    """JAX glue (gathers / packing) around the Pallas geometry kernel."""
    def_T, oh_T, lit_T, am_T = packed_consts
    B, N = aatype.shape
    L = B * N
    L_pad = _round_up(L, CHUNK)
    NB = L_pad // LANE

    aa = jnp.zeros((L_pad,), jnp.int32).at[:L].set(aatype.reshape(L).astype(jnp.int32))
    aa_mod = jnp.remainder(aa, 20)     # torch.fmod(aatype, 20); default frames use raw aatype

    # single axis-1 gathers produce the packed [rows, L_pad] layout (no .T passes)
    def_p = jnp.take(def_T, aa, axis=1).reshape(96, NB, LANE)
    oh_p = jnp.take(oh_T, aa_mod, axis=1).reshape(112, NB, LANE)
    lit_p = jnp.take(lit_T, aa_mod, axis=1).reshape(42, NB, LANE)
    am_p = jnp.take(am_T, aa_mod, axis=1).reshape(14, NB, LANE)

    tor = torsions.astype(jnp.float32).reshape(L, 14).T                 # [14, L]
    alpha_p = jnp.zeros((16, L_pad), jnp.float32).at[1, :].set(1.0)     # bb rot = (sin 0, cos 1)
    alpha_p = alpha_p.at[2:, :L].set(tor).reshape(16, NB, LANE)

    r12 = rigid_4x4[..., :3, :].astype(jnp.float32).reshape(L, 12).T    # [12, L]
    r_p = jnp.zeros((12, L_pad), jnp.float32).at[:, :L].set(r12).reshape(12, NB, LANE)

    in_rows = (96, 16, 12, 112, 42, 14)
    frames_p, atom14_p = pl.pallas_call(
        _geometry_kernel,
        out_shape=(jax.ShapeDtypeStruct((128, NB, LANE), jnp.float32),
                   jax.ShapeDtypeStruct((42, NB, LANE), jnp.float32)),
        grid=(L_pad // CHUNK,),
        in_specs=[pl.BlockSpec((r, SUB, LANE), lambda i: (0, i, 0)) for r in in_rows],
        out_specs=(pl.BlockSpec((128, SUB, LANE), lambda i: (0, i, 0)),
                   pl.BlockSpec((42, SUB, LANE), lambda i: (0, i, 0))),
        compiler_params=pltpu.CompilerParams(
            dimension_semantics=("parallel",)),
    )(def_p, alpha_p, r_p, oh_p, lit_p, am_p)

    frames = frames_p.reshape(128, L_pad)[:, :L].T.reshape(B, N, 8, 4, 4)
    atom14 = atom14_p.reshape(42, L_pad)[:, :L].reshape(3, 14, L)
    atom14 = jnp.transpose(atom14, (2, 1, 0)).reshape(B, N, 14, 3)
    return frames, atom14


# ----------------------------------------------------------------------------
# Synthetic embedder / structure_module (deterministic stand-ins)
# ----------------------------------------------------------------------------
def quat_to_rot(q):
    w, x, y, z = jnp.moveaxis(q, -1, 0)
    r00 = 1 - 2 * (y * y + z * z); r01 = 2 * (x * y - w * z); r02 = 2 * (x * z + w * y)
    r10 = 2 * (x * y + w * z); r11 = 1 - 2 * (x * x + z * z); r12 = 2 * (y * z - w * x)
    r20 = 2 * (x * z - w * y); r21 = 2 * (y * z + w * x); r22 = 1 - 2 * (x * x + y * y)
    return jnp.stack([jnp.stack([r00, r01, r02], -1),
                      jnp.stack([r10, r11, r12], -1),
                      jnp.stack([r20, r21, r22], -1)], -2)


def rt_to_4x4(rot, trans):
    m = jnp.zeros(rot.shape[:-2] + (4, 4), jnp.float32)
    m = m.at[..., :3, :3].set(rot)
    m = m.at[..., :3, 3].set(trans)
    m = m.at[..., 3, 3].set(1.0)
    return m


def make_params(key):
    ks = jax.random.split(key, 6)

    def lin(k, din, dout, scale=0.1):
        return (scale * jax.random.normal(k, (din, dout), jnp.float32),
                jnp.zeros((dout,), jnp.float32))

    tor_w, tor_b = lin(ks[3], C_S, 14)
    quat_w, quat_b = lin(ks[4], C_S, 4)
    trans_w, trans_b = lin(ks[5], C_S, 3)
    return {
        "node_w": lin(ks[0], 6, C_S),
        "edge_w": lin(ks[1], 2, C_Z),
        "trunk_w": lin(ks[2], C_S + C_Z, C_S),
        # three heads fused into one [C_S, 14+4+3] projection (single pallas_call)
        "head_w": (jnp.concatenate([tor_w, quat_w, trans_w], axis=1),
                   jnp.concatenate([tor_b, quat_b, trans_b], axis=0)),
    }


def make_residue_constants(key):
    # Shapes match rc.* tables; values synthesized deterministically.
    k1, k2, k3, k4, k5 = jax.random.split(key, 5)
    q = jax.random.normal(k1, (21, 8, 4), jnp.float32)
    q = q / jnp.linalg.norm(q, axis=-1, keepdims=True)
    rot = quat_to_rot(q)
    tr = 0.5 * jax.random.normal(k2, (21, 8, 3), jnp.float32)
    default_frames = rt_to_4x4(rot, tr)                               # [21,8,4,4]
    group_idx = jax.random.randint(k3, (21, 14), 0, 8)                # [21,14]
    atom_mask = (jax.random.uniform(k4, (21, 14)) > 0.2).astype(jnp.float32)
    lit_positions = jax.random.normal(k5, (21, 14, 3), jnp.float32)   # [21,14,3]
    return default_frames, group_idx, atom_mask, lit_positions


def embedder(params, padding_mask, t, res_idx, rigids_t):
    # TODO(synk): embedder architecture is unspecified; deterministic synthetic stand-in.
    B, N = padding_mask.shape
    trans = rigids_t[..., 4:7]
    t_b = jnp.broadcast_to(t[:, None, None], (B, N, 1))
    node_in = jnp.concatenate([
        (res_idx / N)[..., None].astype(jnp.float32),
        t_b,
        padding_mask[..., None],
        trans,
    ], axis=-1)                                                       # [B,N,6]
    w, b = params["node_w"]
    node_feat = pallas_dense(node_in.reshape(B * N, 6), w, b, "relu").reshape(B, N, C_S)

    rel = (res_idx[:, :, None] - res_idx[:, None, :]) / N             # [B,N,N]
    t_bb = jnp.broadcast_to(t[:, None, None], (B, N, N))
    edge_in = jnp.stack([rel, t_bb], axis=-1)                         # [B,N,N,2]
    w, b = params["edge_w"]
    edge_feat = pallas_dense(edge_in.reshape(B * N * N, 2), w, b, "relu")
    edge_feat = edge_feat.reshape(B, N, N, C_Z)
    return node_feat, edge_feat


def structure_module(params, rigids_t, node_feat, edge_feat, node_mask, padding_mask):
    # TODO(synk): structure-module internals unspecified; padding_mask unused in
    # this synthetic message mean.
    B, N, _ = node_feat.shape
    msg = jnp.mean(edge_feat, axis=2)                                 # [B,N,C_Z]
    h_in = jnp.concatenate([node_feat, msg], axis=-1)                 # [B,N,C_S+C_Z]
    w, b = params["trunk_w"]
    h = pallas_dense(h_in.reshape(B * N, C_S + C_Z), w, b, "relu")    # [B*N,C_S]

    w, b = params["head_w"]
    heads = pallas_dense(h, w, b).reshape(B, N, 21)                   # fused heads

    tor = heads[..., :14].reshape(B, N, 7, 2)
    tor = tor / jnp.sqrt(jnp.sum(tor ** 2, axis=-1, keepdims=True) + 1e-8)

    q = heads[..., 14:18] + jnp.array([1.0, 0.0, 0.0, 0.0], jnp.float32)
    q = q / jnp.linalg.norm(q, axis=-1, keepdims=True)
    rot = quat_to_rot(q)                                              # [B,N,3,3]

    tr = heads[..., 18:21]
    trans = (rigids_t[..., 4:7] + tr) * node_mask[..., None]

    rigid_4x4 = rt_to_4x4(rot, trans)                                 # [B,N,4,4]
    return {"pred_rigids_0": rigid_4x4, "pred_torsions": tor}


# ----------------------------------------------------------------------------
# FoldNet.forward
# ----------------------------------------------------------------------------
def fold_net_forward(params, packed_consts, aatype, padding_mask, t, rigids_t,
                     rigids_mask, res_idx=None):
    if res_idx is None:
        res_idx = jnp.broadcast_to(jnp.arange(aatype.shape[1]), aatype.shape)
    res_idx = res_idx * padding_mask

    node_feat, edge_feat = embedder(params, padding_mask, t, res_idx, rigids_t)
    model_out = structure_module(params, rigids_t, node_feat, edge_feat,
                                 node_mask=rigids_mask, padding_mask=padding_mask)

    frames, atom14 = torsion_geometry(packed_consts,
                                      model_out["pred_rigids_0"],
                                      model_out["pred_torsions"],
                                      aatype)
    model_out["pred_atom14"] = atom14                  # [B,N,14,3]
    model_out["pred_sidechain_frames"] = frames        # [B,N,8,4,4]  (to_tensor_4x4)
    return model_out


if __name__ == "__main__":
    key = jax.random.PRNGKey(0)
    B, N = 2, 8
    k1, k2, k3, k4 = jax.random.split(key, 4)

    aatype = jax.random.randint(k1, (B, N), 0, 21)
    padding_mask = jnp.ones((B, N), jnp.float32).at[1, 6:].set(0.0)
    t = jax.random.uniform(k2, (B,), jnp.float32)
    quat_t = jax.random.normal(k3, (B, N, 4), jnp.float32)
    quat_t = quat_t / jnp.linalg.norm(quat_t, axis=-1, keepdims=True)
    trans_t = jax.random.normal(k4, (B, N, 3), jnp.float32)
    rigids_t = jnp.concatenate([quat_t, trans_t], axis=-1)            # [B,N,7]
    rigids_mask = padding_mask

    params = make_params(jax.random.PRNGKey(1))
    consts = make_residue_constants(jax.random.PRNGKey(2))
    packed_consts = pack_residue_constants(consts)                    # one-time re-layout

    fwd = jax.jit(fold_net_forward)
    out = fwd(params, packed_consts, aatype, padding_mask, t, rigids_t, rigids_mask)
    jax.block_until_ready(out)

    assert out["pred_atom14"].shape == (B, N, 14, 3)
    assert out["pred_sidechain_frames"].shape == (B, N, 8, 4, 4)
    assert out["pred_torsions"].shape == (B, N, 7, 2)
    print("KERNEL_OK")
</pallas_src>

<mosaic_0001>
module attributes {stable_mosaic.version = 11 : i64} {
  func.func @_dense_kernel(%arg0: i32, %arg1: memref<16x24xbf16, #tpu.memory_space<vmem>>, %arg2: memref<24x128xbf16, #tpu.memory_space<vmem>>, %arg3: memref<1x128xf32, #tpu.memory_space<vmem>>, %arg4: memref<16x128xf32, #tpu.memory_space<vmem>>) attributes {dimension_semantics = [#tpu.dimension_semantics<parallel>], iteration_bounds = array<i64: 1>, scalar_prefetch = 0 : i64, scratch_operands = 0 : i64, tpu.core_type = #tpu.core_type<tc>, window_params = [{transform_indices = @transform_0, window_bounds = array<i64: 16, 24>}, {pipeline_mode = #tpu.pipeline_mode<synchronous>, transform_indices = @transform_1, window_bounds = array<i64: 24, 128>}, {pipeline_mode = #tpu.pipeline_mode<synchronous>, transform_indices = @transform_2, window_bounds = array<i64: 1, 128>}, {transform_indices = @transform_3, window_bounds = array<i64: 16, 128>}]} {
    %c0 = arith.constant 0 : index
    %c0_0 = arith.constant 0 : index
    %0 = vector.load %arg1[%c0, %c0_0] : memref<16x24xbf16, #tpu.memory_space<vmem>>, vector<16x24xbf16>
    %c0_1 = arith.constant 0 : index
    %c0_2 = arith.constant 0 : index
    %1 = vector.load %arg2[%c0_1, %c0_2] : memref<24x128xbf16, #tpu.memory_space<vmem>>, vector<24x128xbf16>
    %cst = arith.constant dense<0.000000e+00> : vector<16x128xf32>
    %2 = tpu.matmul %0, %1, %cst {dimension_numbers = #tpu.dot_dimension_numbers<[1], [0], [0], [1], [0, 0, 1, 1], [], []>} : vector<16x24xbf16>, vector<24x128xbf16>, vector<16x128xf32> -> vector<16x128xf32>
    %c0_3 = arith.constant 0 : index
    %c0_4 = arith.constant 0 : index
    %3 = vector.load %arg3[%c0_3, %c0_4] : memref<1x128xf32, #tpu.memory_space<vmem>>, vector<1x128xf32>
    %4 = vector.broadcast %3 : vector<1x128xf32> to vector<16x128xf32>
    %5 = arith.addf %2, %4 : vector<16x128xf32>
    %cst_5 = arith.constant 0.000000e+00 : f32
    %6 = vector.broadcast %cst_5 : f32 to vector<16x128xf32>
    %7 = arith.maximumf %5, %6 : vector<16x128xf32>
    %c0_6 = arith.constant 0 : index
    %c0_7 = arith.constant 0 : index
    %8 = vector.load %arg4[%c0_6, %c0_7] : memref<16x128xf32, #tpu.memory_space<vmem>>, vector<16x128xf32>
    tpu.vector_store %arg4[%c0_6, %c0_7], %7 {strides = array<i32>} : memref<16x128xf32, #tpu.memory_space<vmem>>, vector<16x128xf32>,
    return
  }
  func.func @transform_0(%arg0: i32) -> (i32, i32) {
    %c0_i32 = arith.constant 0 : i32
    %c0_i32_0 = arith.constant 0 : i32
    return %arg0, %c0_i32 : i32, i32
  }
  func.func @transform_1(%arg0: i32) -> (i32, i32) {
    %c0_i32 = arith.constant 0 : i32
    %c0_i32_0 = arith.constant 0 : i32
    %c0_i32_1 = arith.constant 0 : i32
    return %c0_i32, %c0_i32_0 : i32, i32
  }
  func.func @transform_2(%arg0: i32) -> (i32, i32) {
    %c0_i32 = arith.constant 0 : i32
    %c0_i32_0 = arith.constant 0 : i32
    %c0_i32_1 = arith.constant 0 : i32
    return %c0_i32, %c0_i32_0 : i32, i32
  }
  func.func @transform_3(%arg0: i32) -> (i32, i32) {
    %c0_i32 = arith.constant 0 : i32
    %c0_i32_0 = arith.constant 0 : i32
    return %arg0, %c0_i32 : i32, i32
  }
}

module attributes {stable_mosaic.version = 11 : i64} {
  func.func @_dense_kernel(%arg0: i32, %arg1: memref<16x16xbf16, #tpu.memory_space<vmem>>, %arg2: memref<16x128xbf16, #tpu.memory_space<vmem>>, %arg3: memref<1x128xf32, #tpu.memory_space<vmem>>, %arg4: memref<16x128xf32, #tpu.memory_space<vmem>>) attributes {dimension_semantics = [#tpu.dimension_semantics<parallel>], iteration_bounds = array<i64: 1>, scalar_prefetch = 0 : i64, scratch_operands = 0 : i64, tpu.core_type = #tpu.core_type<tc>, window_params = [{transform_indices = @transform_0, window_bounds = array<i64: 16, 16>}, {pipeline_mode = #tpu.pipeline_mode<synchronous>, transform_indices = @transform_1, window_bounds = array<i64: 16, 128>}, {pipeline_mode = #tpu.pipeline_mode<synchronous>, transform_indices = @transform_2, window_bounds = array<i64: 1, 128>}, {transform_indices = @transform_3, window_bounds = array<i64: 16, 128>}]} {
    %c0 = arith.constant 0 : index
    %c0_0 = arith.constant 0 : index
    %0 = vector.load %arg1[%c0, %c0_0] : memref<16x16xbf16, #tpu.memory_space<vmem>>, vector<16x16xbf16>
    %c0_1 = arith.constant 0 : index
    %c0_2 = arith.constant 0 : index
    %1 = vector.load %arg2[%c0_1, %c0_2] : memref<16x128xbf16, #tpu.memory_space<vmem>>, vector<16x128xbf16>
    %cst = arith.constant dense<0.000000e+00> : vector<16x128xf32>
    %2 = tpu.matmul %0, %1, %cst {dimension_numbers = #tpu.dot_dimension_numbers<[1], [0], [0], [1], [0, 0, 1, 1], [], []>} : vector<16x16xbf16>, vector<16x128xbf16>, vector<16x128xf32> -> vector<16x128xf32>
    %c0_3 = arith.constant 0 : index
    %c0_4 = arith.constant 0 : index
    %3 = vector.load %arg3[%c0_3, %c0_4] : memref<1x128xf32, #tpu.memory_space<vmem>>, vector<1x128xf32>
    %4 = vector.broadcast %3 : vector<1x128xf32> to vector<16x128xf32>
    %5 = arith.addf %2, %4 : vector<16x128xf32>
    %cst_5 = arith.constant 0.000000e+00 : f32
    %6 = vector.broadcast %cst_5 : f32 to vector<16x128xf32>
    %7 = arith.maximumf %5, %6 : vector<16x128xf32>
    %c0_6 = arith.constant 0 : index
    %c0_7 = arith.constant 0 : index
    %8 = vector.load %arg4[%c0_6, %c0_7] : memref<16x128xf32, #tpu.memory_space<vmem>>, vector<16x128xf32>
    tpu.vector_store %arg4[%c0_6, %c0_7], %7 {strides = array<i32>} : memref<16x128xf32, #tpu.memory_space<vmem>>, vector<16x128xf32>,
    return
  }
  func.func @transform_0(%arg0: i32) -> (i32, i32) {
    %c0_i32 = arith.constant 0 : i32
    %c0_i32_0 = arith.constant 0 : i32
    return %arg0, %c0_i32 : i32, i32
  }
  func.func @transform_1(%arg0: i32) -> (i32, i32) {
    %c0_i32 = arith.constant 0 : i32
    %c0_i32_0 = arith.constant 0 : i32
    %c0_i32_1 = arith.constant 0 : i32
    return %c0_i32, %c0_i32_0 : i32, i32
  }
  func.func @transform_2(%arg0: i32) -> (i32, i32) {
    %c0_i32 = arith.constant 0 : i32
    %c0_i32_0 = arith.constant 0 : i32
    %c0_i32_1 = arith.constant 0 : i32
    return %c0_i32, %c0_i32_0 : i32, i32
  }
  func.func @transform_3(%arg0: i32) -> (i32, i32) {
    %c0_i32 = arith.constant 0 : i32
    %c0_i32_0 = arith.constant 0 : i32
    return %arg0, %c0_i32 : i32, i32
  }
}

module attributes {stable_mosaic.version = 11 : i64} {
  func.func @_dense_kernel(%arg0: i32, %arg1: memref<16x192xbf16, #tpu.memory_space<vmem>>, %arg2: memref<192x128xbf16, #tpu.memory_space<vmem>>, %arg3: memref<1x128xf32, #tpu.memory_space<vmem>>, %arg4: memref<16x128xf32, #tpu.memory_space<vmem>>) attributes {dimension_semantics = [#tpu.dimension_semantics<parallel>], iteration_bounds = array<i64: 1>, scalar_prefetch = 0 : i64, scratch_operands = 0 : i64, tpu.core_type = #tpu.core_type<tc>, window_params = [{transform_indices = @transform_0, window_bounds = array<i64: 16, 192>}, {pipeline_mode = #tpu.pipeline_mode<synchronous>, transform_indices = @transform_1, window_bounds = array<i64: 192, 128>}, {pipeline_mode = #tpu.pipeline_mode<synchronous>, transform_indices = @transform_2, window_bounds = array<i64: 1, 128>}, {transform_indices = @transform_3, window_bounds = array<i64: 16, 128>}]} {
    %c0 = arith.constant 0 : index
    %c0_0 = arith.constant 0 : index
    %0 = vector.load %arg1[%c0, %c0_0] : memref<16x192xbf16, #tpu.memory_space<vmem>>, vector<16x192xbf16>
    %c0_1 = arith.constant 0 : index
    %c0_2 = arith.constant 0 : index
    %1 = vector.load %arg2[%c0_1, %c0_2] : memref<192x128xbf16, #tpu.memory_space<vmem>>, vector<192x128xbf16>
    %cst = arith.constant dense<0.000000e+00> : vector<16x128xf32>
    %2 = tpu.matmul %0, %1, %cst {dimension_numbers = #tpu.dot_dimension_numbers<[1], [0], [0], [1], [0, 0, 1, 1], [], []>} : vector<16x192xbf16>, vector<192x128xbf16>, vector<16x128xf32> -> vector<16x128xf32>
    %c0_3 = arith.constant 0 : index
    %c0_4 = arith.constant 0 : index
    %3 = vector.load %arg3[%c0_3, %c0_4] : memref<1x128xf32, #tpu.memory_space<vmem>>, vector<1x128xf32>
    %4 = vector.broadcast %3 : vector<1x128xf32> to vector<16x128xf32>
    %5 = arith.addf %2, %4 : vector<16x128xf32>
    %cst_5 = arith.constant 0.000000e+00 : f32
    %6 = vector.broadcast %cst_5 : f32 to vector<16x128xf32>
    %7 = arith.maximumf %5, %6 : vector<16x128xf32>
    %c0_6 = arith.constant 0 : index
    %c0_7 = arith.constant 0 : index
    %8 = vector.load %arg4[%c0_6, %c0_7] : memref<16x128xf32, #tpu.memory_space<vmem>>, vector<16x128xf32>
    tpu.vector_store %arg4[%c0_6, %c0_7], %7 {strides = array<i32>} : memref<16x128xf32, #tpu.memory_space<vmem>>, vector<16x128xf32>,
    return
  }
  func.func @transform_0(%arg0: i32) -> (i32, i32) {
    %c0_i32 = arith.constant 0 : i32
    %c0_i32_0 = arith.constant 0 : i32
    return %arg0, %c0_i32 : i32, i32
  }
  func.func @transform_1(%arg0: i32) -> (i32, i32) {
    %c0_i32 = arith.constant 0 : i32
    %c0_i32_0 = arith.constant 0 : i32
    %c0_i32_1 = arith.constant 0 : i32
    return %c0_i32, %c0_i32_0 : i32, i32
  }
  func.func @transform_2(%arg0: i32) -> (i32, i32) {
    %c0_i32 = arith.constant 0 : i32
    %c0_i32_0 = arith.constant 0 : i32
    %c0_i32_1 = arith.constant 0 : i32
    return %c0_i32, %c0_i32_0 : i32, i32
  }
  func.func @transform_3(%arg0: i32) -> (i32, i32) {
    %c0_i32 = arith.constant 0 : i32
    %c0_i32_0 = arith.constant 0 : i32
    return %arg0, %c0_i32 : i32, i32
  }
}

module attributes {stable_mosaic.version = 11 : i64} {
  func.func @_dense_kernel(%arg0: i32, %arg1: memref<16x128xbf16, #tpu.memory_space<vmem>>, %arg2: memref<128x84xbf16, #tpu.memory_space<vmem>>, %arg3: memref<1x84xf32, #tpu.memory_space<vmem>>, %arg4: memref<16x84xf32, #tpu.memory_space<vmem>>) attributes {dimension_semantics = [#tpu.dimension_semantics<parallel>], iteration_bounds = array<i64: 1>, scalar_prefetch = 0 : i64, scratch_operands = 0 : i64, tpu.core_type = #tpu.core_type<tc>, window_params = [{transform_indices = @transform_0, window_bounds = array<i64: 16, 128>}, {pipeline_mode = #tpu.pipeline_mode<synchronous>, transform_indices = @transform_1, window_bounds = array<i64: 128, 84>}, {pipeline_mode = #tpu.pipeline_mode<synchronous>, transform_indices = @transform_2, window_bounds = array<i64: 1, 84>}, {transform_indices = @transform_3, window_bounds = array<i64: 16, 84>}]} {
    %c0 = arith.constant 0 : index
    %c0_0 = arith.constant 0 : index
    %0 = vector.load %arg1[%c0, %c0_0] : memref<16x128xbf16, #tpu.memory_space<vmem>>, vector<16x128xbf16>
    %c0_1 = arith.constant 0 : index
    %c0_2 = arith.constant 0 : index
    %1 = vector.load %arg2[%c0_1, %c0_2] : memref<128x84xbf16, #tpu.memory_space<vmem>>, vector<128x84xbf16>
    %cst = arith.constant dense<0.000000e+00> : vector<16x84xf32>
    %2 = tpu.matmul %0, %1, %cst {dimension_numbers = #tpu.dot_dimension_numbers<[1], [0], [0], [1], [0, 0, 1, 1], [], []>} : vector<16x128xbf16>, vector<128x84xbf16>, vector<16x84xf32> -> vector<16x84xf32>
    %c0_3 = arith.constant 0 : index
    %c0_4 = arith.constant 0 : index
    %3 = vector.load %arg3[%c0_3, %c0_4] : memref<1x84xf32, #tpu.memory_space<vmem>>, vector<1x84xf32>
    %4 = vector.broadcast %3 : vector<1x84xf32> to vector<16x84xf32>
    %5 = arith.addf %2, %4 : vector<16x84xf32>
    %c0_5 = arith.constant 0 : index
    %c0_6 = arith.constant 0 : index
    %6 = vector.load %arg4[%c0_5, %c0_6] : memref<16x84xf32, #tpu.memory_space<vmem>>, vector<16x84xf32>
    tpu.vector_store %arg4[%c0_5, %c0_6], %5 {strides = array<i32>} : memref<16x84xf32, #tpu.memory_space<vmem>>, vector<16x84xf32>,
    return
  }
  func.func @transform_0(%arg0: i32) -> (i32, i32) {
    %c0_i32 = arith.constant 0 : i32
    %c0_i32_0 = arith.constant 0 : i32
    return %arg0, %c0_i32 : i32, i32
  }
  func.func @transform_1(%arg0: i32) -> (i32, i32) {
    %c0_i32 = arith.constant 0 : i32
    %c0_i32_0 = arith.constant 0 : i32
    %c0_i32_1 = arith.constant 0 : i32
    return %c0_i32, %c0_i32_0 : i32, i32
  }
  func.func @transform_2(%arg0: i32) -> (i32, i32) {
    %c0_i32 = arith.constant 0 : i32
    %c0_i32_0 = arith.constant 0 : i32
    %c0_i32_1 = arith.constant 0 : i32
    return %c0_i32, %c0_i32_0 : i32, i32
  }
  func.func @transform_3(%arg0: i32) -> (i32, i32) {
    %c0_i32 = arith.constant 0 : i32
    %c0_i32_0 = arith.constant 0 : i32
    return %arg0, %c0_i32 : i32, i32
  }
}

module attributes {stable_mosaic.version = 11 : i64} {
  func.func @_geometry_kernel(%arg0: i32, %arg1: memref<96x8x128xf32, #tpu.memory_space<vmem>>, %arg2: memref<16x8x128xf32, #tpu.memory_space<vmem>>, %arg3: memref<12x8x128xf32, #tpu.memory_space<vmem>>, %arg4: memref<112x8x128xf32, #tpu.memory_space<vmem>>, %arg5: memref<42x8x128xf32, #tpu.memory_space<vmem>>, %arg6: memref<14x8x128xf32, #tpu.memory_space<vmem>>, %arg7: memref<128x8x128xf32, #tpu.memory_space<vmem>>, %arg8: memref<42x8x128xf32, #tpu.memory_space<vmem>>) attributes {dimension_semantics = [#tpu.dimension_semantics<parallel>], iteration_bounds = array<i64: 1>, scalar_prefetch = 0 : i64, scratch_operands = 0 : i64, tpu.core_type = #tpu.core_type<tc>, window_params = [{transform_indices = @transform_0, window_bounds = array<i64: 96, 8, 128>}, {transform_indices = @transform_1, window_bounds = array<i64: 16, 8, 128>}, {transform_indices = @transform_2, window_bounds = array<i64: 12, 8, 128>}, {transform_indices = @transform_3, window_bounds = array<i64: 112, 8, 128>}, {transform_indices = @transform_4, window_bounds = array<i64: 42, 8, 128>}, {transform_indices = @transform_5, window_bounds = array<i64: 14, 8, 128>}, {transform_indices = @transform_6, window_bounds = array<i64: 128, 8, 128>}, {transform_indices = @transform_7, window_bounds = array<i64: 42, 8, 128>}]} {
    %cst = arith.constant 0.000000e+00 : f32
    %0 = vector.broadcast %cst : f32 to vector<8x128xf32>
    %cst_0 = arith.constant 1.000000e+00 : f32
    %1 = vector.broadcast %cst_0 : f32 to vector<8x128xf32>
    %c0 = arith.constant 0 : index
    %c0_1 = arith.constant 0 : index
    %c0_2 = arith.constant 0 : index
    %2 = vector.load %arg3[%c0, %c0_1, %c0_2] : memref<12x8x128xf32, #tpu.memory_space<vmem>>, vector<1x8x128xf32>
    %3 = vector.shape_cast %2 : vector<1x8x128xf32> to vector<8x128xf32>
    %c1 = arith.constant 1 : index
    %c0_3 = arith.constant 0 : index
    %c0_4 = arith.constant 0 : index
    %4 = vector.load %arg3[%c1, %c0_3, %c0_4] : memref<12x8x128xf32, #tpu.memory_space<vmem>>, vector<1x8x128xf32>
    %5 = vector.shape_cast %4 : vector<1x8x128xf32> to vector<8x128xf32>
    %c2 = arith.constant 2 : index
    %c0_5 = arith.constant 0 : index
    %c0_6 = arith.constant 0 : index
    %6 = vector.load %arg3[%c2, %c0_5, %c0_6] : memref<12x8x128xf32, #tpu.memory_space<vmem>>, vector<1x8x128xf32>
    %7 = vector.shape_cast %6 : vector<1x8x128xf32> to vector<8x128xf32>
    %c3 = arith.constant 3 : index
    %c0_7 = arith.constant 0 : index
    %c0_8 = arith.constant 0 : index
    %8 = vector.load %arg3[%c3, %c0_7, %c0_8] : memref<12x8x128xf32, #tpu.memory_space<vmem>>, vector<1x8x128xf32>
    %9 = vector.shape_cast %8 : vector<1x8x128xf32> to vector<8x128xf32>
    %c4 = arith.constant 4 : index
    %c0_9 = arith.constant 0 : index
    %c0_10 = arith.constant 0 : index
    %10 = vector.load %arg3[%c4, %c0_9, %c0_10] : memref<12x8x128xf32, #tpu.memory_space<vmem>>, vector<1x8x128xf32>
    %11 = vector.shape_cast %10 : vector<1x8x128xf32> to vector<8x128xf32>
    %c5 = arith.constant 5 : index
    %c0_11 = arith.constant 0 : index
    %c0_12 = arith.constant 0 : index
    %12 = vector.load %arg3[%c5, %c0_11, %c0_12] : memref<12x8x128xf32, #tpu.memory_space<vmem>>, vector<1x8x128xf32>
    %13 = vector.shape_cast %12 : vector<1x8x128xf32> to vector<8x128xf32>
    %c6 = arith.constant 6 : index
    %c0_13 = arith.constant 0 : index
    %c0_14 = arith.constant 0 : index
    %14 = vector.load %arg3[%c6, %c0_13, %c0_14] : memref<12x8x128xf32, #tpu.memory_space<vmem>>, vector<1x8x128xf32>
    %15 = vector.shape_cast %14 : vector<1x8x128xf32> to vector<8x128xf32>
    %c7 = arith.constant 7 : index
    %c0_15 = arith.constant 0 : index
    %c0_16 = arith.constant 0 : index
    %16 = vector.load %arg3[%c7, %c0_15, %c0_16] : memref<12x8x128xf32, #tpu.memory_space<vmem>>, vector<1x8x128xf32>
    %17 = vector.shape_cast %16 : vector<1x8x128xf32> to vector<8x128xf32>
    %c8 = arith.constant 8 : index
    %c0_17 = arith.constant 0 : index
    %c0_18 = arith.constant 0 : index
    %18 = vector.load %arg3[%c8, %c0_17, %c0_18] : memref<12x8x128xf32, #tpu.memory_space<vmem>>, vector<1x8x128xf32>
    %19 = vector.shape_cast %18 : vector<1x8x128xf32> to vector<8x128xf32>
    %c9 = arith.constant 9 : index
    %c0_19 = arith.constant 0 : index
    %c0_20 = arith.constant 0 : index
    %20 = vector.load %arg3[%c9, %c0_19, %c0_20] : memref<12x8x128xf32, #tpu.memory_space<vmem>>, vector<1x8x128xf32>
    %21 = vector.shape_cast %20 : vector<1x8x128xf32> to vector<8x128xf32>
    %c10 = arith.constant 10 : index
    %c0_21 = arith.constant 0 : index
    %c0_22 = arith.constant 0 : index
    %22 = vector.load %arg3[%c10, %c0_21, %c0_22] : memref<12x8x128xf32, #tpu.memory_space<vmem>>, vector<1x8x128xf32>
    %23 = vector.shape_cast %22 : vector<1x8x128xf32> to vector<8x128xf32>
    %c11 = arith.constant 11 : index
    %c0_23 = arith.constant 0 : index
    %c0_24 = arith.constant 0 : index
    %24 = vector.load %arg3[%c11, %c0_23, %c0_24] : memref<12x8x128xf32, #tpu.memory_space<vmem>>, vector<1x8x128xf32>
    %25 = vector.shape_cast %24 : vector<1x8x128xf32> to vector<8x128xf32>
    %c0_25 = arith.constant 0 : index
    %c0_26 = arith.constant 0 : index
    %c0_27 = arith.constant 0 : index
    %26 = vector.load %arg5[%c0_25, %c0_26, %c0_27] : memref<42x8x128xf32, #tpu.memory_space<vmem>>, vector<14x8x128xf32>
    %c14 = arith.constant 14 : index
    %c0_28 = arith.constant 0 : index
    %c0_29 = arith.constant 0 : index
    %27 = vector.load %arg5[%c14, %c0_28, %c0_29] : memref<42x8x128xf32, #tpu.memory_space<vmem>>, vector<14x8x128xf32>
    %c28 = arith.constant 28 : index
    %c0_30 = arith.constant 0 : index
    %c0_31 = arith.constant 0 : index
    %28 = vector.load %arg5[%c28, %c0_30, %c0_31] : memref<42x8x128xf32, #tpu.memory_space<vmem>>, vector<14x8x128xf32>
    %cst_32 = arith.constant 0.000000e+00 : f32
    %29 = vector.broadcast %cst_32 : f32 to vector<14x8x128xf32>
    %cst_33 = arith.constant 0.000000e+00 : f32
    %30 = vector.broadcast %cst_33 : f32 to vector<14x8x128xf32>
    %cst_34 = arith.constant 0.000000e+00 : f32
    %31 = vector.broadcast %cst_34 : f32 to vector<14x8x128xf32>
    %c0_35 = arith.constant 0 : index
    %c0_36 = arith.constant 0 : index
    %c0_37 = arith.constant 0 : index
    %32 = vector.load %arg2[%c0_35, %c0_36, %c0_37] : memref<16x8x128xf32, #tpu.memory_space<vmem>>, vector<1x8x128xf32>
    %33 = vector.shape_cast %32 : vector<1x8x128xf32> to vector<8x128xf32>
    %c1_38 = arith.constant 1 : index
    %c0_39 = arith.constant 0 : index
    %c0_40 = arith.constant 0 : index
    %34 = vector.load %arg2[%c1_38, %c0_39, %c0_40] : memref<16x8x128xf32, #tpu.memory_space<vmem>>, vector<1x8x128xf32>
    %35 = vector.shape_cast %34 : vector<1x8x128xf32> to vector<8x128xf32>
    %c0_41 = arith.constant 0 : index
    %c0_42 = arith.constant 0 : index
    %c0_43 = arith.constant 0 : index
    %36 = vector.load %arg1[%c0_41, %c0_42, %c0_43] : memref<96x8x128xf32, #tpu.memory_space<vmem>>, vector<1x8x128xf32>
    %37 = vector.shape_cast %36 : vector<1x8x128xf32> to vector<8x128xf32>
    %c1_44 = arith.constant 1 : index
    %c0_45 = arith.constant 0 : index
    %c0_46 = arith.constant 0 : index
    %38 = vector.load %arg1[%c1_44, %c0_45, %c0_46] : memref<96x8x128xf32, #tpu.memory_space<vmem>>, vector<1x8x128xf32>
    %39 = vector.shape_cast %38 : vector<1x8x128xf32> to vector<8x128xf32>
    %c2_47 = arith.constant 2 : index
    %c0_48 = arith.constant 0 : index
    %c0_49 = arith.constant 0 : index
    %40 = vector.load %arg1[%c2_47, %c0_48, %c0_49] : memref<96x8x128xf32, #tpu.memory_space<vmem>>, vector<1x8x128xf32>
    %41 = vector.shape_cast %40 : vector<1x8x128xf32> to vector<8x128xf32>
    %c3_50 = arith.constant 3 : index
    %c0_51 = arith.constant 0 : index
    %c0_52 = arith.constant 0 : index
    %42 = vector.load %arg1[%c3_50, %c0_51, %c0_52] : memref<96x8x128xf32, #tpu.memory_space<vmem>>, vector<1x8x128xf32>
    %43 = vector.shape_cast %42 : vector<1x8x128xf32> to vector<8x128xf32>
    %44 = arith.mulf %35, %39 : vector<8x128xf32>
    %45 = arith.mulf %33, %41 : vector<8x128xf32>
    %46 = arith.addf %44, %45 : vector<8x128xf32>
    %47 = arith.mulf %35, %41 : vector<8x128xf32>
    %48 = arith.mulf %33, %39 : vector<8x128xf32>
    %49 = arith.subf %47, %48 : vector<8x128xf32>
    %c4_53 = arith.constant 4 : index
    %c0_54 = arith.constant 0 : index
    %c0_55 = arith.constant 0 : index
    %50 = vector.load %arg1[%c4_53, %c0_54, %c0_55] : memref<96x8x128xf32, #tpu.memory_space<vmem>>, vector<1x8x128xf32>
    %51 = vector.shape_cast %50 : vector<1x8x128xf32> to vector<8x128xf32>
    %c5_56 = arith.constant 5 : index
    %c0_57 = arith.constant 0 : index
    %c0_58 = arith.constant 0 : index
    %52 = vector.load %arg1[%c5_56, %c0_57, %c0_58] : memref<96x8x128xf32, #tpu.memory_space<vmem>>, vector<1x8x128xf32>
    %53 = vector.shape_cast %52 : vector<1x8x128xf32> to vector<8x128xf32>
    %c6_59 = arith.constant 6 : index
    %c0_60 = arith.constant 0 : index
    %c0_61 = arith.constant 0 : index
    %54 = vector.load %arg1[%c6_59, %c0_60, %c0_61] : memref<96x8x128xf32, #tpu.memory_space<vmem>>, vector<1x8x128xf32>
    %55 = vector.shape_cast %54 : vector<1x8x128xf32> to vector<8x128xf32>
    %c7_62 = arith.constant 7 : index
    %c0_63 = arith.constant 0 : index
    %c0_64 = arith.constant 0 : index
    %56 = vector.load %arg1[%c7_62, %c0_63, %c0_64] : memref<96x8x128xf32, #tpu.memory_space<vmem>>, vector<1x8x128xf32>
    %57 = vector.shape_cast %56 : vector<1x8x128xf32> to vector<8x128xf32>
    %58 = arith.mulf %35, %53 : vector<8x128xf32>
    %59 = arith.mulf %33, %55 : vector<8x128xf32>
    %60 = arith.addf %58, %59 : vector<8x128xf32>
    %61 = arith.mulf %35, %55 : vector<8x128xf32>
    %62 = arith.mulf %33, %53 : vector<8x128xf32>
    %63 = arith.subf %61, %62 : vector<8x128xf32>
    %c8_65 = arith.constant 8 : index
    %c0_66 = arith.constant 0 : index
    %c0_67 = arith.constant 0 : index
    %64 = vector.load %arg1[%c8_65, %c0_66, %c0_67] : memref<96x8x128xf32, #tpu.memory_space<vmem>>, vector<1x8x128xf32>
    %65 = vector.shape_cast %64 : vector<1x8x128xf32> to vector<8x128xf32>
    %c9_68 = arith.constant 9 : index
    %c0_69 = arith.constant 0 : index
    %c0_70 = arith.constant 0 : index
    %66 = vector.load %arg1[%c9_68, %c0_69, %c0_70] : memref<96x8x128xf32, #tpu.memory_space<vmem>>, vector<1x8x128xf32>
    %67 = vector.shape_cast %66 : vector<1x8x128xf32> to vector<8x128xf32>
    %c10_71 = arith.constant 10 : index
    %c0_72 = arith.constant 0 : index
    %c0_73 = arith.constant 0 : index
    %68 = vector.load %arg1[%c10_71, %c0_72, %c0_73] : memref<96x8x128xf32, #tpu.memory_space<vmem>>, vector<1x8x128xf32>
    %69 = vector.shape_cast %68 : vector<1x8x128xf32> to vector<8x128xf32>
    %c11_74 = arith.constant 11 : index
    %c0_75 = arith.constant 0 : index
    %c0_76 = arith.constant 0 : index
    %70 = vector.load %arg1[%c11_74, %c0_75, %c0_76] : memref<96x8x128xf32, #tpu.memory_space<vmem>>, vector<1x8x128xf32>
    %71 = vector.shape_cast %70 : vector<1x8x128xf32> to vector<8x128xf32>
    %72 = arith.mulf %35, %67 : vector<8x128xf32>
    %73 = arith.mulf %33, %69 : vector<8x128xf32>
    %74 = arith.addf %72, %73 : vector<8x128xf32>
    %75 = arith.mulf %35, %69 : vector<8x128xf32>
    %76 = arith.mulf %33, %67 : vector<8x128xf32>
    %77 = arith.subf %75, %76 : vector<8x128xf32>
    %78 = arith.mulf %3, %37 : vector<8x128xf32>
    %79 = arith.mulf %5, %51 : vector<8x128xf32>
    %80 = arith.addf %78, %79 : vector<8x128xf32>
    %81 = arith.mulf %7, %65 : vector<8x128xf32>
    %82 = arith.addf %80, %81 : vector<8x128xf32>
    %83 = arith.mulf %3, %46 : vector<8x128xf32>
    %84 = arith.mulf %5, %60 : vector<8x128xf32>
    %85 = arith.addf %83, %84 : vector<8x128xf32>
    %86 = arith.mulf %7, %74 : vector<8x128xf32>
    %87 = arith.addf %85, %86 : vector<8x128xf32>
    %88 = arith.mulf %3, %49 : vector<8x128xf32>
    %89 = arith.mulf %5, %63 : vector<8x128xf32>
    %90 = arith.addf %88, %89 : vector<8x128xf32>
    %91 = arith.mulf %7, %77 : vector<8x128xf32>
    %92 = arith.addf %90, %91 : vector<8x128xf32>
    %93 = arith.mulf %3, %43 : vector<8x128xf32>
    %94 = arith.mulf %5, %57 : vector<8x128xf32>
    %95 = arith.addf %93, %94 : vector<8x128xf32>
    %96 = arith.mulf %7, %71 : vector<8x128xf32>
    %97 = arith.addf %95, %96 : vector<8x128xf32>
    %98 = arith.addf %97, %9 : vector<8x128xf32>
    %99 = arith.mulf %11, %37 : vector<8x128xf32>
    %100 = arith.mulf %13, %51 : vector<8x128xf32>
    %101 = arith.addf %99, %100 : vector<8x128xf32>
    %102 = arith.mulf %15, %65 : vector<8x128xf32>
    %103 = arith.addf %101, %102 : vector<8x128xf32>
    %104 = arith.mulf %11, %46 : vector<8x128xf32>
    %105 = arith.mulf %13, %60 : vector<8x128xf32>
    %106 = arith.addf %104, %105 : vector<8x128xf32>
    %107 = arith.mulf %15, %74 : vector<8x128xf32>
    %108 = arith.addf %106, %107 : vector<8x128xf32>
    %109 = arith.mulf %11, %49 : vector<8x128xf32>
    %110 = arith.mulf %13, %63 : vector<8x128xf32>
    %111 = arith.addf %109, %110 : vector<8x128xf32>
    %112 = arith.mulf %15, %77 : vector<8x128xf32>
    %113 = arith.addf %111, %112 : vector<8x128xf32>
    %114 = arith.mulf %11, %43 : vector<8x128xf32>
    %115 = arith.mulf %13, %57 : vector<8x128xf32>
    %116 = arith.addf %114, %115 : vector<8x128xf32>
    %117 = arith.mulf %15, %71 : vector<8x128xf32>
    %118 = arith.addf %116, %117 : vector<8x128xf32>
    %119 = arith.addf %118, %17 : vector<8x128xf32>
    %120 = arith.mulf %19, %37 : vector<8x128xf32>
    %121 = arith.mulf %21, %51 : vector<8x128xf32>
    %122 = arith.addf %120, %121 : vector<8x128xf32>
    %123 = arith.mulf %23, %65 : vector<8x128xf32>
    %124 = arith.addf %122, %123 : vector<8x128xf32>
    %125 = arith.mulf %19, %46 : vector<8x128xf32>
    %126 = arith.mulf %21, %60 : vector<8x128xf32>
    %127 = arith.addf %125, %126 : vector<8x128xf32>
    %128 = arith.mulf %23, %74 : vector<8x128xf32>
    %129 = arith.addf %127, %128 : vector<8x128xf32>
    %130 = arith.mulf %19, %49 : vector<8x128xf32>
    %131 = arith.mulf %21, %63 : vector<8x128xf32>
    %132 = arith.addf %130, %131 : vector<8x128xf32>
    %133 = arith.mulf %23, %77 : vector<8x128xf32>
    %134 = arith.addf %132, %133 : vector<8x128xf32>
    %135 = arith.mulf %19, %43 : vector<8x128xf32>
    %136 = arith.mulf %21, %57 : vector<8x128xf32>
    %137 = arith.addf %135, %136 : vector<8x128xf32>
    %138 = arith.mulf %23, %71 : vector<8x128xf32>
    %139 = arith.addf %137, %138 : vector<8x128xf32>
    %140 = arith.addf %139, %25 : vector<8x128xf32>
    %c0_77 = arith.constant 0 : index
    %c0_78 = arith.constant 0 : index
    %c0_79 = arith.constant 0 : index
    %141 = vector.load %arg7[%c0_77, %c0_78, %c0_79] : memref<128x8x128xf32, #tpu.memory_space<vmem>>, vector<1x8x128xf32>
    %142 = vector.shape_cast %141 : vector<1x8x128xf32> to vector<8x128xf32>
    %143 = vector.shape_cast %82 : vector<8x128xf32> to vector<1x8x128xf32>
    tpu.vector_store %arg7[%c0_77, %c0_78, %c0_79], %143 {strides = array<i32>} : memref<128x8x128xf32, #tpu.memory_space<vmem>>, vector<1x8x128xf32>,
    %c1_80 = arith.constant 1 : index
    %c0_81 = arith.constant 0 : index
    %c0_82 = arith.constant 0 : index
    %144 = vector.load %arg7[%c1_80, %c0_81, %c0_82] : memref<128x8x128xf32, #tpu.memory_space<vmem>>, vector<1x8x128xf32>
    %145 = vector.shape_cast %144 : vector<1x8x128xf32> to vector<8x128xf32>
    %146 = vector.shape_cast %87 : vector<8x128xf32> to vector<1x8x128xf32>
    tpu.vector_store %arg7[%c1_80, %c0_81, %c0_82], %146 {strides = array<i32>} : memref<128x8x128xf32, #tpu.memory_space<vmem>>, vector<1x8x128xf32>,
    %c2_83 = arith.constant 2 : index
    %c0_84 = arith.constant 0 : index
    %c0_85 = arith.constant 0 : index
    %147 = vector.load %arg7[%c2_83, %c0_84, %c0_85] : memref<128x8x128xf32, #tpu.memory_space<vmem>>, vector<1x8x128xf32>
    %148 = vector.shape_cast %147 : vector<1x8x128xf32> to vector<8x128xf32>
    %149 = vector.shape_cast %92 : vector<8x128xf32> to vector<1x8x128xf32>
    tpu.vector_store %arg7[%c2_83, %c0_84, %c0_85], %149 {strides = array<i32>} : memref<128x8x128xf32, #tpu.memory_space<vmem>>, vector<1x8x128xf32>,
    %c3_86 = arith.constant 3 : index
    %c0_87 = arith.constant 0 : index
    %c0_88 = arith.constant 0 : index
    %150 = vector.load %arg7[%c3_86, %c0_87, %c0_88] : memref<128x8x128xf32, #tpu.memory_space<vmem>>, vector<1x8x128xf32>
    %151 = vector.shape_cast %150 : vector<1x8x128xf32> to vector<8x128xf32>
    %152 = vector.shape_cast %98 : vector<8x128xf32> to vector<1x8x128xf32>
    tpu.vector_store %arg7[%c3_86, %c0_87, %c0_88], %152 {strides = array<i32>} : memref<128x8x128xf32, #tpu.memory_space<vmem>>, vector<1x8x128xf32>,
    %c4_89 = arith.constant 4 : index
    %c0_90 = arith.constant 0 : index
    %c0_91 = arith.constant 0 : index
    %153 = vector.load %arg7[%c4_89, %c0_90, %c0_91] : memref<128x8x128xf32, #tpu.memory_space<vmem>>, vector<1x8x128xf32>
    %154 = vector.shape_cast %153 : vector<1x8x128xf32> to vector<8x128xf32>
    %155 = vector.shape_cast %103 : vector<8x128xf32> to vector<1x8x128xf32>
    tpu.vector_store %arg7[%c4_89, %c0_90, %c0_91], %155 {strides = array<i32>} : memref<128x8x128xf32, #tpu.memory_space<vmem>>, vector<1x8x128xf32>,
    %c5_92 = arith.constant 5 : index
    %c0_93 = arith.constant 0 : index
    %c0_94 = arith.constant 0 : index
    %156 = vector.load %arg7[%c5_92, %c0_93, %c0_94] : memref<128x8x128xf32, #tpu.memory_space<vmem>>, vector<1x8x128xf32>
    %157 = vector.shape_cast %156 : vector<1x8x128xf32> to vector<8x128xf32>
    %158 = vector.shape_cast %108 : vector<8x128xf32> to vector<1x8x128xf32>
    tpu.vector_store %arg7[%c5_92, %c0_93, %c0_94], %158 {strides = array<i32>} : memref<128x8x128xf32, #tpu.memory_space<vmem>>, vector<1x8x128xf32>,
    %c6_95 = arith.constant 6 : index
    %c0_96 = arith.constant 0 : index
    %c0_97 = arith.constant 0 : index
    %159 = vector.load %arg7[%c6_95, %c0_96, %c0_97] : memref<128x8x128xf32, #tpu.memory_space<vmem>>, vector<1x8x128xf32>
    %160 = vector.shape_cast %159 : vector<1x8x128xf32> to vector<8x128xf32>
    %161 = vector.shape_cast %113 : vector<8x128xf32> to vector<1x8x128xf32>
    tpu.vector_store %arg7[%c6_95, %c0_96, %c0_97], %161 {strides = array<i32>} : memref<128x8x128xf32, #tpu.memory_space<vmem>>, vector<1x8x128xf32>,
    %c7_98 = arith.constant 7 : index
    %c0_99 = arith.constant 0 : index
    %c0_100 = arith.constant 0 : index
    %162 = vector.load %arg7[%c7_98, %c0_99, %c0_100] : memref<128x8x128xf32, #tpu.memory_space<vmem>>, vector<1x8x128xf32>
    %163 = vector.shape_cast %162 : vector<1x8x128xf32> to vector<8x128xf32>
    %164 = vector.shape_cast %119 : vector<8x128xf32> to vector<1x8x128xf32>
    tpu.vector_store %arg7[%c7_98, %c0_99, %c0_100], %164 {strides = array<i32>} : memref<128x8x128xf32, #tpu.memory_space<vmem>>, vector<1x8x128xf32>,
    %c8_101 = arith.constant 8 : index
    %c0_102 = arith.constant 0 : index
    %c0_103 = arith.constant 0 : index
    %165 = vector.load %arg7[%c8_101, %c0_102, %c0_103] : memref<128x8x128xf32, #tpu.memory_space<vmem>>, vector<1x8x128xf32>
    %166 = vector.shape_cast %165 : vector<1x8x128xf32> to vector<8x128xf32>
    %167 = vector.shape_cast %124 : vector<8x128xf32> to vector<1x8x128xf32>
    tpu.vector_store %arg7[%c8_101, %c0_102, %c0_103], %167 {strides = array<i32>} : memref<128x8x128xf32, #tpu.memory_space<vmem>>, vector<1x8x128xf32>,
    %c9_104 = arith.constant 9 : index
    %c0_105 = arith.constant 0 : index
    %c0_106 = arith.constant 0 : index
    %168 = vector.load %arg7[%c9_104, %c0_105, %c0_106] : memref<128x8x128xf32, #tpu.memory_space<vmem>>, vector<1x8x128xf32>
    %169 = vector.shape_cast %168 : vector<1x8x128xf32> to vector<8x128xf32>
    %170 = vector.shape_cast %129 : vector<8x128xf32> to vector<1x8x128xf32>
    tpu.vector_store %arg7[%c9_104, %c0_105, %c0_106], %170 {strides = array<i32>} : memref<128x8x128xf32, #tpu.memory_space<vmem>>, vector<1x8x128xf32>,
    %c10_107 = arith.constant 10 : index
    %c0_108 = arith.constant 0 : index
    %c0_109 = arith.constant 0 : index
    %171 = vector.load %arg7[%c10_107, %c0_108, %c0_109] : memref<128x8x128xf32, #tpu.memory_space<vmem>>, vector<1x8x128xf32>
    %172 = vector.shape_cast %171 : vector<1x8x128xf32> to vector<8x128xf32>
    %173 = vector.shape_cast %134 : vector<8x128xf32> to vector<1x8x128xf32>
    tpu.vector_store %arg7[%c10_107, %c0_108, %c0_109], %173 {strides = array<i32>} : memref<128x8x128xf32, #tpu.memory_space<vmem>>, vector<1x8x128xf32>,
    %c11_110 = arith.constant 11 : index
    %c0_111 = arith.constant 0 : index
    %c0_112 = arith.constant 0 : index
    %174 = vector.load %arg7[%c11_110, %c0_111, %c0_112] : memref<128x8x128xf32, #tpu.memory_space<vmem>>, vector<1x8x128xf32>
    %175 = vector.shape_cast %174 : vector<1x8x128xf32> to vector<8x128xf32>
    %176 = vector.shape_cast %140 : vector<8x128xf32> to vector<1x8x128xf32>
    tpu.vector_store %arg7[%c11_110, %c0_111, %c0_112], %176 {strides = array<i32>} : memref<128x8x128xf32, #tpu.memory_space<vmem>>, vector<1x8x128xf32>,
    %c12 = arith.constant 12 : index
    %c0_113 = arith.constant 0 : index
    %c0_114 = arith.constant 0 : index
    %177 = vector.load %arg7[%c12, %c0_113, %c0_114] : memref<128x8x128xf32, #tpu.memory_space<vmem>>, vector<1x8x128xf32>
    %178 = vector.shape_cast %177 : vector<1x8x128xf32> to vector<8x128xf32>
    %179 = vector.shape_cast %0 : vector<8x128xf32> to vector<1x8x128xf32>
    tpu.vector_store %arg7[%c12, %c0_113, %c0_114], %179 {strides = array<i32>} : memref<128x8x128xf32, #tpu.memory_space<vmem>>, vector<1x8x128xf32>,
    %c13 = arith.constant 13 : index
    %c0_115 = arith.constant 0 : index
    %c0_116 = arith.constant 0 : index
    %180 = vector.load %arg7[%c13, %c0_115, %c0_116] : memref<128x8x128xf32, #tpu.memory_space<vmem>>, vector<1x8x128xf32>
    %181 = vector.shape_cast %180 : vector<1x8x128xf32> to vector<8x128xf32>
    %182 = vector.shape_cast %0 : vector<8x128xf32> to vector<1x8x128xf32>
    tpu.vector_store %arg7[%c13, %c0_115, %c0_116], %182 {strides = array<i32>} : memref<128x8x128xf32, #tpu.memory_space<vmem>>, vector<1x8x128xf32>,
    %c14_117 = arith.constant 14 : index
    %c0_118 = arith.constant 0 : index
    %c0_119 = arith.constant 0 : index
    %183 = vector.load %arg7[%c14_117, %c0_118, %c0_119] : memref<128x8x128xf32, #tpu.memory_space<vmem>>, vector<1x8x128xf32>
    %184 = vector.shape_cast %183 : vector<1x8x128xf32> to vector<8x128xf32>
    %185 = vector.shape_cast %0 : vector<8x128xf32> to vector<1x8x128xf32>
    tpu.vector_store %arg7[%c14_117, %c0_118, %c0_119], %185 {strides = array<i32>} : memref<128x8x128xf32, #tpu.memory_space<vmem>>, vector<1x8x128xf32>,
    %c15 = arith.constant 15 : index
    %c0_120 = arith.constant 0 : index
    %c0_121 = arith.constant 0 : index
    %186 = vector.load %arg7[%c15, %c0_120, %c0_121] : memref<128x8x128xf32, #tpu.memory_space<vmem>>, vector<1x8x128xf32>
    %187 = vector.shape_cast %186 : vector<1x8x128xf32> to vector<8x128xf32>
    %188 = vector.shape_cast %1 : vector<8x128xf32> to vector<1x8x128xf32>
    tpu.vector_store %arg7[%c15, %c0_120, %c0_121], %188 {strides = array<i32>} : memref<128x8x128xf32, #tpu.memory_space<vmem>>, vector<1x8x128xf32>,
    %c0_122 = arith.constant 0 : index
    %c0_123 = arith.constant 0 : index
    %c0_124 = arith.constant 0 : index
    %189 = vector.load %arg4[%c0_122, %c0_123, %c0_124] : memref<112x8x128xf32, #tpu.memory_space<vmem>>, vector<14x8x128xf32>
    %190 = vector.shape_cast %82 : vector<8x128xf32> to vector<1x8x128xf32>
    %191 = vector.broadcast %190 : vector<1x8x128xf32> to vector<14x8x128xf32>
    %192 = arith.mulf %191, %26 : vector<14x8x128xf32>
    %193 = vector.shape_cast %87 : vector<8x128xf32> to vector<1x8x128xf32>
    %194 = vector.broadcast %193 : vector<1x8x128xf32> to vector<14x8x128xf32>
    %195 = arith.mulf %194, %27 : vector<14x8x128xf32>
    %196 = arith.addf %192, %195 : vector<14x8x128xf32>
    %197 = vector.shape_cast %92 : vector<8x128xf32> to vector<1x8x128xf32>
    %198 = vector.broadcast %197 : vector<1x8x128xf32> to vector<14x8x128xf32>
    %199 = arith.mulf %198, %28 : vector<14x8x128xf32>
    %200 = arith.addf %196, %199 : vector<14x8x128xf32>
    %201 = vector.shape_cast %98 : vector<8x128xf32> to vector<1x8x128xf32>
    %202 = vector.broadcast %201 : vector<1x8x128xf32> to vector<14x8x128xf32>
    %203 = arith.addf %200, %202 : vector<14x8x128xf32>
    %204 = arith.mulf %189, %203 : vector<14x8x128xf32>
    %205 = arith.addf %29, %204 : vector<14x8x128xf32>
    %206 = vector.shape_cast %103 : vector<8x128xf32> to vector<1x8x128xf32>
    %207 = vector.broadcast %206 : vector<1x8x128xf32> to vector<14x8x128xf32>
    %208 = arith.mulf %207, %26 : vector<14x8x128xf32>
    %209 = vector.shape_cast %108 : vector<8x128xf32> to vector<1x8x128xf32>
    %210 = vector.broadcast %209 : vector<1x8x128xf32> to vector<14x8x128xf32>
    %211 = arith.mulf %210, %27 : vector<14x8x128xf32>
    %212 = arith.addf %208, %211 : vector<14x8x128xf32>
    %213 = vector.shape_cast %113 : vector<8x128xf32> to vector<1x8x128xf32>
    %214 = vector.broadcast %213 : vector<1x8x128xf32> to vector<14x8x128xf32>
    %215 = arith.mulf %214, %28 : vector<14x8x128xf32>
    %216 = arith.addf %212, %215 : vector<14x8x128xf32>
    %217 = vector.shape_cast %119 : vector<8x128xf32> to vector<1x8x128xf32>
    %218 = vector.broadcast %217 : vector<1x8x128xf32> to vector<14x8x128xf32>
    %219 = arith.addf %216, %218 : vector<14x8x128xf32>
    %220 = arith.mulf %189, %219 : vector<14x8x128xf32>
    %221 = arith.addf %30, %220 : vector<14x8x128xf32>
    %222 = vector.shape_cast %124 : vector<8x128xf32> to vector<1x8x128xf32>
    %223 = vector.broadcast %222 : vector<1x8x128xf32> to vector<14x8x128xf32>
    %224 = arith.mulf %223, %26 : vector<14x8x128xf32>
    %225 = vector.shape_cast %129 : vector<8x128xf32> to vector<1x8x128xf32>
    %226 = vector.broadcast %225 : vector<1x8x128xf32> to vector<14x8x128xf32>
    %227 = arith.mulf %226, %27 : vector<14x8x128xf32>
    %228 = arith.addf %224, %227 : vector<14x8x128xf32>
    %229 = vector.shape_cast %134 : vector<8x128xf32> to vector<1x8x128xf32>
    %230 = vector.broadcast %229 : vector<1x8x128xf32> to vector<14x8x128xf32>
    %231 = arith.mulf %230, %28 : vector<14x8x128xf32>
    %232 = arith.addf %228, %231 : vector<14x8x128xf32>
    %233 = vector.shape_cast %140 : vector<8x128xf32> to vector<1x8x128xf32>
    %234 = vector.broadcast %233 : vector<1x8x128xf32> to vector<14x8x128xf32>
    %235 = arith.addf %232, %234 : vector<14x8x128xf32>
    %236 = arith.mulf %189, %235 : vector<14x8x128xf32>
    %237 = arith.addf %31, %236 : vector<14x8x128xf32>
    %c2_125 = arith.constant 2 : index
    %c0_126 = arith.constant 0 : index
    %c0_127 = arith.constant 0 : index
    %238 = vector.load %arg2[%c2_125, %c0_126, %c0_127] : memref<16x8x128xf32, #tpu.memory_space<vmem>>, vector<1x8x128xf32>
    %239 = vector.shape_cast %238 : vector<1x8x128xf32> to vector<8x128xf32>
    %c3_128 = arith.constant 3 : index
    %c0_129 = arith.constant 0 : index
    %c0_130 = arith.constant 0 : index
    %240 = vector.load %arg2[%c3_128, %c0_129, %c0_130] : memref<16x8x128xf32, #tpu.memory_space<vmem>>, vector<1x8x128xf32>
    %241 = vector.shape_cast %240 : vector<1x8x128xf32> to vector<8x128xf32>
    %c12_131 = arith.constant 12 : index
    %c0_132 = arith.constant 0 : index
    %c0_133 = arith.constant 0 : index
    %242 = vector.load %arg1[%c12_131, %c0_132, %c0_133] : memref<96x8x128xf32, #tpu.memory_space<vmem>>, vector<1x8x128xf32>
    %243 = vector.shape_cast %242 : vector<1x8x128xf32> to vector<8x128xf32>
    %c13_134 = arith.constant 13 : index
    %c0_135 = arith.constant 0 : index
    %c0_136 = arith.constant 0 : index
    %244 = vector.load %arg1[%c13_134, %c0_135, %c0_136] : memref<96x8x128xf32, #tpu.memory_space<vmem>>, vector<1x8x128xf32>
    %245 = vector.shape_cast %244 : vector<1x8x128xf32> to vector<8x128xf32>
    %c14_137 = arith.constant 14 : index
    %c0_138 = arith.constant 0 : index
    %c0_139 = arith.constant 0 : index
    %246 = vector.load %arg1[%c14_137, %c0_138, %c0_139] : memref<96x8x128xf32, #tpu.memory_space<vmem>>, vector<1x8x128xf32>
    %247 = vector.shape_cast %246 : vector<1x8x128xf32> to vector<8x128xf32>
    %c15_140 = arith.constant 15 : index
    %c0_141 = arith.constant 0 : index
    %c0_142 = arith.constant 0 : index
    %248 = vector.load %arg1[%c15_140, %c0_141, %c0_142] : memref<96x8x128xf32, #tpu.memory_space<vmem>>, vector<1x8x128xf32>
    %249 = vector.shape_cast %248 : vector<1x8x128xf32> to vector<8x128xf32>
    %250 = arith.mulf %241, %245 : vector<8x128xf32>
    %251 = arith.mulf %239, %247 : vector<8x128xf32>
    %252 = arith.addf %250, %251 : vector<8x128xf32>
    %253 = arith.mulf %241, %247 : vector<8x128xf32>
    %254 = arith.mulf %239, %245 : vector<8x128xf32>
    %255 = arith.subf %253, %254 : vector<8x128xf32>
    %c16 = arith.constant 16 : index
    %c0_143 = arith.constant 0 : index
    %c0_144 = arith.constant 0 : index
    %256 = vector.load %arg1[%c16, %c0_143, %c0_144] : memref<96x8x128xf32, #tpu.memory_space<vmem>>, vector<1x8x128xf32>
    %257 = vector.shape_cast %256 : vector<1x8x128xf32> to vector<8x128xf32>
    %c17 = arith.constant 17 : index
    %c0_145 = arith.constant 0 : index
    %c0_146 = arith.constant 0 : index
    %258 = vector.load %arg1[%c17, %c0_145, %c0_146] : memref<96x8x128xf32, #tpu.memory_space<vmem>>, vector<1x8x128xf32>
    %259 = vector.shape_cast %258 : vector<1x8x128xf32> to vector<8x128xf32>
    %c18 = arith.constant 18 : index
    %c0_147 = arith.constant 0 : index
    %c0_148 = arith.constant 0 : index
    %260 = vector.load %arg1[%c18, %c0_147, %c0_148] : memref<96x8x128xf32, #tpu.memory_space<vmem>>, vector<1x8x128xf32>
    %261 = vector.shape_cast %260 : vector<1x8x128xf32> to vector<8x128xf32>
    %c19 = arith.constant 19 : index
    %c0_149 = arith.constant 0 : index
    %c0_150 = arith.constant 0 : index
    %262 = vector.load %arg1[%c19, %c0_149, %c0_150] : memref<96x8x128xf32, #tpu.memory_space<vmem>>, vector<1x8x128xf32>
    %263 = vector.shape_cast %262 : vector<1x8x128xf32> to vector<8x128xf32>
    %264 = arith.mulf %241, %259 : vector<8x128xf32>
    %265 = arith.mulf %239, %261 : vector<8x128xf32>
    %266 = arith.addf %264, %265 : vector<8x128xf32>
    %267 = arith.mulf %241, %261 : vector<8x128xf32>
    %268 = arith.mulf %239, %259 : vector<8x128xf32>
    %269 = arith.subf %267, %268 : vector<8x128xf32>
    %c20 = arith.constant 20 : index
    %c0_151 = arith.constant 0 : index
    %c0_152 = arith.constant 0 : index
    %270 = vector.load %arg1[%c20, %c0_151, %c0_152] : memref<96x8x128xf32, #tpu.memory_space<vmem>>, vector<1x8x128xf32>
    %271 = vector.shape_cast %270 : vector<1x8x128xf32> to vector<8x128xf32>
    %c21 = arith.constant 21 : index
    %c0_153 = arith.constant 0 : index
    %c0_154 = arith.constant 0 : index
    %272 = vector.load %arg1[%c21, %c0_153, %c0_154] : memref<96x8x128xf32, #tpu.memory_space<vmem>>, vector<1x8x128xf32>
    %273 = vector.shape_cast %272 : vector<1x8x128xf32> to vector<8x128xf32>
    %c22 = arith.constant 22 : index
    %c0_155 = arith.constant 0 : index
    %c0_156 = arith.constant 0 : index
    %274 = vector.load %arg1[%c22, %c0_155, %c0_156] : memref<96x8x128xf32, #tpu.memory_space<vmem>>, vector<1x8x128xf32>
    %275 = vector.shape_cast %274 : vector<1x8x128xf32> to vector<8x128xf32>
    %c23 = arith.constant 23 : index
    %c0_157 = arith.constant 0 : index
    %c0_158 = arith.constant 0 : index
    %276 = vector.load %arg1[%c23, %c0_157, %c0_158] : memref<96x8x128xf32, #tpu.memory_space<vmem>>, vector<1x8x128xf32>
    %277 = vector.shape_cast %276 : vector<1x8x128xf32> to vector<8x128xf32>
    %278 = arith.mulf %241, %273 : vector<8x128xf32>
    %279 = arith.mulf %239, %275 : vector<8x128xf32>
    %280 = arith.addf %278, %279 : vector<8x128xf32>
    %281 = arith.mulf %241, %275 : vector<8x128xf32>
    %282 = arith.mulf %239, %273 : vector<8x128xf32>
    %283 = arith.subf %281, %282 : vector<8x128xf32>
    %284 = arith.mulf %3, %243 : vector<8x128xf32>
    %285 = arith.mulf %5, %257 : vector<8x128xf32>
    %286 = arith.addf %284, %285 : vector<8x128xf32>
    %287 = arith.mulf %7, %271 : vector<8x128xf32>
    %288 = arith.addf %286, %287 : vector<8x128xf32>
    %289 = arith.mulf %3, %252 : vector<8x128xf32>
    %290 = arith.mulf %5, %266 : vector<8x128xf32>
    %291 = arith.addf %289, %290 : vector<8x128xf32>
    %292 = arith.mulf %7, %280 : vector<8x128xf32>
    %293 = arith.addf %291, %292 : vector<8x128xf32>
    %294 = arith.mulf %3, %255 : vector<8x128xf32>
    %295 = arith.mulf %5, %269 : vector<8x128xf32>
    %296 = arith.addf %294, %295 : vector<8x128xf32>
    %297 = arith.mulf %7, %283 : vector<8x128xf32>
    %298 = arith.addf %296, %297 : vector<8x128xf32>
    %299 = arith.mulf %3, %249 : vector<8x128xf32>
    %300 = arith.mulf %5, %263 : vector<8x128xf32>
    %301 = arith.addf %299, %300 : vector<8x128xf32>
    %302 = arith.mulf %7, %277 : vector<8x128xf32>
    %303 = arith.addf %301, %302 : vector<8x128xf32>
    %304 = arith.addf %303, %9 : vector<8x128xf32>
    %305 = arith.mulf %11, %243 : vector<8x128xf32>
    %306 = arith.mulf %13, %257 : vector<8x128xf32>
    %307 = arith.addf %305, %306 : vector<8x128xf32>
    %308 = arith.mulf %15, %271 : vector<8x128xf32>
    %309 = arith.addf %307, %308 : vector<8x128xf32>
    %310 = arith.mulf %11, %252 : vector<8x128xf32>
    %311 = arith.mulf %13, %266 : vector<8x128xf32>
    %312 = arith.addf %310, %311 : vector<8x128xf32>
    %313 = arith.mulf %15, %280 : vector<8x128xf32>
    %314 = arith.addf %312, %313 : vector<8x128xf32>
    %315 = arith.mulf %11, %255 : vector<8x128xf32>
    %316 = arith.mulf %13, %269 : vector<8x128xf32>
    %317 = arith.addf %315, %316 : vector<8x128xf32>
    %318 = arith.mulf %15, %283 : vector<8x128xf32>
    %319 = arith.addf %317, %318 : vector<8x128xf32>
    %320 = arith.mulf %11, %249 : vector<8x128xf32>
    %321 = arith.mulf %13, %263 : vector<8x128xf32>
    %322 = arith.addf %320, %321 : vector<8x128xf32>
    %323 = arith.mulf %15, %277 : vector<8x128xf32>
    %324 = arith.addf %322, %323 : vector<8x128xf32>
    %325 = arith.addf %324, %17 : vector<8x128xf32>
    %326 = arith.mulf %19, %243 : vector<8x128xf32>
    %327 = arith.mulf %21, %257 : vector<8x128xf32>
    %328 = arith.addf %326, %327 : vector<8x128xf32>
    %329 = arith.mulf %23, %271 : vector<8x128xf32>
    %330 = arith.addf %328, %329 : vector<8x128xf32>
    %331 = arith.mulf %19, %252 : vector<8x128xf32>
    %332 = arith.mulf %21, %266 : vector<8x128xf32>
    %333 = arith.addf %331, %332 : vector<8x128xf32>
    %334 = arith.mulf %23, %280 : vector<8x128xf32>
    %335 = arith.addf %333, %334 : vector<8x128xf32>
    %336 = arith.mulf %19, %255 : vector<8x128xf32>
    %337 = arith.mulf %21, %269 : vector<8x128xf32>
    %338 = arith.addf %336, %337 : vector<8x128xf32>
    %339 = arith.mulf %23, %283 : vector<8x128xf32>
    %340 = arith.addf %338, %339 : vector<8x128xf32>
    %341 = arith.mulf %19, %249 : vector<8x128xf32>
    %342 = arith.mulf %21, %263 : vector<8x128xf32>
    %343 = arith.addf %341, %342 : vector<8x128xf32>
    %344 = arith.mulf %23, %277 : vector<8x128xf32>
    %345 = arith.addf %343, %344 : vector<8x128xf32>
    %346 = arith.addf %345, %25 : vector<8x128xf32>
    %c16_159 = arith.constant 16 : index
    %c0_160 = arith.constant 0 : index
    %c0_161 = arith.constant 0 : index
    %347 = vector.load %arg7[%c16_159, %c0_160, %c0_161] : memref<128x8x128xf32, #tpu.memory_space<vmem>>, vector<1x8x128xf32>
    %348 = vector.shape_cast %347 : vector<1x8x128xf32> to vector<8x128xf32>
    %349 = vector.shape_cast %288 : vector<8x128xf32> to vector<1x8x128xf32>
    tpu.vector_store %arg7[%c16_159, %c0_160, %c0_161], %349 {strides = array<i32>} : memref<128x8x128xf32, #tpu.memory_space<vmem>>, vector<1x8x128xf32>,
    %c17_162 = arith.constant 17 : index
    %c0_163 = arith.constant 0 : index
    %c0_164 = arith.constant 0 : index
    %350 = vector.load %arg7[%c17_162, %c0_163, %c0_164] : memref<128x8x128xf32, #tpu.memory_space<vmem>>, vector<1x8x128xf32>
    %351 = vector.shape_cast %350 : vector<1x8x128xf32> to vector<8x128xf32>
    %352 = vector.shape_cast %293 : vector<8x128xf32> to vector<1x8x128xf32>
    tpu.vector_store %arg7[%c17_162, %c0_163, %c0_164], %352 {strides = array<i32>} : memref<128x8x128xf32, #tpu.memory_space<vmem>>, vector<1x8x128xf32>,
    %c18_165 = arith.constant 18 : index
    %c0_166 = arith.constant 0 : index
    %c0_167 = arith.constant 0 : index
    %353 = vector.load %arg7[%c18_165, %c0_166, %c0_167] : memref<128x8x128xf32, #tpu.memory_space<vmem>>, vector<1x8x128xf32>
    %354 = vector.shape_cast %353 : vector<1x8x128xf32> to vector<8x128xf32>
    %355 = vector.shape_cast %298 : vector<8x128xf32> to vector<1x8x128xf32>
    tpu.vector_store %arg7[%c18_165, %c0_166, %c0_167], %355 {strides = array<i32>} : memref<128x8x128xf32, #tpu.memory_space<vmem>>, vector<1x8x128xf32>,
    %c19_168 = arith.constant 19 : index
    %c0_169 = arith.constant 0 : index
    %c0_170 = arith.constant 0 : index
    %356 = vector.load %arg7[%c19_168, %c0_169, %c0_170] : memref<128x8x128xf32, #tpu.memory_space<vmem>>, vector<1x8x128xf32>
    %357 = vector.shape_cast %356 : vector<1x8x128xf32> to vector<8x128xf32>
    %358 = vector.shape_cast %304 : vector<8x128xf32> to vector<1x8x128xf32>
    tpu.vector_store %arg7[%c19_168, %c0_169, %c0_170], %358 {strides = array<i32>} : memref<128x8x128xf32, #tpu.memory_space<vmem>>, vector<1x8x128xf32>,
    %c20_171 = arith.constant 20 : index
    %c0_172 = arith.constant 0 : index
    %c0_173 = arith.constant 0 : index
    %359 = vector.load %arg7[%c20_171, %c0_172, %c0_173] : memref<128x8x128xf32, #tpu.memory_space<vmem>>, vector<1x8x128xf32>
    %360 = vector.shape_cast %359 : vector<1x8x128xf32> to vector<8x128xf32>
    %361 = vector.shape_cast %309 : vector<8x128xf32> to vector<1x8x128xf32>
    tpu.vector_store %arg7[%c20_171, %c0_172, %c0_173], %361 {strides = array<i32>} : memref<128x8x128xf32, #tpu.memory_space<vmem>>, vector<1x8x128xf32>,
    %c21_174 = arith.constant 21 : index
    %c0_175 = arith.constant 0 : index
    %c0_176 = arith.constant 0 : index
    %362 = vector.load %arg7[%c21_174, %c0_175, %c0_176] : memref<128x8x128xf32, #tpu.memory_space<vmem>>, vector<1x8x128xf32>
    %363 = vector.shape_cast %362 : vector<1x8x128xf32> to vector<8x128xf32>
    %364 = vector.shape_cast %314 : vector<8x128xf32> to vector<1x8x128xf32>
    tpu.vector_store %arg7[%c21_174, %c0_175, %c0_176], %364 {strides = array<i32>} : memref<128x8x128xf32, #tpu.memory_space<vmem>>, vector<1x8x128xf32>,
    %c22_177 = arith.constant 22 : index
    %c0_178 = arith.constant 0 : index
    %c0_179 = arith.constant 0 : index
    %365 = vector.load %arg7[%c22_177, %c0_178, %c0_179] : memref<128x8x128xf32, #tpu.memory_space<vmem>>, vector<1x8x128xf32>
    %366 = vector.shape_cast %365 : vector<1x8x128xf32> to vector<8x128xf32>
    %367 = vector.shape_cast %319 : vector<8x128xf32> to vector<1x8x128xf32>
    tpu.vector_store %arg7[%c22_177, %c0_178, %c0_179], %367 {strides = array<i32>} : memref<128x8x128xf32, #tpu.memory_space<vmem>>, vector<1x8x128xf32>,
    %c23_180 = arith.constant 23 : index
    %c0_181 = arith.constant 0 : index
    %c0_182 = arith.constant 0 : index
    %368 = vector.load %arg7[%c23_180, %c0_181, %c0_182] : memref<128x8x128xf32, #tpu.memory_space<vmem>>, vector<1x8x128xf32>
    %369 = vector.shape_cast %368 : vector<1x8x128xf32> to vector<8x128xf32>
    %370 = vector.shape_cast %325 : vector<8x128xf32> to vector<1x8x128xf32>
    tpu.vector_store %arg7[%c23_180, %c0_181, %c0_182], %370 {strides = array<i32>} : memref<128x8x128xf32, #tpu.memory_space<vmem>>, vector<1x8x128xf32>,
    %c24 = arith.constant 24 : index
    %c0_183 = arith.constant 0 : index
    %c0_184 = arith.constant 0 : index
    %371 = vector.load %arg7[%c24, %c0_183, %c0_184] : memref<128x8x128xf32, #tpu.memory_space<vmem>>, vector<1x8x128xf32>
    %372 = vector.shape_cast %371 : vector<1x8x128xf32> to vector<8x128xf32>
    %373 = vector.shape_cast %330 : vector<8x128xf32> to vector<1x8x128xf32>
    tpu.vector_store %arg7[%c24, %c0_183, %c0_184], %373 {strides = array<i32>} : memref<128x8x128xf32, #tpu.memory_space<vmem>>, vector<1x8x128xf32>,
    %c25 = arith.constant 25 : index
    %c0_185 = arith.constant 0 : index
    %c0_186 = arith.constant 0 : index
    %374 = vector.load %arg7[%c25, %c0_185, %c0_186] : memref<128x8x128xf32, #tpu.memory_space<vmem>>, vector<1x8x128xf32>
    %375 = vector.shape_cast %374 : vector<1x8x128xf32> to vector<8x128xf32>
    %376 = vector.shape_cast %335 : vector<8x128xf32> to vector<1x8x128xf32>
    tpu.vector_store %arg7[%c25, %c0_185, %c0_186], %376 {strides = array<i32>} : memref<128x8x128xf32, #tpu.memory_space<vmem>>, vector<1x8x128xf32>,
    %c26 = arith.constant 26 : index
    %c0_187 = arith.constant 0 : index
    %c0_188 = arith.constant 0 : index
    %377 = vector.load %arg7[%c26, %c0_187, %c0_188] : memref<128x8x128xf32, #tpu.memory_space<vmem>>, vector<1x8x128xf32>
    %378 = vector.shape_cast %377 : vector<1x8x128xf32> to vector<8x128xf32>
    %379 = vector.shape_cast %340 : vector<8x128xf32> to vector<1x8x128xf32>
    tpu.vector_store %arg7[%c26, %c0_187, %c0_188], %379 {strides = array<i32>} : memref<128x8x128xf32, #tpu.memory_space<vmem>>, vector<1x8x128xf32>,
    %c27 = arith.constant 27 : index
    %c0_189 = arith.constant 0 : index
    %c0_190 = arith.constant 0 : index
    %380 = vector.load %arg7[%c27, %c0_189, %c0_190] : memref<128x8x128xf32, #tpu.memory_space<vmem>>, vector<1x8x128xf32>
    %381 = vector.shape_cast %380 : vector<1x8x128xf32> to vector<8x128xf32>
    %382 = vector.shape_cast %346 : vector<8x128xf32> to vector<1x8x128xf32>
    tpu.vector_store %arg7[%c27, %c0_189, %c0_190], %382 {strides = array<i32>} : memref<128x8x128xf32, #tpu.memory_space<vmem>>, vector<1x8x128xf32>,
    %c28_191 = arith.constant 28 : index
    %c0_192 = arith.constant 0 : index
    %c0_193 = arith.constant 0 : index
    %383 = vector.load %arg7[%c28_191, %c0_192, %c0_193] : memref<128x8x128xf32, #tpu.memory_space<vmem>>, vector<1x8x128xf32>
    %384 = vector.shape_cast %383 : vector<1x8x128xf32> to vector<8x128xf32>
    %385 = vector.shape_cast %0 : vector<8x128xf32> to vector<1x8x128xf32>
    tpu.vector_store %arg7[%c28_191, %c0_192, %c0_193], %385 {strides = array<i32>} : memref<128x8x128xf32, #tpu.memory_space<vmem>>, vector<1x8x128xf32>,
    %c29 = arith.constant 29 : index
    %c0_194 = arith.constant 0 : index
    %c0_195 = arith.constant 0 : index
    %386 = vector.load %arg7[%c29, %c0_194, %c0_195] : memref<128x8x128xf32, #tpu.memory_space<vmem>>, vector<1x8x128xf32>
    %387 = vector.shape_cast %386 : vector<1x8x128xf32> to vector<8x128xf32>
    %388 = vector.shape_cast %0 : vector<8x128xf32> to vector<1x8x128xf32>
    tpu.vector_store %arg7[%c29, %c0_194, %c0_195], %388 {strides = array<i32>} : memref<128x8x128xf32, #tpu.memory_space<vmem>>, vector<1x8x128xf32>,
    %c30 = arith.constant 30 : index
    %c0_196 = arith.constant 0 : index
    %c0_197 = arith.constant 0 : index
    %389 = vector.load %arg7[%c30, %c0_196, %c0_197] : memref<128x8x128xf32, #tpu.memory_space<vmem>>, vector<1x8x128xf32>
    %390 = vector.shape_cast %389 : vector<1x8x128xf32> to vector<8x128xf32>
    %391 = vector.shape_cast %0 : vector<8x128xf32> to vector<1x8x128xf32>
    tpu.vector_store %arg7[%c30, %c0_196, %c0_197], %391 {strides = array<i32>} : memref<128x8x128xf32, #tpu.memory_space<vmem>>, vector<1x8x128xf32>,
    %c31 = arith.constant 31 : index
    %c0_198 = arith.constant 0 : index
    %c0_199 = arith.constant 0 : index
    %392 = vector.load %arg7[%c31, %c0_198, %c0_199] : memref<128x8x128xf32, #tpu.memory_space<vmem>>, vector<1x8x128xf32>
    %393 = vector.shape_cast %392 : vector<1x8x128xf32> to vector<8x128xf32>
    %394 = vector.shape_cast %1 : vector<8x128xf32> to vector<1x8x128xf32>
    tpu.vector_store %arg7[%c31, %c0_198, %c0_199], %394 {strides = array<i32>} : memref<128x8x128xf32, #tpu.memory_space<vmem>>, vector<1x8x128xf32>,
    %c14_200 = arith.constant 14 : index
    %c0_201 = arith.constant 0 : index
    %c0_202 = arith.constant 0 : index
    %395 = vector.load %arg4[%c14_200, %c0_201, %c0_202] : memref<112x8x128xf32, #tpu.memory_space<vmem>>, vector<14x8x128xf32>
    %396 = vector.shape_cast %288 : vector<8x128xf32> to vector<1x8x128xf32>
    %397 = vector.broadcast %396 : vector<1x8x128xf32> to vector<14x8x128xf32>
    %398 = arith.mulf %397, %26 : vector<14x8x128xf32>
    %399 = vector.shape_cast %293 : vector<8x128xf32> to vector<1x8x128xf32>
    %400 = vector.broadcast %399 : vector<1x8x128xf32> to vector<14x8x128xf32>
    %401 = arith.mulf %400, %27 : vector<14x8x128xf32>
    %402 = arith.addf %398, %401 : vector<14x8x128xf32>
    %403 = vector.shape_cast %298 : vector<8x128xf32> to vector<1x8x128xf32>
    %404 = vector.broadcast %403 : vector<1x8x128xf32> to vector<14x8x128xf32>
    %405 = arith.mulf %404, %28 : vector<14x8x128xf32>
    %406 = arith.addf %402, %405 : vector<14x8x128xf32>
    %407 = vector.shape_cast %304 : vector<8x128xf32> to vector<1x8x128xf32>
    %408 = vector.broadcast %407 : vector<1x8x128xf32> to vector<14x8x128xf32>
    %409 = arith.addf %406, %408 : vector<14x8x128xf32>
    %410 = arith.mulf %395, %409 : vector<14x8x128xf32>
    %411 = arith.addf %205, %410 : vector<14x8x128xf32>
    %412 = vector.shape_cast %309 : vector<8x128xf32> to vector<1x8x128xf32>
    %413 = vector.broadcast %412 : vector<1x8x128xf32> to vector<14x8x128xf32>
    %414 = arith.mulf %413, %26 : vector<14x8x128xf32>
    %415 = vector.shape_cast %314 : vector<8x128xf32> to vector<1x8x128xf32>
    %416 = vector.broadcast %415 : vector<1x8x128xf32> to vector<14x8x128xf32>
    %417 = arith.mulf %416, %27 : vector<14x8x128xf32>
    %418 = arith.addf %414, %417 : vector<14x8x128xf32>
    %419 = vector.shape_cast %319 : vector<8x128xf32> to vector<1x8x128xf32>
    %420 = vector.broadcast %419 : vector<1x8x128xf32> to vector<14x8x128xf32>
    %421 = arith.mulf %420, %28 : vector<14x8x128xf32>
    %422 = arith.addf %418, %421 : vector<14x8x128xf32>
    %423 = vector.shape_cast %325 : vector<8x128xf32> to vector<1x8x128xf32>
    %424 = vector.broadcast %423 : vector<1x8x128xf32> to vector<14x8x128xf32>
    %425 = arith.addf %422, %424 : vector<14x8x128xf32>
    %426 = arith.mulf %395, %425 : vector<14x8x128xf32>
    %427 = arith.addf %221, %426 : vector<14x8x128xf32>
    %428 = vector.shape_cast %330 : vector<8x128xf32> to vector<1x8x128xf32>
    %429 = vector.broadcast %428 : vector<1x8x128xf32> to vector<14x8x128xf32>
    %430 = arith.mulf %429, %26 : vector<14x8x128xf32>
    %431 = vector.shape_cast %335 : vector<8x128xf32> to vector<1x8x128xf32>
    %432 = vector.broadcast %431 : vector<1x8x128xf32> to vector<14x8x128xf32>
    %433 = arith.mulf %432, %27 : vector<14x8x128xf32>
    %434 = arith.addf %430, %433 : vector<14x8x128xf32>
    %435 = vector.shape_cast %340 : vector<8x128xf32> to vector<1x8x128xf32>
    %436 = vector.broadcast %435 : vector<1x8x128xf32> to vector<14x8x128xf32>
    %437 = arith.mulf %436, %28 : vector<14x8x128xf32>
    %438 = arith.addf %434, %437 : vector<14x8x128xf32>
    %439 = vector.shape_cast %346 : vector<8x128xf32> to vector<1x8x128xf32>
    %440 = vector.broadcast %439 : vector<1x8x128xf32> to vector<14x8x128xf32>
    %441 = arith.addf %438, %440 : vector<14x8x128xf32>
    %442 = arith.mulf %395, %441 : vector<14x8x128xf32>
    %443 = arith.addf %237, %442 : vector<14x8x128xf32>
    %c4_203 = arith.constant 4 : index
    %c0_204 = arith.constant 0 : index
    %c0_205 = arith.constant 0 : index
    %444 = vector.load %arg2[%c4_203, %c0_204, %c0_205] : memref<16x8x128xf32, #tpu.memory_space<vmem>>, vector<1x8x128xf32>
    %445 = vector.shape_cast %444 : vector<1x8x128xf32> to vector<8x128xf32>
    %c5_206 = arith.constant 5 : index
    %c0_207 = arith.constant 0 : index
    %c0_208 = arith.constant 0 : index
    %446 = vector.load %arg2[%c5_206, %c0_207, %c0_208] : memref<16x8x128xf32, #tpu.memory_space<vmem>>, vector<1x8x128xf32>
    %447 = vector.shape_cast %446 : vector<1x8x128xf32> to vector<8x128xf32>
    %c24_209 = arith.constant 24 : index
    %c0_210 = arith.constant 0 : index
    %c0_211 = arith.constant 0 : index
    %448 = vector.load %arg1[%c24_209, %c0_210, %c0_211] : memref<96x8x128xf32, #tpu.memory_space<vmem>>, vector<1x8x128xf32>
    %449 = vector.shape_cast %448 : vector<1x8x128xf32> to vector<8x128xf32>
    %c25_212 = arith.constant 25 : index
    %c0_213 = arith.constant 0 : index
    %c0_214 = arith.constant 0 : index
    %450 = vector.load %arg1[%c25_212, %c0_213, %c0_214] : memref<96x8x128xf32, #tpu.memory_space<vmem>>, vector<1x8x128xf32>
    %451 = vector.shape_cast %450 : vector<1x8x128xf32> to vector<8x128xf32>
    %c26_215 = arith.constant 26 : index
    %c0_216 = arith.constant 0 : index
    %c0_217 = arith.constant 0 : index
    %452 = vector.load %arg1[%c26_215, %c0_216, %c0_217] : memref<96x8x128xf32, #tpu.memory_space<vmem>>, vector<1x8x128xf32>
    %453 = vector.shape_cast %452 : vector<1x8x128xf32> to vector<8x128xf32>
    %c27_218 = arith.constant 27 : index
    %c0_219 = arith.constant 0 : index
    %c0_220 = arith.constant 0 : index
    %454 = vector.load %arg1[%c27_218, %c0_219, %c0_220] : memref<96x8x128xf32, #tpu.memory_space<vmem>>, vector<1x8x128xf32>
    %455 = vector.shape_cast %454 : vector<1x8x128xf32> to vector<8x128xf32>
    %456 = arith.mulf %447, %451 : vector<8x128xf32>
    %457 = arith.mulf %445, %453 : vector<8x128xf32>
    %458 = arith.addf %456, %457 : vector<8x128xf32>
    %459 = arith.mulf %447, %453 : vector<8x128xf32>
    %460 = arith.mulf %445, %451 : vector<8x128xf32>
    %461 = arith.subf %459, %460 : vector<8x128xf32>
    %c28_221 = arith.constant 28 : index
    %c0_222 = arith.constant 0 : index
    %c0_223 = arith.constant 0 : index
    %462 = vector.load %arg1[%c28_221, %c0_222, %c0_223] : memref<96x8x128xf32, #tpu.memory_space<vmem>>, vector<1x8x128xf32>
    %463 = vector.shape_cast %462 : vector<1x8x128xf32> to vector<8x128xf32>
    %c29_224 = arith.constant 29 : index
    %c0_225 = arith.constant 0 : index
    %c0_226 = arith.constant 0 : index
    %464 = vector.load %arg1[%c29_224, %c0_225, %c0_226] : memref<96x8x128xf32, #tpu.memory_space<vmem>>, vector<1x8x128xf32>
    %465 = vector.shape_cast %464 : vector<1x8x128xf32> to vector<8x128xf32>
    %c30_227 = arith.constant 30 : index
    %c0_228 = arith.constant 0 : index
    %c0_229 = arith.constant 0 : index
    %466 = vector.load %arg1[%c30_227, %c0_228, %c0_229] : memref<96x8x128xf32, #tpu.memory_space<vmem>>, vector<1x8x128xf32>
    %467 = vector.shape_cast %466 : vector<1x8x128xf32> to vector<8x128xf32>
    %c31_230 = arith.constant 31 : index
    %c0_231 = arith.constant 0 : index
    %c0_232 = arith.constant 0 : index
    %468 = vector.load %arg1[%c31_230, %c0_231, %c0_232] : memref<96x8x128xf32, #tpu.memory_space<vmem>>, vector<1x8x128xf32>
    %469 = vector.shape_cast %468 : vector<1x8x128xf32> to vector<8x128xf32>
    %470 = arith.mulf %447, %465 : vector<8x128xf32>
    %471 = arith.mulf %445, %467 : vector<8x128xf32>
    %472 = arith.addf %470, %471 : vector<8x128xf32>
    %473 = arith.mulf %447, %467 : vector<8x128xf32>
    %474 = arith.mulf %445, %465 : vector<8x128xf32>
    %475 = arith.subf %473, %474 : vector<8x128xf32>
    %c32 = arith.constant 32 : index
    %c0_233 = arith.constant 0 : index
    %c0_234 = arith.constant 0 : index
    %476 = vector.load %arg1[%c32, %c0_233, %c0_234] : memref<96x8x128xf32, #tpu.memory_space<vmem>>, vector<1x8x128xf32>
    %477 = vector.shape_cast %476 : vector<1x8x128xf32> to vector<8x128xf32>
    %c33 = arith.constant 33 : index
    %c0_235 = arith.constant 0 : index
    %c0_236 = arith.constant 0 : index
    %478 = vector.load %arg1[%c33, %c0_235, %c0_236] : memref<96x8x128xf32, #tpu.memory_space<vmem>>, vector<1x8x128xf32>
    %479 = vector.shape_cast %478 : vector<1x8x128xf32> to vector<8x128xf32>
    %c34 = arith.constant 34 : index
    %c0_237 = arith.constant 0 : index
    %c0_238 = arith.constant 0 : index
    %480 = vector.load %arg1[%c34, %c0_237, %c0_238] : memref<96x8x128xf32, #tpu.memory_space<vmem>>, vector<1x8x128xf32>
    %481 = vector.shape_cast %480 : vector<1x8x128xf32> to vector<8x128xf32>
    %c35 = arith.constant 35 : index
    %c0_239 = arith.constant 0 : index
    %c0_240 = arith.constant 0 : index
    %482 = vector.load %arg1[%c35, %c0_239, %c0_240] : memref<96x8x128xf32, #tpu.memory_space<vmem>>, vector<1x8x128xf32>
    %483 = vector.shape_cast %482 : vector<1x8x128xf32> to vector<8x128xf32>
    %484 = arith.mulf %447, %479 : vector<8x128xf32>
    %485 = arith.mulf %445, %481 : vector<8x128xf32>
    %486 = arith.addf %484, %485 : vector<8x128xf32>
    %487 = arith.mulf %447, %481 : vector<8x128xf32>
    %488 = arith.mulf %445, %479 : vector<8x128xf32>
    %489 = arith.subf %487, %488 : vector<8x128xf32>
    %490 = arith.mulf %3, %449 : vector<8x128xf32>
    %491 = arith.mulf %5, %463 : vector<8x128xf32>
    %492 = arith.addf %490, %491 : vector<8x128xf32>
    %493 = arith.mulf %7, %477 : vector<8x128xf32>
    %494 = arith.addf %492, %493 : vector<8x128xf32>
    %495 = arith.mulf %3, %458 : vector<8x128xf32>
    %496 = arith.mulf %5, %472 : vector<8x128xf32>
    %497 = arith.addf %495, %496 : vector<8x128xf32>
    %498 = arith.mulf %7, %486 : vector<8x128xf32>
    %499 = arith.addf %497, %498 : vector<8x128xf32>
    %500 = arith.mulf %3, %461 : vector<8x128xf32>
    %501 = arith.mulf %5, %475 : vector<8x128xf32>
    %502 = arith.addf %500, %501 : vector<8x128xf32>
    %503 = arith.mulf %7, %489 : vector<8x128xf32>
    %504 = arith.addf %502, %503 : vector<8x128xf32>
    %505 = arith.mulf %3, %455 : vector<8x128xf32>
    %506 = arith.mulf %5, %469 : vector<8x128xf32>
    %507 = arith.addf %505, %506 : vector<8x128xf32>
    %508 = arith.mulf %7, %483 : vector<8x128xf32>
    %509 = arith.addf %507, %508 : vector<8x128xf32>
    %510 = arith.addf %509, %9 : vector<8x128xf32>
    %511 = arith.mulf %11, %449 : vector<8x128xf32>
    %512 = arith.mulf %13, %463 : vector<8x128xf32>
    %513 = arith.addf %511, %512 : vector<8x128xf32>
    %514 = arith.mulf %15, %477 : vector<8x128xf32>
    %515 = arith.addf %513, %514 : vector<8x128xf32>
    %516 = arith.mulf %11, %458 : vector<8x128xf32>
    %517 = arith.mulf %13, %472 : vector<8x128xf32>
    %518 = arith.addf %516, %517 : vector<8x128xf32>
    %519 = arith.mulf %15, %486 : vector<8x128xf32>
    %520 = arith.addf %518, %519 : vector<8x128xf32>
    %521 = arith.mulf %11, %461 : vector<8x128xf32>
    %522 = arith.mulf %13, %475 : vector<8x128xf32>
    %523 = arith.addf %521, %522 : vector<8x128xf32>
    %524 = arith.mulf %15, %489 : vector<8x128xf32>
    %525 = arith.addf %523, %524 : vector<8x128xf32>
    %526 = arith.mulf %11, %455 : vector<8x128xf32>
    %527 = arith.mulf %13, %469 : vector<8x128xf32>
    %528 = arith.addf %526, %527 : vector<8x128xf32>
    %529 = arith.mulf %15, %483 : vector<8x128xf32>
    %530 = arith.addf %528, %529 : vector<8x128xf32>
    %531 = arith.addf %530, %17 : vector<8x128xf32>
    %532 = arith.mulf %19, %449 : vector<8x128xf32>
    %533 = arith.mulf %21, %463 : vector<8x128xf32>
    %534 = arith.addf %532, %533 : vector<8x128xf32>
    %535 = arith.mulf %23, %477 : vector<8x128xf32>
    %536 = arith.addf %534, %535 : vector<8x128xf32>
    %537 = arith.mulf %19, %458 : vector<8x128xf32>
    %538 = arith.mulf %21, %472 : vector<8x128xf32>
    %539 = arith.addf %537, %538 : vector<8x128xf32>
    %540 = arith.mulf %23, %486 : vector<8x128xf32>
    %541 = arith.addf %539, %540 : vector<8x128xf32>
    %542 = arith.mulf %19, %461 : vector<8x128xf32>
    %543 = arith.mulf %21, %475 : vector<8x128xf32>
    %544 = arith.addf %542, %543 : vector<8x128xf32>
    %545 = arith.mulf %23, %489 : vector<8x128xf32>
    %546 = arith.addf %544, %545 : vector<8x128xf32>
    %547 = arith.mulf %19, %455 : vector<8x128xf32>
    %548 = arith.mulf %21, %469 : vector<8x128xf32>
    %549 = arith.addf %547, %548 : vector<8x128xf32>
    %550 = arith.mulf %23, %483 : vector<8x128xf32>
    %551 = arith.addf %549, %550 : vector<8x128xf32>
    %552 = arith.addf %551, %25 : vector<8x128xf32>
    %c32_241 = arith.constant 32 : index
    %c0_242 = arith.constant 0 : index
    %c0_243 = arith.constant 0 : index
    %553 = vector.load %arg7[%c32_241, %c0_242, %c0_243] : memref<128x8x128xf32, #tpu.memory_space<vmem>>, vector<1x8x128xf32>
    %554 = vector.shape_cast %553 : vector<1x8x128xf32> to vector<8x128xf32>
    %555 = vector.shape_cast %494 : vector<8x128xf32> to vector<1x8x128xf32>
    tpu.vector_store %arg7[%c32_241, %c0_242, %c0_243], %555 {strides = array<i32>} : memref<128x8x128xf32, #tpu.memory_space<vmem>>, vector<1x8x128xf32>,
    %c33_244 = arith.constant 33 : index
    %c0_245 = arith.constant 0 : index
    %c0_246 = arith.constant 0 : index
    %556 = vector.load %arg7[%c33_244, %c0_245, %c0_246] : memref<128x8x128xf32, #tpu.memory_space<vmem>>, vector<1x8x128xf32>
    %557 = vector.shape_cast %556 : vector<1x8x128xf32> to vector<8x128xf32>
    %558 = vector.shape_cast %499 : vector<8x128xf32> to vector<1x8x128xf32>
    tpu.vector_store %arg7[%c33_244, %c0_245, %c0_246], %558 {strides = array<i32>} : memref<128x8x128xf32, #tpu.memory_space<vmem>>, vector<1x8x128xf32>,
    %c34_247 = arith.constant 34 : index
    %c0_248 = arith.constant 0 : index
    %c0_249 = arith.constant 0 : index
    %559 = vector.load %arg7[%c34_247, %c0_248, %c0_249] : memref<128x8x128xf32, #tpu.memory_space<vmem>>, vector<1x8x128xf32>
    %560 = vector.shape_cast %559 : vector<1x8x128xf32> to vector<8x128xf32>
    %561 = vector.shape_cast %504 : vector<8x128xf32> to vector<1x8x128xf32>
    tpu.vector_store %arg7[%c34_247, %c0_248, %c0_249], %561 {strides = array<i32>} : memref<128x8x128xf32, #tpu.memory_space<vmem>>, vector<1x8x128xf32>,
    %c35_250 = arith.constant 35 : index
    %c0_251 = arith.constant 0 : index
    %c0_252 = arith.constant 0 : index
    %562 = vector.load %arg7[%c35_250, %c0_251, %c0_252] : memref<128x8x128xf32, #tpu.memory_space<vmem>>, vector<1x8x128xf32>
    %563 = vector.shape_cast %562 : vector<1x8x128xf32> to vector<8x128xf32>
    %564 = vector.shape_cast %510 : vector<8x128xf32> to vector<1x8x128xf32>
    tpu.vector_store %arg7[%c35_250, %c0_251, %c0_252], %564 {strides = array<i32>} : memref<128x8x128xf32, #tpu.memory_space<vmem>>, vector<1x8x128xf32>,
    %c36 = arith.constant 36 : index
    %c0_253 = arith.constant 0 : index
    %c0_254 = arith.constant 0 : index
    %565 = vector.load %arg7[%c36, %c0_253, %c0_254] : memref<128x8x128xf32, #tpu.memory_space<vmem>>, vector<1x8x128xf32>
    %566 = vector.shape_cast %565 : vector<1x8x128xf32> to vector<8x128xf32>
    %567 = vector.shape_cast %515 : vector<8x128xf32> to vector<1x8x128xf32>
    tpu.vector_store %arg7[%c36, %c0_253, %c0_254], %567 {strides = array<i32>} : memref<128x8x128xf32, #tpu.memory_space<vmem>>, vector<1x8x128xf32>,
    %c37 = arith.constant 37 : index
    %c0_255 = arith.constant 0 : index
    %c0_256 = arith.constant 0 : index
    %568 = vector.load %arg7[%c37, %c0_255, %c0_256] : memref<128x8x128xf32, #tpu.memory_space<vmem>>, vector<1x8x128xf32>
    %569 = vector.shape_cast %568 : vector<1x8x128xf32> to vector<8x128xf32>
    %570 = vector.shape_cast %520 : vector<8x128xf32> to vector<1x8x128xf32>
    tpu.vector_store %arg7[%c37, %c0_255, %c0_256], %570 {strides = array<i32>} : memref<128x8x128xf32, #tpu.memory_space<vmem>>, vector<1x8x128xf32>,
    %c38 = arith.constant 38 : index
    %c0_257 = arith.constant 0 : index
    %c0_258 = arith.constant 0 : index
    %571 = vector.load %arg7[%c38, %c0_257, %c0_258] : memref<128x8x128xf32, #tpu.memory_space<vmem>>, vector<1x8x128xf32>
    %572 = vector.shape_cast %571 : vector<1x8x128xf32> to vector<8x128xf32>
    %573 = vector.shape_cast %525 : vector<8x128xf32> to vector<1x8x128xf32>
    tpu.vector_store %arg7[%c38, %c0_257, %c0_258], %573 {strides = array<i32>} : memref<128x8x128xf32, #tpu.memory_space<vmem>>, vector<1x8x128xf32>,
    %c39 = arith.constant 39 : index
    %c0_259 = arith.constant 0 : index
    %c0_260 = arith.constant 0 : index
    %574 = vector.load %arg7[%c39, %c0_259, %c0_260] : memref<128x8x128xf32, #tpu.memory_space<vmem>>, vector<1x8x128xf32>
    %575 = vector.shape_cast %574 : vector<1x8x128xf32> to vector<8x128xf32>
    %576 = vector.shape_cast %531 : vector<8x128xf32> to vector<1x8x128xf32>
    tpu.vector_store %arg7[%c39, %c0_259, %c0_260], %576 {strides = array<i32>} : memref<128x8x128xf32, #tpu.memory_space<vmem>>, vector<1x8x128xf32>,
    %c40 = arith.constant 40 : index
    %c0_261 = arith.constant 0 : index
    %c0_262 = arith.constant 0 : index
    %577 = vector.load %arg7[%c40, %c0_261, %c0_262] : memref<128x8x128xf32, #tpu.memory_space<vmem>>, vector<1x8x128xf32>
    %578 = vector.shape_cast %577 : vector<1x8x128xf32> to vector<8x128xf32>
    %579 = vector.shape_cast %536 : vector<8x128xf32> to vector<1x8x128xf32>
    tpu.vector_store %arg7[%c40, %c0_261, %c0_262], %579 {strides = array<i32>} : memref<128x8x128xf32, #tpu.memory_space<vmem>>, vector<1x8x128xf32>,
    %c41 = arith.constant 41 : index
    %c0_263 = arith.constant 0 : index
    %c0_264 = arith.constant 0 : index
    %580 = vector.load %arg7[%c41, %c0_263, %c0_264] : memref<128x8x128xf32, #tpu.memory_space<vmem>>, vector<1x8x128xf32>
    %581 = vector.shape_cast %580 : vector<1x8x128xf32> to vector<8x128xf32>
    %582 = vector.shape_cast %541 : vector<8x128xf32> to vector<1x8x128xf32>
    tpu.vector_store %arg7[%c41, %c0_263, %c0_264], %582 {strides = array<i32>} : memref<128x8x128xf32, #tpu.memory_space<vmem>>, vector<1x8x128xf32>,
    %c42 = arith.constant 42 : index
    %c0_265 = arith.constant 0 : index
    %c0_266 = arith.constant 0 : index
    %583 = vector.load %arg7[%c42, %c0_265, %c0_266] : memref<128x8x128xf32, #tpu.memory_space<vmem>>, vector<1x8x128xf32>
    %584 = vector.shape_cast %583 : vector<1x8x128xf32> to vector<8x128xf32>
    %585 = vector.shape_cast %546 : vector<8x128xf32> to vector<1x8x128xf32>
    tpu.vector_store %arg7[%c42, %c0_265, %c0_266], %585 {strides = array<i32>} : memref<128x8x128xf32, #tpu.memory_space<vmem>>, vector<1x8x128xf32>,
    %c43 = arith.constant 43 : index
    %c0_267 = arith.constant 0 : index
    %c0_268 = arith.constant 0 : index
    %586 = vector.load %arg7[%c43, %c0_267, %c0_268] : memref<128x8x128xf32, #tpu.memory_space<vmem>>, vector<1x8x128xf32>
    %587 = vector.shape_cast %586 : vector<1x8x128xf32> to vector<8x128xf32>
    %588 = vector.shape_cast %552 : vector<8x128xf32> to vector<1x8x128xf32>
    tpu.vector_store %arg7[%c43, %c0_267, %c0_268], %588 {strides = array<i32>} : memref<128x8x128xf32, #tpu.memory_space<vmem>>, vector<1x8x128xf32>,
    %c44 = arith.constant 44 : index
    %c0_269 = arith.constant 0 : index
    %c0_270 = arith.constant 0 : index
    %589 = vector.load %arg7[%c44, %c0_269, %c0_270] : memref<128x8x128xf32, #tpu.memory_space<vmem>>, vector<1x8x128xf32>
    %590 = vector.shape_cast %589 : vector<1x8x128xf32> to vector<8x128xf32>
    %591 = vector.shape_cast %0 : vector<8x128xf32> to vector<1x8x128xf32>
    tpu.vector_store %arg7[%c44, %c0_269, %c0_270], %591 {strides = array<i32>} : memref<128x8x128xf32, #tpu.memory_space<vmem>>, vector<1x8x128xf32>,
    %c45 = arith.constant 45 : index
    %c0_271 = arith.constant 0 : index
    %c0_272 = arith.constant 0 : index
    %592 = vector.load %arg7[%c45, %c0_271, %c0_272] : memref<128x8x128xf32, #tpu.memory_space<vmem>>, vector<1x8x128xf32>
    %593 = vector.shape_cast %592 : vector<1x8x128xf32> to vector<8x128xf32>
    %594 = vector.shape_cast %0 : vector<8x128xf32> to vector<1x8x128xf32>
    tpu.vector_store %arg7[%c45, %c0_271, %c0_272], %594 {strides = array<i32>} : memref<128x8x128xf32, #tpu.memory_space<vmem>>, vector<1x8x128xf32>,
    %c46 = arith.constant 46 : index
    %c0_273 = arith.constant 0 : index
    %c0_274 = arith.constant 0 : index
    %595 = vector.load %arg7[%c46, %c0_273, %c0_274] : memref<128x8x128xf32, #tpu.memory_space<vmem>>, vector<1x8x128xf32>
    %596 = vector.shape_cast %595 : vector<1x8x128xf32> to vector<8x128xf32>
    %597 = vector.shape_cast %0 : vector<8x128xf32> to vector<1x8x128xf32>
    tpu.vector_store %arg7[%c46, %c0_273, %c0_274], %597 {strides = array<i32>} : memref<128x8x128xf32, #tpu.memory_space<vmem>>, vector<1x8x128xf32>,
    %c47 = arith.constant 47 : index
    %c0_275 = arith.constant 0 : index
    %c0_276 = arith.constant 0 : index
    %598 = vector.load %arg7[%c47, %c0_275, %c0_276] : memref<128x8x128xf32, #tpu.memory_space<vmem>>, vector<1x8x128xf32>
    %599 = vector.shape_cast %598 : vector<1x8x128xf32> to vector<8x128xf32>
    %600 = vector.shape_cast %1 : vector<8x128xf32> to vector<1x8x128xf32>
    tpu.vector_store %arg7[%c47, %c0_275, %c0_276], %600 {strides = array<i32>} : memref<128x8x128xf32, #tpu.memory_space<vmem>>, vector<1x8x128xf32>,
    %c28_277 = arith.constant 28 : index
    %c0_278 = arith.constant 0 : index
    %c0_279 = arith.constant 0 : index
    %601 = vector.load %arg4[%c28_277, %c0_278, %c0_279] : memref<112x8x128xf32, #tpu.memory_space<vmem>>, vector<14x8x128xf32>
    %602 = vector.shape_cast %494 : vector<8x128xf32> to vector<1x8x128xf32>
    %603 = vector.broadcast %602 : vector<1x8x128xf32> to vector<14x8x128xf32>
    %604 = arith.mulf %603, %26 : vector<14x8x128xf32>
    %605 = vector.shape_cast %499 : vector<8x128xf32> to vector<1x8x128xf32>
    %606 = vector.broadcast %605 : vector<1x8x128xf32> to vector<14x8x128xf32>
    %607 = arith.mulf %606, %27 : vector<14x8x128xf32>
    %608 = arith.addf %604, %607 : vector<14x8x128xf32>
    %609 = vector.shape_cast %504 : vector<8x128xf32> to vector<1x8x128xf32>
    %610 = vector.broadcast %609 : vector<1x8x128xf32> to vector<14x8x128xf32>
    %611 = arith.mulf %610, %28 : vector<14x8x128xf32>
    %612 = arith.addf %608, %611 : vector<14x8x128xf32>
    %613 = vector.shape_cast %510 : vector<8x128xf32> to vector<1x8x128xf32>
    %614 = vector.broadcast %613 : vector<1x8x128xf32> to vector<14x8x128xf32>
    %615 = arith.addf %612, %614 : vector<14x8x128xf32>
    %616 = arith.mulf %601, %615 : vector<14x8x128xf32>
    %617 = arith.addf %411, %616 : vector<14x8x128xf32>
    %618 = vector.shape_cast %515 : vector<8x128xf32> to vector<1x8x128xf32>
    %619 = vector.broadcast %618 : vector<1x8x128xf32> to vector<14x8x128xf32>
    %620 = arith.mulf %619, %26 : vector<14x8x128xf32>
    %621 = vector.shape_cast %520 : vector<8x128xf32> to vector<1x8x128xf32>
    %622 = vector.broadcast %621 : vector<1x8x128xf32> to vector<14x8x128xf32>
    %623 = arith.mulf %622, %27 : vector<14x8x128xf32>
    %624 = arith.addf %620, %623 : vector<14x8x128xf32>
    %625 = vector.shape_cast %525 : vector<8x128xf32> to vector<1x8x128xf32>
    %626 = vector.broadcast %625 : vector<1x8x128xf32> to vector<14x8x128xf32>
    %627 = arith.mulf %626, %28 : vector<14x8x128xf32>
    %628 = arith.addf %624, %627 : vector<14x8x128xf32>
    %629 = vector.shape_cast %531 : vector<8x128xf32> to vector<1x8x128xf32>
    %630 = vector.broadcast %629 : vector<1x8x128xf32> to vector<14x8x128xf32>
    %631 = arith.addf %628, %630 : vector<14x8x128xf32>
    %632 = arith.mulf %601, %631 : vector<14x8x128xf32>
    %633 = arith.addf %427, %632 : vector<14x8x128xf32>
    %634 = vector.shape_cast %536 : vector<8x128xf32> to vector<1x8x128xf32>
    %635 = vector.broadcast %634 : vector<1x8x128xf32> to vector<14x8x128xf32>
    %636 = arith.mulf %635, %26 : vector<14x8x128xf32>
    %637 = vector.shape_cast %541 : vector<8x128xf32> to vector<1x8x128xf32>
    %638 = vector.broadcast %637 : vector<1x8x128xf32> to vector<14x8x128xf32>
    %639 = arith.mulf %638, %27 : vector<14x8x128xf32>
    %640 = arith.addf %636, %639 : vector<14x8x128xf32>
    %641 = vector.shape_cast %546 : vector<8x128xf32> to vector<1x8x128xf32>
    %642 = vector.broadcast %641 : vector<1x8x128xf32> to vector<14x8x128xf32>
    %643 = arith.mulf %642, %28 : vector<14x8x128xf32>
    %644 = arith.addf %640, %643 : vector<14x8x128xf32>
    %645 = vector.shape_cast %552 : vector<8x128xf32> to vector<1x8x128xf32>
    %646 = vector.broadcast %645 : vector<1x8x128xf32> to vector<14x8x128xf32>
    %647 = arith.addf %644, %646 : vector<14x8x128xf32>
    %648 = arith.mulf %601, %647 : vector<14x8x128xf32>
    %649 = arith.addf %443, %648 : vector<14x8x128xf32>
    %c6_280 = arith.constant 6 : index
    %c0_281 = arith.constant 0 : index
    %c0_282 = arith.constant 0 : index
    %650 = vector.load %arg2[%c6_280, %c0_281, %c0_282] : memref<16x8x128xf32, #tpu.memory_space<vmem>>, vector<1x8x128xf32>
    %651 = vector.shape_cast %650 : vector<1x8x128xf32> to vector<8x128xf32>
    %c7_283 = arith.constant 7 : index
    %c0_284 = arith.constant 0 : index
    %c0_285 = arith.constant 0 : index
    %652 = vector.load %arg2[%c7_283, %c0_284, %c0_285] : memref<16x8x128xf32, #tpu.memory_space<vmem>>, vector<1x8x128xf32>
    %653 = vector.shape_cast %652 : vector<1x8x128xf32> to vector<8x128xf32>
    %c36_286 = arith.constant 36 : index
    %c0_287 = arith.constant 0 : index
    %c0_288 = arith.constant 0 : index
    %654 = vector.load %arg1[%c36_286, %c0_287, %c0_288] : memref<96x8x128xf32, #tpu.memory_space<vmem>>, vector<1x8x128xf32>
    %655 = vector.shape_cast %654 : vector<1x8x128xf32> to vector<8x128xf32>
    %c37_289 = arith.constant 37 : index
    %c0_290 = arith.constant 0 : index
    %c0_291 = arith.constant 0 : index
    %656 = vector.load %arg1[%c37_289, %c0_290, %c0_291] : memref<96x8x128xf32, #tpu.memory_space<vmem>>, vector<1x8x128xf32>
    %657 = vector.shape_cast %656 : vector<1x8x128xf32> to vector<8x128xf32>
    %c38_292 = arith.constant 38 : index
    %c0_293 = arith.constant 0 : index
    %c0_294 = arith.constant 0 : index
    %658 = vector.load %arg1[%c38_292, %c0_293, %c0_294] : memref<96x8x128xf32, #tpu.memory_space<vmem>>, vector<1x8x128xf32>
    %659 = vector.shape_cast %658 : vector<1x8x128xf32> to vector<8x128xf32>
    %c39_295 = arith.constant 39 : index
    %c0_296 = arith.constant 0 : index
    %c0_297 = arith.constant 0 : index
    %660 = vector.load %arg1[%c39_295, %c0_296, %c0_297] : memref<96x8x128xf32, #tpu.memory_space<vmem>>, vector<1x8x128xf32>
    %661 = vector.shape_cast %660 : vector<1x8x128xf32> to vector<8x128xf32>
    %662 = arith.mulf %653, %657 : vector<8x128xf32>
    %663 = arith.mulf %651, %659 : vector<8x128xf32>
    %664 = arith.addf %662, %663 : vector<8x128xf32>
    %665 = arith.mulf %653, %659 : vector<8x128xf32>
    %666 = arith.mulf %651, %657 : vector<8x128xf32>
    %667 = arith.subf %665, %666 : vector<8x128xf32>
    %c40_298 = arith.constant 40 : index
    %c0_299 = arith.constant 0 : index
    %c0_300 = arith.constant 0 : index
    %668 = vector.load %arg1[%c40_298, %c0_299, %c0_300] : memref<96x8x128xf32, #tpu.memory_space<vmem>>, vector<1x8x128xf32>
    %669 = vector.shape_cast %668 : vector<1x8x128xf32> to vector<8x128xf32>
    %c41_301 = arith.constant 41 : index
    %c0_302 = arith.constant 0 : index
    %c0_303 = arith.constant 0 : index
    %670 = vector.load %arg1[%c41_301, %c0_302, %c0_303] : memref<96x8x128xf32, #tpu.memory_space<vmem>>, vector<1x8x128xf32>
    %671 = vector.shape_cast %670 : vector<1x8x128xf32> to vector<8x128xf32>
    %c42_304 = arith.constant 42 : index
    %c0_305 = arith.constant 0 : index
    %c0_306 = arith.constant 0 : index
    %672 = vector.load %arg1[%c42_304, %c0_305, %c0_306] : memref<96x8x128xf32, #tpu.memory_space<vmem>>, vector<1x8x128xf32>
    %673 = vector.shape_cast %672 : vector<1x8x128xf32> to vector<8x128xf32>
    %c43_307 = arith.constant 43 : index
    %c0_308 = arith.constant 0 : index
    %c0_309 = arith.constant 0 : index
    %674 = vector.load %arg1[%c43_307, %c0_308, %c0_309] : memref<96x8x128xf32, #tpu.memory_space<vmem>>, vector<1x8x128xf32>
    %675 = vector.shape_cast %674 : vector<1x8x128xf32> to vector<8x128xf32>
    %676 = arith.mulf %653, %671 : vector<8x128xf32>
    %677 = arith.mulf %651, %673 : vector<8x128xf32>
    %678 = arith.addf %676, %677 : vector<8x128xf32>
    %679 = arith.mulf %653, %673 : vector<8x128xf32>
    %680 = arith.mulf %651, %671 : vector<8x128xf32>
    %681 = arith.subf %679, %680 : vector<8x128xf32>
    %c44_310 = arith.constant 44 : index
    %c0_311 = arith.constant 0 : index
    %c0_312 = arith.constant 0 : index
    %682 = vector.load %arg1[%c44_310, %c0_311, %c0_312] : memref<96x8x128xf32, #tpu.memory_space<vmem>>, vector<1x8x128xf32>
    %683 = vector.shape_cast %682 : vector<1x8x128xf32> to vector<8x128xf32>
    %c45_313 = arith.constant 45 : index
    %c0_314 = arith.constant 0 : index
    %c0_315 = arith.constant 0 : index
    %684 = vector.load %arg1[%c45_313, %c0_314, %c0_315] : memref<96x8x128xf32, #tpu.memory_space<vmem>>, vector<1x8x128xf32>
    %685 = vector.shape_cast %684 : vector<1x8x128xf32> to vector<8x128xf32>
    %c46_316 = arith.constant 46 : index
    %c0_317 = arith.constant 0 : index
    %c0_318 = arith.constant 0 : index
    %686 = vector.load %arg1[%c46_316, %c0_317, %c0_318] : memref<96x8x128xf32, #tpu.memory_space<vmem>>, vector<1x8x128xf32>
    %687 = vector.shape_cast %686 : vector<1x8x128xf32> to vector<8x128xf32>
    %c47_319 = arith.constant 47 : index
    %c0_320 = arith.constant 0 : index
    %c0_321 = arith.constant 0 : index
    %688 = vector.load %arg1[%c47_319, %c0_320, %c0_321] : memref<96x8x128xf32, #tpu.memory_space<vmem>>, vector<1x8x128xf32>
    %689 = vector.shape_cast %688 : vector<1x8x128xf32> to vector<8x128xf32>
    %690 = arith.mulf %653, %685 : vector<8x128xf32>
    %691 = arith.mulf %651, %687 : vector<8x128xf32>
    %692 = arith.addf %690, %691 : vector<8x128xf32>
    %693 = arith.mulf %653, %687 : vector<8x128xf32>
    %694 = arith.mulf %651, %685 : vector<8x128xf32>
    %695 = arith.subf %693, %694 : vector<8x128xf32>
    %696 = arith.mulf %3, %655 : vector<8x128xf32>
    %697 = arith.mulf %5, %669 : vector<8x128xf32>
    %698 = arith.addf %696, %697 : vector<8x128xf32>
    %699 = arith.mulf %7, %683 : vector<8x128xf32>
    %700 = arith.addf %698, %699 : vector<8x128xf32>
    %701 = arith.mulf %3, %664 : vector<8x128xf32>
    %702 = arith.mulf %5, %678 : vector<8x128xf32>
    %703 = arith.addf %701, %702 : vector<8x128xf32>
    %704 = arith.mulf %7, %692 : vector<8x128xf32>
    %705 = arith.addf %703, %704 : vector<8x128xf32>
    %706 = arith.mulf %3, %667 : vector<8x128xf32>
    %707 = arith.mulf %5, %681 : vector<8x128xf32>
    %708 = arith.addf %706, %707 : vector<8x128xf32>
    %709 = arith.mulf %7, %695 : vector<8x128xf32>
    %710 = arith.addf %708, %709 : vector<8x128xf32>
    %711 = arith.mulf %3, %661 : vector<8x128xf32>
    %712 = arith.mulf %5, %675 : vector<8x128xf32>
    %713 = arith.addf %711, %712 : vector<8x128xf32>
    %714 = arith.mulf %7, %689 : vector<8x128xf32>
    %715 = arith.addf %713, %714 : vector<8x128xf32>
    %716 = arith.addf %715, %9 : vector<8x128xf32>
    %717 = arith.mulf %11, %655 : vector<8x128xf32>
    %718 = arith.mulf %13, %669 : vector<8x128xf32>
    %719 = arith.addf %717, %718 : vector<8x128xf32>
    %720 = arith.mulf %15, %683 : vector<8x128xf32>
    %721 = arith.addf %719, %720 : vector<8x128xf32>
    %722 = arith.mulf %11, %664 : vector<8x128xf32>
    %723 = arith.mulf %13, %678 : vector<8x128xf32>
    %724 = arith.addf %722, %723 : vector<8x128xf32>
    %725 = arith.mulf %15, %692 : vector<8x128xf32>
    %726 = arith.addf %724, %725 : vector<8x128xf32>
    %727 = arith.mulf %11, %667 : vector<8x128xf32>
    %728 = arith.mulf %13, %681 : vector<8x128xf32>
    %729 = arith.addf %727, %728 : vector<8x128xf32>
    %730 = arith.mulf %15, %695 : vector<8x128xf32>
    %731 = arith.addf %729, %730 : vector<8x128xf32>
    %732 = arith.mulf %11, %661 : vector<8x128xf32>
    %733 = arith.mulf %13, %675 : vector<8x128xf32>
    %734 = arith.addf %732, %733 : vector<8x128xf32>
    %735 = arith.mulf %15, %689 : vector<8x128xf32>
    %736 = arith.addf %734, %735 : vector<8x128xf32>
    %737 = arith.addf %736, %17 : vector<8x128xf32>
    %738 = arith.mulf %19, %655 : vector<8x128xf32>
    %739 = arith.mulf %21, %669 : vector<8x128xf32>
    %740 = arith.addf %738, %739 : vector<8x128xf32>
    %741 = arith.mulf %23, %683 : vector<8x128xf32>
    %742 = arith.addf %740, %741 : vector<8x128xf32>
    %743 = arith.mulf %19, %664 : vector<8x128xf32>
    %744 = arith.mulf %21, %678 : vector<8x128xf32>
    %745 = arith.addf %743, %744 : vector<8x128xf32>
    %746 = arith.mulf %23, %692 : vector<8x128xf32>
    %747 = arith.addf %745, %746 : vector<8x128xf32>
    %748 = arith.mulf %19, %667 : vector<8x128xf32>
    %749 = arith.mulf %21, %681 : vector<8x128xf32>
    %750 = arith.addf %748, %749 : vector<8x128xf32>
    %751 = arith.mulf %23, %695 : vector<8x128xf32>
    %752 = arith.addf %750, %751 : vector<8x128xf32>
    %753 = arith.mulf %19, %661 : vector<8x128xf32>
    %754 = arith.mulf %21, %675 : vector<8x128xf32>
    %755 = arith.addf %753, %754 : vector<8x128xf32>
    %756 = arith.mulf %23, %689 : vector<8x128xf32>
    %757 = arith.addf %755, %756 : vector<8x128xf32>
    %758 = arith.addf %757, %25 : vector<8x128xf32>
    %c48 = arith.constant 48 : index
    %c0_322 = arith.constant 0 : index
    %c0_323 = arith.constant 0 : index
    %759 = vector.load %arg7[%c48, %c0_322, %c0_323] : memref<128x8x128xf32, #tpu.memory_space<vmem>>, vector<1x8x128xf32>
    %760 = vector.shape_cast %759 : vector<1x8x128xf32> to vector<8x128xf32>
    %761 = vector.shape_cast %700 : vector<8x128xf32> to vector<1x8x128xf32>
    tpu.vector_store %arg7[%c48, %c0_322, %c0_323], %761 {strides = array<i32>} : memref<128x8x128xf32, #tpu.memory_space<vmem>>, vector<1x8x128xf32>,
    %c49 = arith.constant 49 : index
    %c0_324 = arith.constant 0 : index
    %c0_325 = arith.constant 0 : index
    %762 = vector.load %arg7[%c49, %c0_324, %c0_325] : memref<128x8x128xf32, #tpu.memory_space<vmem>>, vector<1x8x128xf32>
    %763 = vector.shape_cast %762 : vector<1x8x128xf32> to vector<8x128xf32>
    %764 = vector.shape_cast %705 : vector<8x128xf32> to vector<1x8x128xf32>
    tpu.vector_store %arg7[%c49, %c0_324, %c0_325], %764 {strides = array<i32>} : memref<128x8x128xf32, #tpu.memory_space<vmem>>, vector<1x8x128xf32>,
    %c50 = arith.constant 50 : index
    %c0_326 = arith.constant 0 : index
    %c0_327 = arith.constant 0 : index
    %765 = vector.load %arg7[%c50, %c0_326, %c0_327] : memref<128x8x128xf32, #tpu.memory_space<vmem>>, vector<1x8x128xf32>
    %766 = vector.shape_cast %765 : vector<1x8x128xf32> to vector<8x128xf32>
    %767 = vector.shape_cast %710 : vector<8x128xf32> to vector<1x8x128xf32>
    tpu.vector_store %arg7[%c50, %c0_326, %c0_327], %767 {strides = array<i32>} : memref<128x8x128xf32, #tpu.memory_space<vmem>>, vector<1x8x128xf32>,
    %c51 = arith.constant 51 : index
    %c0_328 = arith.constant 0 : index
    %c0_329 = arith.constant 0 : index
    %768 = vector.load %arg7[%c51, %c0_328, %c0_329] : memref<128x8x128xf32, #tpu.memory_space<vmem>>, vector<1x8x128xf32>
    %769 = vector.shape_cast %768 : vector<1x8x128xf32> to vector<8x128xf32>
    %770 = vector.shape_cast %716 : vector<8x128xf32> to vector<1x8x128xf32>
    tpu.vector_store %arg7[%c51, %c0_328, %c0_329], %770 {strides = array<i32>} : memref<128x8x128xf32, #tpu.memory_space<vmem>>, vector<1x8x128xf32>,
    %c52 = arith.constant 52 : index
    %c0_330 = arith.constant 0 : index
    %c0_331 = arith.constant 0 : index
    %771 = vector.load %arg7[%c52, %c0_330, %c0_331] : memref<128x8x128xf32, #tpu.memory_space<vmem>>, vector<1x8x128xf32>
    %772 = vector.shape_cast %771 : vector<1x8x128xf32> to vector<8x128xf32>
    %773 = vector.shape_cast %721 : vector<8x128xf32> to vector<1x8x128xf32>
    tpu.vector_store %arg7[%c52, %c0_330, %c0_331], %773 {strides = array<i32>} : memref<128x8x128xf32, #tpu.memory_space<vmem>>, vector<1x8x128xf32>,
    %c53 = arith.constant 53 : index
    %c0_332 = arith.constant 0 : index
    %c0_333 = arith.constant 0 : index
    %774 = vector.load %arg7[%c53, %c0_332, %c0_333] : memref<128x8x128xf32, #tpu.memory_space<vmem>>, vector<1x8x128xf32>
    %775 = vector.shape_cast %774 : vector<1x8x128xf32> to vector<8x128xf32>
    %776 = vector.shape_cast %726 : vector<8x128xf32> to vector<1x8x128xf32>
    tpu.vector_store %arg7[%c53, %c0_332, %c0_333], %776 {strides = array<i32>} : memref<128x8x128xf32, #tpu.memory_space<vmem>>, vector<1x8x128xf32>,
    %c54 = arith.constant 54 : index
    %c0_334 = arith.constant 0 : index
    %c0_335 = arith.constant 0 : index
    %777 = vector.load %arg7[%c54, %c0_334, %c0_335] : memref<128x8x128xf32, #tpu.memory_space<vmem>>, vector<1x8x128xf32>
    %778 = vector.shape_cast %777 : vector<1x8x128xf32> to vector<8x128xf32>
    %779 = vector.shape_cast %731 : vector<8x128xf32> to vector<1x8x128xf32>
    tpu.vector_store %arg7[%c54, %c0_334, %c0_335], %779 {strides = array<i32>} : memref<128x8x128xf32, #tpu.memory_space<vmem>>, vector<1x8x128xf32>,
    %c55 = arith.constant 55 : index
    %c0_336 = arith.constant 0 : index
    %c0_337 = arith.constant 0 : index
    %780 = vector.load %arg7[%c55, %c0_336, %c0_337] : memref<128x8x128xf32, #tpu.memory_space<vmem>>, vector<1x8x128xf32>
    %781 = vector.shape_cast %780 : vector<1x8x128xf32> to vector<8x128xf32>
    %782 = vector.shape_cast %737 : vector<8x128xf32> to vector<1x8x128xf32>
    tpu.vector_store %arg7[%c55, %c0_336, %c0_337], %782 {strides = array<i32>} : memref<128x8x128xf32, #tpu.memory_space<vmem>>, vector<1x8x128xf32>,
    %c56 = arith.constant 56 : index
    %c0_338 = arith.constant 0 : index
    %c0_339 = arith.constant 0 : index
    %783 = vector.load %arg7[%c56, %c0_338, %c0_339] : memref<128x8x128xf32, #tpu.memory_space<vmem>>, vector<1x8x128xf32>
    %784 = vector.shape_cast %783 : vector<1x8x128xf32> to vector<8x128xf32>
    %785 = vector.shape_cast %742 : vector<8x128xf32> to vector<1x8x128xf32>
    tpu.vector_store %arg7[%c56, %c0_338, %c0_339], %785 {strides = array<i32>} : memref<128x8x128xf32, #tpu.memory_space<vmem>>, vector<1x8x128xf32>,
    %c57 = arith.constant 57 : index
    %c0_340 = arith.constant 0 : index
    %c0_341 = arith.constant 0 : index
    %786 = vector.load %arg7[%c57, %c0_340, %c0_341] : memref<128x8x128xf32, #tpu.memory_space<vmem>>, vector<1x8x128xf32>
    %787 = vector.shape_cast %786 : vector<1x8x128xf32> to vector<8x128xf32>
    %788 = vector.shape_cast %747 : vector<8x128xf32> to vector<1x8x128xf32>
    tpu.vector_store %arg7[%c57, %c0_340, %c0_341], %788 {strides = array<i32>} : memref<128x8x128xf32, #tpu.memory_space<vmem>>, vector<1x8x128xf32>,
    %c58 = arith.constant 58 : index
    %c0_342 = arith.constant 0 : index
    %c0_343 = arith.constant 0 : index
    %789 = vector.load %arg7[%c58, %c0_342, %c0_343] : memref<128x8x128xf32, #tpu.memory_space<vmem>>, vector<1x8x128xf32>
    %790 = vector.shape_cast %789 : vector<1x8x128xf32> to vector<8x128xf32>
    %791 = vector.shape_cast %752 : vector<8x128xf32> to vector<1x8x128xf32>
    tpu.vector_store %arg7[%c58, %c0_342, %c0_343], %791 {strides = array<i32>} : memref<128x8x128xf32, #tpu.memory_space<vmem>>, vector<1x8x128xf32>,
    %c59 = arith.constant 59 : index
    %c0_344 = arith.constant 0 : index
    %c0_345 = arith.constant 0 : index
    %792 = vector.load %arg7[%c59, %c0_344, %c0_345] : memref<128x8x128xf32, #tpu.memory_space<vmem>>, vector<1x8x128xf32>
    %793 = vector.shape_cast %792 : vector<1x8x128xf32> to vector<8x128xf32>
    %794 = vector.shape_cast %758 : vector<8x128xf32> to vector<1x8x128xf32>
    tpu.vector_store %arg7[%c59, %c0_344, %c0_345], %794 {strides = array<i32>} : memref<128x8x128xf32, #tpu.memory_space<vmem>>, vector<1x8x128xf32>,
    %c60 = arith.constant 60 : index
    %c0_346 = arith.constant 0 : index
    %c0_347 = arith.constant 0 : index
    %795 = vector.load %arg7[%c60, %c0_346, %c0_347] : memref<128x8x128xf32, #tpu.memory_space<vmem>>, vector<1x8x128xf32>
    %796 = vector.shape_cast %795 : vector<1x8x128xf32> to vector<8x128xf32>
    %797 = vector.shape_cast %0 : vector<8x128xf32> to vector<1x8x128xf32>
    tpu.vector_store %arg7[%c60, %c0_346, %c0_347], %797 {strides = array<i32>} : memref<128x8x128xf32, #tpu.memory_space<vmem>>, vector<1x8x128xf32>,
    %c61 = arith.constant 61 : index
    %c0_348 = arith.constant 0 : index
    %c0_349 = arith.constant 0 : index
    %798 = vector.load %arg7[%c61, %c0_348, %c0_349] : memref<128x8x128xf32, #tpu.memory_space<vmem>>, vector<1x8x128xf32>
    %799 = vector.shape_cast %798 : vector<1x8x128xf32> to vector<8x128xf32>
    %800 = vector.shape_cast %0 : vector<8x128xf32> to vector<1x8x128xf32>
    tpu.vector_store %arg7[%c61, %c0_348, %c0_349], %800 {strides = array<i32>} : memref<128x8x128xf32, #tpu.memory_space<vmem>>, vector<1x8x128xf32>,
    %c62 = arith.constant 62 : index
    %c0_350 = arith.constant 0 : index
    %c0_351 = arith.constant 0 : index
    %801 = vector.load %arg7[%c62, %c0_350, %c0_351] : memref<128x8x128xf32, #tpu.memory_space<vmem>>, vector<1x8x128xf32>
    %802 = vector.shape_cast %801 : vector<1x8x128xf32> to vector<8x128xf32>
    %803 = vector.shape_cast %0 : vector<8x128xf32> to vector<1x8x128xf32>
    tpu.vector_store %arg7[%c62, %c0_350, %c0_351], %803 {strides = array<i32>} : memref<128x8x128xf32, #tpu.memory_space<vmem>>, vector<1x8x128xf32>,
    %c63 = arith.constant 63 : index
    %c0_352 = arith.constant 0 : index
    %c0_353 = arith.constant 0 : index
    %804 = vector.load %arg7[%c63, %c0_352, %c0_353] : memref<128x8x128xf32, #tpu.memory_space<vmem>>, vector<1x8x128xf32>
    %805 = vector.shape_cast %804 : vector<1x8x128xf32> to vector<8x128xf32>
    %806 = vector.shape_cast %1 : vector<8x128xf32> to vector<1x8x128xf32>
    tpu.vector_store %arg7[%c63, %c0_352, %c0_353], %806 {strides = array<i32>} : memref<128x8x128xf32, #tpu.memory_space<vmem>>, vector<1x8x128xf32>,
    %c42_354 = arith.constant 42 : index
    %c0_355 = arith.constant 0 : index
    %c0_356 = arith.constant 0 : index
    %807 = vector.load %arg4[%c42_354, %c0_355, %c0_356] : memref<112x8x128xf32, #tpu.memory_space<vmem>>, vector<14x8x128xf32>
    %808 = vector.shape_cast %700 : vector<8x128xf32> to vector<1x8x128xf32>
    %809 = vector.broadcast %808 : vector<1x8x128xf32> to vector<14x8x128xf32>
    %810 = arith.mulf %809, %26 : vector<14x8x128xf32>
    %811 = vector.shape_cast %705 : vector<8x128xf32> to vector<1x8x128xf32>
    %812 = vector.broadcast %811 : vector<1x8x128xf32> to vector<14x8x128xf32>
    %813 = arith.mulf %812, %27 : vector<14x8x128xf32>
    %814 = arith.addf %810, %813 : vector<14x8x128xf32>
    %815 = vector.shape_cast %710 : vector<8x128xf32> to vector<1x8x128xf32>
    %816 = vector.broadcast %815 : vector<1x8x128xf32> to vector<14x8x128xf32>
    %817 = arith.mulf %816, %28 : vector<14x8x128xf32>
    %818 = arith.addf %814, %817 : vector<14x8x128xf32>
    %819 = vector.shape_cast %716 : vector<8x128xf32> to vector<1x8x128xf32>
    %820 = vector.broadcast %819 : vector<1x8x128xf32> to vector<14x8x128xf32>
    %821 = arith.addf %818, %820 : vector<14x8x128xf32>
    %822 = arith.mulf %807, %821 : vector<14x8x128xf32>
    %823 = arith.addf %617, %822 : vector<14x8x128xf32>
    %824 = vector.shape_cast %721 : vector<8x128xf32> to vector<1x8x128xf32>
    %825 = vector.broadcast %824 : vector<1x8x128xf32> to vector<14x8x128xf32>
    %826 = arith.mulf %825, %26 : vector<14x8x128xf32>
    %827 = vector.shape_cast %726 : vector<8x128xf32> to vector<1x8x128xf32>
    %828 = vector.broadcast %827 : vector<1x8x128xf32> to vector<14x8x128xf32>
    %829 = arith.mulf %828, %27 : vector<14x8x128xf32>
    %830 = arith.addf %826, %829 : vector<14x8x128xf32>
    %831 = vector.shape_cast %731 : vector<8x128xf32> to vector<1x8x128xf32>
    %832 = vector.broadcast %831 : vector<1x8x128xf32> to vector<14x8x128xf32>
    %833 = arith.mulf %832, %28 : vector<14x8x128xf32>
    %834 = arith.addf %830, %833 : vector<14x8x128xf32>
    %835 = vector.shape_cast %737 : vector<8x128xf32> to vector<1x8x128xf32>
    %836 = vector.broadcast %835 : vector<1x8x128xf32> to vector<14x8x128xf32>
    %837 = arith.addf %834, %836 : vector<14x8x128xf32>
    %838 = arith.mulf %807, %837 : vector<14x8x128xf32>
    %839 = arith.addf %633, %838 : vector<14x8x128xf32>
    %840 = vector.shape_cast %742 : vector<8x128xf32> to vector<1x8x128xf32>
    %841 = vector.broadcast %840 : vector<1x8x128xf32> to vector<14x8x128xf32>
    %842 = arith.mulf %841, %26 : vector<14x8x128xf32>
    %843 = vector.shape_cast %747 : vector<8x128xf32> to vector<1x8x128xf32>
    %844 = vector.broadcast %843 : vector<1x8x128xf32> to vector<14x8x128xf32>
    %845 = arith.mulf %844, %27 : vector<14x8x128xf32>
    %846 = arith.addf %842, %845 : vector<14x8x128xf32>
    %847 = vector.shape_cast %752 : vector<8x128xf32> to vector<1x8x128xf32>
    %848 = vector.broadcast %847 : vector<1x8x128xf32> to vector<14x8x128xf32>
    %849 = arith.mulf %848, %28 : vector<14x8x128xf32>
    %850 = arith.addf %846, %849 : vector<14x8x128xf32>
    %851 = vector.shape_cast %758 : vector<8x128xf32> to vector<1x8x128xf32>
    %852 = vector.broadcast %851 : vector<1x8x128xf32> to vector<14x8x128xf32>
    %853 = arith.addf %850, %852 : vector<14x8x128xf32>
    %854 = arith.mulf %807, %853 : vector<14x8x128xf32>
    %855 = arith.addf %649, %854 : vector<14x8x128xf32>
    %c8_357 = arith.constant 8 : index
    %c0_358 = arith.constant 0 : index
    %c0_359 = arith.constant 0 : index
    %856 = vector.load %arg2[%c8_357, %c0_358, %c0_359] : memref<16x8x128xf32, #tpu.memory_space<vmem>>, vector<1x8x128xf32>
    %857 = vector.shape_cast %856 : vector<1x8x128xf32> to vector<8x128xf32>
    %c9_360 = arith.constant 9 : index
    %c0_361 = arith.constant 0 : index
    %c0_362 = arith.constant 0 : index
    %858 = vector.load %arg2[%c9_360, %c0_361, %c0_362] : memref<16x8x128xf32, #tpu.memory_space<vmem>>, vector<1x8x128xf32>
    %859 = vector.shape_cast %858 : vector<1x8x128xf32> to vector<8x128xf32>
    %c48_363 = arith.constant 48 : index
    %c0_364 = arith.constant 0 : index
    %c0_365 = arith.constant 0 : index
    %860 = vector.load %arg1[%c48_363, %c0_364, %c0_365] : memref<96x8x128xf32, #tpu.memory_space<vmem>>, vector<1x8x128xf32>
    %861 = vector.shape_cast %860 : vector<1x8x128xf32> to vector<8x128xf32>
    %c49_366 = arith.constant 49 : index
    %c0_367 = arith.constant 0 : index
    %c0_368 = arith.constant 0 : index
    %862 = vector.load %arg1[%c49_366, %c0_367, %c0_368] : memref<96x8x128xf32, #tpu.memory_space<vmem>>, vector<1x8x128xf32>
    %863 = vector.shape_cast %862 : vector<1x8x128xf32> to vector<8x128xf32>
    %c50_369 = arith.constant 50 : index
    %c0_370 = arith.constant 0 : index
    %c0_371 = arith.constant 0 : index
    %864 = vector.load %arg1[%c50_369, %c0_370, %c0_371] : memref<96x8x128xf32, #tpu.memory_space<vmem>>, vector<1x8x128xf32>
    %865 = vector.shape_cast %864 : vector<1x8x128xf32> to vector<8x128xf32>
    %c51_372 = arith.constant 51 : index
    %c0_373 = arith.constant 0 : index
    %c0_374 = arith.constant 0 : index
    %866 = vector.load %arg1[%c51_372, %c0_373, %c0_374] : memref<96x8x128xf32, #tpu.memory_space<vmem>>, vector<1x8x128xf32>
    %867 = vector.shape_cast %866 : vector<1x8x128xf32> to vector<8x128xf32>
    %868 = arith.mulf %859, %863 : vector<8x128xf32>
    %869 = arith.mulf %857, %865 : vector<8x128xf32>
    %870 = arith.addf %868, %869 : vector<8x128xf32>
    %871 = arith.mulf %859, %865 : vector<8x128xf32>
    %872 = arith.mulf %857, %863 : vector<8x128xf32>
    %873 = arith.subf %871, %872 : vector<8x128xf32>
    %c52_375 = arith.constant 52 : index
    %c0_376 = arith.constant 0 : index
    %c0_377 = arith.constant 0 : index
    %874 = vector.load %arg1[%c52_375, %c0_376, %c0_377] : memref<96x8x128xf32, #tpu.memory_space<vmem>>, vector<1x8x128xf32>
    %875 = vector.shape_cast %874 : vector<1x8x128xf32> to vector<8x128xf32>
    %c53_378 = arith.constant 53 : index
    %c0_379 = arith.constant 0 : index
    %c0_380 = arith.constant 0 : index
    %876 = vector.load %arg1[%c53_378, %c0_379, %c0_380] : memref<96x8x128xf32, #tpu.memory_space<vmem>>, vector<1x8x128xf32>
    %877 = vector.shape_cast %876 : vector<1x8x128xf32> to vector<8x128xf32>
    %c54_381 = arith.constant 54 : index
    %c0_382 = arith.constant 0 : index
    %c0_383 = arith.constant 0 : index
    %878 = vector.load %arg1[%c54_381, %c0_382, %c0_383] : memref<96x8x128xf32, #tpu.memory_space<vmem>>, vector<1x8x128xf32>
    %879 = vector.shape_cast %878 : vector<1x8x128xf32> to vector<8x128xf32>
    %c55_384 = arith.constant 55 : index
    %c0_385 = arith.constant 0 : index
    %c0_386 = arith.constant 0 : index
    %880 = vector.load %arg1[%c55_384, %c0_385, %c0_386] : memref<96x8x128xf32, #tpu.memory_space<vmem>>, vector<1x8x128xf32>
    %881 = vector.shape_cast %880 : vector<1x8x128xf32> to vector<8x128xf32>
    %882 = arith.mulf %859, %877 : vector<8x128xf32>
    %883 = arith.mulf %857, %879 : vector<8x128xf32>
    %884 = arith.addf %882, %883 : vector<8x128xf32>
    %885 = arith.mulf %859, %879 : vector<8x128xf32>
    %886 = arith.mulf %857, %877 : vector<8x128xf32>
    %887 = arith.subf %885, %886 : vector<8x128xf32>
    %c56_387 = arith.constant 56 : index
    %c0_388 = arith.constant 0 : index
    %c0_389 = arith.constant 0 : index
    %888 = vector.load %arg1[%c56_387, %c0_388, %c0_389] : memref<96x8x128xf32, #tpu.memory_space<vmem>>, vector<1x8x128xf32>
    %889 = vector.shape_cast %888 : vector<1x8x128xf32> to vector<8x128xf32>
    %c57_390 = arith.constant 57 : index
    %c0_391 = arith.constant 0 : index
    %c0_392 = arith.constant 0 : index
    %890 = vector.load %arg1[%c57_390, %c0_391, %c0_392] : memref<96x8x128xf32, #tpu.memory_space<vmem>>, vector<1x8x128xf32>
    %891 = vector.shape_cast %890 : vector<1x8x128xf32> to vector<8x128xf32>
    %c58_393 = arith.constant 58 : index
    %c0_394 = arith.constant 0 : index
    %c0_395 = arith.constant 0 : index
    %892 = vector.load %arg1[%c58_393, %c0_394, %c0_395] : memref<96x8x128xf32, #tpu.memory_space<vmem>>, vector<1x8x128xf32>
    %893 = vector.shape_cast %892 : vector<1x8x128xf32> to vector<8x128xf32>
    %c59_396 = arith.constant 59 : index
    %c0_397 = arith.constant 0 : index
    %c0_398 = arith.constant 0 : index
    %894 = vector.load %arg1[%c59_396, %c0_397, %c0_398] : memref<96x8x128xf32, #tpu.memory_space<vmem>>, vector<1x8x128xf32>
    %895 = vector.shape_cast %894 : vector<1x8x128xf32> to vector<8x128xf32>
    %896 = arith.mulf %859, %891 : vector<8x128xf32>
    %897 = arith.mulf %857, %893 : vector<8x128xf32>
    %898 = arith.addf %896, %897 : vector<8x128xf32>
    %899 = arith.mulf %859, %893 : vector<8x128xf32>
    %900 = arith.mulf %857, %891 : vector<8x128xf32>
    %901 = arith.subf %899, %900 : vector<8x128xf32>
    %902 = arith.mulf %3, %861 : vector<8x128xf32>
    %903 = arith.mulf %5, %875 : vector<8x128xf32>
    %904 = arith.addf %902, %903 : vector<8x128xf32>
    %905 = arith.mulf %7, %889 : vector<8x128xf32>
    %906 = arith.addf %904, %905 : vector<8x128xf32>
    %907 = arith.mulf %3, %870 : vector<8x128xf32>
    %908 = arith.mulf %5, %884 : vector<8x128xf32>
    %909 = arith.addf %907, %908 : vector<8x128xf32>
    %910 = arith.mulf %7, %898 : vector<8x128xf32>
    %911 = arith.addf %909, %910 : vector<8x128xf32>
    %912 = arith.mulf %3, %873 : vector<8x128xf32>
    %913 = arith.mulf %5, %887 : vector<8x128xf32>
    %914 = arith.addf %912, %913 : vector<8x128xf32>
    %915 = arith.mulf %7, %901 : vector<8x128xf32>
    %916 = arith.addf %914, %915 : vector<8x128xf32>
    %917 = arith.mulf %3, %867 : vector<8x128xf32>
    %918 = arith.mulf %5, %881 : vector<8x128xf32>
    %919 = arith.addf %917, %918 : vector<8x128xf32>
    %920 = arith.mulf %7, %895 : vector<8x128xf32>
    %921 = arith.addf %919, %920 : vector<8x128xf32>
    %922 = arith.addf %921, %9 : vector<8x128xf32>
    %923 = arith.mulf %11, %861 : vector<8x128xf32>
    %924 = arith.mulf %13, %875 : vector<8x128xf32>
    %925 = arith.addf %923, %924 : vector<8x128xf32>
    %926 = arith.mulf %15, %889 : vector<8x128xf32>
    %927 = arith.addf %925, %926 : vector<8x128xf32>
    %928 = arith.mulf %11, %870 : vector<8x128xf32>
    %929 = arith.mulf %13, %884 : vector<8x128xf32>
    %930 = arith.addf %928, %929 : vector<8x128xf32>
    %931 = arith.mulf %15, %898 : vector<8x128xf32>
    %932 = arith.addf %930, %931 : vector<8x128xf32>
    %933 = arith.mulf %11, %873 : vector<8x128xf32>
    %934 = arith.mulf %13, %887 : vector<8x128xf32>
    %935 = arith.addf %933, %934 : vector<8x128xf32>
    %936 = arith.mulf %15, %901 : vector<8x128xf32>
    %937 = arith.addf %935, %936 : vector<8x128xf32>
    %938 = arith.mulf %11, %867 : vector<8x128xf32>
    %939 = arith.mulf %13, %881 : vector<8x128xf32>
    %940 = arith.addf %938, %939 : vector<8x128xf32>
    %941 = arith.mulf %15, %895 : vector<8x128xf32>
    %942 = arith.addf %940, %941 : vector<8x128xf32>
    %943 = arith.addf %942, %17 : vector<8x128xf32>
    %944 = arith.mulf %19, %861 : vector<8x128xf32>
    %945 = arith.mulf %21, %875 : vector<8x128xf32>
    %946 = arith.addf %944, %945 : vector<8x128xf32>
    %947 = arith.mulf %23, %889 : vector<8x128xf32>
    %948 = arith.addf %946, %947 : vector<8x128xf32>
    %949 = arith.mulf %19, %870 : vector<8x128xf32>
    %950 = arith.mulf %21, %884 : vector<8x128xf32>
    %951 = arith.addf %949, %950 : vector<8x128xf32>
    %952 = arith.mulf %23, %898 : vector<8x128xf32>
    %953 = arith.addf %951, %952 : vector<8x128xf32>
    %954 = arith.mulf %19, %873 : vector<8x128xf32>
    %955 = arith.mulf %21, %887 : vector<8x128xf32>
    %956 = arith.addf %954, %955 : vector<8x128xf32>
    %957 = arith.mulf %23, %901 : vector<8x128xf32>
    %958 = arith.addf %956, %957 : vector<8x128xf32>
    %959 = arith.mulf %19, %867 : vector<8x128xf32>
    %960 = arith.mulf %21, %881 : vector<8x128xf32>
    %961 = arith.addf %959, %960 : vector<8x128xf32>
    %962 = arith.mulf %23, %895 : vector<8x128xf32>
    %963 = arith.addf %961, %962 : vector<8x128xf32>
    %964 = arith.addf %963, %25 : vector<8x128xf32>
    %c64 = arith.constant 64 : index
    %c0_399 = arith.constant 0 : index
    %c0_400 = arith.constant 0 : index
    %965 = vector.load %arg7[%c64, %c0_399, %c0_400] : memref<128x8x128xf32, #tpu.memory_space<vmem>>, vector<1x8x128xf32>
    %966 = vector.shape_cast %965 : vector<1x8x128xf32> to vector<8x128xf32>
    %967 = vector.shape_cast %906 : vector<8x128xf32> to vector<1x8x128xf32>
    tpu.vector_store %arg7[%c64, %c0_399, %c0_400], %967 {strides = array<i32>} : memref<128x8x128xf32, #tpu.memory_space<vmem>>, vector<1x8x128xf32>,
    %c65 = arith.constant 65 : index
    %c0_401 = arith.constant 0 : index
    %c0_402 = arith.constant 0 : index
    %968 = vector.load %arg7[%c65, %c0_401, %c0_402] : memref<128x8x128xf32, #tpu.memory_space<vmem>>, vector<1x8x128xf32>
    %969 = vector.shape_cast %968 : vector<1x8x128xf32> to vector<8x128xf32>
    %970 = vector.shape_cast %911 : vector<8x128xf32> to vector<1x8x128xf32>
    tpu.vector_store %arg7[%c65, %c0_401, %c0_402], %970 {strides = array<i32>} : memref<128x8x128xf32, #tpu.memory_space<vmem>>, vector<1x8x128xf32>,
    %c66 = arith.constant 66 : index
    %c0_403 = arith.constant 0 : index
    %c0_404 = arith.constant 0 : index
    %971 = vector.load %arg7[%c66, %c0_403, %c0_404] : memref<128x8x128xf32, #tpu.memory_space<vmem>>, vector<1x8x128xf32>
    %972 = vector.shape_cast %971 : vector<1x8x128xf32> to vector<8x128xf32>
    %973 = vector.shape_cast %916 : vector<8x128xf32> to vector<1x8x128xf32>
    tpu.vector_store %arg7[%c66, %c0_403, %c0_404], %973 {strides = array<i32>} : memref<128x8x128xf32, #tpu.memory_space<vmem>>, vector<1x8x128xf32>,
    %c67 = arith.constant 67 : index
    %c0_405 = arith.constant 0 : index
    %c0_406 = arith.constant 0 : index
    %974 = vector.load %arg7[%c67, %c0_405, %c0_406] : memref<128x8x128xf32, #tpu.memory_space<vmem>>, vector<1x8x128xf32>
    %975 = vector.shape_cast %974 : vector<1x8x128xf32> to vector<8x128xf32>
    %976 = vector.shape_cast %922 : vector<8x128xf32> to vector<1x8x128xf32>
    tpu.vector_store %arg7[%c67, %c0_405, %c0_406], %976 {strides = array<i32>} : memref<128x8x128xf32, #tpu.memory_space<vmem>>, vector<1x8x128xf32>,
    %c68 = arith.constant 68 : index
    %c0_407 = arith.constant 0 : index
    %c0_408 = arith.constant 0 : index
    %977 = vector.load %arg7[%c68, %c0_407, %c0_408] : memref<128x8x128xf32, #tpu.memory_space<vmem>>, vector<1x8x128xf32>
    %978 = vector.shape_cast %977 : vector<1x8x128xf32> to vector<8x128xf32>
    %979 = vector.shape_cast %927 : vector<8x128xf32> to vector<1x8x128xf32>
    tpu.vector_store %arg7[%c68, %c0_407, %c0_408], %979 {strides = array<i32>} : memref<128x8x128xf32, #tpu.memory_space<vmem>>, vector<1x8x128xf32>,
    %c69 = arith.constant 69 : index
    %c0_409 = arith.constant 0 : index
    %c0_410 = arith.constant 0 : index
    %980 = vector.load %arg7[%c69, %c0_409, %c0_410] : memref<128x8x128xf32, #tpu.memory_space<vmem>>, vector<1x8x128xf32>
    %981 = vector.shape_cast %980 : vector<1x8x128xf32> to vector<8x128xf32>
    %982 = vector.shape_cast %932 : vector<8x128xf32> to vector<1x8x128xf32>
    tpu.vector_store %arg7[%c69, %c0_409, %c0_410], %982 {strides = array<i32>} : memref<128x8x128xf32, #tpu.memory_space<vmem>>, vector<1x8x128xf32>,
    %c70 = arith.constant 70 : index
    %c0_411 = arith.constant 0 : index
    %c0_412 = arith.constant 0 : index
    %983 = vector.load %arg7[%c70, %c0_411, %c0_412] : memref<128x8x128xf32, #tpu.memory_space<vmem>>, vector<1x8x128xf32>
    %984 = vector.shape_cast %983 : vector<1x8x128xf32> to vector<8x128xf32>
    %985 = vector.shape_cast %937 : vector<8x128xf32> to vector<1x8x128xf32>
    tpu.vector_store %arg7[%c70, %c0_411, %c0_412], %985 {strides = array<i32>} : memref<128x8x128xf32, #tpu.memory_space<vmem>>, vector<1x8x128xf32>,
    %c71 = arith.constant 71 : index
    %c0_413 = arith.constant 0 : index
    %c0_414 = arith.constant 0 : index
    %986 = vector.load %arg7[%c71, %c0_413, %c0_414] : memref<128x8x128xf32, #tpu.memory_space<vmem>>, vector<1x8x128xf32>
    %987 = vector.shape_cast %986 : vector<1x8x128xf32> to vector<8x128xf32>
    %988 = vector.shape_cast %943 : vector<8x128xf32> to vector<1x8x128xf32>
    tpu.vector_store %arg7[%c71, %c0_413, %c0_414], %988 {strides = array<i32>} : memref<128x8x128xf32, #tpu.memory_space<vmem>>, vector<1x8x128xf32>,
    %c72 = arith.constant 72 : index
    %c0_415 = arith.constant 0 : index
    %c0_416 = arith.constant 0 : index
    %989 = vector.load %arg7[%c72, %c0_415, %c0_416] : memref<128x8x128xf32, #tpu.memory_space<vmem>>, vector<1x8x128xf32>
    %990 = vector.shape_cast %989 : vector<1x8x128xf32> to vector<8x128xf32>
    %991 = vector.shape_cast %948 : vector<8x128xf32> to vector<1x8x128xf32>
    tpu.vector_store %arg7[%c72, %c0_415, %c0_416], %991 {strides = array<i32>} : memref<128x8x128xf32, #tpu.memory_space<vmem>>, vector<1x8x128xf32>,
    %c73 = arith.constant 73 : index
    %c0_417 = arith.constant 0 : index
    %c0_418 = arith.constant 0 : index
    %992 = vector.load %arg7[%c73, %c0_417, %c0_418] : memref<128x8x128xf32, #tpu.memory_space<vmem>>, vector<1x8x128xf32>
    %993 = vector.shape_cast %992 : vector<1x8x128xf32> to vector<8x128xf32>
    %994 = vector.shape_cast %953 : vector<8x128xf32> to vector<1x8x128xf32>
    tpu.vector_store %arg7[%c73, %c0_417, %c0_418], %994 {strides = array<i32>} : memref<128x8x128xf32, #tpu.memory_space<vmem>>, vector<1x8x128xf32>,
    %c74 = arith.constant 74 : index
    %c0_419 = arith.constant 0 : index
    %c0_420 = arith.constant 0 : index
    %995 = vector.load %arg7[%c74, %c0_419, %c0_420] : memref<128x8x128xf32, #tpu.memory_space<vmem>>, vector<1x8x128xf32>
    %996 = vector.shape_cast %995 : vector<1x8x128xf32> to vector<8x128xf32>
    %997 = vector.shape_cast %958 : vector<8x128xf32> to vector<1x8x128xf32>
    tpu.vector_store %arg7[%c74, %c0_419, %c0_420], %997 {strides = array<i32>} : memref<128x8x128xf32, #tpu.memory_space<vmem>>, vector<1x8x128xf32>,
    %c75 = arith.constant 75 : index
    %c0_421 = arith.constant 0 : index
    %c0_422 = arith.constant 0 : index
    %998 = vector.load %arg7[%c75, %c0_421, %c0_422] : memref<128x8x128xf32, #tpu.memory_space<vmem>>, vector<1x8x128xf32>
    %999 = vector.shape_cast %998 : vector<1x8x128xf32> to vector<8x128xf32>
    %1000 = vector.shape_cast %964 : vector<8x128xf32> to vector<1x8x128xf32>
    tpu.vector_store %arg7[%c75, %c0_421, %c0_422], %1000 {strides = array<i32>} : memref<128x8x128xf32, #tpu.memory_space<vmem>>, vector<1x8x128xf32>,
    %c76 = arith.constant 76 : index
    %c0_423 = arith.constant 0 : index
    %c0_424 = arith.constant 0 : index
    %1001 = vector.load %arg7[%c76, %c0_423, %c0_424] : memref<128x8x128xf32, #tpu.memory_space<vmem>>, vector<1x8x128xf32>
    %1002 = vector.shape_cast %1001 : vector<1x8x128xf32> to vector<8x128xf32>
    %1003 = vector.shape_cast %0 : vector<8x128xf32> to vector<1x8x128xf32>
    tpu.vector_store %arg7[%c76, %c0_423, %c0_424], %1003 {strides = array<i32>} : memref<128x8x128xf32, #tpu.memory_space<vmem>>, vector<1x8x128xf32>,
    %c77 = arith.constant 77 : index
    %c0_425 = arith.constant 0 : index
    %c0_426 = arith.constant 0 : index
    %1004 = vector.load %arg7[%c77, %c0_425, %c0_426] : memref<128x8x128xf32, #tpu.memory_space<vmem>>, vector<1x8x128xf32>
    %1005 = vector.shape_cast %1004 : vector<1x8x128xf32> to vector<8x128xf32>
    %1006 = vector.shape_cast %0 : vector<8x128xf32> to vector<1x8x128xf32>
    tpu.vector_store %arg7[%c77, %c0_425, %c0_426], %1006 {strides = array<i32>} : memref<128x8x128xf32, #tpu.memory_space<vmem>>, vector<1x8x128xf32>,
    %c78 = arith.constant 78 : index
    %c0_427 = arith.constant 0 : index
    %c0_428 = arith.constant 0 : index
    %1007 = vector.load %arg7[%c78, %c0_427, %c0_428] : memref<128x8x128xf32, #tpu.memory_space<vmem>>, vector<1x8x128xf32>
    %1008 = vector.shape_cast %1007 : vector<1x8x128xf32> to vector<8x128xf32>
    %1009 = vector.shape_cast %0 : vector<8x128xf32> to vector<1x8x128xf32>
    tpu.vector_store %arg7[%c78, %c0_427, %c0_428], %1009 {strides = array<i32>} : memref<128x8x128xf32, #tpu.memory_space<vmem>>, vector<1x8x128xf32>,
    %c79 = arith.constant 79 : index
    %c0_429 = arith.constant 0 : index
    %c0_430 = arith.constant 0 : index
    %1010 = vector.load %arg7[%c79, %c0_429, %c0_430] : memref<128x8x128xf32, #tpu.memory_space<vmem>>, vector<1x8x128xf32>
    %1011 = vector.shape_cast %1010 : vector<1x8x128xf32> to vector<8x128xf32>
    %1012 = vector.shape_cast %1 : vector<8x128xf32> to vector<1x8x128xf32>
    tpu.vector_store %arg7[%c79, %c0_429, %c0_430], %1012 {strides = array<i32>} : memref<128x8x128xf32, #tpu.memory_space<vmem>>, vector<1x8x128xf32>,
    %c56_431 = arith.constant 56 : index
    %c0_432 = arith.constant 0 : index
    %c0_433 = arith.constant 0 : index
    %1013 = vector.load %arg4[%c56_431, %c0_432, %c0_433] : memref<112x8x128xf32, #tpu.memory_space<vmem>>, vector<14x8x128xf32>
    %1014 = vector.shape_cast %906 : vector<8x128xf32> to vector<1x8x128xf32>
    %1015 = vector.broadcast %1014 : vector<1x8x128xf32> to vector<14x8x128xf32>
    %1016 = arith.mulf %1015, %26 : vector<14x8x128xf32>
    %1017 = vector.shape_cast %911 : vector<8x128xf32> to vector<1x8x128xf32>
    %1018 = vector.broadcast %1017 : vector<1x8x128xf32> to vector<14x8x128xf32>
    %1019 = arith.mulf %1018, %27 : vector<14x8x128xf32>
    %1020 = arith.addf %1016, %1019 : vector<14x8x128xf32>
    %1021 = vector.shape_cast %916 : vector<8x128xf32> to vector<1x8x128xf32>
    %1022 = vector.broadcast %1021 : vector<1x8x128xf32> to vector<14x8x128xf32>
    %1023 = arith.mulf %1022, %28 : vector<14x8x128xf32>
    %1024 = arith.addf %1020, %1023 : vector<14x8x128xf32>
    %1025 = vector.shape_cast %922 : vector<8x128xf32> to vector<1x8x128xf32>
    %1026 = vector.broadcast %1025 : vector<1x8x128xf32> to vector<14x8x128xf32>
    %1027 = arith.addf %1024, %1026 : vector<14x8x128xf32>
    %1028 = arith.mulf %1013, %1027 : vector<14x8x128xf32>
    %1029 = arith.addf %823, %1028 : vector<14x8x128xf32>
    %1030 = vector.shape_cast %927 : vector<8x128xf32> to vector<1x8x128xf32>
    %1031 = vector.broadcast %1030 : vector<1x8x128xf32> to vector<14x8x128xf32>
    %1032 = arith.mulf %1031, %26 : vector<14x8x128xf32>
    %1033 = vector.shape_cast %932 : vector<8x128xf32> to vector<1x8x128xf32>
    %1034 = vector.broadcast %1033 : vector<1x8x128xf32> to vector<14x8x128xf32>
    %1035 = arith.mulf %1034, %27 : vector<14x8x128xf32>
    %1036 = arith.addf %1032, %1035 : vector<14x8x128xf32>
    %1037 = vector.shape_cast %937 : vector<8x128xf32> to vector<1x8x128xf32>
    %1038 = vector.broadcast %1037 : vector<1x8x128xf32> to vector<14x8x128xf32>
    %1039 = arith.mulf %1038, %28 : vector<14x8x128xf32>
    %1040 = arith.addf %1036, %1039 : vector<14x8x128xf32>
    %1041 = vector.shape_cast %943 : vector<8x128xf32> to vector<1x8x128xf32>
    %1042 = vector.broadcast %1041 : vector<1x8x128xf32> to vector<14x8x128xf32>
    %1043 = arith.addf %1040, %1042 : vector<14x8x128xf32>
    %1044 = arith.mulf %1013, %1043 : vector<14x8x128xf32>
    %1045 = arith.addf %839, %1044 : vector<14x8x128xf32>
    %1046 = vector.shape_cast %948 : vector<8x128xf32> to vector<1x8x128xf32>
    %1047 = vector.broadcast %1046 : vector<1x8x128xf32> to vector<14x8x128xf32>
    %1048 = arith.mulf %1047, %26 : vector<14x8x128xf32>
    %1049 = vector.shape_cast %953 : vector<8x128xf32> to vector<1x8x128xf32>
    %1050 = vector.broadcast %1049 : vector<1x8x128xf32> to vector<14x8x128xf32>
    %1051 = arith.mulf %1050, %27 : vector<14x8x128xf32>
    %1052 = arith.addf %1048, %1051 : vector<14x8x128xf32>
    %1053 = vector.shape_cast %958 : vector<8x128xf32> to vector<1x8x128xf32>
    %1054 = vector.broadcast %1053 : vector<1x8x128xf32> to vector<14x8x128xf32>
    %1055 = arith.mulf %1054, %28 : vector<14x8x128xf32>
    %1056 = arith.addf %1052, %1055 : vector<14x8x128xf32>
    %1057 = vector.shape_cast %964 : vector<8x128xf32> to vector<1x8x128xf32>
    %1058 = vector.broadcast %1057 : vector<1x8x128xf32> to vector<14x8x128xf32>
    %1059 = arith.addf %1056, %1058 : vector<14x8x128xf32>
    %1060 = arith.mulf %1013, %1059 : vector<14x8x128xf32>
    %1061 = arith.addf %855, %1060 : vector<14x8x128xf32>
    %c10_434 = arith.constant 10 : index
    %c0_435 = arith.constant 0 : index
    %c0_436 = arith.constant 0 : index
    %1062 = vector.load %arg2[%c10_434, %c0_435, %c0_436] : memref<16x8x128xf32, #tpu.memory_space<vmem>>, vector<1x8x128xf32>
    %1063 = vector.shape_cast %1062 : vector<1x8x128xf32> to vector<8x128xf32>
    %c11_437 = arith.constant 11 : index
    %c0_438 = arith.constant 0 : index
    %c0_439 = arith.constant 0 : index
    %1064 = vector.load %arg2[%c11_437, %c0_438, %c0_439] : memref<16x8x128xf32, #tpu.memory_space<vmem>>, vector<1x8x128xf32>
    %1065 = vector.shape_cast %1064 : vector<1x8x128xf32> to vector<8x128xf32>
    %c60_440 = arith.constant 60 : index
    %c0_441 = arith.constant 0 : index
    %c0_442 = arith.constant 0 : index
    %1066 = vector.load %arg1[%c60_440, %c0_441, %c0_442] : memref<96x8x128xf32, #tpu.memory_space<vmem>>, vector<1x8x128xf32>
    %1067 = vector.shape_cast %1066 : vector<1x8x128xf32> to vector<8x128xf32>
    %c61_443 = arith.constant 61 : index
    %c0_444 = arith.constant 0 : index
    %c0_445 = arith.constant 0 : index
    %1068 = vector.load %arg1[%c61_443, %c0_444, %c0_445] : memref<96x8x128xf32, #tpu.memory_space<vmem>>, vector<1x8x128xf32>
    %1069 = vector.shape_cast %1068 : vector<1x8x128xf32> to vector<8x128xf32>
    %c62_446 = arith.constant 62 : index
    %c0_447 = arith.constant 0 : index
    %c0_448 = arith.constant 0 : index
    %1070 = vector.load %arg1[%c62_446, %c0_447, %c0_448] : memref<96x8x128xf32, #tpu.memory_space<vmem>>, vector<1x8x128xf32>
    %1071 = vector.shape_cast %1070 : vector<1x8x128xf32> to vector<8x128xf32>
    %c63_449 = arith.constant 63 : index
    %c0_450 = arith.constant 0 : index
    %c0_451 = arith.constant 0 : index
    %1072 = vector.load %arg1[%c63_449, %c0_450, %c0_451] : memref<96x8x128xf32, #tpu.memory_space<vmem>>, vector<1x8x128xf32>
    %1073 = vector.shape_cast %1072 : vector<1x8x128xf32> to vector<8x128xf32>
    %1074 = arith.mulf %1065, %1069 : vector<8x128xf32>
    %1075 = arith.mulf %1063, %1071 : vector<8x128xf32>
    %1076 = arith.addf %1074, %1075 : vector<8x128xf32>
    %1077 = arith.mulf %1065, %1071 : vector<8x128xf32>
    %1078 = arith.mulf %1063, %1069 : vector<8x128xf32>
    %1079 = arith.subf %1077, %1078 : vector<8x128xf32>
    %c64_452 = arith.constant 64 : index
    %c0_453 = arith.constant 0 : index
    %c0_454 = arith.constant 0 : index
    %1080 = vector.load %arg1[%c64_452, %c0_453, %c0_454] : memref<96x8x128xf32, #tpu.memory_space<vmem>>, vector<1x8x128xf32>
    %1081 = vector.shape_cast %1080 : vector<1x8x128xf32> to vector<8x128xf32>
    %c65_455 = arith.constant 65 : index
    %c0_456 = arith.constant 0 : index
    %c0_457 = arith.constant 0 : index
    %1082 = vector.load %arg1[%c65_455, %c0_456, %c0_457] : memref<96x8x128xf32, #tpu.memory_space<vmem>>, vector<1x8x128xf32>
    %1083 = vector.shape_cast %1082 : vector<1x8x128xf32> to vector<8x128xf32>
    %c66_458 = arith.constant 66 : index
    %c0_459 = arith.constant 0 : index
    %c0_460 = arith.constant 0 : index
    %1084 = vector.load %arg1[%c66_458, %c0_459, %c0_460] : memref<96x8x128xf32, #tpu.memory_space<vmem>>, vector<1x8x128xf32>
    %1085 = vector.shape_cast %1084 : vector<1x8x128xf32> to vector<8x128xf32>
    %c67_461 = arith.constant 67 : index
    %c0_462 = arith.constant 0 : index
    %c0_463 = arith.constant 0 : index
    %1086 = vector.load %arg1[%c67_461, %c0_462, %c0_463] : memref<96x8x128xf32, #tpu.memory_space<vmem>>, vector<1x8x128xf32>
    %1087 = vector.shape_cast %1086 : vector<1x8x128xf32> to vector<8x128xf32>
    %1088 = arith.mulf %1065, %1083 : vector<8x128xf32>
    %1089 = arith.mulf %1063, %1085 : vector<8x128xf32>
    %1090 = arith.addf %1088, %1089 : vector<8x128xf32>
    %1091 = arith.mulf %1065, %1085 : vector<8x128xf32>
    %1092 = arith.mulf %1063, %1083 : vector<8x128xf32>
    %1093 = arith.subf %1091, %1092 : vector<8x128xf32>
    %c68_464 = arith.constant 68 : index
    %c0_465 = arith.constant 0 : index
    %c0_466 = arith.constant 0 : index
    %1094 = vector.load %arg1[%c68_464, %c0_465, %c0_466] : memref<96x8x128xf32, #tpu.memory_space<vmem>>, vector<1x8x128xf32>
    %1095 = vector.shape_cast %1094 : vector<1x8x128xf32> to vector<8x128xf32>
    %c69_467 = arith.constant 69 : index
    %c0_468 = arith.constant 0 : index
    %c0_469 = arith.constant 0 : index
    %1096 = vector.load %arg1[%c69_467, %c0_468, %c0_469] : memref<96x8x128xf32, #tpu.memory_space<vmem>>, vector<1x8x128xf32>
    %1097 = vector.shape_cast %1096 : vector<1x8x128xf32> to vector<8x128xf32>
    %c70_470 = arith.constant 70 : index
    %c0_471 = arith.constant 0 : index
    %c0_472 = arith.constant 0 : index
    %1098 = vector.load %arg1[%c70_470, %c0_471, %c0_472] : memref<96x8x128xf32, #tpu.memory_space<vmem>>, vector<1x8x128xf32>
    %1099 = vector.shape_cast %1098 : vector<1x8x128xf32> to vector<8x128xf32>
    %c71_473 = arith.constant 71 : index
    %c0_474 = arith.constant 0 : index
    %c0_475 = arith.constant 0 : index
    %1100 = vector.load %arg1[%c71_473, %c0_474, %c0_475] : memref<96x8x128xf32, #tpu.memory_space<vmem>>, vector<1x8x128xf32>
    %1101 = vector.shape_cast %1100 : vector<1x8x128xf32> to vector<8x128xf32>
    %1102 = arith.mulf %1065, %1097 : vector<8x128xf32>
    %1103 = arith.mulf %1063, %1099 : vector<8x128xf32>
    %1104 = arith.addf %1102, %1103 : vector<8x128xf32>
    %1105 = arith.mulf %1065, %1099 : vector<8x128xf32>
    %1106 = arith.mulf %1063, %1097 : vector<8x128xf32>
    %1107 = arith.subf %1105, %1106 : vector<8x128xf32>
    %1108 = arith.mulf %861, %1067 : vector<8x128xf32>
    %1109 = arith.mulf %870, %1081 : vector<8x128xf32>
    %1110 = arith.addf %1108, %1109 : vector<8x128xf32>
    %1111 = arith.mulf %873, %1095 : vector<8x128xf32>
    %1112 = arith.addf %1110, %1111 : vector<8x128xf32>
    %1113 = arith.mulf %861, %1076 : vector<8x128xf32>
    %1114 = arith.mulf %870, %1090 : vector<8x128xf32>
    %1115 = arith.addf %1113, %1114 : vector<8x128xf32>
    %1116 = arith.mulf %873, %1104 : vector<8x128xf32>
    %1117 = arith.addf %1115, %1116 : vector<8x128xf32>
    %1118 = arith.mulf %861, %1079 : vector<8x128xf32>
    %1119 = arith.mulf %870, %1093 : vector<8x128xf32>
    %1120 = arith.addf %1118, %1119 : vector<8x128xf32>
    %1121 = arith.mulf %873, %1107 : vector<8x128xf32>
    %1122 = arith.addf %1120, %1121 : vector<8x128xf32>
    %1123 = arith.mulf %861, %1073 : vector<8x128xf32>
    %1124 = arith.mulf %870, %1087 : vector<8x128xf32>
    %1125 = arith.addf %1123, %1124 : vector<8x128xf32>
    %1126 = arith.mulf %873, %1101 : vector<8x128xf32>
    %1127 = arith.addf %1125, %1126 : vector<8x128xf32>
    %1128 = arith.addf %1127, %867 : vector<8x128xf32>
    %1129 = arith.mulf %875, %1067 : vector<8x128xf32>
    %1130 = arith.mulf %884, %1081 : vector<8x128xf32>
    %1131 = arith.addf %1129, %1130 : vector<8x128xf32>
    %1132 = arith.mulf %887, %1095 : vector<8x128xf32>
    %1133 = arith.addf %1131, %1132 : vector<8x128xf32>
    %1134 = arith.mulf %875, %1076 : vector<8x128xf32>
    %1135 = arith.mulf %884, %1090 : vector<8x128xf32>
    %1136 = arith.addf %1134, %1135 : vector<8x128xf32>
    %1137 = arith.mulf %887, %1104 : vector<8x128xf32>
    %1138 = arith.addf %1136, %1137 : vector<8x128xf32>
    %1139 = arith.mulf %875, %1079 : vector<8x128xf32>
    %1140 = arith.mulf %884, %1093 : vector<8x128xf32>
    %1141 = arith.addf %1139, %1140 : vector<8x128xf32>
    %1142 = arith.mulf %887, %1107 : vector<8x128xf32>
    %1143 = arith.addf %1141, %1142 : vector<8x128xf32>
    %1144 = arith.mulf %875, %1073 : vector<8x128xf32>
    %1145 = arith.mulf %884, %1087 : vector<8x128xf32>
    %1146 = arith.addf %1144, %1145 : vector<8x128xf32>
    %1147 = arith.mulf %887, %1101 : vector<8x128xf32>
    %1148 = arith.addf %1146, %1147 : vector<8x128xf32>
    %1149 = arith.addf %1148, %881 : vector<8x128xf32>
    %1150 = arith.mulf %889, %1067 : vector<8x128xf32>
    %1151 = arith.mulf %898, %1081 : vector<8x128xf32>
    %1152 = arith.addf %1150, %1151 : vector<8x128xf32>
    %1153 = arith.mulf %901, %1095 : vector<8x128xf32>
    %1154 = arith.addf %1152, %1153 : vector<8x128xf32>
    %1155 = arith.mulf %889, %1076 : vector<8x128xf32>
    %1156 = arith.mulf %898, %1090 : vector<8x128xf32>
    %1157 = arith.addf %1155, %1156 : vector<8x128xf32>
    %1158 = arith.mulf %901, %1104 : vector<8x128xf32>
    %1159 = arith.addf %1157, %1158 : vector<8x128xf32>
    %1160 = arith.mulf %889, %1079 : vector<8x128xf32>
    %1161 = arith.mulf %898, %1093 : vector<8x128xf32>
    %1162 = arith.addf %1160, %1161 : vector<8x128xf32>
    %1163 = arith.mulf %901, %1107 : vector<8x128xf32>
    %1164 = arith.addf %1162, %1163 : vector<8x128xf32>
    %1165 = arith.mulf %889, %1073 : vector<8x128xf32>
    %1166 = arith.mulf %898, %1087 : vector<8x128xf32>
    %1167 = arith.addf %1165, %1166 : vector<8x128xf32>
    %1168 = arith.mulf %901, %1101 : vector<8x128xf32>
    %1169 = arith.addf %1167, %1168 : vector<8x128xf32>
    %1170 = arith.addf %1169, %895 : vector<8x128xf32>
    %1171 = arith.mulf %3, %1112 : vector<8x128xf32>
    %1172 = arith.mulf %5, %1133 : vector<8x128xf32>
    %1173 = arith.addf %1171, %1172 : vector<8x128xf32>
    %1174 = arith.mulf %7, %1154 : vector<8x128xf32>
    %1175 = arith.addf %1173, %1174 : vector<8x128xf32>
    %1176 = arith.mulf %3, %1117 : vector<8x128xf32>
    %1177 = arith.mulf %5, %1138 : vector<8x128xf32>
    %1178 = arith.addf %1176, %1177 : vector<8x128xf32>
    %1179 = arith.mulf %7, %1159 : vector<8x128xf32>
    %1180 = arith.addf %1178, %1179 : vector<8x128xf32>
    %1181 = arith.mulf %3, %1122 : vector<8x128xf32>
    %1182 = arith.mulf %5, %1143 : vector<8x128xf32>
    %1183 = arith.addf %1181, %1182 : vector<8x128xf32>
    %1184 = arith.mulf %7, %1164 : vector<8x128xf32>
    %1185 = arith.addf %1183, %1184 : vector<8x128xf32>
    %1186 = arith.mulf %3, %1128 : vector<8x128xf32>
    %1187 = arith.mulf %5, %1149 : vector<8x128xf32>
    %1188 = arith.addf %1186, %1187 : vector<8x128xf32>
    %1189 = arith.mulf %7, %1170 : vector<8x128xf32>
    %1190 = arith.addf %1188, %1189 : vector<8x128xf32>
    %1191 = arith.addf %1190, %9 : vector<8x128xf32>
    %1192 = arith.mulf %11, %1112 : vector<8x128xf32>
    %1193 = arith.mulf %13, %1133 : vector<8x128xf32>
    %1194 = arith.addf %1192, %1193 : vector<8x128xf32>
    %1195 = arith.mulf %15, %1154 : vector<8x128xf32>
    %1196 = arith.addf %1194, %1195 : vector<8x128xf32>
    %1197 = arith.mulf %11, %1117 : vector<8x128xf32>
    %1198 = arith.mulf %13, %1138 : vector<8x128xf32>
    %1199 = arith.addf %1197, %1198 : vector<8x128xf32>
    %1200 = arith.mulf %15, %1159 : vector<8x128xf32>
    %1201 = arith.addf %1199, %1200 : vector<8x128xf32>
    %1202 = arith.mulf %11, %1122 : vector<8x128xf32>
    %1203 = arith.mulf %13, %1143 : vector<8x128xf32>
    %1204 = arith.addf %1202, %1203 : vector<8x128xf32>
    %1205 = arith.mulf %15, %1164 : vector<8x128xf32>
    %1206 = arith.addf %1204, %1205 : vector<8x128xf32>
    %1207 = arith.mulf %11, %1128 : vector<8x128xf32>
    %1208 = arith.mulf %13, %1149 : vector<8x128xf32>
    %1209 = arith.addf %1207, %1208 : vector<8x128xf32>
    %1210 = arith.mulf %15, %1170 : vector<8x128xf32>
    %1211 = arith.addf %1209, %1210 : vector<8x128xf32>
    %1212 = arith.addf %1211, %17 : vector<8x128xf32>
    %1213 = arith.mulf %19, %1112 : vector<8x128xf32>
    %1214 = arith.mulf %21, %1133 : vector<8x128xf32>
    %1215 = arith.addf %1213, %1214 : vector<8x128xf32>
    %1216 = arith.mulf %23, %1154 : vector<8x128xf32>
    %1217 = arith.addf %1215, %1216 : vector<8x128xf32>
    %1218 = arith.mulf %19, %1117 : vector<8x128xf32>
    %1219 = arith.mulf %21, %1138 : vector<8x128xf32>
    %1220 = arith.addf %1218, %1219 : vector<8x128xf32>
    %1221 = arith.mulf %23, %1159 : vector<8x128xf32>
    %1222 = arith.addf %1220, %1221 : vector<8x128xf32>
    %1223 = arith.mulf %19, %1122 : vector<8x128xf32>
    %1224 = arith.mulf %21, %1143 : vector<8x128xf32>
    %1225 = arith.addf %1223, %1224 : vector<8x128xf32>
    %1226 = arith.mulf %23, %1164 : vector<8x128xf32>
    %1227 = arith.addf %1225, %1226 : vector<8x128xf32>
    %1228 = arith.mulf %19, %1128 : vector<8x128xf32>
    %1229 = arith.mulf %21, %1149 : vector<8x128xf32>
    %1230 = arith.addf %1228, %1229 : vector<8x128xf32>
    %1231 = arith.mulf %23, %1170 : vector<8x128xf32>
    %1232 = arith.addf %1230, %1231 : vector<8x128xf32>
    %1233 = arith.addf %1232, %25 : vector<8x128xf32>
    %c80 = arith.constant 80 : index
    %c0_476 = arith.constant 0 : index
    %c0_477 = arith.constant 0 : index
    %1234 = vector.load %arg7[%c80, %c0_476, %c0_477] : memref<128x8x128xf32, #tpu.memory_space<vmem>>, vector<1x8x128xf32>
    %1235 = vector.shape_cast %1234 : vector<1x8x128xf32> to vector<8x128xf32>
    %1236 = vector.shape_cast %1175 : vector<8x128xf32> to vector<1x8x128xf32>
    tpu.vector_store %arg7[%c80, %c0_476, %c0_477], %1236 {strides = array<i32>} : memref<128x8x128xf32, #tpu.memory_space<vmem>>, vector<1x8x128xf32>,
    %c81 = arith.constant 81 : index
    %c0_478 = arith.constant 0 : index
    %c0_479 = arith.constant 0 : index
    %1237 = vector.load %arg7[%c81, %c0_478, %c0_479] : memref<128x8x128xf32, #tpu.memory_space<vmem>>, vector<1x8x128xf32>
    %1238 = vector.shape_cast %1237 : vector<1x8x128xf32> to vector<8x128xf32>
    %1239 = vector.shape_cast %1180 : vector<8x128xf32> to vector<1x8x128xf32>
    tpu.vector_store %arg7[%c81, %c0_478, %c0_479], %1239 {strides = array<i32>} : memref<128x8x128xf32, #tpu.memory_space<vmem>>, vector<1x8x128xf32>,
    %c82 = arith.constant 82 : index
    %c0_480 = arith.constant 0 : index
    %c0_481 = arith.constant 0 : index
    %1240 = vector.load %arg7[%c82, %c0_480, %c0_481] : memref<128x8x128xf32, #tpu.memory_space<vmem>>, vector<1x8x128xf32>
    %1241 = vector.shape_cast %1240 : vector<1x8x128xf32> to vector<8x128xf32>
    %1242 = vector.shape_cast %1185 : vector<8x128xf32> to vector<1x8x128xf32>
    tpu.vector_store %arg7[%c82, %c0_480, %c0_481], %1242 {strides = array<i32>} : memref<128x8x128xf32, #tpu.memory_space<vmem>>, vector<1x8x128xf32>,
    %c83 = arith.constant 83 : index
    %c0_482 = arith.constant 0 : index
    %c0_483 = arith.constant 0 : index
    %1243 = vector.load %arg7[%c83, %c0_482, %c0_483] : memref<128x8x128xf32, #tpu.memory_space<vmem>>, vector<1x8x128xf32>
    %1244 = vector.shape_cast %1243 : vector<1x8x128xf32> to vector<8x128xf32>
    %1245 = vector.shape_cast %1191 : vector<8x128xf32> to vector<1x8x128xf32>
    tpu.vector_store %arg7[%c83, %c0_482, %c0_483], %1245 {strides = array<i32>} : memref<128x8x128xf32, #tpu.memory_space<vmem>>, vector<1x8x128xf32>,
    %c84 = arith.constant 84 : index
    %c0_484 = arith.constant 0 : index
    %c0_485 = arith.constant 0 : index
    %1246 = vector.load %arg7[%c84, %c0_484, %c0_485] : memref<128x8x128xf32, #tpu.memory_space<vmem>>, vector<1x8x128xf32>
    %1247 = vector.shape_cast %1246 : vector<1x8x128xf32> to vector<8x128xf32>
    %1248 = vector.shape_cast %1196 : vector<8x128xf32> to vector<1x8x128xf32>
    tpu.vector_store %arg7[%c84, %c0_484, %c0_485], %1248 {strides = array<i32>} : memref<128x8x128xf32, #tpu.memory_space<vmem>>, vector<1x8x128xf32>,
    %c85 = arith.constant 85 : index
    %c0_486 = arith.constant 0 : index
    %c0_487 = arith.constant 0 : index
    %1249 = vector.load %arg7[%c85, %c0_486, %c0_487] : memref<128x8x128xf32, #tpu.memory_space<vmem>>, vector<1x8x128xf32>
    %1250 = vector.shape_cast %1249 : vector<1x8x128xf32> to vector<8x128xf32>
    %1251 = vector.shape_cast %1201 : vector<8x128xf32> to vector<1x8x128xf32>
    tpu.vector_store %arg7[%c85, %c0_486, %c0_487], %1251 {strides = array<i32>} : memref<128x8x128xf32, #tpu.memory_space<vmem>>, vector<1x8x128xf32>,
    %c86 = arith.constant 86 : index
    %c0_488 = arith.constant 0 : index
    %c0_489 = arith.constant 0 : index
    %1252 = vector.load %arg7[%c86, %c0_488, %c0_489] : memref<128x8x128xf32, #tpu.memory_space<vmem>>, vector<1x8x128xf32>
    %1253 = vector.shape_cast %1252 : vector<1x8x128xf32> to vector<8x128xf32>
    %1254 = vector.shape_cast %1206 : vector<8x128xf32> to vector<1x8x128xf32>
    tpu.vector_store %arg7[%c86, %c0_488, %c0_489], %1254 {strides = array<i32>} : memref<128x8x128xf32, #tpu.memory_space<vmem>>, vector<1x8x128xf32>,
    %c87 = arith.constant 87 : index
    %c0_490 = arith.constant 0 : index
    %c0_491 = arith.constant 0 : index
    %1255 = vector.load %arg7[%c87, %c0_490, %c0_491] : memref<128x8x128xf32, #tpu.memory_space<vmem>>, vector<1x8x128xf32>
    %1256 = vector.shape_cast %1255 : vector<1x8x128xf32> to vector<8x128xf32>
    %1257 = vector.shape_cast %1212 : vector<8x128xf32> to vector<1x8x128xf32>
    tpu.vector_store %arg7[%c87, %c0_490, %c0_491], %1257 {strides = array<i32>} : memref<128x8x128xf32, #tpu.memory_space<vmem>>, vector<1x8x128xf32>,
    %c88 = arith.constant 88 : index
    %c0_492 = arith.constant 0 : index
    %c0_493 = arith.constant 0 : index
    %1258 = vector.load %arg7[%c88, %c0_492, %c0_493] : memref<128x8x128xf32, #tpu.memory_space<vmem>>, vector<1x8x128xf32>
    %1259 = vector.shape_cast %1258 : vector<1x8x128xf32> to vector<8x128xf32>
    %1260 = vector.shape_cast %1217 : vector<8x128xf32> to vector<1x8x128xf32>
    tpu.vector_store %arg7[%c88, %c0_492, %c0_493], %1260 {strides = array<i32>} : memref<128x8x128xf32, #tpu.memory_space<vmem>>, vector<1x8x128xf32>,
    %c89 = arith.constant 89 : index
    %c0_494 = arith.constant 0 : index
    %c0_495 = arith.constant 0 : index
    %1261 = vector.load %arg7[%c89, %c0_494, %c0_495] : memref<128x8x128xf32, #tpu.memory_space<vmem>>, vector<1x8x128xf32>
    %1262 = vector.shape_cast %1261 : vector<1x8x128xf32> to vector<8x128xf32>
    %1263 = vector.shape_cast %1222 : vector<8x128xf32> to vector<1x8x128xf32>
    tpu.vector_store %arg7[%c89, %c0_494, %c0_495], %1263 {strides = array<i32>} : memref<128x8x128xf32, #tpu.memory_space<vmem>>, vector<1x8x128xf32>,
    %c90 = arith.constant 90 : index
    %c0_496 = arith.constant 0 : index
    %c0_497 = arith.constant 0 : index
    %1264 = vector.load %arg7[%c90, %c0_496, %c0_497] : memref<128x8x128xf32, #tpu.memory_space<vmem>>, vector<1x8x128xf32>
    %1265 = vector.shape_cast %1264 : vector<1x8x128xf32> to vector<8x128xf32>
    %1266 = vector.shape_cast %1227 : vector<8x128xf32> to vector<1x8x128xf32>
    tpu.vector_store %arg7[%c90, %c0_496, %c0_497], %1266 {strides = array<i32>} : memref<128x8x128xf32, #tpu.memory_space<vmem>>, vector<1x8x128xf32>,
    %c91 = arith.constant 91 : index
    %c0_498 = arith.constant 0 : index
    %c0_499 = arith.constant 0 : index
    %1267 = vector.load %arg7[%c91, %c0_498, %c0_499] : memref<128x8x128xf32, #tpu.memory_space<vmem>>, vector<1x8x128xf32>
    %1268 = vector.shape_cast %1267 : vector<1x8x128xf32> to vector<8x128xf32>
    %1269 = vector.shape_cast %1233 : vector<8x128xf32> to vector<1x8x128xf32>
    tpu.vector_store %arg7[%c91, %c0_498, %c0_499], %1269 {strides = array<i32>} : memref<128x8x128xf32, #tpu.memory_space<vmem>>, vector<1x8x128xf32>,
    %c92 = arith.constant 92 : index
    %c0_500 = arith.constant 0 : index
    %c0_501 = arith.constant 0 : index
    %1270 = vector.load %arg7[%c92, %c0_500, %c0_501] : memref<128x8x128xf32, #tpu.memory_space<vmem>>, vector<1x8x128xf32>
    %1271 = vector.shape_cast %1270 : vector<1x8x128xf32> to vector<8x128xf32>
    %1272 = vector.shape_cast %0 : vector<8x128xf32> to vector<1x8x128xf32>
    tpu.vector_store %arg7[%c92, %c0_500, %c0_501], %1272 {strides = array<i32>} : memref<128x8x128xf32, #tpu.memory_space<vmem>>, vector<1x8x128xf32>,
    %c93 = arith.constant 93 : index
    %c0_502 = arith.constant 0 : index
    %c0_503 = arith.constant 0 : index
    %1273 = vector.load %arg7[%c93, %c0_502, %c0_503] : memref<128x8x128xf32, #tpu.memory_space<vmem>>, vector<1x8x128xf32>
    %1274 = vector.shape_cast %1273 : vector<1x8x128xf32> to vector<8x128xf32>
    %1275 = vector.shape_cast %0 : vector<8x128xf32> to vector<1x8x128xf32>
    tpu.vector_store %arg7[%c93, %c0_502, %c0_503], %1275 {strides = array<i32>} : memref<128x8x128xf32, #tpu.memory_space<vmem>>, vector<1x8x128xf32>,
    %c94 = arith.constant 94 : index
    %c0_504 = arith.constant 0 : index
    %c0_505 = arith.constant 0 : index
    %1276 = vector.load %arg7[%c94, %c0_504, %c0_505] : memref<128x8x128xf32, #tpu.memory_space<vmem>>, vector<1x8x128xf32>
    %1277 = vector.shape_cast %1276 : vector<1x8x128xf32> to vector<8x128xf32>
    %1278 = vector.shape_cast %0 : vector<8x128xf32> to vector<1x8x128xf32>
    tpu.vector_store %arg7[%c94, %c0_504, %c0_505], %1278 {strides = array<i32>} : memref<128x8x128xf32, #tpu.memory_space<vmem>>, vector<1x8x128xf32>,
    %c95 = arith.constant 95 : index
    %c0_506 = arith.constant 0 : index
    %c0_507 = arith.constant 0 : index
    %1279 = vector.load %arg7[%c95, %c0_506, %c0_507] : memref<128x8x128xf32, #tpu.memory_space<vmem>>, vector<1x8x128xf32>
    %1280 = vector.shape_cast %1279 : vector<1x8x128xf32> to vector<8x128xf32>
    %1281 = vector.shape_cast %1 : vector<8x128xf32> to vector<1x8x128xf32>
    tpu.vector_store %arg7[%c95, %c0_506, %c0_507], %1281 {strides = array<i32>} : memref<128x8x128xf32, #tpu.memory_space<vmem>>, vector<1x8x128xf32>,
    %c70_508 = arith.constant 70 : index
    %c0_509 = arith.constant 0 : index
    %c0_510 = arith.constant 0 : index
    %1282 = vector.load %arg4[%c70_508, %c0_509, %c0_510] : memref<112x8x128xf32, #tpu.memory_space<vmem>>, vector<14x8x128xf32>
    %1283 = vector.shape_cast %1175 : vector<8x128xf32> to vector<1x8x128xf32>
    %1284 = vector.broadcast %1283 : vector<1x8x128xf32> to vector<14x8x128xf32>
    %1285 = arith.mulf %1284, %26 : vector<14x8x128xf32>
    %1286 = vector.shape_cast %1180 : vector<8x128xf32> to vector<1x8x128xf32>
    %1287 = vector.broadcast %1286 : vector<1x8x128xf32> to vector<14x8x128xf32>
    %1288 = arith.mulf %1287, %27 : vector<14x8x128xf32>
    %1289 = arith.addf %1285, %1288 : vector<14x8x128xf32>
    %1290 = vector.shape_cast %1185 : vector<8x128xf32> to vector<1x8x128xf32>
    %1291 = vector.broadcast %1290 : vector<1x8x128xf32> to vector<14x8x128xf32>
    %1292 = arith.mulf %1291, %28 : vector<14x8x128xf32>
    %1293 = arith.addf %1289, %1292 : vector<14x8x128xf32>
    %1294 = vector.shape_cast %1191 : vector<8x128xf32> to vector<1x8x128xf32>
    %1295 = vector.broadcast %1294 : vector<1x8x128xf32> to vector<14x8x128xf32>
    %1296 = arith.addf %1293, %1295 : vector<14x8x128xf32>
    %1297 = arith.mulf %1282, %1296 : vector<14x8x128xf32>
    %1298 = arith.addf %1029, %1297 : vector<14x8x128xf32>
    %1299 = vector.shape_cast %1196 : vector<8x128xf32> to vector<1x8x128xf32>
    %1300 = vector.broadcast %1299 : vector<1x8x128xf32> to vector<14x8x128xf32>
    %1301 = arith.mulf %1300, %26 : vector<14x8x128xf32>
    %1302 = vector.shape_cast %1201 : vector<8x128xf32> to vector<1x8x128xf32>
    %1303 = vector.broadcast %1302 : vector<1x8x128xf32> to vector<14x8x128xf32>
    %1304 = arith.mulf %1303, %27 : vector<14x8x128xf32>
    %1305 = arith.addf %1301, %1304 : vector<14x8x128xf32>
    %1306 = vector.shape_cast %1206 : vector<8x128xf32> to vector<1x8x128xf32>
    %1307 = vector.broadcast %1306 : vector<1x8x128xf32> to vector<14x8x128xf32>
    %1308 = arith.mulf %1307, %28 : vector<14x8x128xf32>
    %1309 = arith.addf %1305, %1308 : vector<14x8x128xf32>
    %1310 = vector.shape_cast %1212 : vector<8x128xf32> to vector<1x8x128xf32>
    %1311 = vector.broadcast %1310 : vector<1x8x128xf32> to vector<14x8x128xf32>
    %1312 = arith.addf %1309, %1311 : vector<14x8x128xf32>
    %1313 = arith.mulf %1282, %1312 : vector<14x8x128xf32>
    %1314 = arith.addf %1045, %1313 : vector<14x8x128xf32>
    %1315 = vector.shape_cast %1217 : vector<8x128xf32> to vector<1x8x128xf32>
    %1316 = vector.broadcast %1315 : vector<1x8x128xf32> to vector<14x8x128xf32>
    %1317 = arith.mulf %1316, %26 : vector<14x8x128xf32>
    %1318 = vector.shape_cast %1222 : vector<8x128xf32> to vector<1x8x128xf32>
    %1319 = vector.broadcast %1318 : vector<1x8x128xf32> to vector<14x8x128xf32>
    %1320 = arith.mulf %1319, %27 : vector<14x8x128xf32>
    %1321 = arith.addf %1317, %1320 : vector<14x8x128xf32>
    %1322 = vector.shape_cast %1227 : vector<8x128xf32> to vector<1x8x128xf32>
    %1323 = vector.broadcast %1322 : vector<1x8x128xf32> to vector<14x8x128xf32>
    %1324 = arith.mulf %1323, %28 : vector<14x8x128xf32>
    %1325 = arith.addf %1321, %1324 : vector<14x8x128xf32>
    %1326 = vector.shape_cast %1233 : vector<8x128xf32> to vector<1x8x128xf32>
    %1327 = vector.broadcast %1326 : vector<1x8x128xf32> to vector<14x8x128xf32>
    %1328 = arith.addf %1325, %1327 : vector<14x8x128xf32>
    %1329 = arith.mulf %1282, %1328 : vector<14x8x128xf32>
    %1330 = arith.addf %1061, %1329 : vector<14x8x128xf32>
    %c12_511 = arith.constant 12 : index
    %c0_512 = arith.constant 0 : index
    %c0_513 = arith.constant 0 : index
    %1331 = vector.load %arg2[%c12_511, %c0_512, %c0_513] : memref<16x8x128xf32, #tpu.memory_space<vmem>>, vector<1x8x128xf32>
    %1332 = vector.shape_cast %1331 : vector<1x8x128xf32> to vector<8x128xf32>
    %c13_514 = arith.constant 13 : index
    %c0_515 = arith.constant 0 : index
    %c0_516 = arith.constant 0 : index
    %1333 = vector.load %arg2[%c13_514, %c0_515, %c0_516] : memref<16x8x128xf32, #tpu.memory_space<vmem>>, vector<1x8x128xf32>
    %1334 = vector.shape_cast %1333 : vector<1x8x128xf32> to vector<8x128xf32>
    %c72_517 = arith.constant 72 : index
    %c0_518 = arith.constant 0 : index
    %c0_519 = arith.constant 0 : index
    %1335 = vector.load %arg1[%c72_517, %c0_518, %c0_519] : memref<96x8x128xf32, #tpu.memory_space<vmem>>, vector<1x8x128xf32>
    %1336 = vector.shape_cast %1335 : vector<1x8x128xf32> to vector<8x128xf32>
    %c73_520 = arith.constant 73 : index
    %c0_521 = arith.constant 0 : index
    %c0_522 = arith.constant 0 : index
    %1337 = vector.load %arg1[%c73_520, %c0_521, %c0_522] : memref<96x8x128xf32, #tpu.memory_space<vmem>>, vector<1x8x128xf32>
    %1338 = vector.shape_cast %1337 : vector<1x8x128xf32> to vector<8x128xf32>
    %c74_523 = arith.constant 74 : index
    %c0_524 = arith.constant 0 : index
    %c0_525 = arith.constant 0 : index
    %1339 = vector.load %arg1[%c74_523, %c0_524, %c0_525] : memref<96x8x128xf32, #tpu.memory_space<vmem>>, vector<1x8x128xf32>
    %1340 = vector.shape_cast %1339 : vector<1x8x128xf32> to vector<8x128xf32>
    %c75_526 = arith.constant 75 : index
    %c0_527 = arith.constant 0 : index
    %c0_528 = arith.constant 0 : index
    %1341 = vector.load %arg1[%c75_526, %c0_527, %c0_528] : memref<96x8x128xf32, #tpu.memory_space<vmem>>, vector<1x8x128xf32>
    %1342 = vector.shape_cast %1341 : vector<1x8x128xf32> to vector<8x128xf32>
    %1343 = arith.mulf %1334, %1338 : vector<8x128xf32>
    %1344 = arith.mulf %1332, %1340 : vector<8x128xf32>
    %1345 = arith.addf %1343, %1344 : vector<8x128xf32>
    %1346 = arith.mulf %1334, %1340 : vector<8x128xf32>
    %1347 = arith.mulf %1332, %1338 : vector<8x128xf32>
    %1348 = arith.subf %1346, %1347 : vector<8x128xf32>
    %c76_529 = arith.constant 76 : index
    %c0_530 = arith.constant 0 : index
    %c0_531 = arith.constant 0 : index
    %1349 = vector.load %arg1[%c76_529, %c0_530, %c0_531] : memref<96x8x128xf32, #tpu.memory_space<vmem>>, vector<1x8x128xf32>
    %1350 = vector.shape_cast %1349 : vector<1x8x128xf32> to vector<8x128xf32>
    %c77_532 = arith.constant 77 : index
    %c0_533 = arith.constant 0 : index
    %c0_534 = arith.constant 0 : index
    %1351 = vector.load %arg1[%c77_532, %c0_533, %c0_534] : memref<96x8x128xf32, #tpu.memory_space<vmem>>, vector<1x8x128xf32>
    %1352 = vector.shape_cast %1351 : vector<1x8x128xf32> to vector<8x128xf32>
    %c78_535 = arith.constant 78 : index
    %c0_536 = arith.constant 0 : index
    %c0_537 = arith.constant 0 : index
    %1353 = vector.load %arg1[%c78_535, %c0_536, %c0_537] : memref<96x8x128xf32, #tpu.memory_space<vmem>>, vector<1x8x128xf32>
    %1354 = vector.shape_cast %1353 : vector<1x8x128xf32> to vector<8x128xf32>
    %c79_538 = arith.constant 79 : index
    %c0_539 = arith.constant 0 : index
    %c0_540 = arith.constant 0 : index
    %1355 = vector.load %arg1[%c79_538, %c0_539, %c0_540] : memref<96x8x128xf32, #tpu.memory_space<vmem>>, vector<1x8x128xf32>
    %1356 = vector.shape_cast %1355 : vector<1x8x128xf32> to vector<8x128xf32>
    %1357 = arith.mulf %1334, %1352 : vector<8x128xf32>
    %1358 = arith.mulf %1332, %1354 : vector<8x128xf32>
    %1359 = arith.addf %1357, %1358 : vector<8x128xf32>
    %1360 = arith.mulf %1334, %1354 : vector<8x128xf32>
    %1361 = arith.mulf %1332, %1352 : vector<8x128xf32>
    %1362 = arith.subf %1360, %1361 : vector<8x128xf32>
    %c80_541 = arith.constant 80 : index
    %c0_542 = arith.constant 0 : index
    %c0_543 = arith.constant 0 : index
    %1363 = vector.load %arg1[%c80_541, %c0_542, %c0_543] : memref<96x8x128xf32, #tpu.memory_space<vmem>>, vector<1x8x128xf32>
    %1364 = vector.shape_cast %1363 : vector<1x8x128xf32> to vector<8x128xf32>
    %c81_544 = arith.constant 81 : index
    %c0_545 = arith.constant 0 : index
    %c0_546 = arith.constant 0 : index
    %1365 = vector.load %arg1[%c81_544, %c0_545, %c0_546] : memref<96x8x128xf32, #tpu.memory_space<vmem>>, vector<1x8x128xf32>
    %1366 = vector.shape_cast %1365 : vector<1x8x128xf32> to vector<8x128xf32>
    %c82_547 = arith.constant 82 : index
    %c0_548 = arith.constant 0 : index
    %c0_549 = arith.constant 0 : index
    %1367 = vector.load %arg1[%c82_547, %c0_548, %c0_549] : memref<96x8x128xf32, #tpu.memory_space<vmem>>, vector<1x8x128xf32>
    %1368 = vector.shape_cast %1367 : vector<1x8x128xf32> to vector<8x128xf32>
    %c83_550 = arith.constant 83 : index
    %c0_551 = arith.constant 0 : index
    %c0_552 = arith.constant 0 : index
    %1369 = vector.load %arg1[%c83_550, %c0_551, %c0_552] : memref<96x8x128xf32, #tpu.memory_space<vmem>>, vector<1x8x128xf32>
    %1370 = vector.shape_cast %1369 : vector<1x8x128xf32> to vector<8x128xf32>
    %1371 = arith.mulf %1334, %1366 : vector<8x128xf32>
    %1372 = arith.mulf %1332, %1368 : vector<8x128xf32>
    %1373 = arith.addf %1371, %1372 : vector<8x128xf32>
    %1374 = arith.mulf %1334, %1368 : vector<8x128xf32>
    %1375 = arith.mulf %1332, %1366 : vector<8x128xf32>
    %1376 = arith.subf %1374, %1375 : vector<8x128xf32>
    %1377 = arith.mulf %1112, %1336 : vector<8x128xf32>
    %1378 = arith.mulf %1117, %1350 : vector<8x128xf32>
    %1379 = arith.addf %1377, %1378 : vector<8x128xf32>
    %1380 = arith.mulf %1122, %1364 : vector<8x128xf32>
    %1381 = arith.addf %1379, %1380 : vector<8x128xf32>
    %1382 = arith.mulf %1112, %1345 : vector<8x128xf32>
    %1383 = arith.mulf %1117, %1359 : vector<8x128xf32>
    %1384 = arith.addf %1382, %1383 : vector<8x128xf32>
    %1385 = arith.mulf %1122, %1373 : vector<8x128xf32>
    %1386 = arith.addf %1384, %1385 : vector<8x128xf32>
    %1387 = arith.mulf %1112, %1348 : vector<8x128xf32>
    %1388 = arith.mulf %1117, %1362 : vector<8x128xf32>
    %1389 = arith.addf %1387, %1388 : vector<8x128xf32>
    %1390 = arith.mulf %1122, %1376 : vector<8x128xf32>
    %1391 = arith.addf %1389, %1390 : vector<8x128xf32>
    %1392 = arith.mulf %1112, %1342 : vector<8x128xf32>
    %1393 = arith.mulf %1117, %1356 : vector<8x128xf32>
    %1394 = arith.addf %1392, %1393 : vector<8x128xf32>
    %1395 = arith.mulf %1122, %1370 : vector<8x128xf32>
    %1396 = arith.addf %1394, %1395 : vector<8x128xf32>
    %1397 = arith.addf %1396, %1128 : vector<8x128xf32>
    %1398 = arith.mulf %1133, %1336 : vector<8x128xf32>
    %1399 = arith.mulf %1138, %1350 : vector<8x128xf32>
    %1400 = arith.addf %1398, %1399 : vector<8x128xf32>
    %1401 = arith.mulf %1143, %1364 : vector<8x128xf32>
    %1402 = arith.addf %1400, %1401 : vector<8x128xf32>
    %1403 = arith.mulf %1133, %1345 : vector<8x128xf32>
    %1404 = arith.mulf %1138, %1359 : vector<8x128xf32>
    %1405 = arith.addf %1403, %1404 : vector<8x128xf32>
    %1406 = arith.mulf %1143, %1373 : vector<8x128xf32>
    %1407 = arith.addf %1405, %1406 : vector<8x128xf32>
    %1408 = arith.mulf %1133, %1348 : vector<8x128xf32>
    %1409 = arith.mulf %1138, %1362 : vector<8x128xf32>
    %1410 = arith.addf %1408, %1409 : vector<8x128xf32>
    %1411 = arith.mulf %1143, %1376 : vector<8x128xf32>
    %1412 = arith.addf %1410, %1411 : vector<8x128xf32>
    %1413 = arith.mulf %1133, %1342 : vector<8x128xf32>
    %1414 = arith.mulf %1138, %1356 : vector<8x128xf32>
    %1415 = arith.addf %1413, %1414 : vector<8x128xf32>
    %1416 = arith.mulf %1143, %1370 : vector<8x128xf32>
    %1417 = arith.addf %1415, %1416 : vector<8x128xf32>
    %1418 = arith.addf %1417, %1149 : vector<8x128xf32>
    %1419 = arith.mulf %1154, %1336 : vector<8x128xf32>
    %1420 = arith.mulf %1159, %1350 : vector<8x128xf32>
    %1421 = arith.addf %1419, %1420 : vector<8x128xf32>
    %1422 = arith.mulf %1164, %1364 : vector<8x128xf32>
    %1423 = arith.addf %1421, %1422 : vector<8x128xf32>
    %1424 = arith.mulf %1154, %1345 : vector<8x128xf32>
    %1425 = arith.mulf %1159, %1359 : vector<8x128xf32>
    %1426 = arith.addf %1424, %1425 : vector<8x128xf32>
    %1427 = arith.mulf %1164, %1373 : vector<8x128xf32>
    %1428 = arith.addf %1426, %1427 : vector<8x128xf32>
    %1429 = arith.mulf %1154, %1348 : vector<8x128xf32>
    %1430 = arith.mulf %1159, %1362 : vector<8x128xf32>
    %1431 = arith.addf %1429, %1430 : vector<8x128xf32>
    %1432 = arith.mulf %1164, %1376 : vector<8x128xf32>
    %1433 = arith.addf %1431, %1432 : vector<8x128xf32>
    %1434 = arith.mulf %1154, %1342 : vector<8x128xf32>
    %1435 = arith.mulf %1159, %1356 : vector<8x128xf32>
    %1436 = arith.addf %1434, %1435 : vector<8x128xf32>
    %1437 = arith.mulf %1164, %1370 : vector<8x128xf32>
    %1438 = arith.addf %1436, %1437 : vector<8x128xf32>
    %1439 = arith.addf %1438, %1170 : vector<8x128xf32>
    %1440 = arith.mulf %3, %1381 : vector<8x128xf32>
    %1441 = arith.mulf %5, %1402 : vector<8x128xf32>
    %1442 = arith.addf %1440, %1441 : vector<8x128xf32>
    %1443 = arith.mulf %7, %1423 : vector<8x128xf32>
    %1444 = arith.addf %1442, %1443 : vector<8x128xf32>
    %1445 = arith.mulf %3, %1386 : vector<8x128xf32>
    %1446 = arith.mulf %5, %1407 : vector<8x128xf32>
    %1447 = arith.addf %1445, %1446 : vector<8x128xf32>
    %1448 = arith.mulf %7, %1428 : vector<8x128xf32>
    %1449 = arith.addf %1447, %1448 : vector<8x128xf32>
    %1450 = arith.mulf %3, %1391 : vector<8x128xf32>
    %1451 = arith.mulf %5, %1412 : vector<8x128xf32>
    %1452 = arith.addf %1450, %1451 : vector<8x128xf32>
    %1453 = arith.mulf %7, %1433 : vector<8x128xf32>
    %1454 = arith.addf %1452, %1453 : vector<8x128xf32>
    %1455 = arith.mulf %3, %1397 : vector<8x128xf32>
    %1456 = arith.mulf %5, %1418 : vector<8x128xf32>
    %1457 = arith.addf %1455, %1456 : vector<8x128xf32>
    %1458 = arith.mulf %7, %1439 : vector<8x128xf32>
    %1459 = arith.addf %1457, %1458 : vector<8x128xf32>
    %1460 = arith.addf %1459, %9 : vector<8x128xf32>
    %1461 = arith.mulf %11, %1381 : vector<8x128xf32>
    %1462 = arith.mulf %13, %1402 : vector<8x128xf32>
    %1463 = arith.addf %1461, %1462 : vector<8x128xf32>
    %1464 = arith.mulf %15, %1423 : vector<8x128xf32>
    %1465 = arith.addf %1463, %1464 : vector<8x128xf32>
    %1466 = arith.mulf %11, %1386 : vector<8x128xf32>
    %1467 = arith.mulf %13, %1407 : vector<8x128xf32>
    %1468 = arith.addf %1466, %1467 : vector<8x128xf32>
    %1469 = arith.mulf %15, %1428 : vector<8x128xf32>
    %1470 = arith.addf %1468, %1469 : vector<8x128xf32>
    %1471 = arith.mulf %11, %1391 : vector<8x128xf32>
    %1472 = arith.mulf %13, %1412 : vector<8x128xf32>
    %1473 = arith.addf %1471, %1472 : vector<8x128xf32>
    %1474 = arith.mulf %15, %1433 : vector<8x128xf32>
    %1475 = arith.addf %1473, %1474 : vector<8x128xf32>
    %1476 = arith.mulf %11, %1397 : vector<8x128xf32>
    %1477 = arith.mulf %13, %1418 : vector<8x128xf32>
    %1478 = arith.addf %1476, %1477 : vector<8x128xf32>
    %1479 = arith.mulf %15, %1439 : vector<8x128xf32>
    %1480 = arith.addf %1478, %1479 : vector<8x128xf32>
    %1481 = arith.addf %1480, %17 : vector<8x128xf32>
    %1482 = arith.mulf %19, %1381 : vector<8x128xf32>
    %1483 = arith.mulf %21, %1402 : vector<8x128xf32>
    %1484 = arith.addf %1482, %1483 : vector<8x128xf32>
    %1485 = arith.mulf %23, %1423 : vector<8x128xf32>
    %1486 = arith.addf %1484, %1485 : vector<8x128xf32>
    %1487 = arith.mulf %19, %1386 : vector<8x128xf32>
    %1488 = arith.mulf %21, %1407 : vector<8x128xf32>
    %1489 = arith.addf %1487, %1488 : vector<8x128xf32>
    %1490 = arith.mulf %23, %1428 : vector<8x128xf32>
    %1491 = arith.addf %1489, %1490 : vector<8x128xf32>
    %1492 = arith.mulf %19, %1391 : vector<8x128xf32>
    %1493 = arith.mulf %21, %1412 : vector<8x128xf32>
    %1494 = arith.addf %1492, %1493 : vector<8x128xf32>
    %1495 = arith.mulf %23, %1433 : vector<8x128xf32>
    %1496 = arith.addf %1494, %1495 : vector<8x128xf32>
    %1497 = arith.mulf %19, %1397 : vector<8x128xf32>
    %1498 = arith.mulf %21, %1418 : vector<8x128xf32>
    %1499 = arith.addf %1497, %1498 : vector<8x128xf32>
    %1500 = arith.mulf %23, %1439 : vector<8x128xf32>
    %1501 = arith.addf %1499, %1500 : vector<8x128xf32>
    %1502 = arith.addf %1501, %25 : vector<8x128xf32>
    %c96 = arith.constant 96 : index
    %c0_553 = arith.constant 0 : index
    %c0_554 = arith.constant 0 : index
    %1503 = vector.load %arg7[%c96, %c0_553, %c0_554] : memref<128x8x128xf32, #tpu.memory_space<vmem>>, vector<1x8x128xf32>
    %1504 = vector.shape_cast %1503 : vector<1x8x128xf32> to vector<8x128xf32>
    %1505 = vector.shape_cast %1444 : vector<8x128xf32> to vector<1x8x128xf32>
    tpu.vector_store %arg7[%c96, %c0_553, %c0_554], %1505 {strides = array<i32>} : memref<128x8x128xf32, #tpu.memory_space<vmem>>, vector<1x8x128xf32>,
    %c97 = arith.constant 97 : index
    %c0_555 = arith.constant 0 : index
    %c0_556 = arith.constant 0 : index
    %1506 = vector.load %arg7[%c97, %c0_555, %c0_556] : memref<128x8x128xf32, #tpu.memory_space<vmem>>, vector<1x8x128xf32>
    %1507 = vector.shape_cast %1506 : vector<1x8x128xf32> to vector<8x128xf32>
    %1508 = vector.shape_cast %1449 : vector<8x128xf32> to vector<1x8x128xf32>
    tpu.vector_store %arg7[%c97, %c0_555, %c0_556], %1508 {strides = array<i32>} : memref<128x8x128xf32, #tpu.memory_space<vmem>>, vector<1x8x128xf32>,
    %c98 = arith.constant 98 : index
    %c0_557 = arith.constant 0 : index
    %c0_558 = arith.constant 0 : index
    %1509 = vector.load %arg7[%c98, %c0_557, %c0_558] : memref<128x8x128xf32, #tpu.memory_space<vmem>>, vector<1x8x128xf32>
    %1510 = vector.shape_cast %1509 : vector<1x8x128xf32> to vector<8x128xf32>
    %1511 = vector.shape_cast %1454 : vector<8x128xf32> to vector<1x8x128xf32>
    tpu.vector_store %arg7[%c98, %c0_557, %c0_558], %1511 {strides = array<i32>} : memref<128x8x128xf32, #tpu.memory_space<vmem>>, vector<1x8x128xf32>,
    %c99 = arith.constant 99 : index
    %c0_559 = arith.constant 0 : index
    %c0_560 = arith.constant 0 : index
    %1512 = vector.load %arg7[%c99, %c0_559, %c0_560] : memref<128x8x128xf32, #tpu.memory_space<vmem>>, vector<1x8x128xf32>
    %1513 = vector.shape_cast %1512 : vector<1x8x128xf32> to vector<8x128xf32>
    %1514 = vector.shape_cast %1460 : vector<8x128xf32> to vector<1x8x128xf32>
    tpu.vector_store %arg7[%c99, %c0_559, %c0_560], %1514 {strides = array<i32>} : memref<128x8x128xf32, #tpu.memory_space<vmem>>, vector<1x8x128xf32>,
    %c100 = arith.constant 100 : index
    %c0_561 = arith.constant 0 : index
    %c0_562 = arith.constant 0 : index
    %1515 = vector.load %arg7[%c100, %c0_561, %c0_562] : memref<128x8x128xf32, #tpu.memory_space<vmem>>, vector<1x8x128xf32>
    %1516 = vector.shape_cast %1515 : vector<1x8x128xf32> to vector<8x128xf32>
    %1517 = vector.shape_cast %1465 : vector<8x128xf32> to vector<1x8x128xf32>
    tpu.vector_store %arg7[%c100, %c0_561, %c0_562], %1517 {strides = array<i32>} : memref<128x8x128xf32, #tpu.memory_space<vmem>>, vector<1x8x128xf32>,
    %c101 = arith.constant 101 : index
    %c0_563 = arith.constant 0 : index
    %c0_564 = arith.constant 0 : index
    %1518 = vector.load %arg7[%c101, %c0_563, %c0_564] : memref<128x8x128xf32, #tpu.memory_space<vmem>>, vector<1x8x128xf32>
    %1519 = vector.shape_cast %1518 : vector<1x8x128xf32> to vector<8x128xf32>
    %1520 = vector.shape_cast %1470 : vector<8x128xf32> to vector<1x8x128xf32>
    tpu.vector_store %arg7[%c101, %c0_563, %c0_564], %1520 {strides = array<i32>} : memref<128x8x128xf32, #tpu.memory_space<vmem>>, vector<1x8x128xf32>,
    %c102 = arith.constant 102 : index
    %c0_565 = arith.constant 0 : index
    %c0_566 = arith.constant 0 : index
    %1521 = vector.load %arg7[%c102, %c0_565, %c0_566] : memref<128x8x128xf32, #tpu.memory_space<vmem>>, vector<1x8x128xf32>
    %1522 = vector.shape_cast %1521 : vector<1x8x128xf32> to vector<8x128xf32>
    %1523 = vector.shape_cast %1475 : vector<8x128xf32> to vector<1x8x128xf32>
    tpu.vector_store %arg7[%c102, %c0_565, %c0_566], %1523 {strides = array<i32>} : memref<128x8x128xf32, #tpu.memory_space<vmem>>, vector<1x8x128xf32>,
    %c103 = arith.constant 103 : index
    %c0_567 = arith.constant 0 : index
    %c0_568 = arith.constant 0 : index
    %1524 = vector.load %arg7[%c103, %c0_567, %c0_568] : memref<128x8x128xf32, #tpu.memory_space<vmem>>, vector<1x8x128xf32>
    %1525 = vector.shape_cast %1524 : vector<1x8x128xf32> to vector<8x128xf32>
    %1526 = vector.shape_cast %1481 : vector<8x128xf32> to vector<1x8x128xf32>
    tpu.vector_store %arg7[%c103, %c0_567, %c0_568], %1526 {strides = array<i32>} : memref<128x8x128xf32, #tpu.memory_space<vmem>>, vector<1x8x128xf32>,
    %c104 = arith.constant 104 : index
    %c0_569 = arith.constant 0 : index
    %c0_570 = arith.constant 0 : index
    %1527 = vector.load %arg7[%c104, %c0_569, %c0_570] : memref<128x8x128xf32, #tpu.memory_space<vmem>>, vector<1x8x128xf32>
    %1528 = vector.shape_cast %1527 : vector<1x8x128xf32> to vector<8x128xf32>
    %1529 = vector.shape_cast %1486 : vector<8x128xf32> to vector<1x8x128xf32>
    tpu.vector_store %arg7[%c104, %c0_569, %c0_570], %1529 {strides = array<i32>} : memref<128x8x128xf32, #tpu.memory_space<vmem>>, vector<1x8x128xf32>,
    %c105 = arith.constant 105 : index
    %c0_571 = arith.constant 0 : index
    %c0_572 = arith.constant 0 : index
    %1530 = vector.load %arg7[%c105, %c0_571, %c0_572] : memref<128x8x128xf32, #tpu.memory_space<vmem>>, vector<1x8x128xf32>
    %1531 = vector.shape_cast %1530 : vector<1x8x128xf32> to vector<8x128xf32>
    %1532 = vector.shape_cast %1491 : vector<8x128xf32> to vector<1x8x128xf32>
    tpu.vector_store %arg7[%c105, %c0_571, %c0_572], %1532 {strides = array<i32>} : memref<128x8x128xf32, #tpu.memory_space<vmem>>, vector<1x8x128xf32>,
    %c106 = arith.constant 106 : index
    %c0_573 = arith.constant 0 : index
    %c0_574 = arith.constant 0 : index
    %1533 = vector.load %arg7[%c106, %c0_573, %c0_574] : memref<128x8x128xf32, #tpu.memory_space<vmem>>, vector<1x8x128xf32>
    %1534 = vector.shape_cast %1533 : vector<1x8x128xf32> to vector<8x128xf32>
    %1535 = vector.shape_cast %1496 : vector<8x128xf32> to vector<1x8x128xf32>
    tpu.vector_store %arg7[%c106, %c0_573, %c0_574], %1535 {strides = array<i32>} : memref<128x8x128xf32, #tpu.memory_space<vmem>>, vector<1x8x128xf32>,
    %c107 = arith.constant 107 : index
    %c0_575 = arith.constant 0 : index
    %c0_576 = arith.constant 0 : index
    %1536 = vector.load %arg7[%c107, %c0_575, %c0_576] : memref<128x8x128xf32, #tpu.memory_space<vmem>>, vector<1x8x128xf32>
    %1537 = vector.shape_cast %1536 : vector<1x8x128xf32> to vector<8x128xf32>
    %1538 = vector.shape_cast %1502 : vector<8x128xf32> to vector<1x8x128xf32>
    tpu.vector_store %arg7[%c107, %c0_575, %c0_576], %1538 {strides = array<i32>} : memref<128x8x128xf32, #tpu.memory_space<vmem>>, vector<1x8x128xf32>,
    %c108 = arith.constant 108 : index
    %c0_577 = arith.constant 0 : index
    %c0_578 = arith.constant 0 : index
    %1539 = vector.load %arg7[%c108, %c0_577, %c0_578] : memref<128x8x128xf32, #tpu.memory_space<vmem>>, vector<1x8x128xf32>
    %1540 = vector.shape_cast %1539 : vector<1x8x128xf32> to vector<8x128xf32>
    %1541 = vector.shape_cast %0 : vector<8x128xf32> to vector<1x8x128xf32>
    tpu.vector_store %arg7[%c108, %c0_577, %c0_578], %1541 {strides = array<i32>} : memref<128x8x128xf32, #tpu.memory_space<vmem>>, vector<1x8x128xf32>,
    %c109 = arith.constant 109 : index
    %c0_579 = arith.constant 0 : index
    %c0_580 = arith.constant 0 : index
    %1542 = vector.load %arg7[%c109, %c0_579, %c0_580] : memref<128x8x128xf32, #tpu.memory_space<vmem>>, vector<1x8x128xf32>
    %1543 = vector.shape_cast %1542 : vector<1x8x128xf32> to vector<8x128xf32>
    %1544 = vector.shape_cast %0 : vector<8x128xf32> to vector<1x8x128xf32>
    tpu.vector_store %arg7[%c109, %c0_579, %c0_580], %1544 {strides = array<i32>} : memref<128x8x128xf32, #tpu.memory_space<vmem>>, vector<1x8x128xf32>,
    %c110 = arith.constant 110 : index
    %c0_581 = arith.constant 0 : index
    %c0_582 = arith.constant 0 : index
    %1545 = vector.load %arg7[%c110, %c0_581, %c0_582] : memref<128x8x128xf32, #tpu.memory_space<vmem>>, vector<1x8x128xf32>
    %1546 = vector.shape_cast %1545 : vector<1x8x128xf32> to vector<8x128xf32>
    %1547 = vector.shape_cast %0 : vector<8x128xf32> to vector<1x8x128xf32>
    tpu.vector_store %arg7[%c110, %c0_581, %c0_582], %1547 {strides = array<i32>} : memref<128x8x128xf32, #tpu.memory_space<vmem>>, vector<1x8x128xf32>,
    %c111 = arith.constant 111 : index
    %c0_583 = arith.constant 0 : index
    %c0_584 = arith.constant 0 : index
    %1548 = vector.load %arg7[%c111, %c0_583, %c0_584] : memref<128x8x128xf32, #tpu.memory_space<vmem>>, vector<1x8x128xf32>
    %1549 = vector.shape_cast %1548 : vector<1x8x128xf32> to vector<8x128xf32>
    %1550 = vector.shape_cast %1 : vector<8x128xf32> to vector<1x8x128xf32>
    tpu.vector_store %arg7[%c111, %c0_583, %c0_584], %1550 {strides = array<i32>} : memref<128x8x128xf32, #tpu.memory_space<vmem>>, vector<1x8x128xf32>,
    %c84_585 = arith.constant 84 : index
    %c0_586 = arith.constant 0 : index
    %c0_587 = arith.constant 0 : index
    %1551 = vector.load %arg4[%c84_585, %c0_586, %c0_587] : memref<112x8x128xf32, #tpu.memory_space<vmem>>, vector<14x8x128xf32>
    %1552 = vector.shape_cast %1444 : vector<8x128xf32> to vector<1x8x128xf32>
    %1553 = vector.broadcast %1552 : vector<1x8x128xf32> to vector<14x8x128xf32>
    %1554 = arith.mulf %1553, %26 : vector<14x8x128xf32>
    %1555 = vector.shape_cast %1449 : vector<8x128xf32> to vector<1x8x128xf32>
    %1556 = vector.broadcast %1555 : vector<1x8x128xf32> to vector<14x8x128xf32>
    %1557 = arith.mulf %1556, %27 : vector<14x8x128xf32>
    %1558 = arith.addf %1554, %1557 : vector<14x8x128xf32>
    %1559 = vector.shape_cast %1454 : vector<8x128xf32> to vector<1x8x128xf32>
    %1560 = vector.broadcast %1559 : vector<1x8x128xf32> to vector<14x8x128xf32>
    %1561 = arith.mulf %1560, %28 : vector<14x8x128xf32>
    %1562 = arith.addf %1558, %1561 : vector<14x8x128xf32>
    %1563 = vector.shape_cast %1460 : vector<8x128xf32> to vector<1x8x128xf32>
    %1564 = vector.broadcast %1563 : vector<1x8x128xf32> to vector<14x8x128xf32>
    %1565 = arith.addf %1562, %1564 : vector<14x8x128xf32>
    %1566 = arith.mulf %1551, %1565 : vector<14x8x128xf32>
    %1567 = arith.addf %1298, %1566 : vector<14x8x128xf32>
    %1568 = vector.shape_cast %1465 : vector<8x128xf32> to vector<1x8x128xf32>
    %1569 = vector.broadcast %1568 : vector<1x8x128xf32> to vector<14x8x128xf32>
    %1570 = arith.mulf %1569, %26 : vector<14x8x128xf32>
    %1571 = vector.shape_cast %1470 : vector<8x128xf32> to vector<1x8x128xf32>
    %1572 = vector.broadcast %1571 : vector<1x8x128xf32> to vector<14x8x128xf32>
    %1573 = arith.mulf %1572, %27 : vector<14x8x128xf32>
    %1574 = arith.addf %1570, %1573 : vector<14x8x128xf32>
    %1575 = vector.shape_cast %1475 : vector<8x128xf32> to vector<1x8x128xf32>
    %1576 = vector.broadcast %1575 : vector<1x8x128xf32> to vector<14x8x128xf32>
    %1577 = arith.mulf %1576, %28 : vector<14x8x128xf32>
    %1578 = arith.addf %1574, %1577 : vector<14x8x128xf32>
    %1579 = vector.shape_cast %1481 : vector<8x128xf32> to vector<1x8x128xf32>
    %1580 = vector.broadcast %1579 : vector<1x8x128xf32> to vector<14x8x128xf32>
    %1581 = arith.addf %1578, %1580 : vector<14x8x128xf32>
    %1582 = arith.mulf %1551, %1581 : vector<14x8x128xf32>
    %1583 = arith.addf %1314, %1582 : vector<14x8x128xf32>
    %1584 = vector.shape_cast %1486 : vector<8x128xf32> to vector<1x8x128xf32>
    %1585 = vector.broadcast %1584 : vector<1x8x128xf32> to vector<14x8x128xf32>
    %1586 = arith.mulf %1585, %26 : vector<14x8x128xf32>
    %1587 = vector.shape_cast %1491 : vector<8x128xf32> to vector<1x8x128xf32>
    %1588 = vector.broadcast %1587 : vector<1x8x128xf32> to vector<14x8x128xf32>
    %1589 = arith.mulf %1588, %27 : vector<14x8x128xf32>
    %1590 = arith.addf %1586, %1589 : vector<14x8x128xf32>
    %1591 = vector.shape_cast %1496 : vector<8x128xf32> to vector<1x8x128xf32>
    %1592 = vector.broadcast %1591 : vector<1x8x128xf32> to vector<14x8x128xf32>
    %1593 = arith.mulf %1592, %28 : vector<14x8x128xf32>
    %1594 = arith.addf %1590, %1593 : vector<14x8x128xf32>
    %1595 = vector.shape_cast %1502 : vector<8x128xf32> to vector<1x8x128xf32>
    %1596 = vector.broadcast %1595 : vector<1x8x128xf32> to vector<14x8x128xf32>
    %1597 = arith.addf %1594, %1596 : vector<14x8x128xf32>
    %1598 = arith.mulf %1551, %1597 : vector<14x8x128xf32>
    %1599 = arith.addf %1330, %1598 : vector<14x8x128xf32>
    %c14_588 = arith.constant 14 : index
    %c0_589 = arith.constant 0 : index
    %c0_590 = arith.constant 0 : index
    %1600 = vector.load %arg2[%c14_588, %c0_589, %c0_590] : memref<16x8x128xf32, #tpu.memory_space<vmem>>, vector<1x8x128xf32>
    %1601 = vector.shape_cast %1600 : vector<1x8x128xf32> to vector<8x128xf32>
    %c15_591 = arith.constant 15 : index
    %c0_592 = arith.constant 0 : index
    %c0_593 = arith.constant 0 : index
    %1602 = vector.load %arg2[%c15_591, %c0_592, %c0_593] : memref<16x8x128xf32, #tpu.memory_space<vmem>>, vector<1x8x128xf32>
    %1603 = vector.shape_cast %1602 : vector<1x8x128xf32> to vector<8x128xf32>
    %c84_594 = arith.constant 84 : index
    %c0_595 = arith.constant 0 : index
    %c0_596 = arith.constant 0 : index
    %1604 = vector.load %arg1[%c84_594, %c0_595, %c0_596] : memref<96x8x128xf32, #tpu.memory_space<vmem>>, vector<1x8x128xf32>
    %1605 = vector.shape_cast %1604 : vector<1x8x128xf32> to vector<8x128xf32>
    %c85_597 = arith.constant 85 : index
    %c0_598 = arith.constant 0 : index
    %c0_599 = arith.constant 0 : index
    %1606 = vector.load %arg1[%c85_597, %c0_598, %c0_599] : memref<96x8x128xf32, #tpu.memory_space<vmem>>, vector<1x8x128xf32>
    %1607 = vector.shape_cast %1606 : vector<1x8x128xf32> to vector<8x128xf32>
    %c86_600 = arith.constant 86 : index
    %c0_601 = arith.constant 0 : index
    %c0_602 = arith.constant 0 : index
    %1608 = vector.load %arg1[%c86_600, %c0_601, %c0_602] : memref<96x8x128xf32, #tpu.memory_space<vmem>>, vector<1x8x128xf32>
    %1609 = vector.shape_cast %1608 : vector<1x8x128xf32> to vector<8x128xf32>
    %c87_603 = arith.constant 87 : index
    %c0_604 = arith.constant 0 : index
    %c0_605 = arith.constant 0 : index
    %1610 = vector.load %arg1[%c87_603, %c0_604, %c0_605] : memref<96x8x128xf32, #tpu.memory_space<vmem>>, vector<1x8x128xf32>
    %1611 = vector.shape_cast %1610 : vector<1x8x128xf32> to vector<8x128xf32>
    %1612 = arith.mulf %1603, %1607 : vector<8x128xf32>
    %1613 = arith.mulf %1601, %1609 : vector<8x128xf32>
    %1614 = arith.addf %1612, %1613 : vector<8x128xf32>
    %1615 = arith.mulf %1603, %1609 : vector<8x128xf32>
    %1616 = arith.mulf %1601, %1607 : vector<8x128xf32>
    %1617 = arith.subf %1615, %1616 : vector<8x128xf32>
    %c88_606 = arith.constant 88 : index
    %c0_607 = arith.constant 0 : index
    %c0_608 = arith.constant 0 : index
    %1618 = vector.load %arg1[%c88_606, %c0_607, %c0_608] : memref<96x8x128xf32, #tpu.memory_space<vmem>>, vector<1x8x128xf32>
    %1619 = vector.shape_cast %1618 : vector<1x8x128xf32> to vector<8x128xf32>
    %c89_609 = arith.constant 89 : index
    %c0_610 = arith.constant 0 : index
    %c0_611 = arith.constant 0 : index
    %1620 = vector.load %arg1[%c89_609, %c0_610, %c0_611] : memref<96x8x128xf32, #tpu.memory_space<vmem>>, vector<1x8x128xf32>
    %1621 = vector.shape_cast %1620 : vector<1x8x128xf32> to vector<8x128xf32>
    %c90_612 = arith.constant 90 : index
    %c0_613 = arith.constant 0 : index
    %c0_614 = arith.constant 0 : index
    %1622 = vector.load %arg1[%c90_612, %c0_613, %c0_614] : memref<96x8x128xf32, #tpu.memory_space<vmem>>, vector<1x8x128xf32>
    %1623 = vector.shape_cast %1622 : vector<1x8x128xf32> to vector<8x128xf32>
    %c91_615 = arith.constant 91 : index
    %c0_616 = arith.constant 0 : index
    %c0_617 = arith.constant 0 : index
    %1624 = vector.load %arg1[%c91_615, %c0_616, %c0_617] : memref<96x8x128xf32, #tpu.memory_space<vmem>>, vector<1x8x128xf32>
    %1625 = vector.shape_cast %1624 : vector<1x8x128xf32> to vector<8x128xf32>
    %1626 = arith.mulf %1603, %1621 : vector<8x128xf32>
    %1627 = arith.mulf %1601, %1623 : vector<8x128xf32>
    %1628 = arith.addf %1626, %1627 : vector<8x128xf32>
    %1629 = arith.mulf %1603, %1623 : vector<8x128xf32>
    %1630 = arith.mulf %1601, %1621 : vector<8x128xf32>
    %1631 = arith.subf %1629, %1630 : vector<8x128xf32>
    %c92_618 = arith.constant 92 : index
    %c0_619 = arith.constant 0 : index
    %c0_620 = arith.constant 0 : index
    %1632 = vector.load %arg1[%c92_618, %c0_619, %c0_620] : memref<96x8x128xf32, #tpu.memory_space<vmem>>, vector<1x8x128xf32>
    %1633 = vector.shape_cast %1632 : vector<1x8x128xf32> to vector<8x128xf32>
    %c93_621 = arith.constant 93 : index
    %c0_622 = arith.constant 0 : index
    %c0_623 = arith.constant 0 : index
    %1634 = vector.load %arg1[%c93_621, %c0_622, %c0_623] : memref<96x8x128xf32, #tpu.memory_space<vmem>>, vector<1x8x128xf32>
    %1635 = vector.shape_cast %1634 : vector<1x8x128xf32> to vector<8x128xf32>
    %c94_624 = arith.constant 94 : index
    %c0_625 = arith.constant 0 : index
    %c0_626 = arith.constant 0 : index
    %1636 = vector.load %arg1[%c94_624, %c0_625, %c0_626] : memref<96x8x128xf32, #tpu.memory_space<vmem>>, vector<1x8x128xf32>
    %1637 = vector.shape_cast %1636 : vector<1x8x128xf32> to vector<8x128xf32>
    %c95_627 = arith.constant 95 : index
    %c0_628 = arith.constant 0 : index
    %c0_629 = arith.constant 0 : index
    %1638 = vector.load %arg1[%c95_627, %c0_628, %c0_629] : memref<96x8x128xf32, #tpu.memory_space<vmem>>, vector<1x8x128xf32>
    %1639 = vector.shape_cast %1638 : vector<1x8x128xf32> to vector<8x128xf32>
    %1640 = arith.mulf %1603, %1635 : vector<8x128xf32>
    %1641 = arith.mulf %1601, %1637 : vector<8x128xf32>
    %1642 = arith.addf %1640, %1641 : vector<8x128xf32>
    %1643 = arith.mulf %1603, %1637 : vector<8x128xf32>
    %1644 = arith.mulf %1601, %1635 : vector<8x128xf32>
    %1645 = arith.subf %1643, %1644 : vector<8x128xf32>
    %1646 = arith.mulf %1381, %1605 : vector<8x128xf32>
    %1647 = arith.mulf %1386, %1619 : vector<8x128xf32>
    %1648 = arith.addf %1646, %1647 : vector<8x128xf32>
    %1649 = arith.mulf %1391, %1633 : vector<8x128xf32>
    %1650 = arith.addf %1648, %1649 : vector<8x128xf32>
    %1651 = arith.mulf %1381, %1614 : vector<8x128xf32>
    %1652 = arith.mulf %1386, %1628 : vector<8x128xf32>
    %1653 = arith.addf %1651, %1652 : vector<8x128xf32>
    %1654 = arith.mulf %1391, %1642 : vector<8x128xf32>
    %1655 = arith.addf %1653, %1654 : vector<8x128xf32>
    %1656 = arith.mulf %1381, %1617 : vector<8x128xf32>
    %1657 = arith.mulf %1386, %1631 : vector<8x128xf32>
    %1658 = arith.addf %1656, %1657 : vector<8x128xf32>
    %1659 = arith.mulf %1391, %1645 : vector<8x128xf32>
    %1660 = arith.addf %1658, %1659 : vector<8x128xf32>
    %1661 = arith.mulf %1381, %1611 : vector<8x128xf32>
    %1662 = arith.mulf %1386, %1625 : vector<8x128xf32>
    %1663 = arith.addf %1661, %1662 : vector<8x128xf32>
    %1664 = arith.mulf %1391, %1639 : vector<8x128xf32>
    %1665 = arith.addf %1663, %1664 : vector<8x128xf32>
    %1666 = arith.addf %1665, %1397 : vector<8x128xf32>
    %1667 = arith.mulf %1402, %1605 : vector<8x128xf32>
    %1668 = arith.mulf %1407, %1619 : vector<8x128xf32>
    %1669 = arith.addf %1667, %1668 : vector<8x128xf32>
    %1670 = arith.mulf %1412, %1633 : vector<8x128xf32>
    %1671 = arith.addf %1669, %1670 : vector<8x128xf32>
    %1672 = arith.mulf %1402, %1614 : vector<8x128xf32>
    %1673 = arith.mulf %1407, %1628 : vector<8x128xf32>
    %1674 = arith.addf %1672, %1673 : vector<8x128xf32>
    %1675 = arith.mulf %1412, %1642 : vector<8x128xf32>
    %1676 = arith.addf %1674, %1675 : vector<8x128xf32>
    %1677 = arith.mulf %1402, %1617 : vector<8x128xf32>
    %1678 = arith.mulf %1407, %1631 : vector<8x128xf32>
    %1679 = arith.addf %1677, %1678 : vector<8x128xf32>
    %1680 = arith.mulf %1412, %1645 : vector<8x128xf32>
    %1681 = arith.addf %1679, %1680 : vector<8x128xf32>
    %1682 = arith.mulf %1402, %1611 : vector<8x128xf32>
    %1683 = arith.mulf %1407, %1625 : vector<8x128xf32>
    %1684 = arith.addf %1682, %1683 : vector<8x128xf32>
    %1685 = arith.mulf %1412, %1639 : vector<8x128xf32>
    %1686 = arith.addf %1684, %1685 : vector<8x128xf32>
    %1687 = arith.addf %1686, %1418 : vector<8x128xf32>
    %1688 = arith.mulf %1423, %1605 : vector<8x128xf32>
    %1689 = arith.mulf %1428, %1619 : vector<8x128xf32>
    %1690 = arith.addf %1688, %1689 : vector<8x128xf32>
    %1691 = arith.mulf %1433, %1633 : vector<8x128xf32>
    %1692 = arith.addf %1690, %1691 : vector<8x128xf32>
    %1693 = arith.mulf %1423, %1614 : vector<8x128xf32>
    %1694 = arith.mulf %1428, %1628 : vector<8x128xf32>
    %1695 = arith.addf %1693, %1694 : vector<8x128xf32>
    %1696 = arith.mulf %1433, %1642 : vector<8x128xf32>
    %1697 = arith.addf %1695, %1696 : vector<8x128xf32>
    %1698 = arith.mulf %1423, %1617 : vector<8x128xf32>
    %1699 = arith.mulf %1428, %1631 : vector<8x128xf32>
    %1700 = arith.addf %1698, %1699 : vector<8x128xf32>
    %1701 = arith.mulf %1433, %1645 : vector<8x128xf32>
    %1702 = arith.addf %1700, %1701 : vector<8x128xf32>
    %1703 = arith.mulf %1423, %1611 : vector<8x128xf32>
    %1704 = arith.mulf %1428, %1625 : vector<8x128xf32>
    %1705 = arith.addf %1703, %1704 : vector<8x128xf32>
    %1706 = arith.mulf %1433, %1639 : vector<8x128xf32>
    %1707 = arith.addf %1705, %1706 : vector<8x128xf32>
    %1708 = arith.addf %1707, %1439 : vector<8x128xf32>
    %1709 = arith.mulf %3, %1650 : vector<8x128xf32>
    %1710 = arith.mulf %5, %1671 : vector<8x128xf32>
    %1711 = arith.addf %1709, %1710 : vector<8x128xf32>
    %1712 = arith.mulf %7, %1692 : vector<8x128xf32>
    %1713 = arith.addf %1711, %1712 : vector<8x128xf32>
    %1714 = arith.mulf %3, %1655 : vector<8x128xf32>
    %1715 = arith.mulf %5, %1676 : vector<8x128xf32>
    %1716 = arith.addf %1714, %1715 : vector<8x128xf32>
    %1717 = arith.mulf %7, %1697 : vector<8x128xf32>
    %1718 = arith.addf %1716, %1717 : vector<8x128xf32>
    %1719 = arith.mulf %3, %1660 : vector<8x128xf32>
    %1720 = arith.mulf %5, %1681 : vector<8x128xf32>
    %1721 = arith.addf %1719, %1720 : vector<8x128xf32>
    %1722 = arith.mulf %7, %1702 : vector<8x128xf32>
    %1723 = arith.addf %1721, %1722 : vector<8x128xf32>
    %1724 = arith.mulf %3, %1666 : vector<8x128xf32>
    %1725 = arith.mulf %5, %1687 : vector<8x128xf32>
    %1726 = arith.addf %1724, %1725 : vector<8x128xf32>
    %1727 = arith.mulf %7, %1708 : vector<8x128xf32>
    %1728 = arith.addf %1726, %1727 : vector<8x128xf32>
    %1729 = arith.addf %1728, %9 : vector<8x128xf32>
    %1730 = arith.mulf %11, %1650 : vector<8x128xf32>
    %1731 = arith.mulf %13, %1671 : vector<8x128xf32>
    %1732 = arith.addf %1730, %1731 : vector<8x128xf32>
    %1733 = arith.mulf %15, %1692 : vector<8x128xf32>
    %1734 = arith.addf %1732, %1733 : vector<8x128xf32>
    %1735 = arith.mulf %11, %1655 : vector<8x128xf32>
    %1736 = arith.mulf %13, %1676 : vector<8x128xf32>
    %1737 = arith.addf %1735, %1736 : vector<8x128xf32>
    %1738 = arith.mulf %15, %1697 : vector<8x128xf32>
    %1739 = arith.addf %1737, %1738 : vector<8x128xf32>
    %1740 = arith.mulf %11, %1660 : vector<8x128xf32>
    %1741 = arith.mulf %13, %1681 : vector<8x128xf32>
    %1742 = arith.addf %1740, %1741 : vector<8x128xf32>
    %1743 = arith.mulf %15, %1702 : vector<8x128xf32>
    %1744 = arith.addf %1742, %1743 : vector<8x128xf32>
    %1745 = arith.mulf %11, %1666 : vector<8x128xf32>
    %1746 = arith.mulf %13, %1687 : vector<8x128xf32>
    %1747 = arith.addf %1745, %1746 : vector<8x128xf32>
    %1748 = arith.mulf %15, %1708 : vector<8x128xf32>
    %1749 = arith.addf %1747, %1748 : vector<8x128xf32>
    %1750 = arith.addf %1749, %17 : vector<8x128xf32>
    %1751 = arith.mulf %19, %1650 : vector<8x128xf32>
    %1752 = arith.mulf %21, %1671 : vector<8x128xf32>
    %1753 = arith.addf %1751, %1752 : vector<8x128xf32>
    %1754 = arith.mulf %23, %1692 : vector<8x128xf32>
    %1755 = arith.addf %1753, %1754 : vector<8x128xf32>
    %1756 = arith.mulf %19, %1655 : vector<8x128xf32>
    %1757 = arith.mulf %21, %1676 : vector<8x128xf32>
    %1758 = arith.addf %1756, %1757 : vector<8x128xf32>
    %1759 = arith.mulf %23, %1697 : vector<8x128xf32>
    %1760 = arith.addf %1758, %1759 : vector<8x128xf32>
    %1761 = arith.mulf %19, %1660 : vector<8x128xf32>
    %1762 = arith.mulf %21, %1681 : vector<8x128xf32>
    %1763 = arith.addf %1761, %1762 : vector<8x128xf32>
    %1764 = arith.mulf %23, %1702 : vector<8x128xf32>
    %1765 = arith.addf %1763, %1764 : vector<8x128xf32>
    %1766 = arith.mulf %19, %1666 : vector<8x128xf32>
    %1767 = arith.mulf %21, %1687 : vector<8x128xf32>
    %1768 = arith.addf %1766, %1767 : vector<8x128xf32>
    %1769 = arith.mulf %23, %1708 : vector<8x128xf32>
    %1770 = arith.addf %1768, %1769 : vector<8x128xf32>
    %1771 = arith.addf %1770, %25 : vector<8x128xf32>
    %c112 = arith.constant 112 : index
    %c0_630 = arith.constant 0 : index
    %c0_631 = arith.constant 0 : index
    %1772 = vector.load %arg7[%c112, %c0_630, %c0_631] : memref<128x8x128xf32, #tpu.memory_space<vmem>>, vector<1x8x128xf32>
    %1773 = vector.shape_cast %1772 : vector<1x8x128xf32> to vector<8x128xf32>
    %1774 = vector.shape_cast %1713 : vector<8x128xf32> to vector<1x8x128xf32>
    tpu.vector_store %arg7[%c112, %c0_630, %c0_631], %1774 {strides = array<i32>} : memref<128x8x128xf32, #tpu.memory_space<vmem>>, vector<1x8x128xf32>,
    %c113 = arith.constant 113 : index
    %c0_632 = arith.constant 0 : index
    %c0_633 = arith.constant 0 : index
    %1775 = vector.load %arg7[%c113, %c0_632, %c0_633] : memref<128x8x128xf32, #tpu.memory_space<vmem>>, vector<1x8x128xf32>
    %1776 = vector.shape_cast %1775 : vector<1x8x128xf32> to vector<8x128xf32>
    %1777 = vector.shape_cast %1718 : vector<8x128xf32> to vector<1x8x128xf32>
    tpu.vector_store %arg7[%c113, %c0_632, %c0_633], %1777 {strides = array<i32>} : memref<128x8x128xf32, #tpu.memory_space<vmem>>, vector<1x8x128xf32>,
    %c114 = arith.constant 114 : index
    %c0_634 = arith.constant 0 : index
    %c0_635 = arith.constant 0 : index
    %1778 = vector.load %arg7[%c114, %c0_634, %c0_635] : memref<128x8x128xf32, #tpu.memory_space<vmem>>, vector<1x8x128xf32>
    %1779 = vector.shape_cast %1778 : vector<1x8x128xf32> to vector<8x128xf32>
    %1780 = vector.shape_cast %1723 : vector<8x128xf32> to vector<1x8x128xf32>
    tpu.vector_store %arg7[%c114, %c0_634, %c0_635], %1780 {strides = array<i32>} : memref<128x8x128xf32, #tpu.memory_space<vmem>>, vector<1x8x128xf32>,
    %c115 = arith.constant 115 : index
    %c0_636 = arith.constant 0 : index
    %c0_637 = arith.constant 0 : index
    %1781 = vector.load %arg7[%c115, %c0_636, %c0_637] : memref<128x8x128xf32, #tpu.memory_space<vmem>>, vector<1x8x128xf32>
    %1782 = vector.shape_cast %1781 : vector<1x8x128xf32> to vector<8x128xf32>
    %1783 = vector.shape_cast %1729 : vector<8x128xf32> to vector<1x8x128xf32>
    tpu.vector_store %arg7[%c115, %c0_636, %c0_637], %1783 {strides = array<i32>} : memref<128x8x128xf32, #tpu.memory_space<vmem>>, vector<1x8x128xf32>,
    %c116 = arith.constant 116 : index
    %c0_638 = arith.constant 0 : index
    %c0_639 = arith.constant 0 : index
    %1784 = vector.load %arg7[%c116, %c0_638, %c0_639] : memref<128x8x128xf32, #tpu.memory_space<vmem>>, vector<1x8x128xf32>
    %1785 = vector.shape_cast %1784 : vector<1x8x128xf32> to vector<8x128xf32>
    %1786 = vector.shape_cast %1734 : vector<8x128xf32> to vector<1x8x128xf32>
    tpu.vector_store %arg7[%c116, %c0_638, %c0_639], %1786 {strides = array<i32>} : memref<128x8x128xf32, #tpu.memory_space<vmem>>, vector<1x8x128xf32>,
    %c117 = arith.constant 117 : index
    %c0_640 = arith.constant 0 : index
    %c0_641 = arith.constant 0 : index
    %1787 = vector.load %arg7[%c117, %c0_640, %c0_641] : memref<128x8x128xf32, #tpu.memory_space<vmem>>, vector<1x8x128xf32>
    %1788 = vector.shape_cast %1787 : vector<1x8x128xf32> to vector<8x128xf32>
    %1789 = vector.shape_cast %1739 : vector<8x128xf32> to vector<1x8x128xf32>
    tpu.vector_store %arg7[%c117, %c0_640, %c0_641], %1789 {strides = array<i32>} : memref<128x8x128xf32, #tpu.memory_space<vmem>>, vector<1x8x128xf32>,
    %c118 = arith.constant 118 : index
    %c0_642 = arith.constant 0 : index
    %c0_643 = arith.constant 0 : index
    %1790 = vector.load %arg7[%c118, %c0_642, %c0_643] : memref<128x8x128xf32, #tpu.memory_space<vmem>>, vector<1x8x128xf32>
    %1791 = vector.shape_cast %1790 : vector<1x8x128xf32> to vector<8x128xf32>
    %1792 = vector.shape_cast %1744 : vector<8x128xf32> to vector<1x8x128xf32>
    tpu.vector_store %arg7[%c118, %c0_642, %c0_643], %1792 {strides = array<i32>} : memref<128x8x128xf32, #tpu.memory_space<vmem>>, vector<1x8x128xf32>,
    %c119 = arith.constant 119 : index
    %c0_644 = arith.constant 0 : index
    %c0_645 = arith.constant 0 : index
    %1793 = vector.load %arg7[%c119, %c0_644, %c0_645] : memref<128x8x128xf32, #tpu.memory_space<vmem>>, vector<1x8x128xf32>
    %1794 = vector.shape_cast %1793 : vector<1x8x128xf32> to vector<8x128xf32>
    %1795 = vector.shape_cast %1750 : vector<8x128xf32> to vector<1x8x128xf32>
    tpu.vector_store %arg7[%c119, %c0_644, %c0_645], %1795 {strides = array<i32>} : memref<128x8x128xf32, #tpu.memory_space<vmem>>, vector<1x8x128xf32>,
    %c120 = arith.constant 120 : index
    %c0_646 = arith.constant 0 : index
    %c0_647 = arith.constant 0 : index
    %1796 = vector.load %arg7[%c120, %c0_646, %c0_647] : memref<128x8x128xf32, #tpu.memory_space<vmem>>, vector<1x8x128xf32>
    %1797 = vector.shape_cast %1796 : vector<1x8x128xf32> to vector<8x128xf32>
    %1798 = vector.shape_cast %1755 : vector<8x128xf32> to vector<1x8x128xf32>
    tpu.vector_store %arg7[%c120, %c0_646, %c0_647], %1798 {strides = array<i32>} : memref<128x8x128xf32, #tpu.memory_space<vmem>>, vector<1x8x128xf32>,
    %c121 = arith.constant 121 : index
    %c0_648 = arith.constant 0 : index
    %c0_649 = arith.constant 0 : index
    %1799 = vector.load %arg7[%c121, %c0_648, %c0_649] : memref<128x8x128xf32, #tpu.memory_space<vmem>>, vector<1x8x128xf32>
    %1800 = vector.shape_cast %1799 : vector<1x8x128xf32> to vector<8x128xf32>
    %1801 = vector.shape_cast %1760 : vector<8x128xf32> to vector<1x8x128xf32>
    tpu.vector_store %arg7[%c121, %c0_648, %c0_649], %1801 {strides = array<i32>} : memref<128x8x128xf32, #tpu.memory_space<vmem>>, vector<1x8x128xf32>,
    %c122 = arith.constant 122 : index
    %c0_650 = arith.constant 0 : index
    %c0_651 = arith.constant 0 : index
    %1802 = vector.load %arg7[%c122, %c0_650, %c0_651] : memref<128x8x128xf32, #tpu.memory_space<vmem>>, vector<1x8x128xf32>
    %1803 = vector.shape_cast %1802 : vector<1x8x128xf32> to vector<8x128xf32>
    %1804 = vector.shape_cast %1765 : vector<8x128xf32> to vector<1x8x128xf32>
    tpu.vector_store %arg7[%c122, %c0_650, %c0_651], %1804 {strides = array<i32>} : memref<128x8x128xf32, #tpu.memory_space<vmem>>, vector<1x8x128xf32>,
    %c123 = arith.constant 123 : index
    %c0_652 = arith.constant 0 : index
    %c0_653 = arith.constant 0 : index
    %1805 = vector.load %arg7[%c123, %c0_652, %c0_653] : memref<128x8x128xf32, #tpu.memory_space<vmem>>, vector<1x8x128xf32>
    %1806 = vector.shape_cast %1805 : vector<1x8x128xf32> to vector<8x128xf32>
    %1807 = vector.shape_cast %1771 : vector<8x128xf32> to vector<1x8x128xf32>
    tpu.vector_store %arg7[%c123, %c0_652, %c0_653], %1807 {strides = array<i32>} : memref<128x8x128xf32, #tpu.memory_space<vmem>>, vector<1x8x128xf32>,
    %c124 = arith.constant 124 : index
    %c0_654 = arith.constant 0 : index
    %c0_655 = arith.constant 0 : index
    %1808 = vector.load %arg7[%c124, %c0_654, %c0_655] : memref<128x8x128xf32, #tpu.memory_space<vmem>>, vector<1x8x128xf32>
    %1809 = vector.shape_cast %1808 : vector<1x8x128xf32> to vector<8x128xf32>
    %1810 = vector.shape_cast %0 : vector<8x128xf32> to vector<1x8x128xf32>
    tpu.vector_store %arg7[%c124, %c0_654, %c0_655], %1810 {strides = array<i32>} : memref<128x8x128xf32, #tpu.memory_space<vmem>>, vector<1x8x128xf32>,
    %c125 = arith.constant 125 : index
    %c0_656 = arith.constant 0 : index
    %c0_657 = arith.constant 0 : index
    %1811 = vector.load %arg7[%c125, %c0_656, %c0_657] : memref<128x8x128xf32, #tpu.memory_space<vmem>>, vector<1x8x128xf32>
    %1812 = vector.shape_cast %1811 : vector<1x8x128xf32> to vector<8x128xf32>
    %1813 = vector.shape_cast %0 : vector<8x128xf32> to vector<1x8x128xf32>
    tpu.vector_store %arg7[%c125, %c0_656, %c0_657], %1813 {strides = array<i32>} : memref<128x8x128xf32, #tpu.memory_space<vmem>>, vector<1x8x128xf32>,
    %c126 = arith.constant 126 : index
    %c0_658 = arith.constant 0 : index
    %c0_659 = arith.constant 0 : index
    %1814 = vector.load %arg7[%c126, %c0_658, %c0_659] : memref<128x8x128xf32, #tpu.memory_space<vmem>>, vector<1x8x128xf32>
    %1815 = vector.shape_cast %1814 : vector<1x8x128xf32> to vector<8x128xf32>
    %1816 = vector.shape_cast %0 : vector<8x128xf32> to vector<1x8x128xf32>
    tpu.vector_store %arg7[%c126, %c0_658, %c0_659], %1816 {strides = array<i32>} : memref<128x8x128xf32, #tpu.memory_space<vmem>>, vector<1x8x128xf32>,
    %c127 = arith.constant 127 : index
    %c0_660 = arith.constant 0 : index
    %c0_661 = arith.constant 0 : index
    %1817 = vector.load %arg7[%c127, %c0_660, %c0_661] : memref<128x8x128xf32, #tpu.memory_space<vmem>>, vector<1x8x128xf32>
    %1818 = vector.shape_cast %1817 : vector<1x8x128xf32> to vector<8x128xf32>
    %1819 = vector.shape_cast %1 : vector<8x128xf32> to vector<1x8x128xf32>
    tpu.vector_store %arg7[%c127, %c0_660, %c0_661], %1819 {strides = array<i32>} : memref<128x8x128xf32, #tpu.memory_space<vmem>>, vector<1x8x128xf32>,
    %c98_662 = arith.constant 98 : index
    %c0_663 = arith.constant 0 : index
    %c0_664 = arith.constant 0 : index
    %1820 = vector.load %arg4[%c98_662, %c0_663, %c0_664] : memref<112x8x128xf32, #tpu.memory_space<vmem>>, vector<14x8x128xf32>
    %1821 = vector.shape_cast %1713 : vector<8x128xf32> to vector<1x8x128xf32>
    %1822 = vector.broadcast %1821 : vector<1x8x128xf32> to vector<14x8x128xf32>
    %1823 = arith.mulf %1822, %26 : vector<14x8x128xf32>
    %1824 = vector.shape_cast %1718 : vector<8x128xf32> to vector<1x8x128xf32>
    %1825 = vector.broadcast %1824 : vector<1x8x128xf32> to vector<14x8x128xf32>
    %1826 = arith.mulf %1825, %27 : vector<14x8x128xf32>
    %1827 = arith.addf %1823, %1826 : vector<14x8x128xf32>
    %1828 = vector.shape_cast %1723 : vector<8x128xf32> to vector<1x8x128xf32>
    %1829 = vector.broadcast %1828 : vector<1x8x128xf32> to vector<14x8x128xf32>
    %1830 = arith.mulf %1829, %28 : vector<14x8x128xf32>
    %1831 = arith.addf %1827, %1830 : vector<14x8x128xf32>
    %1832 = vector.shape_cast %1729 : vector<8x128xf32> to vector<1x8x128xf32>
    %1833 = vector.broadcast %1832 : vector<1x8x128xf32> to vector<14x8x128xf32>
    %1834 = arith.addf %1831, %1833 : vector<14x8x128xf32>
    %1835 = arith.mulf %1820, %1834 : vector<14x8x128xf32>
    %1836 = arith.addf %1567, %1835 : vector<14x8x128xf32>
    %1837 = vector.shape_cast %1734 : vector<8x128xf32> to vector<1x8x128xf32>
    %1838 = vector.broadcast %1837 : vector<1x8x128xf32> to vector<14x8x128xf32>
    %1839 = arith.mulf %1838, %26 : vector<14x8x128xf32>
    %1840 = vector.shape_cast %1739 : vector<8x128xf32> to vector<1x8x128xf32>
    %1841 = vector.broadcast %1840 : vector<1x8x128xf32> to vector<14x8x128xf32>
    %1842 = arith.mulf %1841, %27 : vector<14x8x128xf32>
    %1843 = arith.addf %1839, %1842 : vector<14x8x128xf32>
    %1844 = vector.shape_cast %1744 : vector<8x128xf32> to vector<1x8x128xf32>
    %1845 = vector.broadcast %1844 : vector<1x8x128xf32> to vector<14x8x128xf32>
    %1846 = arith.mulf %1845, %28 : vector<14x8x128xf32>
    %1847 = arith.addf %1843, %1846 : vector<14x8x128xf32>
    %1848 = vector.shape_cast %1750 : vector<8x128xf32> to vector<1x8x128xf32>
    %1849 = vector.broadcast %1848 : vector<1x8x128xf32> to vector<14x8x128xf32>
    %1850 = arith.addf %1847, %1849 : vector<14x8x128xf32>
    %1851 = arith.mulf %1820, %1850 : vector<14x8x128xf32>
    %1852 = arith.addf %1583, %1851 : vector<14x8x128xf32>
    %1853 = vector.shape_cast %1755 : vector<8x128xf32> to vector<1x8x128xf32>
    %1854 = vector.broadcast %1853 : vector<1x8x128xf32> to vector<14x8x128xf32>
    %1855 = arith.mulf %1854, %26 : vector<14x8x128xf32>
    %1856 = vector.shape_cast %1760 : vector<8x128xf32> to vector<1x8x128xf32>
    %1857 = vector.broadcast %1856 : vector<1x8x128xf32> to vector<14x8x128xf32>
    %1858 = arith.mulf %1857, %27 : vector<14x8x128xf32>
    %1859 = arith.addf %1855, %1858 : vector<14x8x128xf32>
    %1860 = vector.shape_cast %1765 : vector<8x128xf32> to vector<1x8x128xf32>
    %1861 = vector.broadcast %1860 : vector<1x8x128xf32> to vector<14x8x128xf32>
    %1862 = arith.mulf %1861, %28 : vector<14x8x128xf32>
    %1863 = arith.addf %1859, %1862 : vector<14x8x128xf32>
    %1864 = vector.shape_cast %1771 : vector<8x128xf32> to vector<1x8x128xf32>
    %1865 = vector.broadcast %1864 : vector<1x8x128xf32> to vector<14x8x128xf32>
    %1866 = arith.addf %1863, %1865 : vector<14x8x128xf32>
    %1867 = arith.mulf %1820, %1866 : vector<14x8x128xf32>
    %1868 = arith.addf %1599, %1867 : vector<14x8x128xf32>
    %c0_665 = arith.constant 0 : index
    %c0_666 = arith.constant 0 : index
    %c0_667 = arith.constant 0 : index
    %1869 = vector.load %arg6[%c0_665, %c0_666, %c0_667] : memref<14x8x128xf32, #tpu.memory_space<vmem>>, vector<14x8x128xf32>
    %1870 = arith.mulf %1836, %1869 : vector<14x8x128xf32>
    %c0_668 = arith.constant 0 : index
    %c0_669 = arith.constant 0 : index
    %c0_670 = arith.constant 0 : index
    %1871 = vector.load %arg8[%c0_668, %c0_669, %c0_670] : memref<42x8x128xf32, #tpu.memory_space<vmem>>, vector<14x8x128xf32>
    tpu.vector_store %arg8[%c0_668, %c0_669, %c0_670], %1870 {strides = array<i32>} : memref<42x8x128xf32, #tpu.memory_space<vmem>>, vector<14x8x128xf32>,
    %1872 = arith.mulf %1852, %1869 : vector<14x8x128xf32>
    %c14_671 = arith.constant 14 : index
    %c0_672 = arith.constant 0 : index
    %c0_673 = arith.constant 0 : index
    %1873 = vector.load %arg8[%c14_671, %c0_672, %c0_673] : memref<42x8x128xf32, #tpu.memory_space<vmem>>, vector<14x8x128xf32>
    tpu.vector_store %arg8[%c14_671, %c0_672, %c0_673], %1872 {strides = array<i32>} : memref<42x8x128xf32, #tpu.memory_space<vmem>>, vector<14x8x128xf32>,
    %1874 = arith.mulf %1868, %1869 : vector<14x8x128xf32>
    %c28_674 = arith.constant 28 : index
    %c0_675 = arith.constant 0 : index
    %c0_676 = arith.constant 0 : index
    %1875 = vector.load %arg8[%c28_674, %c0_675, %c0_676] : memref<42x8x128xf32, #tpu.memory_space<vmem>>, vector<14x8x128xf32>
    tpu.vector_store %arg8[%c28_674, %c0_675, %c0_676], %1874 {strides = array<i32>} : memref<42x8x128xf32, #tpu.memory_space<vmem>>, vector<14x8x128xf32>,
    return
  }
  func.func @transform_0(%arg0: i32) -> (i32, i32, i32) {
    %c0_i32 = arith.constant 0 : i32
    %c0_i32_0 = arith.constant 0 : i32
    %c0_i32_1 = arith.constant 0 : i32
    return %c0_i32, %arg0, %c0_i32_0 : i32, i32, i32
  }
  func.func @transform_1(%arg0: i32) -> (i32, i32, i32) {
    %c0_i32 = arith.constant 0 : i32
    %c0_i32_0 = arith.constant 0 : i32
    %c0_i32_1 = arith.constant 0 : i32
    return %c0_i32, %arg0, %c0_i32_0 : i32, i32, i32
  }
  func.func @transform_2(%arg0: i32) -> (i32, i32, i32) {
    %c0_i32 = arith.constant 0 : i32
    %c0_i32_0 = arith.constant 0 : i32
    %c0_i32_1 = arith.constant 0 : i32
    return %c0_i32, %arg0, %c0_i32_0 : i32, i32, i32
  }
  func.func @transform_3(%arg0: i32) -> (i32, i32, i32) {
    %c0_i32 = arith.constant 0 : i32
    %c0_i32_0 = arith.constant 0 : i32
    %c0_i32_1 = arith.constant 0 : i32
    return %c0_i32, %arg0, %c0_i32_0 : i32, i32, i32
  }
  func.func @transform_4(%arg0: i32) -> (i32, i32, i32) {
    %c0_i32 = arith.constant 0 : i32
    %c0_i32_0 = arith.constant 0 : i32
    %c0_i32_1 = arith.constant 0 : i32
    return %c0_i32, %arg0, %c0_i32_0 : i32, i32, i32
  }
  func.func @transform_5(%arg0: i32) -> (i32, i32, i32) {
    %c0_i32 = arith.constant 0 : i32
    %c0_i32_0 = arith.constant 0 : i32
    %c0_i32_1 = arith.constant 0 : i32
    return %c0_i32, %arg0, %c0_i32_0 : i32, i32, i32
  }
  func.func @transform_6(%arg0: i32) -> (i32, i32, i32) {
    %c0_i32 = arith.constant 0 : i32
    %c0_i32_0 = arith.constant 0 : i32
    %c0_i32_1 = arith.constant 0 : i32
    return %c0_i32, %arg0, %c0_i32_0 : i32, i32, i32
  }
  func.func @transform_7(%arg0: i32) -> (i32, i32, i32) {
    %c0_i32 = arith.constant 0 : i32
    %c0_i32_0 = arith.constant 0 : i32
    %c0_i32_1 = arith.constant 0 : i32
    return %c0_i32, %arg0, %c0_i32_0 : i32, i32, i32
  }
}

</mosaic_0001>

<llo_original>
// kernel: tile.38
$region0: #{tile.38}
  #allocation0 [shape = 's32[1]{0}', space=sflag, size = 0x4, scoped, tag = 'scoped memory for tile.38']
  %s0 = inlined_call_operand.vmem [shape: f32[21], index: 0, kind: input, shape index: {}]
  %s1 = inlined_call_operand.vmem [shape: f32[4,21], index: 1, kind: output, shape index: {}]
  // Predicated region
  $region2: #{tile.38} parent=0 // pred_check
    _
  $region3: #{tile.38} parent=0 // pred_check_branch
    %3 = sbr.rel (0) target = $region5
  $region4: #{tile.38} parent=0 // pred_region
    _
  $region5: #{tile.38} parent=0 // pred_fallthru
    _
  %v4 = vld [vmem:[%s0] ss:$0 sm:$0xff]
  %5 = vst [vmem:[%s1] sm:$0xf] %v4

// kernel: tile.39
$region0: #{tile.39}
  %s0 = inlined_call_operand.vmem [shape: f32[4,21], index: 0, kind: input, shape index: {}]
  %s1 = inlined_call_operand.vmem [shape: f32[1,84], index: 1, kind: output, shape index: {}]
  $region1: #{tile.39} parent=0
    #allocation0 [shape = 'u8[4096]{0}', space=vmem, size = 0x1000, scoped, tag = 'scoped mem for output reshape']
    #allocation1 [shape = 'u8[4096]{0}', space=vmem, size = 0x1000, scoped, tag = 'scoped mem for input reshape']
    %s3 = sshllo.u32 0, 4
    %v4 = vld [vmem:[%s0] sm:%s3]
    %5 = vst [vmem:[#allocation1] sm:%s3] %v4
    %v6 = vld [vmem:[#allocation1] sm:$0x1]
    %vm7 = vcmask 171008
    %8 = vst.msk [vmem:[#allocation0] sm:$0x1] %vm7, %v6
    %s9 = scalar_lea.vmem [#allocation1], 3
    %v10 = vld [vmem:[%s9] sm:$0x1]
    %11 = vrot.lane.b32.xlu0 %v10, 63
    %v12 = vpop.permute.xlu0 %11
    %vm13 = vcmask 687608
    %14 = vst.msk [vmem:[#allocation0] sm:$0x1] %vm13, %v12
    %s15 = scalar_lea.vmem [#allocation1], 2
    %v16 = vld [vmem:[%s15] sm:$0x1]
    %17 = vrot.lane.b32.xlu0 %v16, 42
    %v18 = vpop.permute.xlu0 %17
    %vm19 = vcmask 515408
    %20 = vst.msk [vmem:[#allocation0] sm:$0x1] %vm19, %v18
    %s21 = scalar_lea.vmem [#allocation1], 1
    %v22 = vld [vmem:[%s21] sm:$0x1]
    %23 = vrot.lane.b32.xlu0 %v22, 21
    %v24 = vpop.permute.xlu0 %23
    %vm25 = vcmask 343208
    %26 = vst.msk [vmem:[#allocation0] sm:$0x1] %vm25, %v24
    %s28 = sshllo.u32 0, 1
    %v30 = vld [vmem:[#allocation0] sm:%s28]
    %s31 = sshllo.u32 0, 1
    %32 = vst [vmem:[%s1] sm:%s31] %v30

// kernel: tile.23
$region0: #{tile.23}
  #allocation0 [shape = 's32[1]{0}', space=sflag, size = 0x4, scoped, tag = 'scoped memory for tile.23']
  %s0 = inlined_call_operand.vmem [shape: f32[32], index: 0, kind: input, shape index: {}]
  %s1 = inlined_call_operand.vmem [shape: f32[4,32], index: 1, kind: output, shape index: {}]
  // Predicated region
  $region2: #{tile.23} parent=0 // pred_check
    _
  $region3: #{tile.23} parent=0 // pred_check_branch
    %3 = sbr.rel (0) target = $region5
  $region4: #{tile.23} parent=0 // pred_region
    _
  $region5: #{tile.23} parent=0 // pred_fallthru
    _
  %v4 = vld [vmem:[%s0] ss:$0 sm:$0xff]
  %5 = vst [vmem:[%s1] sm:$0xf] %v4

// kernel: tile.24
$region0: #{tile.24}
  %s0 = inlined_call_operand.vmem [shape: f32[4,32], index: 0, kind: input, shape index: {}]
  %s1 = inlined_call_operand.vmem [shape: f32[1,128], index: 1, kind: output, shape index: {}]
  $region1: #{tile.24} parent=0
    #allocation0 [shape = 'u8[4096]{0}', space=vmem, size = 0x1000, scoped, tag = 'scoped mem for output reshape']
    #allocation1 [shape = 'u8[4096]{0}', space=vmem, size = 0x1000, scoped, tag = 'scoped mem for input reshape']
    %s3 = sshllo.u32 0, 4
    %v4 = vld [vmem:[%s0] sm:%s3]
    %5 = vst [vmem:[#allocation1] sm:%s3] %v4
    %v6 = vld [vmem:[#allocation1] sm:$0x1]
    %vm7 = vcmask 261120
    %8 = vst.msk [vmem:[#allocation0] sm:$0x1] %vm7, %v6
    %s9 = scalar_lea.vmem [#allocation1], 3
    %v10 = vld [vmem:[%s9] sm:$0x1]
    %11 = vrot.lane.b32.xlu0 %v10, 96
    %v12 = vpop.permute.xlu0 %11
    %vm13 = vcmask 1048320
    %14 = vst.msk [vmem:[#allocation0] sm:$0x1] %vm13, %v12
    %s15 = scalar_lea.vmem [#allocation1], 2
    %v16 = vld [vmem:[%s15] sm:$0x1]
    %17 = vrot.lane.b32.xlu0 %v16, 64
    %v18 = vpop.permute.xlu0 %17
    %vm19 = vcmask 785920
    %20 = vst.msk [vmem:[#allocation0] sm:$0x1] %vm19, %v18
    %s21 = scalar_lea.vmem [#allocation1], 1
    %v22 = vld [vmem:[%s21] sm:$0x1]
    %23 = vrot.lane.b32.xlu0 %v22, 32
    %v24 = vpop.permute.xlu0 %23
    %vm25 = vcmask 523520
    %26 = vst.msk [vmem:[#allocation0] sm:$0x1] %vm25, %v24
    %s28 = sshllo.u32 0, 1
    %v30 = vld [vmem:[#allocation0] sm:%s28]
    %s31 = sshllo.u32 0, 1
    %32 = vst [vmem:[%s1] sm:%s31] %v30

// kernel: tile.28
$region0: #{tile.28}
  #allocation0 [shape = 's32[1]{0}', space=sflag, size = 0x4, scoped, tag = 'scoped memory for tile.28']
  %s0 = inlined_call_operand.vmem [shape: f32[16], index: 0, kind: input, shape index: {}]
  %s1 = inlined_call_operand.vmem [shape: f32[8,16], index: 1, kind: output, shape index: {}]
  // Predicated region
  $region2: #{tile.28} parent=0 // pred_check
    _
  $region3: #{tile.28} parent=0 // pred_check_branch
    %3 = sbr.rel (0) target = $region5
  $region4: #{tile.28} parent=0 // pred_region
    _
  $region5: #{tile.28} parent=0 // pred_fallthru
    _
  %v4 = vld [vmem:[%s0] ss:$0 sm:$0xff]
  %5 = vst [vmem:[%s1] sm:$0xff] %v4

// kernel: tile.29
$region0: #{tile.29}
  %s0 = inlined_call_operand.vmem [shape: f32[8,16], index: 0, kind: input, shape index: {}]
  %s1 = inlined_call_operand.vmem [shape: f32[1,128], index: 1, kind: output, shape index: {}]
  $region1: #{tile.29} parent=0
    #allocation0 [shape = 'u8[4096]{0}', space=vmem, size = 0x1000, scoped, tag = 'scoped mem for output reshape']
    %v2 = vld [vmem:[%s0] sm:$0x1]
    %vm3 = vcmask 130048
    %4 = vst.msk [vmem:[#allocation0] sm:$0x1] %vm3, %v2
    %s5 = scalar_lea.vmem %s0, 7
    %v6 = vld [vmem:[%s5] sm:$0x1]
    %7 = vrot.lane.b32.xlu0 %v6, 112
    %v8 = vpop.permute.xlu0 %7
    %vm9 = vcmask 1048448
    %10 = vst.msk [vmem:[#allocation0] sm:$0x1] %vm9, %v8
    %s11 = scalar_lea.vmem %s0, 6
    %v12 = vld [vmem:[%s11] sm:$0x1]
    %13 = vrot.lane.b32.xlu0 %v12, 96
    %v14 = vpop.permute.xlu0 %13
    %vm15 = vcmask 917248
    %16 = vst.msk [vmem:[#allocation0] sm:$0x1] %vm15, %v14
    %s17 = scalar_lea.vmem %s0, 5
    %v18 = vld [vmem:[%s17] sm:$0x1]
    %19 = vrot.lane.b32.xlu0 %v18, 80
    %v20 = vpop.permute.xlu0 %19
    %vm21 = vcmask 786048
    %22 = vst.msk [vmem:[#allocation0] sm:$0x1] %vm21, %v20
    %s23 = scalar_lea.vmem %s0, 4
    %v24 = vld [vmem:[%s23] sm:$0x1]
    %25 = vrot.lane.b32.xlu0 %v24, 64
    %v26 = vpop.permute.xlu0 %25
    %vm27 = vcmask 654848
    %28 = vst.msk [vmem:[#allocation0] sm:$0x1] %vm27, %v26
    %s29 = scalar_lea.vmem %s0, 3
    %v30 = vld [vmem:[%s29] sm:$0x1]
    %31 = vrot.lane.b32.xlu0 %v30, 48
    %v32 = vpop.permute.xlu0 %31
    %vm33 = vcmask 523648
    %34 = vst.msk [vmem:[#allocation0] sm:$0x1] %vm33, %v32
    %s35 = scalar_lea.vmem %s0, 2
    %v36 = vld [vmem:[%s35] sm:$0x1]
    %37 = vrot.lane.b32.xlu0 %v36, 32
    %v38 = vpop.permute.xlu0 %37
    %vm39 = vcmask 392448
    %40 = vst.msk [vmem:[#allocation0] sm:$0x1] %vm39, %v38
    %s41 = scalar_lea.vmem %s0, 1
    %v42 = vld [vmem:[%s41] sm:$0x1]
    %43 = vrot.lane.b32.xlu0 %v42, 16
    %v44 = vpop.permute.xlu0 %43
    %vm45 = vcmask 261248
    %46 = vst.msk [vmem:[#allocation0] sm:$0x1] %vm45, %v44
    %s48 = sshllo.u32 0, 1
    %v50 = vld [vmem:[#allocation0] sm:%s48]
    %s51 = sshllo.u32 0, 1
    %52 = vst [vmem:[%s1] sm:%s51] %v50

// kernel: fold_net_forward.5
$region0: #{fold_net_forward.5}
  #allocation0 [shape = 'u32[]', space=smem, size = 0x4, offset = 0x4, fixed_abs, tag = 'smem constant byte address 0x4 - core index']
  #allocation1 [shape = 'u32[144,128]{1,0:T(1,128)}', space=vmem, size = 0x12000, scoped, tag = 'internal scratch']
  %s0 = inlined_call_operand.vmem [shape: bf16[16,24], index: 0, kind: input, shape index: {}]
  %s1 = inlined_call_operand.vmem [shape: bf16[24,128], index: 1, kind: input, shape index: {}]
  %s2 = inlined_call_operand.vmem [shape: f32[1,128], index: 2, kind: input, shape index: {}]
  %s3 = inlined_call_operand.vmem [shape: f32[16,128], index: 3, kind: output, shape index: {}]
  %s4 = sld [smem:[#allocation0]]
  $region22: #{fold_net_forward.5} parent=0
    _
  %s6 = ssub.s32 1, %s4
  %s7 = scalar_select 0, %s6, %s4
  // Predicated region
  $region2: #{fold_net_forward.5} parent=0 // pred_check
    _
  $region3: #{fold_net_forward.5} parent=0 // pred_check_branch
    %9 = sbr.rel (0) target = $region5
  $region4: #{fold_net_forward.5} parent=0 // pred_region
    _
  $region5: #{fold_net_forward.5} parent=0 // pred_fallthru
    _
  // Predicated region
  $region6: #{fold_net_forward.5} parent=0 // pred_check
    _
  $region7: #{fold_net_forward.5} parent=0 // pred_check_branch
    %11 = sbr.rel (0) target = $region9
  $region8: #{fold_net_forward.5} parent=0 // pred_region
    _
  $region9: #{fold_net_forward.5} parent=0 // pred_fallthru
    _
  // Predicated region
  $region10: #{fold_net_forward.5} parent=0 // pred_check
    _
  $region11: #{fold_net_forward.5} parent=0 // pred_check_branch
    %13 = sbr.rel (0) target = $region13
  $region12: #{fold_net_forward.5} parent=0 // pred_region
    _
  $region13: #{fold_net_forward.5} parent=0 // pred_fallthru
    _
  %v15 = vld [vmem:[%s0] sm:$0xf]
  %v16 = vld [vmem:[%s0 + $0x4] sm:$0xf]
  %v17 = vld [vmem:[%s1] sm:$0xf]
  %v18 = vld [vmem:[%s1 + $0x4] sm:$0xf]
  %v19 = vld [vmem:[%s1 + $0x8] sm:$0xf]
  %v20 = vld [vmem:[%s2] sm:$0x1]
  %v22 = vlaneseq
  %v23 = vshrl.u32 %v22, 7
  %v24 = vsub.s32 0, %v23
  %v25 = vrot.slane %v20, %v24
  %v29 = vunpack.c.l.b16 %v15
  %v30 = vunpack.c.l.b16 %v16
  %v31 = vpack.c.b16 %v30, %v29
  %v35 = vunpack.c.l.b16 %v17
  %v36 = vunpack.c.l.b16 %v18
  %v37 = vunpack.c.l.b16 %v19
  %v38 = vpack.c.b16 %v36, %v35
  %v39 = vpack.c.b16 %v37, %v37
  %vm41 = vcmask 195584
  %v43 = vsel %vm41, %v31, 0
  %vm45 = vcmask 1043456
  %v47 = vsel %vm45, %v39, 0
  %49 = vmatprep.subr.bf16.mxu0 0
  %50 = vmatpush1.bf16.msra.mxu0 %v38
  %51 = vmatprep.subr.bf16.mxu0 0
  %52 = vmatpush1.bf16.msra.mxu0 %v47
  %53 = vmatprep.subr.bf16.mxu0 0
  %54 = vmatpush1.bf16.msra.mxu0 0
  %55 = vmatprep.subr.bf16.mxu0 0
  %56 = vmatpush1.bf16.msra.mxu0 0
  %57 = vmatprep.subr.bf16.mxu0 0
  %58 = vmatpush1.bf16.msra.mxu0 0
  %59 = vmatprep.subr.bf16.mxu0 0
  %60 = vmatpush1.bf16.msra.mxu0 0
  %61 = vmatprep.subr.bf16.mxu0 0
  %62 = vmatpush1.bf16.msra.mxu0 0
  %63 = vmatprep.subr.bf16.mxu0 0
  %64 = vmatpush1.bf16.msra.mxu0 0
  %65 = vmatprep.subr.bf16.mxu0 0
  %66 = vmatpush1.bf16.msra.mxu0 0
  %67 = vmatprep.subr.bf16.mxu0 0
  %68 = vmatpush1.bf16.msra.mxu0 0
  %69 = vmatprep.subr.bf16.mxu0 0
  %70 = vmatpush1.bf16.msra.mxu0 0
  %71 = vmatprep.subr.bf16.mxu0 0
  %72 = vmatpush1.bf16.msra.mxu0 0
  %73 = vmatprep.subr.bf16.mxu0 0
  %74 = vmatpush1.bf16.msra.mxu0 0
  %75 = vmatprep.subr.bf16.mxu0 0
  %76 = vmatpush1.bf16.msra.mxu0 0
  %77 = vmatprep.subr.bf16.mxu0 0
  %78 = vmatpush1.bf16.msra.mxu0 0
  %79 = vmatprep.subr.bf16.mxu0 0
  %80 = vmatpush1.bf16.msra.mxu0 0
  %81 = vmatprep.mubr.bf16.mxu0 0
  %82 = vmatmul.mubr.bf16.gmra.mrb[0].mxu0 %v43
  %v83 = vpop.f32.mrb[0].mxu0
  %v84 = vadd.f32 %v25, %v83
  %v85 = vpop.f32.mrb[0].mxu0
  %v86 = vpop.f32.mrb[0].mxu0
  %v87 = vadd.f32 %v25, %v86
  %v88 = vpop.f32.mrb[0].mxu0
  %89 = vdwg.mxu0
  %v90 = vmax.f32 %v84, 0.0
  %v91 = vmax.f32 %v87, 0.0
  %92 = vst [vmem:[%s3] sm:$0xff] %v90
  %93 = vst [vmem:[%s3 + $0x8] sm:$0xff] %v91
  // Predicated region
  $region14: #{fold_net_forward.5} parent=0 // pred_check
    _
  $region15: #{fold_net_forward.5} parent=0 // pred_check_branch
    %95 = sbr.rel (0) target = $region17
  $region16: #{fold_net_forward.5} parent=0 // pred_region
    _
  $region17: #{fold_net_forward.5} parent=0 // pred_fallthru
    _
  // Predicated region
  $region18: #{fold_net_forward.5} parent=0 // pred_check
    _
  $region19: #{fold_net_forward.5} parent=0 // pred_check_branch
    %97 = sbr.rel (0) target = $region21
  $region20: #{fold_net_forward.5} parent=0 // pred_region
    _
  $region21: #{fold_net_forward.5} parent=0 // pred_fallthru
    _

// kernel: fold_net_forward.6
$region0: #{fold_net_forward.6}
  #allocation0 [shape = 'u32[]', space=smem, size = 0x4, offset = 0x4, fixed_abs, tag = 'smem constant byte address 0x4 - core index']
  #allocation1 [shape = 'u32[144,128]{1,0:T(1,128)}', space=vmem, size = 0x12000, scoped, tag = 'internal scratch']
  %s0 = inlined_call_operand.vmem [shape: bf16[16,16], index: 0, kind: input, shape index: {}]
  %s1 = inlined_call_operand.vmem [shape: bf16[16,128], index: 1, kind: input, shape index: {}]
  %s2 = inlined_call_operand.vmem [shape: f32[1,128], index: 2, kind: input, shape index: {}]
  %s3 = inlined_call_operand.vmem [shape: f32[16,128], index: 3, kind: output, shape index: {}]
  %s4 = sld [smem:[#allocation0]]
  $region22: #{fold_net_forward.6} parent=0
    _
  %s6 = ssub.s32 1, %s4
  %s7 = scalar_select 0, %s6, %s4
  // Predicated region
  $region2: #{fold_net_forward.6} parent=0 // pred_check
    _
  $region3: #{fold_net_forward.6} parent=0 // pred_check_branch
    %9 = sbr.rel (0) target = $region5
  $region4: #{fold_net_forward.6} parent=0 // pred_region
    _
  $region5: #{fold_net_forward.6} parent=0 // pred_fallthru
    _
  // Predicated region
  $region6: #{fold_net_forward.6} parent=0 // pred_check
    _
  $region7: #{fold_net_forward.6} parent=0 // pred_check_branch
    %11 = sbr.rel (0) target = $region9
  $region8: #{fold_net_forward.6} parent=0 // pred_region
    _
  $region9: #{fold_net_forward.6} parent=0 // pred_fallthru
    _
  // Predicated region
  $region10: #{fold_net_forward.6} parent=0 // pred_check
    _
  $region11: #{fold_net_forward.6} parent=0 // pred_check_branch
    %13 = sbr.rel (0) target = $region13
  $region12: #{fold_net_forward.6} parent=0 // pred_region
    _
  $region13: #{fold_net_forward.6} parent=0 // pred_fallthru
    _
  %v15 = vld [vmem:[%s0] sm:$0xf]
  %v16 = vld [vmem:[%s0 + $0x4] sm:$0xf]
  %v17 = vld [vmem:[%s1] sm:$0xf]
  %v18 = vld [vmem:[%s1 + $0x4] sm:$0xf]
  %v19 = vld [vmem:[%s2] sm:$0x1]
  %v21 = vlaneseq
  %v22 = vshrl.u32 %v21, 7
  %v23 = vsub.s32 0, %v22
  %v24 = vrot.slane %v19, %v23
  %v28 = vunpack.c.l.b16 %v15
  %v29 = vunpack.c.l.b16 %v16
  %v30 = vpack.c.b16 %v29, %v28
  %v33 = vunpack.c.l.b16 %v17
  %v34 = vunpack.c.l.b16 %v18
  %v35 = vpack.c.b16 %v34, %v33
  %vm37 = vcmask 130048
  %v39 = vsel %vm37, %v30, 0
  %41 = vmatprep.subr.bf16.mxu0 0
  %42 = vmatpush1.bf16.msra.mxu0 %v35
  %43 = vmatprep.subr.bf16.mxu0 0
  %44 = vmatpush1.bf16.msra.mxu0 0
  %45 = vmatprep.subr.bf16.mxu0 0
  %46 = vmatpush1.bf16.msra.mxu0 0
  %47 = vmatprep.subr.bf16.mxu0 0
  %48 = vmatpush1.bf16.msra.mxu0 0
  %49 = vmatprep.subr.bf16.mxu0 0
  %50 = vmatpush1.bf16.msra.mxu0 0
  %51 = vmatprep.subr.bf16.mxu0 0
  %52 = vmatpush1.bf16.msra.mxu0 0
  %53 = vmatprep.subr.bf16.mxu0 0
  %54 = vmatpush1.bf16.msra.mxu0 0
  %55 = vmatprep.subr.bf16.mxu0 0
  %56 = vmatpush1.bf16.msra.mxu0 0
  %57 = vmatprep.subr.bf16.mxu0 0
  %58 = vmatpush1.bf16.msra.mxu0 0
  %59 = vmatprep.subr.bf16.mxu0 0
  %60 = vmatpush1.bf16.msra.mxu0 0
  %61 = vmatprep.subr.bf16.mxu0 0
  %62 = vmatpush1.bf16.msra.mxu0 0
  %63 = vmatprep.subr.bf16.mxu0 0
  %64 = vmatpush1.bf16.msra.mxu0 0
  %65 = vmatprep.subr.bf16.mxu0 0
  %66 = vmatpush1.bf16.msra.mxu0 0
  %67 = vmatprep.subr.bf16.mxu0 0
  %68 = vmatpush1.bf16.msra.mxu0 0
  %69 = vmatprep.subr.bf16.mxu0 0
  %70 = vmatpush1.bf16.msra.mxu0 0
  %71 = vmatprep.subr.bf16.mxu0 0
  %72 = vmatpush1.bf16.msra.mxu0 0
  %73 = vmatprep.mubr.bf16.mxu0 0
  %74 = vmatmul.mubr.bf16.gmra.mrb[0].mxu0 %v39
  %v75 = vpop.f32.mrb[0].mxu0
  %v76 = vadd.f32 %v24, %v75
  %v77 = vpop.f32.mrb[0].mxu0
  %v78 = vpop.f32.mrb[0].mxu0
  %v79 = vadd.f32 %v24, %v78
  %v80 = vpop.f32.mrb[0].mxu0
  %81 = vdwg.mxu0
  %v82 = vmax.f32 %v76, 0.0
  %v83 = vmax.f32 %v79, 0.0
  %84 = vst [vmem:[%s3] sm:$0xff] %v82
  %85 = vst [vmem:[%s3 + $0x8] sm:$0xff] %v83
  // Predicated region
  $region14: #{fold_net_forward.6} parent=0 // pred_check
    _
  $region15: #{fold_net_forward.6} parent=0 // pred_check_branch
    %87 = sbr.rel (0) target = $region17
  $region16: #{fold_net_forward.6} parent=0 // pred_region
    _
  $region17: #{fold_net_forward.6} parent=0 // pred_fallthru
    _
  // Predicated region
  $region18: #{fold_net_forward.6} parent=0 // pred_check
    _
  $region19: #{fold_net_forward.6} parent=0 // pred_check_branch
    %89 = sbr.rel (0) target = $region21
  $region20: #{fold_net_forward.6} parent=0 // pred_region
    _
  $region21: #{fold_net_forward.6} parent=0 // pred_fallthru
    _

// kernel: fold_net_forward.7
$region0: #{fold_net_forward.7}
  #allocation0 [shape = 'u32[]', space=smem, size = 0x4, offset = 0x4, fixed_abs, tag = 'smem constant byte address 0x4 - core index']
  #allocation1 [shape = 'u32[144,128]{1,0:T(1,128)}', space=vmem, size = 0x12000, scoped, tag = 'internal scratch']
  %s0 = inlined_call_operand.vmem [shape: bf16[16,192], index: 0, kind: input, shape index: {}]
  %s1 = inlined_call_operand.vmem [shape: bf16[192,128], index: 1, kind: input, shape index: {}]
  %s2 = inlined_call_operand.vmem [shape: f32[1,128], index: 2, kind: input, shape index: {}]
  %s3 = inlined_call_operand.vmem [shape: f32[16,128], index: 3, kind: output, shape index: {}]
  %s4 = sld [smem:[#allocation0]]
  $region22: #{fold_net_forward.7} parent=0
    _
  %s6 = ssub.s32 1, %s4
  %s7 = scalar_select 0, %s6, %s4
  // Predicated region
  $region2: #{fold_net_forward.7} parent=0 // pred_check
    _
  $region3: #{fold_net_forward.7} parent=0 // pred_check_branch
    %9 = sbr.rel (0) target = $region5
  $region4: #{fold_net_forward.7} parent=0 // pred_region
    _
  $region5: #{fold_net_forward.7} parent=0 // pred_fallthru
    _
  // Predicated region
  $region6: #{fold_net_forward.7} parent=0 // pred_check
    _
  $region7: #{fold_net_forward.7} parent=0 // pred_check_branch
    %11 = sbr.rel (0) target = $region9
  $region8: #{fold_net_forward.7} parent=0 // pred_region
    _
  $region9: #{fold_net_forward.7} parent=0 // pred_fallthru
    _
  // Predicated region
  $region10: #{fold_net_forward.7} parent=0 // pred_check
    _
  $region11: #{fold_net_forward.7} parent=0 // pred_check_branch
    %13 = sbr.rel (0) target = $region13
  $region12: #{fold_net_forward.7} parent=0 // pred_region
    _
  $region13: #{fold_net_forward.7} parent=0 // pred_fallthru
    _
  %v15 = vld [vmem:[%s0] sm:$0xff]
  %v16 = vld [vmem:[%s0 + $0x8] sm:$0xff]
  %v17 = vld [vmem:[%s1] sm:$0xf]
  %v18 = vld [vmem:[%s1 + $0x4] sm:$0xf]
  %v19 = vld [vmem:[%s1 + $0x8] sm:$0xf]
  %v20 = vld [vmem:[%s1 + $0xc] sm:$0xf]
  %v21 = vld [vmem:[%s1 + $0x10] sm:$0xf]
  %v22 = vld [vmem:[%s1 + $0x14] sm:$0xf]
  %v23 = vld [vmem:[%s1 + $0x18] sm:$0xf]
  %v24 = vld [vmem:[%s1 + $0x1c] sm:$0xf]
  %v25 = vld [vmem:[%s1 + $0x20] sm:$0xf]
  %v26 = vld [vmem:[%s1 + $0x24] sm:$0xf]
  %v27 = vld [vmem:[%s1 + $0x28] sm:$0xf]
  %v28 = vld [vmem:[%s1 + $0x2c] sm:$0xf]
  %v29 = vld [vmem:[%s1 + $0x30] sm:$0xf]
  %v30 = vld [vmem:[%s1 + $0x34] sm:$0xf]
  %v31 = vld [vmem:[%s1 + $0x38] sm:$0xf]
  %v32 = vld [vmem:[%s1 + $0x3c] sm:$0xf]
  %v33 = vld [vmem:[%s1 + $0x40] sm:$0xf]
  %v34 = vld [vmem:[%s1 + $0x44] sm:$0xf]
  %v35 = vld [vmem:[%s1 + $0x48] sm:$0xf]
  %v36 = vld [vmem:[%s1 + $0x4c] sm:$0xf]
  %v37 = vld [vmem:[%s1 + $0x50] sm:$0xf]
  %v38 = vld [vmem:[%s1 + $0x54] sm:$0xf]
  %v39 = vld [vmem:[%s1 + $0x58] sm:$0xf]
  %v40 = vld [vmem:[%s1 + $0x5c] sm:$0xf]
  %v41 = vld [vmem:[%s2] sm:$0x1]
  %v43 = vlaneseq
  %v44 = vshrl.u32 %v43, 7
  %v45 = vsub.s32 0, %v44
  %v46 = vrot.slane %v41, %v45
  %v50 = vunpack.c.l.b16 %v15
  %v51 = vunpack.c.h.b16 %v15
  %v52 = vunpack.c.l.b16 %v16
  %v53 = vunpack.c.h.b16 %v16
  %v54 = vpack.c.b16 %v52, %v50
  %v55 = vpack.c.b16 %v53, %v51
  %v81 = vunpack.c.l.b16 %v17
  %v82 = vunpack.c.l.b16 %v18
  %v83 = vunpack.c.l.b16 %v19
  %v84 = vunpack.c.l.b16 %v20
  %v85 = vunpack.c.l.b16 %v21
  %v86 = vunpack.c.l.b16 %v22
  %v87 = vunpack.c.l.b16 %v23
  %v88 = vunpack.c.l.b16 %v24
  %v89 = vunpack.c.l.b16 %v25
  %v90 = vunpack.c.l.b16 %v26
  %v91 = vunpack.c.l.b16 %v27
  %v92 = vunpack.c.l.b16 %v28
  %v93 = vunpack.c.l.b16 %v29
  %v94 = vunpack.c.l.b16 %v30
  %v95 = vunpack.c.l.b16 %v31
  %v96 = vunpack.c.l.b16 %v32
  %v97 = vunpack.c.l.b16 %v33
  %v98 = vunpack.c.l.b16 %v34
  %v99 = vunpack.c.l.b16 %v35
  %v100 = vunpack.c.l.b16 %v36
  %v101 = vunpack.c.l.b16 %v37
  %v102 = vunpack.c.l.b16 %v38
  %v103 = vunpack.c.l.b16 %v39
  %v104 = vunpack.c.l.b16 %v40
  %v105 = vpack.c.b16 %v82, %v81
  %v106 = vpack.c.b16 %v84, %v83
  %v107 = vpack.c.b16 %v86, %v85
  %v108 = vpack.c.b16 %v88, %v87
  %v109 = vpack.c.b16 %v90, %v89
  %v110 = vpack.c.b16 %v92, %v91
  %v111 = vpack.c.b16 %v94, %v93
  %v112 = vpack.c.b16 %v96, %v95
  %v113 = vpack.c.b16 %v98, %v97
  %v114 = vpack.c.b16 %v100, %v99
  %v115 = vpack.c.b16 %v102, %v101
  %v116 = vpack.c.b16 %v104, %v103
  %vm129 = vcmask 523264
  %v131 = vsel %vm129, %v55, 0
  %133 = vmatprep.subr.bf16.mxu0 0
  %134 = vmatpush1.bf16.msra.mxu0 %v105
  %135 = vmatprep.subr.bf16.mxu0 0
  %136 = vmatpush1.bf16.msra.mxu0 %v106
  %137 = vmatprep.subr.bf16.mxu0 0
  %138 = vmatpush1.bf16.msra.mxu0 %v107
  %139 = vmatprep.subr.bf16.mxu0 0
  %140 = vmatpush1.bf16.msra.mxu0 %v108
  %141 = vmatprep.subr.bf16.mxu0 0
  %142 = vmatpush1.bf16.msra.mxu0 %v109
  %143 = vmatprep.subr.bf16.mxu0 0
  %144 = vmatpush1.bf16.msra.mxu0 %v110
  %145 = vmatprep.subr.bf16.mxu0 0
  %146 = vmatpush1.bf16.msra.mxu0 %v111
  %147 = vmatprep.subr.bf16.mxu0 0
  %148 = vmatpush1.bf16.msra.mxu0 %v112
  %149 = vmatprep.subr.bf16.mxu0 0
  %150 = vmatpush1.bf16.msra.mxu0 %v113
  %151 = vmatprep.subr.bf16.mxu0 0
  %152 = vmatpush1.bf16.msra.mxu0 %v114
  %153 = vmatprep.subr.bf16.mxu0 0
  %154 = vmatpush1.bf16.msra.mxu0 %v115
  %155 = vmatprep.subr.bf16.mxu0 0
  %156 = vmatpush1.bf16.msra.mxu0 %v116
  %157 = vmatprep.subr.bf16.mxu0 0
  %158 = vmatpush1.bf16.msra.mxu0 0
  %159 = vmatprep.subr.bf16.mxu0 0
  %160 = vmatpush1.bf16.msra.mxu0 0
  %161 = vmatprep.subr.bf16.mxu0 0
  %162 = vmatpush1.bf16.msra.mxu0 0
  %163 = vmatprep.subr.bf16.mxu0 0
  %164 = vmatpush1.bf16.msra.mxu0 0
  %165 = vmatprep.mubr.bf16.mxu0 %v131
  %166 = vmatmul.mubr.bf16.gmra.mrb[0].mxu0 %v54
  %v167 = vpop.f32.mrb[0].mxu0
  %v168 = vadd.f32 %v46, %v167
  %v169 = vpop.f32.mrb[0].mxu0
  %v170 = vpop.f32.mrb[0].mxu0
  %v171 = vadd.f32 %v46, %v170
  %v172 = vpop.f32.mrb[0].mxu0
  %173 = vdwg.mxu0
  %v174 = vmax.f32 %v168, 0.0
  %v175 = vmax.f32 %v171, 0.0
  %176 = vst [vmem:[%s3] sm:$0xff] %v174
  %177 = vst [vmem:[%s3 + $0x8] sm:$0xff] %v175
  // Predicated region
  $region14: #{fold_net_forward.7} parent=0 // pred_check
    _
  $region15: #{fold_net_forward.7} parent=0 // pred_check_branch
    %179 = sbr.rel (0) target = $region17
  $region16: #{fold_net_forward.7} parent=0 // pred_region
    _
  $region17: #{fold_net_forward.7} parent=0 // pred_fallthru
    _
  // Predicated region
  $region18: #{fold_net_forward.7} parent=0 // pred_check
    _
  $region19: #{fold_net_forward.7} parent=0 // pred_check_branch
    %181 = sbr.rel (0) target = $region21
  $region20: #{fold_net_forward.7} parent=0 // pred_region
    _
  $region21: #{fold_net_forward.7} parent=0 // pred_fallthru
    _

// kernel: fold_net_forward.8
$region0: #{fold_net_forward.8}
  #allocation0 [shape = 'u32[]', space=smem, size = 0x4, offset = 0x4, fixed_abs, tag = 'smem constant byte address 0x4 - core index']
  #allocation1 [shape = 'u32[144,128]{1,0:T(1,128)}', space=vmem, size = 0x12000, scoped, tag = 'internal scratch']
  %s0 = inlined_call_operand.vmem [shape: bf16[16,128], index: 0, kind: input, shape index: {}]
  %s1 = inlined_call_operand.vmem [shape: bf16[128,84], index: 1, kind: input, shape index: {}]
  %s2 = inlined_call_operand.vmem [shape: f32[1,84], index: 2, kind: input, shape index: {}]
  %s3 = inlined_call_operand.vmem [shape: f32[16,84], index: 3, kind: output, shape index: {}]
  %s4 = sld [smem:[#allocation0]]
  $region22: #{fold_net_forward.8} parent=0
    _
  %s6 = ssub.s32 1, %s4
  %s7 = scalar_select 0, %s6, %s4
  // Predicated region
  $region2: #{fold_net_forward.8} parent=0 // pred_check
    _
  $region3: #{fold_net_forward.8} parent=0 // pred_check_branch
    %9 = sbr.rel (0) target = $region5
  $region4: #{fold_net_forward.8} parent=0 // pred_region
    _
  $region5: #{fold_net_forward.8} parent=0 // pred_fallthru
    _
  // Predicated region
  $region6: #{fold_net_forward.8} parent=0 // pred_check
    _
  $region7: #{fold_net_forward.8} parent=0 // pred_check_branch
    %11 = sbr.rel (0) target = $region9
  $region8: #{fold_net_forward.8} parent=0 // pred_region
    _
  $region9: #{fold_net_forward.8} parent=0 // pred_fallthru
    _
  // Predicated region
  $region10: #{fold_net_forward.8} parent=0 // pred_check
    _
  $region11: #{fold_net_forward.8} parent=0 // pred_check_branch
    %13 = sbr.rel (0) target = $region13
  $region12: #{fold_net_forward.8} parent=0 // pred_region
    _
  $region13: #{fold_net_forward.8} parent=0 // pred_fallthru
    _
  %v15 = vld [vmem:[%s0] sm:$0xf]
  %v16 = vld [vmem:[%s0 + $0x4] sm:$0xf]
  %v17 = vld [vmem:[%s1] sm:$0xf]
  %v18 = vld [vmem:[%s1 + $0x4] sm:$0xf]
  %v19 = vld [vmem:[%s1 + $0x8] sm:$0xf]
  %v20 = vld [vmem:[%s1 + $0xc] sm:$0xf]
  %v21 = vld [vmem:[%s1 + $0x10] sm:$0xf]
  %v22 = vld [vmem:[%s1 + $0x14] sm:$0xf]
  %v23 = vld [vmem:[%s1 + $0x18] sm:$0xf]
  %v24 = vld [vmem:[%s1 + $0x1c] sm:$0xf]
  %v25 = vld [vmem:[%s1 + $0x20] sm:$0xf]
  %v26 = vld [vmem:[%s1 + $0x24] sm:$0xf]
  %v27 = vld [vmem:[%s1 + $0x28] sm:$0xf]
  %v28 = vld [vmem:[%s1 + $0x2c] sm:$0xf]
  %v29 = vld [vmem:[%s1 + $0x30] sm:$0xf]
  %v30 = vld [vmem:[%s1 + $0x34] sm:$0xf]
  %v31 = vld [vmem:[%s1 + $0x38] sm:$0xf]
  %v32 = vld [vmem:[%s1 + $0x3c] sm:$0xf]
  %v33 = vld [vmem:[%s2] sm:$0x1]
  %v35 = vlaneseq
  %v36 = vshrl.u32 %v35, 7
  %v37 = vsub.s32 0, %v36
  %v38 = vrot.slane %v33, %v37
  %v42 = vunpack.c.l.b16 %v15
  %v43 = vunpack.c.l.b16 %v16
  %v44 = vpack.c.b16 %v43, %v42
  %v62 = vunpack.c.l.b16 %v17
  %v63 = vunpack.c.l.b16 %v18
  %v64 = vunpack.c.l.b16 %v19
  %v65 = vunpack.c.l.b16 %v20
  %v66 = vunpack.c.l.b16 %v21
  %v67 = vunpack.c.l.b16 %v22
  %v68 = vunpack.c.l.b16 %v23
  %v69 = vunpack.c.l.b16 %v24
  %v70 = vunpack.c.l.b16 %v25
  %v71 = vunpack.c.l.b16 %v26
  %v72 = vunpack.c.l.b16 %v27
  %v73 = vunpack.c.l.b16 %v28
  %v74 = vunpack.c.l.b16 %v29
  %v75 = vunpack.c.l.b16 %v30
  %v76 = vunpack.c.l.b16 %v31
  %v77 = vunpack.c.l.b16 %v32
  %v78 = vpack.c.b16 %v63, %v62
  %v79 = vpack.c.b16 %v65, %v64
  %v80 = vpack.c.b16 %v67, %v66
  %v81 = vpack.c.b16 %v69, %v68
  %v82 = vpack.c.b16 %v71, %v70
  %v83 = vpack.c.b16 %v73, %v72
  %v84 = vpack.c.b16 %v75, %v74
  %v85 = vpack.c.b16 %v77, %v76
  %94 = vmatprep.subr.bf16.mxu0 0
  %95 = vmatpush1.bf16.msra.mxu0 %v78
  %96 = vmatprep.subr.bf16.mxu0 0
  %97 = vmatpush1.bf16.msra.mxu0 %v79
  %98 = vmatprep.subr.bf16.mxu0 0
  %99 = vmatpush1.bf16.msra.mxu0 %v80
  %100 = vmatprep.subr.bf16.mxu0 0
  %101 = vmatpush1.bf16.msra.mxu0 %v81
  %102 = vmatprep.subr.bf16.mxu0 0
  %103 = vmatpush1.bf16.msra.mxu0 %v82
  %104 = vmatprep.subr.bf16.mxu0 0
  %105 = vmatpush1.bf16.msra.mxu0 %v83
  %106 = vmatprep.subr.bf16.mxu0 0
  %107 = vmatpush1.bf16.msra.mxu0 %v84
  %108 = vmatprep.subr.bf16.mxu0 0
  %109 = vmatpush1.bf16.msra.mxu0 %v85
  %110 = vmatprep.subr.bf16.mxu0 0
  %111 = vmatpush1.bf16.msra.mxu0 0
  %112 = vmatprep.subr.bf16.mxu0 0
  %113 = vmatpush1.bf16.msra.mxu0 0
  %114 = vmatprep.subr.bf16.mxu0 0
  %115 = vmatpush1.bf16.msra.mxu0 0
  %116 = vmatprep.subr.bf16.mxu0 0
  %117 = vmatpush1.bf16.msra.mxu0 0
  %118 = vmatprep.subr.bf16.mxu0 0
  %119 = vmatpush1.bf16.msra.mxu0 0
  %120 = vmatprep.subr.bf16.mxu0 0
  %121 = vmatpush1.bf16.msra.mxu0 0
  %122 = vmatprep.subr.bf16.mxu0 0
  %123 = vmatpush1.bf16.msra.mxu0 0
  %124 = vmatprep.subr.bf16.mxu0 0
  %125 = vmatpush1.bf16.msra.mxu0 0
  %126 = vmatprep.mubr.bf16.mxu0 0
  %127 = vmatmul.mubr.bf16.gmra.mrb[0].mxu0 %v44
  %v128 = vpop.f32.mrb[0].mxu0
  %v129 = vadd.f32 %v38, %v128
  %v130 = vpop.f32.mrb[0].mxu0
  %v131 = vpop.f32.mrb[0].mxu0
  %v132 = vadd.f32 %v38, %v131
  %v133 = vpop.f32.mrb[0].mxu0
  %134 = vdwg.mxu0
  %vm135 = vcmask 687104
  %136 = vst.msk [vmem:[%s3] sm:$0xff] %vm135, %v129
  %137 = vst.msk [vmem:[%s3 + $0x8] sm:$0xff] %vm135, %v132
  // Predicated region
  $region14: #{fold_net_forward.8} parent=0 // pred_check
    _
  $region15: #{fold_net_forward.8} parent=0 // pred_check_branch
    %139 = sbr.rel (0) target = $region17
  $region16: #{fold_net_forward.8} parent=0 // pred_region
    _
  $region17: #{fold_net_forward.8} parent=0 // pred_fallthru
    _
  // Predicated region
  $region18: #{fold_net_forward.8} parent=0 // pred_check
    _
  $region19: #{fold_net_forward.8} parent=0 // pred_check_branch
    %141 = sbr.rel (0) target = $region21
  $region20: #{fold_net_forward.8} parent=0 // pred_region
    _
  $region21: #{fold_net_forward.8} parent=0 // pred_fallthru
    _

// kernel: fold_net_forward.9
$region0: #{fold_net_forward.9}
  #allocation0 [shape = 'u32[]', space=smem, size = 0x4, offset = 0x4, fixed_abs, tag = 'smem constant byte address 0x4 - core index']
  #allocation1 [shape = 'u32[144,128]{1,0:T(1,128)}', space=vmem, size = 0x12000, scoped, tag = 'internal scratch']
  %s0 = inlined_call_operand.vmem [shape: f32[96,8,128], index: 0, kind: input, shape index: {}]
  %s1 = inlined_call_operand.vmem [shape: f32[16,8,128], index: 1, kind: input, shape index: {}]
  %s2 = inlined_call_operand.vmem [shape: f32[12,8,128], index: 2, kind: input, shape index: {}]
  %s3 = inlined_call_operand.vmem [shape: f32[112,8,128], index: 3, kind: input, shape index: {}]
  %s4 = inlined_call_operand.vmem [shape: f32[42,8,128], index: 4, kind: input, shape index: {}]
  %s5 = inlined_call_operand.vmem [shape: f32[14,8,128], index: 5, kind: input, shape index: {}]
  %s6 = inlined_call_operand.vmem [shape: f32[128,8,128], index: 6, kind: output, shape index: {0}]
  %s7 = inlined_call_operand.vmem [shape: f32[42,8,128], index: 7, kind: output, shape index: {1}]
  %8 = xla_tuple %s6, %s7
  %s9 = sld [smem:[#allocation0]]
  $region42: #{fold_net_forward.9} parent=0
    _
  %s11 = ssub.s32 1, %s9
  %s12 = scalar_select 0, %s11, %s9
  // Predicated region
  $region2: #{fold_net_forward.9} parent=0 // pred_check
    _
  $region3: #{fold_net_forward.9} parent=0 // pred_check_branch
    %14 = sbr.rel (0) target = $region5
  $region4: #{fold_net_forward.9} parent=0 // pred_region
    _
  $region5: #{fold_net_forward.9} parent=0 // pred_fallthru
    _
  // Predicated region
  $region6: #{fold_net_forward.9} parent=0 // pred_check
    _
  $region7: #{fold_net_forward.9} parent=0 // pred_check_branch
    %16 = sbr.rel (0) target = $region9
  $region8: #{fold_net_forward.9} parent=0 // pred_region
    _
  $region9: #{fold_net_forward.9} parent=0 // pred_fallthru
    _
  // Predicated region
  $region10: #{fold_net_forward.9} parent=0 // pred_check
    _
  $region11: #{fold_net_forward.9} parent=0 // pred_check_branch
    %18 = sbr.rel (0) target = $region13
  $region12: #{fold_net_forward.9} parent=0 // pred_region
    _
  $region13: #{fold_net_forward.9} parent=0 // pred_fallthru
    _
  // Predicated region
  $region14: #{fold_net_forward.9} parent=0 // pred_check
    _
  $region15: #{fold_net_forward.9} parent=0 // pred_check_branch
    %20 = sbr.rel (0) target = $region17
  $region16: #{fold_net_forward.9} parent=0 // pred_region
    _
  $region17: #{fold_net_forward.9} parent=0 // pred_fallthru
    _
  // Predicated region
  $region18: #{fold_net_forward.9} parent=0 // pred_check
    _
  $region19: #{fold_net_forward.9} parent=0 // pred_check_branch
    %22 = sbr.rel (0) target = $region21
  $region20: #{fold_net_forward.9} parent=0 // pred_region
    _
  $region21: #{fold_net_forward.9} parent=0 // pred_fallthru
    _
  // Predicated region
  $region22: #{fold_net_forward.9} parent=0 // pred_check
    _
  $region23: #{fold_net_forward.9} parent=0 // pred_check_branch
    %24 = sbr.rel (0) target = $region25
  $region24: #{fold_net_forward.9} parent=0 // pred_region
    _
  $region25: #{fold_net_forward.9} parent=0 // pred_fallthru
    _
  %v25 = vld [vmem:[%s2] sm:$0xff]
  %s26 = scalar_lea.vmem %s2, 8
  %v27 = vld [vmem:[%s26] sm:$0xff]
  %s28 = scalar_lea.vmem %s2, 16
  %v29 = vld [vmem:[%s28] sm:$0xff]
  %s30 = scalar_lea.vmem %s2, 24
  %v31 = vld [vmem:[%s30] sm:$0xff]
  %s32 = scalar_lea.vmem %s2, 32
  %v33 = vld [vmem:[%s32] sm:$0xff]
  %s34 = scalar_lea.vmem %s2, 40
  %v35 = vld [vmem:[%s34] sm:$0xff]
  %s36 = scalar_lea.vmem %s2, 48
  %v37 = vld [vmem:[%s36] sm:$0xff]
  %s38 = scalar_lea.vmem %s2, 56
  %v39 = vld [vmem:[%s38] sm:$0xff]
  %s40 = scalar_lea.vmem %s2, 64
  %v41 = vld [vmem:[%s40] sm:$0xff]
  %s42 = scalar_lea.vmem %s2, 72
  %v43 = vld [vmem:[%s42] sm:$0xff]
  %s44 = scalar_lea.vmem %s2, 80
  %v45 = vld [vmem:[%s44] sm:$0xff]
  %s46 = scalar_lea.vmem %s2, 88
  %v47 = vld [vmem:[%s46] sm:$0xff]
  %v48 = vld [vmem:[%s4] sm:$0xff]
  %v49 = vld [vmem:[%s4 + $0x8] sm:$0xff]
  %v50 = vld [vmem:[%s4 + $0x10] sm:$0xff]
  %v51 = vld [vmem:[%s4 + $0x18] sm:$0xff]
  %v52 = vld [vmem:[%s4 + $0x20] sm:$0xff]
  %v53 = vld [vmem:[%s4 + $0x28] sm:$0xff]
  %v54 = vld [vmem:[%s4 + $0x30] sm:$0xff]
  %v55 = vld [vmem:[%s4 + $0x38] sm:$0xff]
  %v56 = vld [vmem:[%s4 + $0x40] sm:$0xff]
  %v57 = vld [vmem:[%s4 + $0x48] sm:$0xff]
  %v58 = vld [vmem:[%s4 + $0x50] sm:$0xff]
  %v59 = vld [vmem:[%s4 + $0x58] sm:$0xff]
  %v60 = vld [vmem:[%s4 + $0x60] sm:$0xff]
  %v61 = vld [vmem:[%s4 + $0x68] sm:$0xff]
  %s62 = scalar_lea.vmem %s4, 112
  %v63 = vld [vmem:[%s62] sm:$0xff]
  %v64 = vld [vmem:[%s62 + $0x8] sm:$0xff]
  %v65 = vld [vmem:[%s62 + $0x10] sm:$0xff]
  %v66 = vld [vmem:[%s62 + $0x18] sm:$0xff]
  %v67 = vld [vmem:[%s62 + $0x20] sm:$0xff]
  %v68 = vld [vmem:[%s62 + $0x28] sm:$0xff]
  %v69 = vld [vmem:[%s62 + $0x30] sm:$0xff]
  %v70 = vld [vmem:[%s62 + $0x38] sm:$0xff]
  %v71 = vld [vmem:[%s62 + $0x40] sm:$0xff]
  %v72 = vld [vmem:[%s62 + $0x48] sm:$0xff]
  %v73 = vld [vmem:[%s62 + $0x50] sm:$0xff]
  %v74 = vld [vmem:[%s62 + $0x58] sm:$0xff]
  %v75 = vld [vmem:[%s62 + $0x60] sm:$0xff]
  %v76 = vld [vmem:[%s62 + $0x68] sm:$0xff]
  %s77 = scalar_lea.vmem %s4, 224
  %v78 = vld [vmem:[%s77] sm:$0xff]
  %v79 = vld [vmem:[%s77 + $0x8] sm:$0xff]
  %v80 = vld [vmem:[%s77 + $0x10] sm:$0xff]
  %v81 = vld [vmem:[%s77 + $0x18] sm:$0xff]
  %v82 = vld [vmem:[%s77 + $0x20] sm:$0xff]
  %v83 = vld [vmem:[%s77 + $0x28] sm:$0xff]
  %v84 = vld [vmem:[%s77 + $0x30] sm:$0xff]
  %v85 = vld [vmem:[%s77 + $0x38] sm:$0xff]
  %v86 = vld [vmem:[%s77 + $0x40] sm:$0xff]
  %v87 = vld [vmem:[%s77 + $0x48] sm:$0xff]
  %v88 = vld [vmem:[%s77 + $0x50] sm:$0xff]
  %v89 = vld [vmem:[%s77 + $0x58] sm:$0xff]
  %v90 = vld [vmem:[%s77 + $0x60] sm:$0xff]
  %v91 = vld [vmem:[%s77 + $0x68] sm:$0xff]
  %v92 = vld [vmem:[%s1] sm:$0xff]
  %s93 = scalar_lea.vmem %s1, 8
  %v94 = vld [vmem:[%s93] sm:$0xff]
  %v95 = vld [vmem:[%s0] sm:$0xff]
  %s96 = scalar_lea.vmem %s0, 8
  %v97 = vld [vmem:[%s96] sm:$0xff]
  %s98 = scalar_lea.vmem %s0, 16
  %v99 = vld [vmem:[%s98] sm:$0xff]
  %s100 = scalar_lea.vmem %s0, 24
  %v101 = vld [vmem:[%s100] sm:$0xff]
  %v102 = vmul.f32 %v94, %v97
  %v103 = vmul.f32 %v92, %v99
  %v104 = vadd.f32 %v102, %v103
  %v105 = vmul.f32 %v94, %v99
  %v106 = vmul.f32 %v92, %v97
  %v107 = vsub.f32 %v105, %v106
  %s108 = scalar_lea.vmem %s0, 32
  %v109 = vld [vmem:[%s108] sm:$0xff]
  %s110 = scalar_lea.vmem %s0, 40
  %v111 = vld [vmem:[%s110] sm:$0xff]
  %s112 = scalar_lea.vmem %s0, 48
  %v113 = vld [vmem:[%s112] sm:$0xff]
  %s114 = scalar_lea.vmem %s0, 56
  %v115 = vld [vmem:[%s114] sm:$0xff]
  %v116 = vmul.f32 %v94, %v111
  %v117 = vmul.f32 %v92, %v113
  %v118 = vadd.f32 %v116, %v117
  %v119 = vmul.f32 %v94, %v113
  %v120 = vmul.f32 %v92, %v111
  %v121 = vsub.f32 %v119, %v120
  %s122 = scalar_lea.vmem %s0, 64
  %v123 = vld [vmem:[%s122] sm:$0xff]
  %s124 = scalar_lea.vmem %s0, 72
  %v125 = vld [vmem:[%s124] sm:$0xff]
  %s126 = scalar_lea.vmem %s0, 80
  %v127 = vld [vmem:[%s126] sm:$0xff]
  %s128 = scalar_lea.vmem %s0, 88
  %v129 = vld [vmem:[%s128] sm:$0xff]
  %v130 = vmul.f32 %v94, %v125
  %v131 = vmul.f32 %v92, %v127
  %v132 = vadd.f32 %v130, %v131
  %v133 = vmul.f32 %v94, %v127
  %v134 = vmul.f32 %v92, %v125
  %v135 = vsub.f32 %v133, %v134
  %v136 = vmul.f32 %v25, %v95
  %v137 = vmul.f32 %v27, %v109
  %v138 = vadd.f32 %v136, %v137
  %v139 = vmul.f32 %v29, %v123
  %v140 = vadd.f32 %v138, %v139
  %v141 = vmul.f32 %v25, %v104
  %v142 = vmul.f32 %v27, %v118
  %v143 = vadd.f32 %v141, %v142
  %v144 = vmul.f32 %v29, %v132
  %v145 = vadd.f32 %v143, %v144
  %v146 = vmul.f32 %v25, %v107
  %v147 = vmul.f32 %v27, %v121
  %v148 = vadd.f32 %v146, %v147
  %v149 = vmul.f32 %v29, %v135
  %v150 = vadd.f32 %v148, %v149
  %v151 = vmul.f32 %v25, %v101
  %v152 = vmul.f32 %v27, %v115
  %v153 = vadd.f32 %v151, %v152
  %v154 = vmul.f32 %v29, %v129
  %v155 = vadd.f32 %v153, %v154
  %v156 = vadd.f32 %v155, %v31
  %v157 = vmul.f32 %v33, %v95
  %v158 = vmul.f32 %v35, %v109
  %v159 = vadd.f32 %v157, %v158
  %v160 = vmul.f32 %v37, %v123
  %v161 = vadd.f32 %v159, %v160
  %v162 = vmul.f32 %v33, %v104
  %v163 = vmul.f32 %v35, %v118
  %v164 = vadd.f32 %v162, %v163
  %v165 = vmul.f32 %v37, %v132
  %v166 = vadd.f32 %v164, %v165
  %v167 = vmul.f32 %v33, %v107
  %v168 = vmul.f32 %v35, %v121
  %v169 = vadd.f32 %v167, %v168
  %v170 = vmul.f32 %v37, %v135
  %v171 = vadd.f32 %v169, %v170
  %v172 = vmul.f32 %v33, %v101
  %v173 = vmul.f32 %v35, %v115
  %v174 = vadd.f32 %v172, %v173
  %v175 = vmul.f32 %v37, %v129
  %v176 = vadd.f32 %v174, %v175
  %v177 = vadd.f32 %v176, %v39
  %v178 = vmul.f32 %v41, %v95
  %v179 = vmul.f32 %v43, %v109
  %v180 = vadd.f32 %v178, %v179
  %v181 = vmul.f32 %v45, %v123
  %v182 = vadd.f32 %v180, %v181
  %v183 = vmul.f32 %v41, %v104
  %v184 = vmul.f32 %v43, %v118
  %v185 = vadd.f32 %v183, %v184
  %v186 = vmul.f32 %v45, %v132
  %v187 = vadd.f32 %v185, %v186
  %v188 = vmul.f32 %v41, %v107
  %v189 = vmul.f32 %v43, %v121
  %v190 = vadd.f32 %v188, %v189
  %v191 = vmul.f32 %v45, %v135
  %v192 = vadd.f32 %v190, %v191
  %v193 = vmul.f32 %v41, %v101
  %v194 = vmul.f32 %v43, %v115
  %v195 = vadd.f32 %v193, %v194
  %v196 = vmul.f32 %v45, %v129
  %v197 = vadd.f32 %v195, %v196
  %v198 = vadd.f32 %v197, %v47
  %199 = vst [vmem:[%s6] sm:$0xff] %v140
  %s200 = scalar_lea.vmem %s6, 8
  %201 = vst [vmem:[%s200] sm:$0xff] %v145
  %s202 = scalar_lea.vmem %s6, 16
  %203 = vst [vmem:[%s202] sm:$0xff] %v150
  %s204 = scalar_lea.vmem %s6, 24
  %205 = vst [vmem:[%s204] sm:$0xff] %v156
  %s206 = scalar_lea.vmem %s6, 32
  %207 = vst [vmem:[%s206] sm:$0xff] %v161
  %s208 = scalar_lea.vmem %s6, 40
  %209 = vst [vmem:[%s208] sm:$0xff] %v166
  %s210 = scalar_lea.vmem %s6, 48
  %211 = vst [vmem:[%s210] sm:$0xff] %v171
  %s212 = scalar_lea.vmem %s6, 56
  %213 = vst [vmem:[%s212] sm:$0xff] %v177
  %s214 = scalar_lea.vmem %s6, 64
  %215 = vst [vmem:[%s214] sm:$0xff] %v182
  %s216 = scalar_lea.vmem %s6, 72
  %217 = vst [vmem:[%s216] sm:$0xff] %v187
  %s218 = scalar_lea.vmem %s6, 80
  %219 = vst [vmem:[%s218] sm:$0xff] %v192
  %s220 = scalar_lea.vmem %s6, 88
  %221 = vst [vmem:[%s220] sm:$0xff] %v198
  %s222 = scalar_lea.vmem %s6, 96
  %223 = vst [vmem:[%s222] sm:$0xff] 0.0
  %s224 = scalar_lea.vmem %s6, 104
  %225 = vst [vmem:[%s224] sm:$0xff] 0.0
  %s226 = scalar_lea.vmem %s6, 112
  %227 = vst [vmem:[%s226] sm:$0xff] 0.0
  %s228 = scalar_lea.vmem %s6, 120
  %229 = vst [vmem:[%s228] sm:$0xff] 1.0
  %v230 = vld [vmem:[%s3] sm:$0xff]
  %v231 = vld [vmem:[%s3 + $0x8] sm:$0xff]
  %v232 = vld [vmem:[%s3 + $0x10] sm:$0xff]
  %v233 = vld [vmem:[%s3 + $0x18] sm:$0xff]
  %v234 = vld [vmem:[%s3 + $0x20] sm:$0xff]
  %v235 = vld [vmem:[%s3 + $0x28] sm:$0xff]
  %v236 = vld [vmem:[%s3 + $0x30] sm:$0xff]
  %v237 = vld [vmem:[%s3 + $0x38] sm:$0xff]
  %v238 = vld [vmem:[%s3 + $0x40] sm:$0xff]
  %v239 = vld [vmem:[%s3 + $0x48] sm:$0xff]
  %v240 = vld [vmem:[%s3 + $0x50] sm:$0xff]
  %v241 = vld [vmem:[%s3 + $0x58] sm:$0xff]
  %v242 = vld [vmem:[%s3 + $0x60] sm:$0xff]
  %v243 = vld [vmem:[%s3 + $0x68] sm:$0xff]
  %v244 = vmul.f32 %v140, %v48
  %v245 = vmul.f32 %v140, %v49
  %v246 = vmul.f32 %v140, %v50
  %v247 = vmul.f32 %v140, %v51
  %v248 = vmul.f32 %v140, %v52
  %v249 = vmul.f32 %v140, %v53
  %v250 = vmul.f32 %v140, %v54
  %v251 = vmul.f32 %v140, %v55
  %v252 = vmul.f32 %v140, %v56
  %v253 = vmul.f32 %v140, %v57
  %v254 = vmul.f32 %v140, %v58
  %v255 = vmul.f32 %v140, %v59
  %v256 = vmul.f32 %v140, %v60
  %v257 = vmul.f32 %v140, %v61
  %v258 = vmul.f32 %v145, %v63
  %v259 = vmul.f32 %v145, %v64
  %v260 = vmul.f32 %v145, %v65
  %v261 = vmul.f32 %v145, %v66
  %v262 = vmul.f32 %v145, %v67
  %v263 = vmul.f32 %v145, %v68
  %v264 = vmul.f32 %v145, %v69
  %v265 = vmul.f32 %v145, %v70
  %v266 = vmul.f32 %v145, %v71
  %v267 = vmul.f32 %v145, %v72
  %v268 = vmul.f32 %v145, %v73
  %v269 = vmul.f32 %v145, %v74
  %v270 = vmul.f32 %v145, %v75
  %v271 = vmul.f32 %v145, %v76
  %v272 = vadd.f32 %v244, %v258
  %v273 = vadd.f32 %v245, %v259
  %v274 = vadd.f32 %v246, %v260
  %v275 = vadd.f32 %v247, %v261
  %v276 = vadd.f32 %v248, %v262
  %v277 = vadd.f32 %v249, %v263
  %v278 = vadd.f32 %v250, %v264
  %v279 = vadd.f32 %v251, %v265
  %v280 = vadd.f32 %v252, %v266
  %v281 = vadd.f32 %v253, %v267
  %v282 = vadd.f32 %v254, %v268
  %v283 = vadd.f32 %v255, %v269
  %v284 = vadd.f32 %v256, %v270
  %v285 = vadd.f32 %v257, %v271
  %v286 = vmul.f32 %v150, %v78
  %v287 = vmul.f32 %v150, %v79
  %v288 = vmul.f32 %v150, %v80
  %v289 = vmul.f32 %v150, %v81
  %v290 = vmul.f32 %v150, %v82
  %v291 = vmul.f32 %v150, %v83
  %v292 = vmul.f32 %v150, %v84
  %v293 = vmul.f32 %v150, %v85
  %v294 = vmul.f32 %v150, %v86
  %v295 = vmul.f32 %v150, %v87
  %v296 = vmul.f32 %v150, %v88
  %v297 = vmul.f32 %v150, %v89
  %v298 = vmul.f32 %v150, %v90
  %v299 = vmul.f32 %v150, %v91
  %v300 = vadd.f32 %v272, %v286
  %v301 = vadd.f32 %v273, %v287
  %v302 = vadd.f32 %v274, %v288
  %v303 = vadd.f32 %v275, %v289
  %v304 = vadd.f32 %v276, %v290
  %v305 = vadd.f32 %v277, %v291
  %v306 = vadd.f32 %v278, %v292
  %v307 = vadd.f32 %v279, %v293
  %v308 = vadd.f32 %v280, %v294
  %v309 = vadd.f32 %v281, %v295
  %v310 = vadd.f32 %v282, %v296
  %v311 = vadd.f32 %v283, %v297
  %v312 = vadd.f32 %v284, %v298
  %v313 = vadd.f32 %v285, %v299
  %v314 = vadd.f32 %v300, %v156
  %v315 = vadd.f32 %v301, %v156
  %v316 = vadd.f32 %v302, %v156
  %v317 = vadd.f32 %v303, %v156
  %v318 = vadd.f32 %v304, %v156
  %v319 = vadd.f32 %v305, %v156
  %v320 = vadd.f32 %v306, %v156
  %v321 = vadd.f32 %v307, %v156
  %v322 = vadd.f32 %v308, %v156
  %v323 = vadd.f32 %v309, %v156
  %v324 = vadd.f32 %v310, %v156
  %v325 = vadd.f32 %v311, %v156
  %v326 = vadd.f32 %v312, %v156
  %v327 = vadd.f32 %v313, %v156
  %v328 = vmul.f32 %v230, %v314
  %v329 = vmul.f32 %v231, %v315
  %v330 = vmul.f32 %v232, %v316
  %v331 = vmul.f32 %v233, %v317
  %v332 = vmul.f32 %v234, %v318
  %v333 = vmul.f32 %v235, %v319
  %v334 = vmul.f32 %v236, %v320
  %v335 = vmul.f32 %v237, %v321
  %v336 = vmul.f32 %v238, %v322
  %v337 = vmul.f32 %v239, %v323
  %v338 = vmul.f32 %v240, %v324
  %v339 = vmul.f32 %v241, %v325
  %v340 = vmul.f32 %v242, %v326
  %v341 = vmul.f32 %v243, %v327
  %v342 = vadd.f32 %v328, 0.0
  %v343 = vadd.f32 %v329, 0.0
  %v344 = vadd.f32 %v330, 0.0
  %v345 = vadd.f32 %v331, 0.0
  %v346 = vadd.f32 %v332, 0.0
  %v347 = vadd.f32 %v333, 0.0
  %v348 = vadd.f32 %v334, 0.0
  %v349 = vadd.f32 %v335, 0.0
  %v350 = vadd.f32 %v336, 0.0
  %v351 = vadd.f32 %v337, 0.0
  %v352 = vadd.f32 %v338, 0.0
  %v353 = vadd.f32 %v339, 0.0
  %v354 = vadd.f32 %v340, 0.0
  %v355 = vadd.f32 %v341, 0.0
  %v356 = vmul.f32 %v161, %v48
  %v357 = vmul.f32 %v161, %v49
  %v358 = vmul.f32 %v161, %v50
  %v359 = vmul.f32 %v161, %v51
  %v360 = vmul.f32 %v161, %v52
  %v361 = vmul.f32 %v161, %v53
  %v362 = vmul.f32 %v161, %v54
  %v363 = vmul.f32 %v161, %v55
  %v364 = vmul.f32 %v161, %v56
  %v365 = vmul.f32 %v161, %v57
  %v366 = vmul.f32 %v161, %v58
  %v367 = vmul.f32 %v161, %v59
  %v368 = vmul.f32 %v161, %v60
  %v369 = vmul.f32 %v161, %v61
  %v370 = vmul.f32 %v166, %v63
  %v371 = vmul.f32 %v166, %v64
  %v372 = vmul.f32 %v166, %v65
  %v373 = vmul.f32 %v166, %v66
  %v374 = vmul.f32 %v166, %v67
  %v375 = vmul.f32 %v166, %v68
  %v376 = vmul.f32 %v166, %v69
  %v377 = vmul.f32 %v166, %v70
  %v378 = vmul.f32 %v166, %v71
  %v379 = vmul.f32 %v166, %v72
  %v380 = vmul.f32 %v166, %v73
  %v381 = vmul.f32 %v166, %v74
  %v382 = vmul.f32 %v166, %v75
  %v383 = vmul.f32 %v166, %v76
  %v384 = vadd.f32 %v356, %v370
  %v385 = vadd.f32 %v357, %v371
  %v386 = vadd.f32 %v358, %v372
  %v387 = vadd.f32 %v359, %v373
  %v388 = vadd.f32 %v360, %v374
  %v389 = vadd.f32 %v361, %v375
  %v390 = vadd.f32 %v362, %v376
  %v391 = vadd.f32 %v363, %v377
  %v392 = vadd.f32 %v364, %v378
  %v393 = vadd.f32 %v365, %v379
  %v394 = vadd.f32 %v366, %v380
  %v395 = vadd.f32 %v367, %v381
  %v396 = vadd.f32 %v368, %v382
  %v397 = vadd.f32 %v369, %v383
  %v398 = vmul.f32 %v171, %v78
  %v399 = vmul.f32 %v171, %v79
  %v400 = vmul.f32 %v171, %v80
  %v401 = vmul.f32 %v171, %v81
  %v402 = vmul.f32 %v171, %v82
  %v403 = vmul.f32 %v171, %v83
  %v404 = vmul.f32 %v171, %v84
  %v405 = vmul.f32 %v171, %v85
  %v406 = vmul.f32 %v171, %v86
  %v407 = vmul.f32 %v171, %v87
  %v408 = vmul.f32 %v171, %v88
  %v409 = vmul.f32 %v171, %v89
  %v410 = vmul.f32 %v171, %v90
  %v411 = vmul.f32 %v171, %v91
  %v412 = vadd.f32 %v384, %v398
  %v413 = vadd.f32 %v385, %v399
  %v414 = vadd.f32 %v386, %v400
  %v415 = vadd.f32 %v387, %v401
  %v416 = vadd.f32 %v388, %v402
  %v417 = vadd.f32 %v389, %v403
  %v418 = vadd.f32 %v390, %v404
  %v419 = vadd.f32 %v391, %v405
  %v420 = vadd.f32 %v392, %v406
  %v421 = vadd.f32 %v393, %v407
  %v422 = vadd.f32 %v394, %v408
  %v423 = vadd.f32 %v395, %v409
  %v424 = vadd.f32 %v396, %v410
  %v425 = vadd.f32 %v397, %v411
  %v426 = vadd.f32 %v412, %v177
  %v427 = vadd.f32 %v413, %v177
  %v428 = vadd.f32 %v414, %v177
  %v429 = vadd.f32 %v415, %v177
  %v430 = vadd.f32 %v416, %v177
  %v431 = vadd.f32 %v417, %v177
  %v432 = vadd.f32 %v418, %v177
  %v433 = vadd.f32 %v419, %v177
  %v434 = vadd.f32 %v420, %v177
  %v435 = vadd.f32 %v421, %v177
  %v436 = vadd.f32 %v422, %v177
  %v437 = vadd.f32 %v423, %v177
  %v438 = vadd.f32 %v424, %v177
  %v439 = vadd.f32 %v425, %v177
  %v440 = vmul.f32 %v230, %v426
  %v441 = vmul.f32 %v231, %v427
  %v442 = vmul.f32 %v232, %v428
  %v443 = vmul.f32 %v233, %v429
  %v444 = vmul.f32 %v234, %v430
  %v445 = vmul.f32 %v235, %v431
  %v446 = vmul.f32 %v236, %v432
  %v447 = vmul.f32 %v237, %v433
  %v448 = vmul.f32 %v238, %v434
  %v449 = vmul.f32 %v239, %v435
  %v450 = vmul.f32 %v240, %v436
  %v451 = vmul.f32 %v241, %v437
  %v452 = vmul.f32 %v242, %v438
  %v453 = vmul.f32 %v243, %v439
  %v454 = vadd.f32 %v440, 0.0
  %v455 = vadd.f32 %v441, 0.0
  %v456 = vadd.f32 %v442, 0.0
  %v457 = vadd.f32 %v443, 0.0
  %v458 = vadd.f32 %v444, 0.0
  %v459 = vadd.f32 %v445, 0.0
  %v460 = vadd.f32 %v446, 0.0
  %v461 = vadd.f32 %v447, 0.0
  %v462 = vadd.f32 %v448, 0.0
  %v463 = vadd.f32 %v449, 0.0
  %v464 = vadd.f32 %v450, 0.0
  %v465 = vadd.f32 %v451, 0.0
  %v466 = vadd.f32 %v452, 0.0
  %v467 = vadd.f32 %v453, 0.0
  %v468 = vmul.f32 %v182, %v48
  %v469 = vmul.f32 %v182, %v49
  %v470 = vmul.f32 %v182, %v50
  %v471 = vmul.f32 %v182, %v51
  %v472 = vmul.f32 %v182, %v52
  %v473 = vmul.f32 %v182, %v53
  %v474 = vmul.f32 %v182, %v54
  %v475 = vmul.f32 %v182, %v55
  %v476 = vmul.f32 %v182, %v56
  %v477 = vmul.f32 %v182, %v57
  %v478 = vmul.f32 %v182, %v58
  %v479 = vmul.f32 %v182, %v59
  %v480 = vmul.f32 %v182, %v60
  %v481 = vmul.f32 %v182, %v61
  %v482 = vmul.f32 %v187, %v63
  %v483 = vmul.f32 %v187, %v64
  %v484 = vmul.f32 %v187, %v65
  %v485 = vmul.f32 %v187, %v66
  %v486 = vmul.f32 %v187, %v67
  %v487 = vmul.f32 %v187, %v68
  %v488 = vmul.f32 %v187, %v69
  %v489 = vmul.f32 %v187, %v70
  %v490 = vmul.f32 %v187, %v71
  %v491 = vmul.f32 %v187, %v72
  %v492 = vmul.f32 %v187, %v73
  %v493 = vmul.f32 %v187, %v74
  %v494 = vmul.f32 %v187, %v75
  %v495 = vmul.f32 %v187, %v76
  %v496 = vadd.f32 %v468, %v482
  %v497 = vadd.f32 %v469, %v483
  %v498 = vadd.f32 %v470, %v484
  %v499 = vadd.f32 %v471, %v485
  %v500 = vadd.f32 %v472, %v486
  %v501 = vadd.f32 %v473, %v487
  %v502 = vadd.f32 %v474, %v488
  %v503 = vadd.f32 %v475, %v489
  %v504 = vadd.f32 %v476, %v490
  %v505 = vadd.f32 %v477, %v491
  %v506 = vadd.f32 %v478, %v492
  %v507 = vadd.f32 %v479, %v493
  %v508 = vadd.f32 %v480, %v494
  %v509 = vadd.f32 %v481, %v495
  %v510 = vmul.f32 %v192, %v78
  %v511 = vmul.f32 %v192, %v79
  %v512 = vmul.f32 %v192, %v80
  %v513 = vmul.f32 %v192, %v81
  %v514 = vmul.f32 %v192, %v82
  %v515 = vmul.f32 %v192, %v83
  %v516 = vmul.f32 %v192, %v84
  %v517 = vmul.f32 %v192, %v85
  %v518 = vmul.f32 %v192, %v86
  %v519 = vmul.f32 %v192, %v87
  %v520 = vmul.f32 %v192, %v88
  %v521 = vmul.f32 %v192, %v89
  %v522 = vmul.f32 %v192, %v90
  %v523 = vmul.f32 %v192, %v91
  %v524 = vadd.f32 %v496, %v510
  %v525 = vadd.f32 %v497, %v511
  %v526 = vadd.f32 %v498, %v512
  %v527 = vadd.f32 %v499, %v513
  %v528 = vadd.f32 %v500, %v514
  %v529 = vadd.f32 %v501, %v515
  %v530 = vadd.f32 %v502, %v516
  %v531 = vadd.f32 %v503, %v517
  %v532 = vadd.f32 %v504, %v518
  %v533 = vadd.f32 %v505, %v519
  %v534 = vadd.f32 %v506, %v520
  %v535 = vadd.f32 %v507, %v521
  %v536 = vadd.f32 %v508, %v522
  %v537 = vadd.f32 %v509, %v523
  %v538 = vadd.f32 %v524, %v198
  %v539 = vadd.f32 %v525, %v198
  %v540 = vadd.f32 %v526, %v198
  %v541 = vadd.f32 %v527, %v198
  %v542 = vadd.f32 %v528, %v198
  %v543 = vadd.f32 %v529, %v198
  %v544 = vadd.f32 %v530, %v198
  %v545 = vadd.f32 %v531, %v198
  %v546 = vadd.f32 %v532, %v198
  %v547 = vadd.f32 %v533, %v198
  %v548 = vadd.f32 %v534, %v198
  %v549 = vadd.f32 %v535, %v198
  %v550 = vadd.f32 %v536, %v198
  %v551 = vadd.f32 %v537, %v198
  %v552 = vmul.f32 %v230, %v538
  %v553 = vmul.f32 %v231, %v539
  %v554 = vmul.f32 %v232, %v540
  %v555 = vmul.f32 %v233, %v541
  %v556 = vmul.f32 %v234, %v542
  %v557 = vmul.f32 %v235, %v543
  %v558 = vmul.f32 %v236, %v544
  %v559 = vmul.f32 %v237, %v545
  %v560 = vmul.f32 %v238, %v546
  %v561 = vmul.f32 %v239, %v547
  %v562 = vmul.f32 %v240, %v548
  %v563 = vmul.f32 %v241, %v549
  %v564 = vmul.f32 %v242, %v550
  %v565 = vmul.f32 %v243, %v551
  %v566 = vadd.f32 %v552, 0.0
  %v567 = vadd.f32 %v553, 0.0
  %v568 = vadd.f32 %v554, 0.0
  %v569 = vadd.f32 %v555, 0.0
  %v570 = vadd.f32 %v556, 0.0
  %v571 = vadd.f32 %v557, 0.0
  %v572 = vadd.f32 %v558, 0.0
  %v573 = vadd.f32 %v559, 0.0
  %v574 = vadd.f32 %v560, 0.0
  %v575 = vadd.f32 %v561, 0.0
  %v576 = vadd.f32 %v562, 0.0
  %v577 = vadd.f32 %v563, 0.0
  %v578 = vadd.f32 %v564, 0.0
  %v579 = vadd.f32 %v565, 0.0
  %s580 = scalar_lea.vmem %s1, 16
  %v581 = vld [vmem:[%s580] sm:$0xff]
  %s582 = scalar_lea.vmem %s1, 24
  %v583 = vld [vmem:[%s582] sm:$0xff]
  %s584 = scalar_lea.vmem %s0, 96
  %v585 = vld [vmem:[%s584] sm:$0xff]
  %s586 = scalar_lea.vmem %s0, 104
  %v587 = vld [vmem:[%s586] sm:$0xff]
  %s588 = scalar_lea.vmem %s0, 112
  %v589 = vld [vmem:[%s588] sm:$0xff]
  %s590 = scalar_lea.vmem %s0, 120
  %v591 = vld [vmem:[%s590] sm:$0xff]
  %v592 = vmul.f32 %v583, %v587
  %v593 = vmul.f32 %v581, %v589
  %v594 = vadd.f32 %v592, %v593
  %v595 = vmul.f32 %v583, %v589
  %v596 = vmul.f32 %v581, %v587
  %v597 = vsub.f32 %v595, %v596
  %s598 = scalar_lea.vmem %s0, 128
  %v599 = vld [vmem:[%s598] sm:$0xff]
  %s600 = scalar_lea.vmem %s0, 136
  %v601 = vld [vmem:[%s600] sm:$0xff]
  %s602 = scalar_lea.vmem %s0, 144
  %v603 = vld [vmem:[%s602] sm:$0xff]
  %s604 = scalar_lea.vmem %s0, 152
  %v605 = vld [vmem:[%s604] sm:$0xff]
  %v606 = vmul.f32 %v583, %v601
  %v607 = vmul.f32 %v581, %v603
  %v608 = vadd.f32 %v606, %v607
  %v609 = vmul.f32 %v583, %v603
  %v610 = vmul.f32 %v581, %v601
  %v611 = vsub.f32 %v609, %v610
  %s612 = scalar_lea.vmem %s0, 160
  %v613 = vld [vmem:[%s612] sm:$0xff]
  %s614 = scalar_lea.vmem %s0, 168
  %v615 = vld [vmem:[%s614] sm:$0xff]
  %s616 = scalar_lea.vmem %s0, 176
  %v617 = vld [vmem:[%s616] sm:$0xff]
  %s618 = scalar_lea.vmem %s0, 184
  %v619 = vld [vmem:[%s618] sm:$0xff]
  %v620 = vmul.f32 %v583, %v615
  %v621 = vmul.f32 %v581, %v617
  %v622 = vadd.f32 %v620, %v621
  %v623 = vmul.f32 %v583, %v617
  %v624 = vmul.f32 %v581, %v615
  %v625 = vsub.f32 %v623, %v624
  %v626 = vmul.f32 %v25, %v585
  %v627 = vmul.f32 %v27, %v599
  %v628 = vadd.f32 %v626, %v627
  %v629 = vmul.f32 %v29, %v613
  %v630 = vadd.f32 %v628, %v629
  %v631 = vmul.f32 %v25, %v594
  %v632 = vmul.f32 %v27, %v608
  %v633 = vadd.f32 %v631, %v632
  %v634 = vmul.f32 %v29, %v622
  %v635 = vadd.f32 %v633, %v634
  %v636 = vmul.f32 %v25, %v597
  %v637 = vmul.f32 %v27, %v611
  %v638 = vadd.f32 %v636, %v637
  %v639 = vmul.f32 %v29, %v625
  %v640 = vadd.f32 %v638, %v639
  %v641 = vmul.f32 %v25, %v591
  %v642 = vmul.f32 %v27, %v605
  %v643 = vadd.f32 %v641, %v642
  %v644 = vmul.f32 %v29, %v619
  %v645 = vadd.f32 %v643, %v644
  %v646 = vadd.f32 %v645, %v31
  %v647 = vmul.f32 %v33, %v585
  %v648 = vmul.f32 %v35, %v599
  %v649 = vadd.f32 %v647, %v648
  %v650 = vmul.f32 %v37, %v613
  %v651 = vadd.f32 %v649, %v650
  %v652 = vmul.f32 %v33, %v594
  %v653 = vmul.f32 %v35, %v608
  %v654 = vadd.f32 %v652, %v653
  %v655 = vmul.f32 %v37, %v622
  %v656 = vadd.f32 %v654, %v655
  %v657 = vmul.f32 %v33, %v597
  %v658 = vmul.f32 %v35, %v611
  %v659 = vadd.f32 %v657, %v658
  %v660 = vmul.f32 %v37, %v625
  %v661 = vadd.f32 %v659, %v660
  %v662 = vmul.f32 %v33, %v591
  %v663 = vmul.f32 %v35, %v605
  %v664 = vadd.f32 %v662, %v663
  %v665 = vmul.f32 %v37, %v619
  %v666 = vadd.f32 %v664, %v665
  %v667 = vadd.f32 %v666, %v39
  %v668 = vmul.f32 %v41, %v585
  %v669 = vmul.f32 %v43, %v599
  %v670 = vadd.f32 %v668, %v669
  %v671 = vmul.f32 %v45, %v613
  %v672 = vadd.f32 %v670, %v671
  %v673 = vmul.f32 %v41, %v594
  %v674 = vmul.f32 %v43, %v608
  %v675 = vadd.f32 %v673, %v674
  %v676 = vmul.f32 %v45, %v622
  %v677 = vadd.f32 %v675, %v676
  %v678 = vmul.f32 %v41, %v597
  %v679 = vmul.f32 %v43, %v611
  %v680 = vadd.f32 %v678, %v679
  %v681 = vmul.f32 %v45, %v625
  %v682 = vadd.f32 %v680, %v681
  %v683 = vmul.f32 %v41, %v591
  %v684 = vmul.f32 %v43, %v605
  %v685 = vadd.f32 %v683, %v684
  %v686 = vmul.f32 %v45, %v619
  %v687 = vadd.f32 %v685, %v686
  %v688 = vadd.f32 %v687, %v47
  %s689 = scalar_lea.vmem %s6, 128
  %690 = vst [vmem:[%s689] sm:$0xff] %v630
  %s691 = scalar_lea.vmem %s6, 136
  %692 = vst [vmem:[%s691] sm:$0xff] %v635
  %s693 = scalar_lea.vmem %s6, 144
  %694 = vst [vmem:[%s693] sm:$0xff] %v640
  %s695 = scalar_lea.vmem %s6, 152
  %696 = vst [vmem:[%s695] sm:$0xff] %v646
  %s697 = scalar_lea.vmem %s6, 160
  %698 = vst [vmem:[%s697] sm:$0xff] %v651
  %s699 = scalar_lea.vmem %s6, 168
  %700 = vst [vmem:[%s699] sm:$0xff] %v656
  %s701 = scalar_lea.vmem %s6, 176
  %702 = vst [vmem:[%s701] sm:$0xff] %v661
  %s703 = scalar_lea.vmem %s6, 184
  %704 = vst [vmem:[%s703] sm:$0xff] %v667
  %s705 = scalar_lea.vmem %s6, 192
  %706 = vst [vmem:[%s705] sm:$0xff] %v672
  %s707 = scalar_lea.vmem %s6, 200
  %708 = vst [vmem:[%s707] sm:$0xff] %v677
  %s709 = scalar_lea.vmem %s6, 208
  %710 = vst [vmem:[%s709] sm:$0xff] %v682
  %s711 = scalar_lea.vmem %s6, 216
  %712 = vst [vmem:[%s711] sm:$0xff] %v688
  %s713 = scalar_lea.vmem %s6, 224
  %714 = vst [vmem:[%s713] sm:$0xff] 0.0
  %s715 = scalar_lea.vmem %s6, 232
  %716 = vst [vmem:[%s715] sm:$0xff] 0.0
  %s717 = scalar_lea.vmem %s6, 240
  %718 = vst [vmem:[%s717] sm:$0xff] 0.0
  %s719 = scalar_lea.vmem %s6, 248
  %720 = vst [vmem:[%s719] sm:$0xff] 1.0
  %s721 = scalar_lea.vmem %s3, 112
  %v722 = vld [vmem:[%s721] sm:$0xff]
  %v723 = vld [vmem:[%s721 + $0x8] sm:$0xff]
  %v724 = vld [vmem:[%s721 + $0x10] sm:$0xff]
  %v725 = vld [vmem:[%s721 + $0x18] sm:$0xff]
  %v726 = vld [vmem:[%s721 + $0x20] sm:$0xff]
  %v727 = vld [vmem:[%s721 + $0x28] sm:$0xff]
  %v728 = vld [vmem:[%s721 + $0x30] sm:$0xff]
  %v729 = vld [vmem:[%s721 + $0x38] sm:$0xff]
  %v730 = vld [vmem:[%s721 + $0x40] sm:$0xff]
  %v731 = vld [vmem:[%s721 + $0x48] sm:$0xff]
  %v732 = vld [vmem:[%s721 + $0x50] sm:$0xff]
  %v733 = vld [vmem:[%s721 + $0x58] sm:$0xff]
  %v734 = vld [vmem:[%s721 + $0x60] sm:$0xff]
  %v735 = vld [vmem:[%s721 + $0x68] sm:$0xff]
  %v736 = vmul.f32 %v630, %v48
  %v737 = vmul.f32 %v630, %v49
  %v738 = vmul.f32 %v630, %v50
  %v739 = vmul.f32 %v630, %v51
  %v740 = vmul.f32 %v630, %v52
  %v741 = vmul.f32 %v630, %v53
  %v742 = vmul.f32 %v630, %v54
  %v743 = vmul.f32 %v630, %v55
  %v744 = vmul.f32 %v630, %v56
  %v745 = vmul.f32 %v630, %v57
  %v746 = vmul.f32 %v630, %v58
  %v747 = vmul.f32 %v630, %v59
  %v748 = vmul.f32 %v630, %v60
  %v749 = vmul.f32 %v630, %v61
  %v750 = vmul.f32 %v635, %v63
  %v751 = vmul.f32 %v635, %v64
  %v752 = vmul.f32 %v635, %v65
  %v753 = vmul.f32 %v635, %v66
  %v754 = vmul.f32 %v635, %v67
  %v755 = vmul.f32 %v635, %v68
  %v756 = vmul.f32 %v635, %v69
  %v757 = vmul.f32 %v635, %v70
  %v758 = vmul.f32 %v635, %v71
  %v759 = vmul.f32 %v635, %v72
  %v760 = vmul.f32 %v635, %v73
  %v761 = vmul.f32 %v635, %v74
  %v762 = vmul.f32 %v635, %v75
  %v763 = vmul.f32 %v635, %v76
  %v764 = vadd.f32 %v736, %v750
  %v765 = vadd.f32 %v737, %v751
  %v766 = vadd.f32 %v738, %v752
  %v767 = vadd.f32 %v739, %v753
  %v768 = vadd.f32 %v740, %v754
  %v769 = vadd.f32 %v741, %v755
  %v770 = vadd.f32 %v742, %v756
  %v771 = vadd.f32 %v743, %v757
  %v772 = vadd.f32 %v744, %v758
  %v773 = vadd.f32 %v745, %v759
  %v774 = vadd.f32 %v746, %v760
  %v775 = vadd.f32 %v747, %v761
  %v776 = vadd.f32 %v748, %v762
  %v777 = vadd.f32 %v749, %v763
  %v778 = vmul.f32 %v640, %v78
  %v779 = vmul.f32 %v640, %v79
  %v780 = vmul.f32 %v640, %v80
  %v781 = vmul.f32 %v640, %v81
  %v782 = vmul.f32 %v640, %v82
  %v783 = vmul.f32 %v640, %v83
  %v784 = vmul.f32 %v640, %v84
  %v785 = vmul.f32 %v640, %v85
  %v786 = vmul.f32 %v640, %v86
  %v787 = vmul.f32 %v640, %v87
  %v788 = vmul.f32 %v640, %v88
  %v789 = vmul.f32 %v640, %v89
  %v790 = vmul.f32 %v640, %v90
  %v791 = vmul.f32 %v640, %v91
  %v792 = vadd.f32 %v764, %v778
  %v793 = vadd.f32 %v765, %v779
  %v794 = vadd.f32 %v766, %v780
  %v795 = vadd.f32 %v767, %v781
  %v796 = vadd.f32 %v768, %v782
  %v797 = vadd.f32 %v769, %v783
  %v798 = vadd.f32 %v770, %v784
  %v799 = vadd.f32 %v771, %v785
  %v800 = vadd.f32 %v772, %v786
  %v801 = vadd.f32 %v773, %v787
  %v802 = vadd.f32 %v774, %v788
  %v803 = vadd.f32 %v775, %v789
  %v804 = vadd.f32 %v776, %v790
  %v805 = vadd.f32 %v777, %v791
  %v806 = vadd.f32 %v792, %v646
  %v807 = vadd.f32 %v793, %v646
  %v808 = vadd.f32 %v794, %v646
  %v809 = vadd.f32 %v795, %v646
  %v810 = vadd.f32 %v796, %v646
  %v811 = vadd.f32 %v797, %v646
  %v812 = vadd.f32 %v798, %v646
  %v813 = vadd.f32 %v799, %v646
  %v814 = vadd.f32 %v800, %v646
  %v815 = vadd.f32 %v801, %v646
  %v816 = vadd.f32 %v802, %v646
  %v817 = vadd.f32 %v803, %v646
  %v818 = vadd.f32 %v804, %v646
  %v819 = vadd.f32 %v805, %v646
  %v820 = vmul.f32 %v722, %v806
  %v821 = vmul.f32 %v723, %v807
  %v822 = vmul.f32 %v724, %v808
  %v823 = vmul.f32 %v725, %v809
  %v824 = vmul.f32 %v726, %v810
  %v825 = vmul.f32 %v727, %v811
  %v826 = vmul.f32 %v728, %v812
  %v827 = vmul.f32 %v729, %v813
  %v828 = vmul.f32 %v730, %v814
  %v829 = vmul.f32 %v731, %v815
  %v830 = vmul.f32 %v732, %v816
  %v831 = vmul.f32 %v733, %v817
  %v832 = vmul.f32 %v734, %v818
  %v833 = vmul.f32 %v735, %v819
  %v834 = vadd.f32 %v342, %v820
  %v835 = vadd.f32 %v343, %v821
  %v836 = vadd.f32 %v344, %v822
  %v837 = vadd.f32 %v345, %v823
  %v838 = vadd.f32 %v346, %v824
  %v839 = vadd.f32 %v347, %v825
  %v840 = vadd.f32 %v348, %v826
  %v841 = vadd.f32 %v349, %v827
  %v842 = vadd.f32 %v350, %v828
  %v843 = vadd.f32 %v351, %v829
  %v844 = vadd.f32 %v352, %v830
  %v845 = vadd.f32 %v353, %v831
  %v846 = vadd.f32 %v354, %v832
  %v847 = vadd.f32 %v355, %v833
  %v848 = vmul.f32 %v651, %v48
  %v849 = vmul.f32 %v651, %v49
  %v850 = vmul.f32 %v651, %v50
  %v851 = vmul.f32 %v651, %v51
  %v852 = vmul.f32 %v651, %v52
  %v853 = vmul.f32 %v651, %v53
  %v854 = vmul.f32 %v651, %v54
  %v855 = vmul.f32 %v651, %v55
  %v856 = vmul.f32 %v651, %v56
  %v857 = vmul.f32 %v651, %v57
  %v858 = vmul.f32 %v651, %v58
  %v859 = vmul.f32 %v651, %v59
  %v860 = vmul.f32 %v651, %v60
  %v861 = vmul.f32 %v651, %v61
  %v862 = vmul.f32 %v656, %v63
  %v863 = vmul.f32 %v656, %v64
  %v864 = vmul.f32 %v656, %v65
  %v865 = vmul.f32 %v656, %v66
  %v866 = vmul.f32 %v656, %v67
  %v867 = vmul.f32 %v656, %v68
  %v868 = vmul.f32 %v656, %v69
  %v869 = vmul.f32 %v656, %v70
  %v870 = vmul.f32 %v656, %v71
  %v871 = vmul.f32 %v656, %v72
  %v872 = vmul.f32 %v656, %v73
  %v873 = vmul.f32 %v656, %v74
  %v874 = vmul.f32 %v656, %v75
  %v875 = vmul.f32 %v656, %v76
  %v876 = vadd.f32 %v848, %v862
  %v877 = vadd.f32 %v849, %v863
  %v878 = vadd.f32 %v850, %v864
  %v879 = vadd.f32 %v851, %v865
  %v880 = vadd.f32 %v852, %v866
  %v881 = vadd.f32 %v853, %v867
  %v882 = vadd.f32 %v854, %v868
  %v883 = vadd.f32 %v855, %v869
  %v884 = vadd.f32 %v856, %v870
  %v885 = vadd.f32 %v857, %v871
  %v886 = vadd.f32 %v858, %v872
  %v887 = vadd.f32 %v859, %v873
  %v888 = vadd.f32 %v860, %v874
  %v889 = vadd.f32 %v861, %v875
  %v890 = vmul.f32 %v661, %v78
  %v891 = vmul.f32 %v661, %v79
  %v892 = vmul.f32 %v661, %v80
  %v893 = vmul.f32 %v661, %v81
  %v894 = vmul.f32 %v661, %v82
  %v895 = vmul.f32 %v661, %v83
  %v896 = vmul.f32 %v661, %v84
  %v897 = vmul.f32 %v661, %v85
  %v898 = vmul.f32 %v661, %v86
  %v899 = vmul.f32 %v661, %v87
  %v900 = vmul.f32 %v661, %v88
  %v901 = vmul.f32 %v661, %v89
  %v902 = vmul.f32 %v661, %v90
  %v903 = vmul.f32 %v661, %v91
  %v904 = vadd.f32 %v876, %v890
  %v905 = vadd.f32 %v877, %v891
  %v906 = vadd.f32 %v878, %v892
  %v907 = vadd.f32 %v879, %v893
  %v908 = vadd.f32 %v880, %v894
  %v909 = vadd.f32 %v881, %v895
  %v910 = vadd.f32 %v882, %v896
  %v911 = vadd.f32 %v883, %v897
  %v912 = vadd.f32 %v884, %v898
  %v913 = vadd.f32 %v885, %v899
  %v914 = vadd.f32 %v886, %v900
  %v915 = vadd.f32 %v887, %v901
  %v916 = vadd.f32 %v888, %v902
  %v917 = vadd.f32 %v889, %v903
  %v918 = vadd.f32 %v904, %v667
  %v919 = vadd.f32 %v905, %v667
  %v920 = vadd.f32 %v906, %v667
  %v921 = vadd.f32 %v907, %v667
  %v922 = vadd.f32 %v908, %v667
  %v923 = vadd.f32 %v909, %v667
  %v924 = vadd.f32 %v910, %v667
  %v925 = vadd.f32 %v911, %v667
  %v926 = vadd.f32 %v912, %v667
  %v927 = vadd.f32 %v913, %v667
  %v928 = vadd.f32 %v914, %v667
  %v929 = vadd.f32 %v915, %v667
  %v930 = vadd.f32 %v916, %v667
  %v931 = vadd.f32 %v917, %v667
  %v932 = vmul.f32 %v722, %v918
  %v933 = vmul.f32 %v723, %v919
  %v934 = vmul.f32 %v724, %v920
  %v935 = vmul.f32 %v725, %v921
  %v936 = vmul.f32 %v726, %v922
  %v937 = vmul.f32 %v727, %v923
  %v938 = vmul.f32 %v728, %v924
  %v939 = vmul.f32 %v729, %v925
  %v940 = vmul.f32 %v730, %v926
  %v941 = vmul.f32 %v731, %v927
  %v942 = vmul.f32 %v732, %v928
  %v943 = vmul.f32 %v733, %v929
  %v944 = vmul.f32 %v734, %v930
  %v945 = vmul.f32 %v735, %v931
  %v946 = vadd.f32 %v454, %v932
  %v947 = vadd.f32 %v455, %v933
  %v948 = vadd.f32 %v456, %v934
  %v949 = vadd.f32 %v457, %v935
  %v950 = vadd.f32 %v458, %v936
  %v951 = vadd.f32 %v459, %v937
  %v952 = vadd.f32 %v460, %v938
  %v953 = vadd.f32 %v461, %v939
  %v954 = vadd.f32 %v462, %v940
  %v955 = vadd.f32 %v463, %v941
  %v956 = vadd.f32 %v464, %v942
  %v957 = vadd.f32 %v465, %v943
  %v958 = vadd.f32 %v466, %v944
  %v959 = vadd.f32 %v467, %v945
  %v960 = vmul.f32 %v672, %v48
  %v961 = vmul.f32 %v672, %v49
  %v962 = vmul.f32 %v672, %v50
  %v963 = vmul.f32 %v672, %v51
  %v964 = vmul.f32 %v672, %v52
  %v965 = vmul.f32 %v672, %v53
  %v966 = vmul.f32 %v672, %v54
  %v967 = vmul.f32 %v672, %v55
  %v968 = vmul.f32 %v672, %v56
  %v969 = vmul.f32 %v672, %v57
  %v970 = vmul.f32 %v672, %v58
  %v971 = vmul.f32 %v672, %v59
  %v972 = vmul.f32 %v672, %v60
  %v973 = vmul.f32 %v672, %v61
  %v974 = vmul.f32 %v677, %v63
  %v975 = vmul.f32 %v677, %v64
  %v976 = vmul.f32 %v677, %v65
  %v977 = vmul.f32 %v677, %v66
  %v978 = vmul.f32 %v677, %v67
  %v979 = vmul.f32 %v677, %v68
  %v980 = vmul.f32 %v677, %v69
  %v981 = vmul.f32 %v677, %v70
  %v982 = vmul.f32 %v677, %v71
  %v983 = vmul.f32 %v677, %v72
  %v984 = vmul.f32 %v677, %v73
  %v985 = vmul.f32 %v677, %v74
  %v986 = vmul.f32 %v677, %v75
  %v987 = vmul.f32 %v677, %v76
  %v988 = vadd.f32 %v960, %v974
  %v989 = vadd.f32 %v961, %v975
  %v990 = vadd.f32 %v962, %v976
  %v991 = vadd.f32 %v963, %v977
  %v992 = vadd.f32 %v964, %v978
  %v993 = vadd.f32 %v965, %v979
  %v994 = vadd.f32 %v966, %v980
  %v995 = vadd.f32 %v967, %v981
  %v996 = vadd.f32 %v968, %v982
  %v997 = vadd.f32 %v969, %v983
  %v998 = vadd.f32 %v970, %v984
  %v999 = vadd.f32 %v971, %v985
  %v1000 = vadd.f32 %v972, %v986
  %v1001 = vadd.f32 %v973, %v987
  %v1002 = vmul.f32 %v682, %v78
  %v1003 = vmul.f32 %v682, %v79
  %v1004 = vmul.f32 %v682, %v80
  %v1005 = vmul.f32 %v682, %v81
  %v1006 = vmul.f32 %v682, %v82
  %v1007 = vmul.f32 %v682, %v83
  %v1008 = vmul.f32 %v682, %v84
  %v1009 = vmul.f32 %v682, %v85
  %v1010 = vmul.f32 %v682, %v86
  %v1011 = vmul.f32 %v682, %v87
  %v1012 = vmul.f32 %v682, %v88
  %v1013 = vmul.f32 %v682, %v89
  %v1014 = vmul.f32 %v682, %v90
  %v1015 = vmul.f32 %v682, %v91
  %v1016 = vadd.f32 %v988, %v1002
  %v1017 = vadd.f32 %v989, %v1003
  %v1018 = vadd.f32 %v990, %v1004
  %v1019 = vadd.f32 %v991, %v1005
  %v1020 = vadd.f32 %v992, %v1006
  %v1021 = vadd.f32 %v993, %v1007
  %v1022 = vadd.f32 %v994, %v1008
  %v1023 = vadd.f32 %v995, %v1009
  %v1024 = vadd.f32 %v996, %v1010
  %v1025 = vadd.f32 %v997, %v1011
  %v1026 = vadd.f32 %v998, %v1012
  %v1027 = vadd.f32 %v999, %v1013
  %v1028 = vadd.f32 %v1000, %v1014
  %v1029 = vadd.f32 %v1001, %v1015
  %v1030 = vadd.f32 %v1016, %v688
  %v1031 = vadd.f32 %v1017, %v688
  %v1032 = vadd.f32 %v1018, %v688
  %v1033 = vadd.f32 %v1019, %v688
  %v1034 = vadd.f32 %v1020, %v688
  %v1035 = vadd.f32 %v1021, %v688
  %v1036 = vadd.f32 %v1022, %v688
  %v1037 = vadd.f32 %v1023, %v688
  %v1038 = vadd.f32 %v1024, %v688
  %v1039 = vadd.f32 %v1025, %v688
  %v1040 = vadd.f32 %v1026, %v688
  %v1041 = vadd.f32 %v1027, %v688
  %v1042 = vadd.f32 %v1028, %v688
  %v1043 = vadd.f32 %v1029, %v688
  %v1044 = vmul.f32 %v722, %v1030
  %v1045 = vmul.f32 %v723, %v1031
  %v1046 = vmul.f32 %v724, %v1032
  %v1047 = vmul.f32 %v725, %v1033
  %v1048 = vmul.f32 %v726, %v1034
  %v1049 = vmul.f32 %v727, %v1035
  %v1050 = vmul.f32 %v728, %v1036
  %v1051 = vmul.f32 %v729, %v1037
  %v1052 = vmul.f32 %v730, %v1038
  %v1053 = vmul.f32 %v731, %v1039
  %v1054 = vmul.f32 %v732, %v1040
  %v1055 = vmul.f32 %v733, %v1041
  %v1056 = vmul.f32 %v734, %v1042
  %v1057 = vmul.f32 %v735, %v1043
  %v1058 = vadd.f32 %v566, %v1044
  %v1059 = vadd.f32 %v567, %v1045
  %v1060 = vadd.f32 %v568, %v1046
  %v1061 = vadd.f32 %v569, %v1047
  %v1062 = vadd.f32 %v570, %v1048
  %v1063 = vadd.f32 %v571, %v1049
  %v1064 = vadd.f32 %v572, %v1050
  %v1065 = vadd.f32 %v573, %v1051
  %v1066 = vadd.f32 %v574, %v1052
  %v1067 = vadd.f32 %v575, %v1053
  %v1068 = vadd.f32 %v576, %v1054
  %v1069 = vadd.f32 %v577, %v1055
  %v1070 = vadd.f32 %v578, %v1056
  %v1071 = vadd.f32 %v579, %v1057
  %s1072 = scalar_lea.vmem %s1, 32
  %v1073 = vld [vmem:[%s1072] sm:$0xff]
  %s1074 = scalar_lea.vmem %s1, 40
  %v1075 = vld [vmem:[%s1074] sm:$0xff]
  %s1076 = scalar_lea.vmem %s0, 192
  %v1077 = vld [vmem:[%s1076] sm:$0xff]
  %s1078 = scalar_lea.vmem %s0, 200
  %v1079 = vld [vmem:[%s1078] sm:$0xff]
  %s1080 = scalar_lea.vmem %s0, 208
  %v1081 = vld [vmem:[%s1080] sm:$0xff]
  %s1082 = scalar_lea.vmem %s0, 216
  %v1083 = vld [vmem:[%s1082] sm:$0xff]
  %v1084 = vmul.f32 %v1075, %v1079
  %v1085 = vmul.f32 %v1073, %v1081
  %v1086 = vadd.f32 %v1084, %v1085
  %v1087 = vmul.f32 %v1075, %v1081
  %v1088 = vmul.f32 %v1073, %v1079
  %v1089 = vsub.f32 %v1087, %v1088
  %s1090 = scalar_lea.vmem %s0, 224
  %v1091 = vld [vmem:[%s1090] sm:$0xff]
  %s1092 = scalar_lea.vmem %s0, 232
  %v1093 = vld [vmem:[%s1092] sm:$0xff]
  %s1094 = scalar_lea.vmem %s0, 240
  %v1095 = vld [vmem:[%s1094] sm:$0xff]
  %s1096 = scalar_lea.vmem %s0, 248
  %v1097 = vld [vmem:[%s1096] sm:$0xff]
  %v1098 = vmul.f32 %v1075, %v1093
  %v1099 = vmul.f32 %v1073, %v1095
  %v1100 = vadd.f32 %v1098, %v1099
  %v1101 = vmul.f32 %v1075, %v1095
  %v1102 = vmul.f32 %v1073, %v1093
  %v1103 = vsub.f32 %v1101, %v1102
  %s1104 = scalar_lea.vmem %s0, 256
  %v1105 = vld [vmem:[%s1104] sm:$0xff]
  %s1106 = scalar_lea.vmem %s0, 264
  %v1107 = vld [vmem:[%s1106] sm:$0xff]
  %s1108 = scalar_lea.vmem %s0, 272
  %v1109 = vld [vmem:[%s1108] sm:$0xff]
  %s1110 = scalar_lea.vmem %s0, 280
  %v1111 = vld [vmem:[%s1110] sm:$0xff]
  %v1112 = vmul.f32 %v1075, %v1107
  %v1113 = vmul.f32 %v1073, %v1109
  %v1114 = vadd.f32 %v1112, %v1113
  %v1115 = vmul.f32 %v1075, %v1109
  %v1116 = vmul.f32 %v1073, %v1107
  %v1117 = vsub.f32 %v1115, %v1116
  %v1118 = vmul.f32 %v25, %v1077
  %v1119 = vmul.f32 %v27, %v1091
  %v1120 = vadd.f32 %v1118, %v1119
  %v1121 = vmul.f32 %v29, %v1105
  %v1122 = vadd.f32 %v1120, %v1121
  %v1123 = vmul.f32 %v25, %v1086
  %v1124 = vmul.f32 %v27, %v1100
  %v1125 = vadd.f32 %v1123, %v1124
  %v1126 = vmul.f32 %v29, %v1114
  %v1127 = vadd.f32 %v1125, %v1126
  %v1128 = vmul.f32 %v25, %v1089
  %v1129 = vmul.f32 %v27, %v1103
  %v1130 = vadd.f32 %v1128, %v1129
  %v1131 = vmul.f32 %v29, %v1117
  %v1132 = vadd.f32 %v1130, %v1131
  %v1133 = vmul.f32 %v25, %v1083
  %v1134 = vmul.f32 %v27, %v1097
  %v1135 = vadd.f32 %v1133, %v1134
  %v1136 = vmul.f32 %v29, %v1111
  %v1137 = vadd.f32 %v1135, %v1136
  %v1138 = vadd.f32 %v1137, %v31
  %v1139 = vmul.f32 %v33, %v1077
  %v1140 = vmul.f32 %v35, %v1091
  %v1141 = vadd.f32 %v1139, %v1140
  %v1142 = vmul.f32 %v37, %v1105
  %v1143 = vadd.f32 %v1141, %v1142
  %v1144 = vmul.f32 %v33, %v1086
  %v1145 = vmul.f32 %v35, %v1100
  %v1146 = vadd.f32 %v1144, %v1145
  %v1147 = vmul.f32 %v37, %v1114
  %v1148 = vadd.f32 %v1146, %v1147
  %v1149 = vmul.f32 %v33, %v1089
  %v1150 = vmul.f32 %v35, %v1103
  %v1151 = vadd.f32 %v1149, %v1150
  %v1152 = vmul.f32 %v37, %v1117
  %v1153 = vadd.f32 %v1151, %v1152
  %v1154 = vmul.f32 %v33, %v1083
  %v1155 = vmul.f32 %v35, %v1097
  %v1156 = vadd.f32 %v1154, %v1155
  %v1157 = vmul.f32 %v37, %v1111
  %v1158 = vadd.f32 %v1156, %v1157
  %v1159 = vadd.f32 %v1158, %v39
  %v1160 = vmul.f32 %v41, %v1077
  %v1161 = vmul.f32 %v43, %v1091
  %v1162 = vadd.f32 %v1160, %v1161
  %v1163 = vmul.f32 %v45, %v1105
  %v1164 = vadd.f32 %v1162, %v1163
  %v1165 = vmul.f32 %v41, %v1086
  %v1166 = vmul.f32 %v43, %v1100
  %v1167 = vadd.f32 %v1165, %v1166
  %v1168 = vmul.f32 %v45, %v1114
  %v1169 = vadd.f32 %v1167, %v1168
  %v1170 = vmul.f32 %v41, %v1089
  %v1171 = vmul.f32 %v43, %v1103
  %v1172 = vadd.f32 %v1170, %v1171
  %v1173 = vmul.f32 %v45, %v1117
  %v1174 = vadd.f32 %v1172, %v1173
  %v1175 = vmul.f32 %v41, %v1083
  %v1176 = vmul.f32 %v43, %v1097
  %v1177 = vadd.f32 %v1175, %v1176
  %v1178 = vmul.f32 %v45, %v1111
  %v1179 = vadd.f32 %v1177, %v1178
  %v1180 = vadd.f32 %v1179, %v47
  %s1181 = scalar_lea.vmem %s6, 256
  %1182 = vst [vmem:[%s1181] sm:$0xff] %v1122
  %s1183 = scalar_lea.vmem %s6, 264
  %1184 = vst [vmem:[%s1183] sm:$0xff] %v1127
  %s1185 = scalar_lea.vmem %s6, 272
  %1186 = vst [vmem:[%s1185] sm:$0xff] %v1132
  %s1187 = scalar_lea.vmem %s6, 280
  %1188 = vst [vmem:[%s1187] sm:$0xff] %v1138
  %s1189 = scalar_lea.vmem %s6, 288
  %1190 = vst [vmem:[%s1189] sm:$0xff] %v1143
  %s1191 = scalar_lea.vmem %s6, 296
  %1192 = vst [vmem:[%s1191] sm:$0xff] %v1148
  %s1193 = scalar_lea.vmem %s6, 304
  %1194 = vst [vmem:[%s1193] sm:$0xff] %v1153
  %s1195 = scalar_lea.vmem %s6, 312
  %1196 = vst [vmem:[%s1195] sm:$0xff] %v1159
  %s1197 = scalar_lea.vmem %s6, 320
  %1198 = vst [vmem:[%s1197] sm:$0xff] %v1164
  %s1199 = scalar_lea.vmem %s6, 328
  %1200 = vst [vmem:[%s1199] sm:$0xff] %v1169
  %s1201 = scalar_lea.vmem %s6, 336
  %1202 = vst [vmem:[%s1201] sm:$0xff] %v1174
  %s1203 = scalar_lea.vmem %s6, 344
  %1204 = vst [vmem:[%s1203] sm:$0xff] %v1180
  %s1205 = scalar_lea.vmem %s6, 352
  %1206 = vst [vmem:[%s1205] sm:$0xff] 0.0
  %s1207 = scalar_lea.vmem %s6, 360
  %1208 = vst [vmem:[%s1207] sm:$0xff] 0.0
  %s1209 = scalar_lea.vmem %s6, 368
  %1210 = vst [vmem:[%s1209] sm:$0xff] 0.0
  %s1211 = scalar_lea.vmem %s6, 376
  %1212 = vst [vmem:[%s1211] sm:$0xff] 1.0
  %s1213 = scalar_lea.vmem %s3, 224
  %v1214 = vld [vmem:[%s1213] sm:$0xff]
  %v1215 = vld [vmem:[%s1213 + $0x8] sm:$0xff]
  %v1216 = vld [vmem:[%s1213 + $0x10] sm:$0xff]
  %v1217 = vld [vmem:[%s1213 + $0x18] sm:$0xff]
  %v1218 = vld [vmem:[%s1213 + $0x20] sm:$0xff]
  %v1219 = vld [vmem:[%s1213 + $0x28] sm:$0xff]
  %v1220 = vld [vmem:[%s1213 + $0x30] sm:$0xff]
  %v1221 = vld [vmem:[%s1213 + $0x38] sm:$0xff]
  %v1222 = vld [vmem:[%s1213 + $0x40] sm:$0xff]
  %v1223 = vld [vmem:[%s1213 + $0x48] sm:$0xff]
  %v1224 = vld [vmem:[%s1213 + $0x50] sm:$0xff]
  %v1225 = vld [vmem:[%s1213 + $0x58] sm:$0xff]
  %v1226 = vld [vmem:[%s1213 + $0x60] sm:$0xff]
  %v1227 = vld [vmem:[%s1213 + $0x68] sm:$0xff]
  %v1228 = vmul.f32 %v1122, %v48
  %v1229 = vmul.f32 %v1122, %v49
  %v1230 = vmul.f32 %v1122, %v50
  %v1231 = vmul.f32 %v1122, %v51
  %v1232 = vmul.f32 %v1122, %v52
  %v1233 = vmul.f32 %v1122, %v53
  %v1234 = vmul.f32 %v1122, %v54
  %v1235 = vmul.f32 %v1122, %v55
  %v1236 = vmul.f32 %v1122, %v56
  %v1237 = vmul.f32 %v1122, %v57
  %v1238 = vmul.f32 %v1122, %v58
  %v1239 = vmul.f32 %v1122, %v59
  %v1240 = vmul.f32 %v1122, %v60
  %v1241 = vmul.f32 %v1122, %v61
  %v1242 = vmul.f32 %v1127, %v63
  %v1243 = vmul.f32 %v1127, %v64
  %v1244 = vmul.f32 %v1127, %v65
  %v1245 = vmul.f32 %v1127, %v66
  %v1246 = vmul.f32 %v1127, %v67
  %v1247 = vmul.f32 %v1127, %v68
  %v1248 = vmul.f32 %v1127, %v69
  %v1249 = vmul.f32 %v1127, %v70
  %v1250 = vmul.f32 %v1127, %v71
  %v1251 = vmul.f32 %v1127, %v72
  %v1252 = vmul.f32 %v1127, %v73
  %v1253 = vmul.f32 %v1127, %v74
  %v1254 = vmul.f32 %v1127, %v75
  %v1255 = vmul.f32 %v1127, %v76
  %v1256 = vadd.f32 %v1228, %v1242
  %v1257 = vadd.f32 %v1229, %v1243
  %v1258 = vadd.f32 %v1230, %v1244
  %v1259 = vadd.f32 %v1231, %v1245
  %v1260 = vadd.f32 %v1232, %v1246
  %v1261 = vadd.f32 %v1233, %v1247
  %v1262 = vadd.f32 %v1234, %v1248
  %v1263 = vadd.f32 %v1235, %v1249
  %v1264 = vadd.f32 %v1236, %v1250
  %v1265 = vadd.f32 %v1237, %v1251
  %v1266 = vadd.f32 %v1238, %v1252
  %v1267 = vadd.f32 %v1239, %v1253
  %v1268 = vadd.f32 %v1240, %v1254
  %v1269 = vadd.f32 %v1241, %v1255
  %v1270 = vmul.f32 %v1132, %v78
  %v1271 = vmul.f32 %v1132, %v79
  %v1272 = vmul.f32 %v1132, %v80
  %v1273 = vmul.f32 %v1132, %v81
  %v1274 = vmul.f32 %v1132, %v82
  %v1275 = vmul.f32 %v1132, %v83
  %v1276 = vmul.f32 %v1132, %v84
  %v1277 = vmul.f32 %v1132, %v85
  %v1278 = vmul.f32 %v1132, %v86
  %v1279 = vmul.f32 %v1132, %v87
  %v1280 = vmul.f32 %v1132, %v88
  %v1281 = vmul.f32 %v1132, %v89
  %v1282 = vmul.f32 %v1132, %v90
  %v1283 = vmul.f32 %v1132, %v91
  %v1284 = vadd.f32 %v1256, %v1270
  %v1285 = vadd.f32 %v1257, %v1271
  %v1286 = vadd.f32 %v1258, %v1272
  %v1287 = vadd.f32 %v1259, %v1273
  %v1288 = vadd.f32 %v1260, %v1274
  %v1289 = vadd.f32 %v1261, %v1275
  %v1290 = vadd.f32 %v1262, %v1276
  %v1291 = vadd.f32 %v1263, %v1277
  %v1292 = vadd.f32 %v1264, %v1278
  %v1293 = vadd.f32 %v1265, %v1279
  %v1294 = vadd.f32 %v1266, %v1280
  %v1295 = vadd.f32 %v1267, %v1281
  %v1296 = vadd.f32 %v1268, %v1282
  %v1297 = vadd.f32 %v1269, %v1283
  %v1298 = vadd.f32 %v1284, %v1138
  %v1299 = vadd.f32 %v1285, %v1138
  %v1300 = vadd.f32 %v1286, %v1138
  %v1301 = vadd.f32 %v1287, %v1138
  %v1302 = vadd.f32 %v1288, %v1138
  %v1303 = vadd.f32 %v1289, %v1138
  %v1304 = vadd.f32 %v1290, %v1138
  %v1305 = vadd.f32 %v1291, %v1138
  %v1306 = vadd.f32 %v1292, %v1138
  %v1307 = vadd.f32 %v1293, %v1138
  %v1308 = vadd.f32 %v1294, %v1138
  %v1309 = vadd.f32 %v1295, %v1138
  %v1310 = vadd.f32 %v1296, %v1138
  %v1311 = vadd.f32 %v1297, %v1138
  %v1312 = vmul.f32 %v1214, %v1298
  %v1313 = vmul.f32 %v1215, %v1299
  %v1314 = vmul.f32 %v1216, %v1300
  %v1315 = vmul.f32 %v1217, %v1301
  %v1316 = vmul.f32 %v1218, %v1302
  %v1317 = vmul.f32 %v1219, %v1303
  %v1318 = vmul.f32 %v1220, %v1304
  %v1319 = vmul.f32 %v1221, %v1305
  %v1320 = vmul.f32 %v1222, %v1306
  %v1321 = vmul.f32 %v1223, %v1307
  %v1322 = vmul.f32 %v1224, %v1308
  %v1323 = vmul.f32 %v1225, %v1309
  %v1324 = vmul.f32 %v1226, %v1310
  %v1325 = vmul.f32 %v1227, %v1311
  %v1326 = vadd.f32 %v834, %v1312
  %v1327 = vadd.f32 %v835, %v1313
  %v1328 = vadd.f32 %v836, %v1314
  %v1329 = vadd.f32 %v837, %v1315
  %v1330 = vadd.f32 %v838, %v1316
  %v1331 = vadd.f32 %v839, %v1317
  %v1332 = vadd.f32 %v840, %v1318
  %v1333 = vadd.f32 %v841, %v1319
  %v1334 = vadd.f32 %v842, %v1320
  %v1335 = vadd.f32 %v843, %v1321
  %v1336 = vadd.f32 %v844, %v1322
  %v1337 = vadd.f32 %v845, %v1323
  %v1338 = vadd.f32 %v846, %v1324
  %v1339 = vadd.f32 %v847, %v1325
  %v1340 = vmul.f32 %v1143, %v48
  %v1341 = vmul.f32 %v1143, %v49
  %v1342 = vmul.f32 %v1143, %v50
  %v1343 = vmul.f32 %v1143, %v51
  %v1344 = vmul.f32 %v1143, %v52
  %v1345 = vmul.f32 %v1143, %v53
  %v1346 = vmul.f32 %v1143, %v54
  %v1347 = vmul.f32 %v1143, %v55
  %v1348 = vmul.f32 %v1143, %v56
  %v1349 = vmul.f32 %v1143, %v57
  %v1350 = vmul.f32 %v1143, %v58
  %v1351 = vmul.f32 %v1143, %v59
  %v1352 = vmul.f32 %v1143, %v60
  %v1353 = vmul.f32 %v1143, %v61
  %v1354 = vmul.f32 %v1148, %v63
  %v1355 = vmul.f32 %v1148, %v64
  %v1356 = vmul.f32 %v1148, %v65
  %v1357 = vmul.f32 %v1148, %v66
  %v1358 = vmul.f32 %v1148, %v67
  %v1359 = vmul.f32 %v1148, %v68
  %v1360 = vmul.f32 %v1148, %v69
  %v1361 = vmul.f32 %v1148, %v70
  %v1362 = vmul.f32 %v1148, %v71
  %v1363 = vmul.f32 %v1148, %v72
  %v1364 = vmul.f32 %v1148, %v73
  %v1365 = vmul.f32 %v1148, %v74
  %v1366 = vmul.f32 %v1148, %v75
  %v1367 = vmul.f32 %v1148, %v76
  %v1368 = vadd.f32 %v1340, %v1354
  %v1369 = vadd.f32 %v1341, %v1355
  %v1370 = vadd.f32 %v1342, %v1356
  %v1371 = vadd.f32 %v1343, %v1357
  %v1372 = vadd.f32 %v1344, %v1358
  %v1373 = vadd.f32 %v1345, %v1359
  %v1374 = vadd.f32 %v1346, %v1360
  %v1375 = vadd.f32 %v1347, %v1361
  %v1376 = vadd.f32 %v1348, %v1362
  %v1377 = vadd.f32 %v1349, %v1363
  %v1378 = vadd.f32 %v1350, %v1364
  %v1379 = vadd.f32 %v1351, %v1365
  %v1380 = vadd.f32 %v1352, %v1366
  %v1381 = vadd.f32 %v1353, %v1367
  %v1382 = vmul.f32 %v1153, %v78
  %v1383 = vmul.f32 %v1153, %v79
  %v1384 = vmul.f32 %v1153, %v80
  %v1385 = vmul.f32 %v1153, %v81
  %v1386 = vmul.f32 %v1153, %v82
  %v1387 = vmul.f32 %v1153, %v83
  %v1388 = vmul.f32 %v1153, %v84
  %v1389 = vmul.f32 %v1153, %v85
  %v1390 = vmul.f32 %v1153, %v86
  %v1391 = vmul.f32 %v1153, %v87
  %v1392 = vmul.f32 %v1153, %v88
  %v1393 = vmul.f32 %v1153, %v89
  %v1394 = vmul.f32 %v1153, %v90
  %v1395 = vmul.f32 %v1153, %v91
  %v1396 = vadd.f32 %v1368, %v1382
  %v1397 = vadd.f32 %v1369, %v1383
  %v1398 = vadd.f32 %v1370, %v1384
  %v1399 = vadd.f32 %v1371, %v1385
  %v1400 = vadd.f32 %v1372, %v1386
  %v1401 = vadd.f32 %v1373, %v1387
  %v1402 = vadd.f32 %v1374, %v1388
  %v1403 = vadd.f32 %v1375, %v1389
  %v1404 = vadd.f32 %v1376, %v1390
  %v1405 = vadd.f32 %v1377, %v1391
  %v1406 = vadd.f32 %v1378, %v1392
  %v1407 = vadd.f32 %v1379, %v1393
  %v1408 = vadd.f32 %v1380, %v1394
  %v1409 = vadd.f32 %v1381, %v1395
  %v1410 = vadd.f32 %v1396, %v1159
  %v1411 = vadd.f32 %v1397, %v1159
  %v1412 = vadd.f32 %v1398, %v1159
  %v1413 = vadd.f32 %v1399, %v1159
  %v1414 = vadd.f32 %v1400, %v1159
  %v1415 = vadd.f32 %v1401, %v1159
  %v1416 = vadd.f32 %v1402, %v1159
  %v1417 = vadd.f32 %v1403, %v1159
  %v1418 = vadd.f32 %v1404, %v1159
  %v1419 = vadd.f32 %v1405, %v1159
  %v1420 = vadd.f32 %v1406, %v1159
  %v1421 = vadd.f32 %v1407, %v1159
  %v1422 = vadd.f32 %v1408, %v1159
  %v1423 = vadd.f32 %v1409, %v1159
  %v1424 = vmul.f32 %v1214, %v1410
  %v1425 = vmul.f32 %v1215, %v1411
  %v1426 = vmul.f32 %v1216, %v1412
  %v1427 = vmul.f32 %v1217, %v1413
  %v1428 = vmul.f32 %v1218, %v1414
  %v1429 = vmul.f32 %v1219, %v1415
  %v1430 = vmul.f32 %v1220, %v1416
  %v1431 = vmul.f32 %v1221, %v1417
  %v1432 = vmul.f32 %v1222, %v1418
  %v1433 = vmul.f32 %v1223, %v1419
  %v1434 = vmul.f32 %v1224, %v1420
  %v1435 = vmul.f32 %v1225, %v1421
  %v1436 = vmul.f32 %v1226, %v1422
  %v1437 = vmul.f32 %v1227, %v1423
  %v1438 = vadd.f32 %v946, %v1424
  %v1439 = vadd.f32 %v947, %v1425
  %v1440 = vadd.f32 %v948, %v1426
  %v1441 = vadd.f32 %v949, %v1427
  %v1442 = vadd.f32 %v950, %v1428
  %v1443 = vadd.f32 %v951, %v1429
  %v1444 = vadd.f32 %v952, %v1430
  %v1445 = vadd.f32 %v953, %v1431
  %v1446 = vadd.f32 %v954, %v1432
  %v1447 = vadd.f32 %v955, %v1433
  %v1448 = vadd.f32 %v956, %v1434
  %v1449 = vadd.f32 %v957, %v1435
  %v1450 = vadd.f32 %v958, %v1436
  %v1451 = vadd.f32 %v959, %v1437
  %v1452 = vmul.f32 %v1164, %v48
  %v1453 = vmul.f32 %v1164, %v49
  %v1454 = vmul.f32 %v1164, %v50
  %v1455 = vmul.f32 %v1164, %v51
  %v1456 = vmul.f32 %v1164, %v52
  %v1457 = vmul.f32 %v1164, %v53
  %v1458 = vmul.f32 %v1164, %v54
  %v1459 = vmul.f32 %v1164, %v55
  %v1460 = vmul.f32 %v1164, %v56
  %v1461 = vmul.f32 %v1164, %v57
  %v1462 = vmul.f32 %v1164, %v58
  %v1463 = vmul.f32 %v1164, %v59
  %v1464 = vmul.f32 %v1164, %v60
  %v1465 = vmul.f32 %v1164, %v61
  %v1466 = vmul.f32 %v1169, %v63
  %v1467 = vmul.f32 %v1169, %v64
  %v1468 = vmul.f32 %v1169, %v65
  %v1469 = vmul.f32 %v1169, %v66
  %v1470 = vmul.f32 %v1169, %v67
  %v1471 = vmul.f32 %v1169, %v68
  %v1472 = vmul.f32 %v1169, %v69
  %v1473 = vmul.f32 %v1169, %v70
  %v1474 = vmul.f32 %v1169, %v71
  %v1475 = vmul.f32 %v1169, %v72
  %v1476 = vmul.f32 %v1169, %v73
  %v1477 = vmul.f32 %v1169, %v74
  %v1478 = vmul.f32 %v1169, %v75
  %v1479 = vmul.f32 %v1169, %v76
  %v1480 = vadd.f32 %v1452, %v1466
  %v1481 = vadd.f32 %v1453, %v1467
  %v1482 = vadd.f32 %v1454, %v1468
  %v1483 = vadd.f32 %v1455, %v1469
  %v1484 = vadd.f32 %v1456, %v1470
  %v1485 = vadd.f32 %v1457, %v1471
  %v1486 = vadd.f32 %v1458, %v1472
  %v1487 = vadd.f32 %v1459, %v1473
  %v1488 = vadd.f32 %v1460, %v1474
  %v1489 = vadd.f32 %v1461, %v1475
  %v1490 = vadd.f32 %v1462, %v1476
  %v1491 = vadd.f32 %v1463, %v1477
  %v1492 = vadd.f32 %v1464, %v1478
  %v1493 = vadd.f32 %v1465, %v1479
  %v1494 = vmul.f32 %v1174, %v78
  %v1495 = vmul.f32 %v1174, %v79
  %v1496 = vmul.f32 %v1174, %v80
  %v1497 = vmul.f32 %v1174, %v81
  %v1498 = vmul.f32 %v1174, %v82
  %v1499 = vmul.f32 %v1174, %v83
  %v1500 = vmul.f32 %v1174, %v84
  %v1501 = vmul.f32 %v1174, %v85
  %v1502 = vmul.f32 %v1174, %v86
  %v1503 = vmul.f32 %v1174, %v87
  %v1504 = vmul.f32 %v1174, %v88
  %v1505 = vmul.f32 %v1174, %v89
  %v1506 = vmul.f32 %v1174, %v90
  %v1507 = vmul.f32 %v1174, %v91
  %v1508 = vadd.f32 %v1480, %v1494
  %v1509 = vadd.f32 %v1481, %v1495
  %v1510 = vadd.f32 %v1482, %v1496
  %v1511 = vadd.f32 %v1483, %v1497
  %v1512 = vadd.f32 %v1484, %v1498
  %v1513 = vadd.f32 %v1485, %v1499
  %v1514 = vadd.f32 %v1486, %v1500
  %v1515 = vadd.f32 %v1487, %v1501
  %v1516 = vadd.f32 %v1488, %v1502
  %v1517 = vadd.f32 %v1489, %v1503
  %v1518 = vadd.f32 %v1490, %v1504
  %v1519 = vadd.f32 %v1491, %v1505
  %v1520 = vadd.f32 %v1492, %v1506
  %v1521 = vadd.f32 %v1493, %v1507
  %v1522 = vadd.f32 %v1508, %v1180
  %v1523 = vadd.f32 %v1509, %v1180
  %v1524 = vadd.f32 %v1510, %v1180
  %v1525 = vadd.f32 %v1511, %v1180
  %v1526 = vadd.f32 %v1512, %v1180
  %v1527 = vadd.f32 %v1513, %v1180
  %v1528 = vadd.f32 %v1514, %v1180
  %v1529 = vadd.f32 %v1515, %v1180
  %v1530 = vadd.f32 %v1516, %v1180
  %v1531 = vadd.f32 %v1517, %v1180
  %v1532 = vadd.f32 %v1518, %v1180
  %v1533 = vadd.f32 %v1519, %v1180
  %v1534 = vadd.f32 %v1520, %v1180
  %v1535 = vadd.f32 %v1521, %v1180
  %v1536 = vmul.f32 %v1214, %v1522
  %v1537 = vmul.f32 %v1215, %v1523
  %v1538 = vmul.f32 %v1216, %v1524
  %v1539 = vmul.f32 %v1217, %v1525
  %v1540 = vmul.f32 %v1218, %v1526
  %v1541 = vmul.f32 %v1219, %v1527
  %v1542 = vmul.f32 %v1220, %v1528
  %v1543 = vmul.f32 %v1221, %v1529
  %v1544 = vmul.f32 %v1222, %v1530
  %v1545 = vmul.f32 %v1223, %v1531
  %v1546 = vmul.f32 %v1224, %v1532
  %v1547 = vmul.f32 %v1225, %v1533
  %v1548 = vmul.f32 %v1226, %v1534
  %v1549 = vmul.f32 %v1227, %v1535
  %v1550 = vadd.f32 %v1058, %v1536
  %v1551 = vadd.f32 %v1059, %v1537
  %v1552 = vadd.f32 %v1060, %v1538
  %v1553 = vadd.f32 %v1061, %v1539
  %v1554 = vadd.f32 %v1062, %v1540
  %v1555 = vadd.f32 %v1063, %v1541
  %v1556 = vadd.f32 %v1064, %v1542
  %v1557 = vadd.f32 %v1065, %v1543
  %v1558 = vadd.f32 %v1066, %v1544
  %v1559 = vadd.f32 %v1067, %v1545
  %v1560 = vadd.f32 %v1068, %v1546
  %v1561 = vadd.f32 %v1069, %v1547
  %v1562 = vadd.f32 %v1070, %v1548
  %v1563 = vadd.f32 %v1071, %v1549
  %s1564 = scalar_lea.vmem %s1, 48
  %v1565 = vld [vmem:[%s1564] sm:$0xff]
  %s1566 = scalar_lea.vmem %s1, 56
  %v1567 = vld [vmem:[%s1566] sm:$0xff]
  %s1568 = scalar_lea.vmem %s0, 288
  %v1569 = vld [vmem:[%s1568] sm:$0xff]
  %s1570 = scalar_lea.vmem %s0, 296
  %v1571 = vld [vmem:[%s1570] sm:$0xff]
  %s1572 = scalar_lea.vmem %s0, 304
  %v1573 = vld [vmem:[%s1572] sm:$0xff]
  %s1574 = scalar_lea.vmem %s0, 312
  %v1575 = vld [vmem:[%s1574] sm:$0xff]
  %v1576 = vmul.f32 %v1567, %v1571
  %v1577 = vmul.f32 %v1565, %v1573
  %v1578 = vadd.f32 %v1576, %v1577
  %v1579 = vmul.f32 %v1567, %v1573
  %v1580 = vmul.f32 %v1565, %v1571
  %v1581 = vsub.f32 %v1579, %v1580
  %s1582 = scalar_lea.vmem %s0, 320
  %v1583 = vld [vmem:[%s1582] sm:$0xff]
  %s1584 = scalar_lea.vmem %s0, 328
  %v1585 = vld [vmem:[%s1584] sm:$0xff]
  %s1586 = scalar_lea.vmem %s0, 336
  %v1587 = vld [vmem:[%s1586] sm:$0xff]
  %s1588 = scalar_lea.vmem %s0, 344
  %v1589 = vld [vmem:[%s1588] sm:$0xff]
  %v1590 = vmul.f32 %v1567, %v1585
  %v1591 = vmul.f32 %v1565, %v1587
  %v1592 = vadd.f32 %v1590, %v1591
  %v1593 = vmul.f32 %v1567, %v1587
  %v1594 = vmul.f32 %v1565, %v1585
  %v1595 = vsub.f32 %v1593, %v1594
  %s1596 = scalar_lea.vmem %s0, 352
  %v1597 = vld [vmem:[%s1596] sm:$0xff]
  %s1598 = scalar_lea.vmem %s0, 360
  %v1599 = vld [vmem:[%s1598] sm:$0xff]
  %s1600 = scalar_lea.vmem %s0, 368
  %v1601 = vld [vmem:[%s1600] sm:$0xff]
  %s1602 = scalar_lea.vmem %s0, 376
  %v1603 = vld [vmem:[%s1602] sm:$0xff]
  %v1604 = vmul.f32 %v1567, %v1599
  %v1605 = vmul.f32 %v1565, %v1601
  %v1606 = vadd.f32 %v1604, %v1605
  %v1607 = vmul.f32 %v1567, %v1601
  %v1608 = vmul.f32 %v1565, %v1599
  %v1609 = vsub.f32 %v1607, %v1608
  %v1610 = vmul.f32 %v25, %v1569
  %v1611 = vmul.f32 %v27, %v1583
  %v1612 = vadd.f32 %v1610, %v1611
  %v1613 = vmul.f32 %v29, %v1597
  %v1614 = vadd.f32 %v1612, %v1613
  %v1615 = vmul.f32 %v25, %v1578
  %v1616 = vmul.f32 %v27, %v1592
  %v1617 = vadd.f32 %v1615, %v1616
  %v1618 = vmul.f32 %v29, %v1606
  %v1619 = vadd.f32 %v1617, %v1618
  %v1620 = vmul.f32 %v25, %v1581
  %v1621 = vmul.f32 %v27, %v1595
  %v1622 = vadd.f32 %v1620, %v1621
  %v1623 = vmul.f32 %v29, %v1609
  %v1624 = vadd.f32 %v1622, %v1623
  %v1625 = vmul.f32 %v25, %v1575
  %v1626 = vmul.f32 %v27, %v1589
  %v1627 = vadd.f32 %v1625, %v1626
  %v1628 = vmul.f32 %v29, %v1603
  %v1629 = vadd.f32 %v1627, %v1628
  %v1630 = vadd.f32 %v1629, %v31
  %v1631 = vmul.f32 %v33, %v1569
  %v1632 = vmul.f32 %v35, %v1583
  %v1633 = vadd.f32 %v1631, %v1632
  %v1634 = vmul.f32 %v37, %v1597
  %v1635 = vadd.f32 %v1633, %v1634
  %v1636 = vmul.f32 %v33, %v1578
  %v1637 = vmul.f32 %v35, %v1592
  %v1638 = vadd.f32 %v1636, %v1637
  %v1639 = vmul.f32 %v37, %v1606
  %v1640 = vadd.f32 %v1638, %v1639
  %v1641 = vmul.f32 %v33, %v1581
  %v1642 = vmul.f32 %v35, %v1595
  %v1643 = vadd.f32 %v1641, %v1642
  %v1644 = vmul.f32 %v37, %v1609
  %v1645 = vadd.f32 %v1643, %v1644
  %v1646 = vmul.f32 %v33, %v1575
  %v1647 = vmul.f32 %v35, %v1589
  %v1648 = vadd.f32 %v1646, %v1647
  %v1649 = vmul.f32 %v37, %v1603
  %v1650 = vadd.f32 %v1648, %v1649
  %v1651 = vadd.f32 %v1650, %v39
  %v1652 = vmul.f32 %v41, %v1569
  %v1653 = vmul.f32 %v43, %v1583
  %v1654 = vadd.f32 %v1652, %v1653
  %v1655 = vmul.f32 %v45, %v1597
  %v1656 = vadd.f32 %v1654, %v1655
  %v1657 = vmul.f32 %v41, %v1578
  %v1658 = vmul.f32 %v43, %v1592
  %v1659 = vadd.f32 %v1657, %v1658
  %v1660 = vmul.f32 %v45, %v1606
  %v1661 = vadd.f32 %v1659, %v1660
  %v1662 = vmul.f32 %v41, %v1581
  %v1663 = vmul.f32 %v43, %v1595
  %v1664 = vadd.f32 %v1662, %v1663
  %v1665 = vmul.f32 %v45, %v1609
  %v1666 = vadd.f32 %v1664, %v1665
  %v1667 = vmul.f32 %v41, %v1575
  %v1668 = vmul.f32 %v43, %v1589
  %v1669 = vadd.f32 %v1667, %v1668
  %v1670 = vmul.f32 %v45, %v1603
  %v1671 = vadd.f32 %v1669, %v1670
  %v1672 = vadd.f32 %v1671, %v47
  %s1673 = scalar_lea.vmem %s6, 384
  %1674 = vst [vmem:[%s1673] sm:$0xff] %v1614
  %s1675 = scalar_lea.vmem %s6, 392
  %1676 = vst [vmem:[%s1675] sm:$0xff] %v1619
  %s1677 = scalar_lea.vmem %s6, 400
  %1678 = vst [vmem:[%s1677] sm:$0xff] %v1624
  %s1679 = scalar_lea.vmem %s6, 408
  %1680 = vst [vmem:[%s1679] sm:$0xff] %v1630
  %s1681 = scalar_lea.vmem %s6, 416
  %1682 = vst [vmem:[%s1681] sm:$0xff] %v1635
  %s1683 = scalar_lea.vmem %s6, 424
  %1684 = vst [vmem:[%s1683] sm:$0xff] %v1640
  %s1685 = scalar_lea.vmem %s6, 432
  %1686 = vst [vmem:[%s1685] sm:$0xff] %v1645
  %s1687 = scalar_lea.vmem %s6, 440
  %1688 = vst [vmem:[%s1687] sm:$0xff] %v1651
  %s1689 = scalar_lea.vmem %s6, 448
  %1690 = vst [vmem:[%s1689] sm:$0xff] %v1656
  %s1691 = scalar_lea.vmem %s6, 456
  %1692 = vst [vmem:[%s1691] sm:$0xff] %v1661
  %s1693 = scalar_lea.vmem %s6, 464
  %1694 = vst [vmem:[%s1693] sm:$0xff] %v1666
  %s1695 = scalar_lea.vmem %s6, 472
  %1696 = vst [vmem:[%s1695] sm:$0xff] %v1672
  %s1697 = scalar_lea.vmem %s6, 480
  %1698 = vst [vmem:[%s1697] sm:$0xff] 0.0
  %s1699 = scalar_lea.vmem %s6, 488
  %1700 = vst [vmem:[%s1699] sm:$0xff] 0.0
  %s1701 = scalar_lea.vmem %s6, 496
  %1702 = vst [vmem:[%s1701] sm:$0xff] 0.0
  %s1703 = scalar_lea.vmem %s6, 504
  %1704 = vst [vmem:[%s1703] sm:$0xff] 1.0
  %s1705 = scalar_lea.vmem %s3, 336
  %v1706 = vld [vmem:[%s1705] sm:$0xff]
  %v1707 = vld [vmem:[%s1705 + $0x8] sm:$0xff]
  %v1708 = vld [vmem:[%s1705 + $0x10] sm:$0xff]
  %v1709 = vld [vmem:[%s1705 + $0x18] sm:$0xff]
  %v1710 = vld [vmem:[%s1705 + $0x20] sm:$0xff]
  %v1711 = vld [vmem:[%s1705 + $0x28] sm:$0xff]
  %v1712 = vld [vmem:[%s1705 + $0x30] sm:$0xff]
  %v1713 = vld [vmem:[%s1705 + $0x38] sm:$0xff]
  %v1714 = vld [vmem:[%s1705 + $0x40] sm:$0xff]
  %v1715 = vld [vmem:[%s1705 + $0x48] sm:$0xff]
  %v1716 = vld [vmem:[%s1705 + $0x50] sm:$0xff]
  %v1717 = vld [vmem:[%s1705 + $0x58] sm:$0xff]
  %v1718 = vld [vmem:[%s1705 + $0x60] sm:$0xff]
  %v1719 = vld [vmem:[%s1705 + $0x68] sm:$0xff]
  %v1720 = vmul.f32 %v1614, %v48
  %v1721 = vmul.f32 %v1614, %v49
  %v1722 = vmul.f32 %v1614, %v50
  %v1723 = vmul.f32 %v1614, %v51
  %v1724 = vmul.f32 %v1614, %v52
  %v1725 = vmul.f32 %v1614, %v53
  %v1726 = vmul.f32 %v1614, %v54
  %v1727 = vmul.f32 %v1614, %v55
  %v1728 = vmul.f32 %v1614, %v56
  %v1729 = vmul.f32 %v1614, %v57
  %v1730 = vmul.f32 %v1614, %v58
  %v1731 = vmul.f32 %v1614, %v59
  %v1732 = vmul.f32 %v1614, %v60
  %v1733 = vmul.f32 %v1614, %v61
  %v1734 = vmul.f32 %v1619, %v63
  %v1735 = vmul.f32 %v1619, %v64
  %v1736 = vmul.f32 %v1619, %v65
  %v1737 = vmul.f32 %v1619, %v66
  %v1738 = vmul.f32 %v1619, %v67
  %v1739 = vmul.f32 %v1619, %v68
  %v1740 = vmul.f32 %v1619, %v69
  %v1741 = vmul.f32 %v1619, %v70
  %v1742 = vmul.f32 %v1619, %v71
  %v1743 = vmul.f32 %v1619, %v72
  %v1744 = vmul.f32 %v1619, %v73
  %v1745 = vmul.f32 %v1619, %v74
  %v1746 = vmul.f32 %v1619, %v75
  %v1747 = vmul.f32 %v1619, %v76
  %v1748 = vadd.f32 %v1720, %v1734
  %v1749 = vadd.f32 %v1721, %v1735
  %v1750 = vadd.f32 %v1722, %v1736
  %v1751 = vadd.f32 %v1723, %v1737
  %v1752 = vadd.f32 %v1724, %v1738
  %v1753 = vadd.f32 %v1725, %v1739
  %v1754 = vadd.f32 %v1726, %v1740
  %v1755 = vadd.f32 %v1727, %v1741
  %v1756 = vadd.f32 %v1728, %v1742
  %v1757 = vadd.f32 %v1729, %v1743
  %v1758 = vadd.f32 %v1730, %v1744
  %v1759 = vadd.f32 %v1731, %v1745
  %v1760 = vadd.f32 %v1732, %v1746
  %v1761 = vadd.f32 %v1733, %v1747
  %v1762 = vmul.f32 %v1624, %v78
  %v1763 = vmul.f32 %v1624, %v79
  %v1764 = vmul.f32 %v1624, %v80
  %v1765 = vmul.f32 %v1624, %v81
  %v1766 = vmul.f32 %v1624, %v82
  %v1767 = vmul.f32 %v1624, %v83
  %v1768 = vmul.f32 %v1624, %v84
  %v1769 = vmul.f32 %v1624, %v85
  %v1770 = vmul.f32 %v1624, %v86
  %v1771 = vmul.f32 %v1624, %v87
  %v1772 = vmul.f32 %v1624, %v88
  %v1773 = vmul.f32 %v1624, %v89
  %v1774 = vmul.f32 %v1624, %v90
  %v1775 = vmul.f32 %v1624, %v91
  %v1776 = vadd.f32 %v1748, %v1762
  %v1777 = vadd.f32 %v1749, %v1763
  %v1778 = vadd.f32 %v1750, %v1764
  %v1779 = vadd.f32 %v1751, %v1765
  %v1780 = vadd.f32 %v1752, %v1766
  %v1781 = vadd.f32 %v1753, %v1767
  %v1782 = vadd.f32 %v1754, %v1768
  %v1783 = vadd.f32 %v1755, %v1769
  %v1784 = vadd.f32 %v1756, %v1770
  %v1785 = vadd.f32 %v1757, %v1771
  %v1786 = vadd.f32 %v1758, %v1772
  %v1787 = vadd.f32 %v1759, %v1773
  %v1788 = vadd.f32 %v1760, %v1774
  %v1789 = vadd.f32 %v1761, %v1775
  %v1790 = vadd.f32 %v1776, %v1630
  %v1791 = vadd.f32 %v1777, %v1630
  %v1792 = vadd.f32 %v1778, %v1630
  %v1793 = vadd.f32 %v1779, %v1630
  %v1794 = vadd.f32 %v1780, %v1630
  %v1795 = vadd.f32 %v1781, %v1630
  %v1796 = vadd.f32 %v1782, %v1630
  %v1797 = vadd.f32 %v1783, %v1630
  %v1798 = vadd.f32 %v1784, %v1630
  %v1799 = vadd.f32 %v1785, %v1630
  %v1800 = vadd.f32 %v1786, %v1630
  %v1801 = vadd.f32 %v1787, %v1630
  %v1802 = vadd.f32 %v1788, %v1630
  %v1803 = vadd.f32 %v1789, %v1630
  %v1804 = vmul.f32 %v1706, %v1790
  %v1805 = vmul.f32 %v1707, %v1791
  %v1806 = vmul.f32 %v1708, %v1792
  %v1807 = vmul.f32 %v1709, %v1793
  %v1808 = vmul.f32 %v1710, %v1794
  %v1809 = vmul.f32 %v1711, %v1795
  %v1810 = vmul.f32 %v1712, %v1796
  %v1811 = vmul.f32 %v1713, %v1797
  %v1812 = vmul.f32 %v1714, %v1798
  %v1813 = vmul.f32 %v1715, %v1799
  %v1814 = vmul.f32 %v1716, %v1800
  %v1815 = vmul.f32 %v1717, %v1801
  %v1816 = vmul.f32 %v1718, %v1802
  %v1817 = vmul.f32 %v1719, %v1803
  %v1818 = vadd.f32 %v1326, %v1804
  %v1819 = vadd.f32 %v1327, %v1805
  %v1820 = vadd.f32 %v1328, %v1806
  %v1821 = vadd.f32 %v1329, %v1807
  %v1822 = vadd.f32 %v1330, %v1808
  %v1823 = vadd.f32 %v1331, %v1809
  %v1824 = vadd.f32 %v1332, %v1810
  %v1825 = vadd.f32 %v1333, %v1811
  %v1826 = vadd.f32 %v1334, %v1812
  %v1827 = vadd.f32 %v1335, %v1813
  %v1828 = vadd.f32 %v1336, %v1814
  %v1829 = vadd.f32 %v1337, %v1815
  %v1830 = vadd.f32 %v1338, %v1816
  %v1831 = vadd.f32 %v1339, %v1817
  %v1832 = vmul.f32 %v1635, %v48
  %v1833 = vmul.f32 %v1635, %v49
  %v1834 = vmul.f32 %v1635, %v50
  %v1835 = vmul.f32 %v1635, %v51
  %v1836 = vmul.f32 %v1635, %v52
  %v1837 = vmul.f32 %v1635, %v53
  %v1838 = vmul.f32 %v1635, %v54
  %v1839 = vmul.f32 %v1635, %v55
  %v1840 = vmul.f32 %v1635, %v56
  %v1841 = vmul.f32 %v1635, %v57
  %v1842 = vmul.f32 %v1635, %v58
  %v1843 = vmul.f32 %v1635, %v59
  %v1844 = vmul.f32 %v1635, %v60
  %v1845 = vmul.f32 %v1635, %v61
  %v1846 = vmul.f32 %v1640, %v63
  %v1847 = vmul.f32 %v1640, %v64
  %v1848 = vmul.f32 %v1640, %v65
  %v1849 = vmul.f32 %v1640, %v66
  %v1850 = vmul.f32 %v1640, %v67
  %v1851 = vmul.f32 %v1640, %v68
  %v1852 = vmul.f32 %v1640, %v69
  %v1853 = vmul.f32 %v1640, %v70
  %v1854 = vmul.f32 %v1640, %v71
  %v1855 = vmul.f32 %v1640, %v72
  %v1856 = vmul.f32 %v1640, %v73
  %v1857 = vmul.f32 %v1640, %v74
  %v1858 = vmul.f32 %v1640, %v75
  %v1859 = vmul.f32 %v1640, %v76
  %v1860 = vadd.f32 %v1832, %v1846
  %v1861 = vadd.f32 %v1833, %v1847
  %v1862 = vadd.f32 %v1834, %v1848
  %v1863 = vadd.f32 %v1835, %v1849
  %v1864 = vadd.f32 %v1836, %v1850
  %v1865 = vadd.f32 %v1837, %v1851
  %v1866 = vadd.f32 %v1838, %v1852
  %v1867 = vadd.f32 %v1839, %v1853
  %v1868 = vadd.f32 %v1840, %v1854
  %v1869 = vadd.f32 %v1841, %v1855
  %v1870 = vadd.f32 %v1842, %v1856
  %v1871 = vadd.f32 %v1843, %v1857
  %v1872 = vadd.f32 %v1844, %v1858
  %v1873 = vadd.f32 %v1845, %v1859
  %v1874 = vmul.f32 %v1645, %v78
  %v1875 = vmul.f32 %v1645, %v79
  %v1876 = vmul.f32 %v1645, %v80
  %v1877 = vmul.f32 %v1645, %v81
  %v1878 = vmul.f32 %v1645, %v82
  %v1879 = vmul.f32 %v1645, %v83
  %v1880 = vmul.f32 %v1645, %v84
  %v1881 = vmul.f32 %v1645, %v85
  %v1882 = vmul.f32 %v1645, %v86
  %v1883 = vmul.f32 %v1645, %v87
  %v1884 = vmul.f32 %v1645, %v88
  %v1885 = vmul.f32 %v1645, %v89
  %v1886 = vmul.f32 %v1645, %v90
  %v1887 = vmul.f32 %v1645, %v91
  %v1888 = vadd.f32 %v1860, %v1874
  %v1889 = vadd.f32 %v1861, %v1875
  %v1890 = vadd.f32 %v1862, %v1876
  %v1891 = vadd.f32 %v1863, %v1877
  %v1892 = vadd.f32 %v1864, %v1878
  %v1893 = vadd.f32 %v1865, %v1879
  %v1894 = vadd.f32 %v1866, %v1880
  %v1895 = vadd.f32 %v1867, %v1881
  %v1896 = vadd.f32 %v1868, %v1882
  %v1897 = vadd.f32 %v1869, %v1883
  %v1898 = vadd.f32 %v1870, %v1884
  %v1899 = vadd.f32 %v1871, %v1885
  %v1900 = vadd.f32 %v1872, %v1886
  %v1901 = vadd.f32 %v1873, %v1887
  %v1902 = vadd.f32 %v1888, %v1651
  %v1903 = vadd.f32 %v1889, %v1651
  %v1904 = vadd.f32 %v1890, %v1651
  %v1905 = vadd.f32 %v1891, %v1651
  %v1906 = vadd.f32 %v1892, %v1651
  %v1907 = vadd.f32 %v1893, %v1651
  %v1908 = vadd.f32 %v1894, %v1651
  %v1909 = vadd.f32 %v1895, %v1651
  %v1910 = vadd.f32 %v1896, %v1651
  %v1911 = vadd.f32 %v1897, %v1651
  %v1912 = vadd.f32 %v1898, %v1651
  %v1913 = vadd.f32 %v1899, %v1651
  %v1914 = vadd.f32 %v1900, %v1651
  %v1915 = vadd.f32 %v1901, %v1651
  %v1916 = vmul.f32 %v1706, %v1902
  %v1917 = vmul.f32 %v1707, %v1903
  %v1918 = vmul.f32 %v1708, %v1904
  %v1919 = vmul.f32 %v1709, %v1905
  %v1920 = vmul.f32 %v1710, %v1906
  %v1921 = vmul.f32 %v1711, %v1907
  %v1922 = vmul.f32 %v1712, %v1908
  %v1923 = vmul.f32 %v1713, %v1909
  %v1924 = vmul.f32 %v1714, %v1910
  %v1925 = vmul.f32 %v1715, %v1911
  %v1926 = vmul.f32 %v1716, %v1912
  %v1927 = vmul.f32 %v1717, %v1913
  %v1928 = vmul.f32 %v1718, %v1914
  %v1929 = vmul.f32 %v1719, %v1915
  %v1930 = vadd.f32 %v1438, %v1916
  %v1931 = vadd.f32 %v1439, %v1917
  %v1932 = vadd.f32 %v1440, %v1918
  %v1933 = vadd.f32 %v1441, %v1919
  %v1934 = vadd.f32 %v1442, %v1920
  %v1935 = vadd.f32 %v1443, %v1921
  %v1936 = vadd.f32 %v1444, %v1922
  %v1937 = vadd.f32 %v1445, %v1923
  %v1938 = vadd.f32 %v1446, %v1924
  %v1939 = vadd.f32 %v1447, %v1925
  %v1940 = vadd.f32 %v1448, %v1926
  %v1941 = vadd.f32 %v1449, %v1927
  %v1942 = vadd.f32 %v1450, %v1928
  %v1943 = vadd.f32 %v1451, %v1929
  %v1944 = vmul.f32 %v1656, %v48
  %v1945 = vmul.f32 %v1656, %v49
  %v1946 = vmul.f32 %v1656, %v50
  %v1947 = vmul.f32 %v1656, %v51
  %v1948 = vmul.f32 %v1656, %v52
  %v1949 = vmul.f32 %v1656, %v53
  %v1950 = vmul.f32 %v1656, %v54
  %v1951 = vmul.f32 %v1656, %v55
  %v1952 = vmul.f32 %v1656, %v56
  %v1953 = vmul.f32 %v1656, %v57
  %v1954 = vmul.f32 %v1656, %v58
  %v1955 = vmul.f32 %v1656, %v59
  %v1956 = vmul.f32 %v1656, %v60
  %v1957 = vmul.f32 %v1656, %v61
  %v1958 = vmul.f32 %v1661, %v63
  %v1959 = vmul.f32 %v1661, %v64
  %v1960 = vmul.f32 %v1661, %v65
  %v1961 = vmul.f32 %v1661, %v66
  %v1962 = vmul.f32 %v1661, %v67
  %v1963 = vmul.f32 %v1661, %v68
  %v1964 = vmul.f32 %v1661, %v69
  %v1965 = vmul.f32 %v1661, %v70
  %v1966 = vmul.f32 %v1661, %v71
  %v1967 = vmul.f32 %v1661, %v72
  %v1968 = vmul.f32 %v1661, %v73
  %v1969 = vmul.f32 %v1661, %v74
  %v1970 = vmul.f32 %v1661, %v75
  %v1971 = vmul.f32 %v1661, %v76
  %v1972 = vadd.f32 %v1944, %v1958
  %v1973 = vadd.f32 %v1945, %v1959
  %v1974 = vadd.f32 %v1946, %v1960
  %v1975 = vadd.f32 %v1947, %v1961
  %v1976 = vadd.f32 %v1948, %v1962
  %v1977 = vadd.f32 %v1949, %v1963
  %v1978 = vadd.f32 %v1950, %v1964
  %v1979 = vadd.f32 %v1951, %v1965
  %v1980 = vadd.f32 %v1952, %v1966
  %v1981 = vadd.f32 %v1953, %v1967
  %v1982 = vadd.f32 %v1954, %v1968
  %v1983 = vadd.f32 %v1955, %v1969
  %v1984 = vadd.f32 %v1956, %v1970
  %v1985 = vadd.f32 %v1957, %v1971
  %v1986 = vmul.f32 %v1666, %v78
  %v1987 = vmul.f32 %v1666, %v79
  %v1988 = vmul.f32 %v1666, %v80
  %v1989 = vmul.f32 %v1666, %v81
  %v1990 = vmul.f32 %v1666, %v82
  %v1991 = vmul.f32 %v1666, %v83
  %v1992 = vmul.f32 %v1666, %v84
  %v1993 = vmul.f32 %v1666, %v85
  %v1994 = vmul.f32 %v1666, %v86
  %v1995 = vmul.f32 %v1666, %v87
  %v1996 = vmul.f32 %v1666, %v88
  %v1997 = vmul.f32 %v1666, %v89
  %v1998 = vmul.f32 %v1666, %v90
  %v1999 = vmul.f32 %v1666, %v91
  %v2000 = vadd.f32 %v1972, %v1986
  %v2001 = vadd.f32 %v1973, %v1987
  %v2002 = vadd.f32 %v1974, %v1988
  %v2003 = vadd.f32 %v1975, %v1989
  %v2004 = vadd.f32 %v1976, %v1990
  %v2005 = vadd.f32 %v1977, %v1991
  %v2006 = vadd.f32 %v1978, %v1992
  %v2007 = vadd.f32 %v1979, %v1993
  %v2008 = vadd.f32 %v1980, %v1994
  %v2009 = vadd.f32 %v1981, %v1995
  %v2010 = vadd.f32 %v1982, %v1996
  %v2011 = vadd.f32 %v1983, %v1997
  %v2012 = vadd.f32 %v1984, %v1998
  %v2013 = vadd.f32 %v1985, %v1999
  %v2014 = vadd.f32 %v2000, %v1672
  %v2015 = vadd.f32 %v2001, %v1672
  %v2016 = vadd.f32 %v2002, %v1672
  %v2017 = vadd.f32 %v2003, %v1672
  %v2018 = vadd.f32 %v2004, %v1672
  %v2019 = vadd.f32 %v2005, %v1672
  %v2020 = vadd.f32 %v2006, %v1672
  %v2021 = vadd.f32 %v2007, %v1672
  %v2022 = vadd.f32 %v2008, %v1672
  %v2023 = vadd.f32 %v2009, %v1672
  %v2024 = vadd.f32 %v2010, %v1672
  %v2025 = vadd.f32 %v2011, %v1672
  %v2026 = vadd.f32 %v2012, %v1672
  %v2027 = vadd.f32 %v2013, %v1672
  %v2028 = vmul.f32 %v1706, %v2014
  %v2029 = vmul.f32 %v1707, %v2015
  %v2030 = vmul.f32 %v1708, %v2016
  %v2031 = vmul.f32 %v1709, %v2017
  %v2032 = vmul.f32 %v1710, %v2018
  %v2033 = vmul.f32 %v1711, %v2019
  %v2034 = vmul.f32 %v1712, %v2020
  %v2035 = vmul.f32 %v1713, %v2021
  %v2036 = vmul.f32 %v1714, %v2022
  %v2037 = vmul.f32 %v1715, %v2023
  %v2038 = vmul.f32 %v1716, %v2024
  %v2039 = vmul.f32 %v1717, %v2025
  %v2040 = vmul.f32 %v1718, %v2026
  %v2041 = vmul.f32 %v1719, %v2027
  %v2042 = vadd.f32 %v1550, %v2028
  %v2043 = vadd.f32 %v1551, %v2029
  %v2044 = vadd.f32 %v1552, %v2030
  %v2045 = vadd.f32 %v1553, %v2031
  %v2046 = vadd.f32 %v1554, %v2032
  %v2047 = vadd.f32 %v1555, %v2033
  %v2048 = vadd.f32 %v1556, %v2034
  %v2049 = vadd.f32 %v1557, %v2035
  %v2050 = vadd.f32 %v1558, %v2036
  %v2051 = vadd.f32 %v1559, %v2037
  %v2052 = vadd.f32 %v1560, %v2038
  %v2053 = vadd.f32 %v1561, %v2039
  %v2054 = vadd.f32 %v1562, %v2040
  %v2055 = vadd.f32 %v1563, %v2041
  %s2056 = scalar_lea.vmem %s1, 64
  %v2057 = vld [vmem:[%s2056] sm:$0xff]
  %s2058 = scalar_lea.vmem %s1, 72
  %v2059 = vld [vmem:[%s2058] sm:$0xff]
  %s2060 = scalar_lea.vmem %s0, 384
  %v2061 = vld [vmem:[%s2060] sm:$0xff]
  %s2062 = scalar_lea.vmem %s0, 392
  %v2063 = vld [vmem:[%s2062] sm:$0xff]
  %s2064 = scalar_lea.vmem %s0, 400
  %v2065 = vld [vmem:[%s2064] sm:$0xff]
  %s2066 = scalar_lea.vmem %s0, 408
  %v2067 = vld [vmem:[%s2066] sm:$0xff]
  %v2068 = vmul.f32 %v2059, %v2063
  %v2069 = vmul.f32 %v2057, %v2065
  %v2070 = vadd.f32 %v2068, %v2069
  %v2071 = vmul.f32 %v2059, %v2065
  %v2072 = vmul.f32 %v2057, %v2063
  %v2073 = vsub.f32 %v2071, %v2072
  %s2074 = scalar_lea.vmem %s0, 416
  %v2075 = vld [vmem:[%s2074] sm:$0xff]
  %s2076 = scalar_lea.vmem %s0, 424
  %v2077 = vld [vmem:[%s2076] sm:$0xff]
  %s2078 = scalar_lea.vmem %s0, 432
  %v2079 = vld [vmem:[%s2078] sm:$0xff]
  %s2080 = scalar_lea.vmem %s0, 440
  %v2081 = vld [vmem:[%s2080] sm:$0xff]
  %v2082 = vmul.f32 %v2059, %v2077
  %v2083 = vmul.f32 %v2057, %v2079
  %v2084 = vadd.f32 %v2082, %v2083
  %v2085 = vmul.f32 %v2059, %v2079
  %v2086 = vmul.f32 %v2057, %v2077
  %v2087 = vsub.f32 %v2085, %v2086
  %s2088 = scalar_lea.vmem %s0, 448
  %v2089 = vld [vmem:[%s2088] sm:$0xff]
  %s2090 = scalar_lea.vmem %s0, 456
  %v2091 = vld [vmem:[%s2090] sm:$0xff]
  %s2092 = scalar_lea.vmem %s0, 464
  %v2093 = vld [vmem:[%s2092] sm:$0xff]
  %s2094 = scalar_lea.vmem %s0, 472
  %v2095 = vld [vmem:[%s2094] sm:$0xff]
  %v2096 = vmul.f32 %v2059, %v2091
  %v2097 = vmul.f32 %v2057, %v2093
  %v2098 = vadd.f32 %v2096, %v2097
  %v2099 = vmul.f32 %v2059, %v2093
  %v2100 = vmul.f32 %v2057, %v2091
  %v2101 = vsub.f32 %v2099, %v2100
  %v2102 = vmul.f32 %v25, %v2061
  %v2103 = vmul.f32 %v27, %v2075
  %v2104 = vadd.f32 %v2102, %v2103
  %v2105 = vmul.f32 %v29, %v2089
  %v2106 = vadd.f32 %v2104, %v2105
  %v2107 = vmul.f32 %v25, %v2070
  %v2108 = vmul.f32 %v27, %v2084
  %v2109 = vadd.f32 %v2107, %v2108
  %v2110 = vmul.f32 %v29, %v2098
  %v2111 = vadd.f32 %v2109, %v2110
  %v2112 = vmul.f32 %v25, %v2073
  %v2113 = vmul.f32 %v27, %v2087
  %v2114 = vadd.f32 %v2112, %v2113
  %v2115 = vmul.f32 %v29, %v2101
  %v2116 = vadd.f32 %v2114, %v2115
  %v2117 = vmul.f32 %v25, %v2067
  %v2118 = vmul.f32 %v27, %v2081
  %v2119 = vadd.f32 %v2117, %v2118
  %v2120 = vmul.f32 %v29, %v2095
  %v2121 = vadd.f32 %v2119, %v2120
  %v2122 = vadd.f32 %v2121, %v31
  %v2123 = vmul.f32 %v33, %v2061
  %v2124 = vmul.f32 %v35, %v2075
  %v2125 = vadd.f32 %v2123, %v2124
  %v2126 = vmul.f32 %v37, %v2089
  %v2127 = vadd.f32 %v2125, %v2126
  %v2128 = vmul.f32 %v33, %v2070
  %v2129 = vmul.f32 %v35, %v2084
  %v2130 = vadd.f32 %v2128, %v2129
  %v2131 = vmul.f32 %v37, %v2098
  %v2132 = vadd.f32 %v2130, %v2131
  %v2133 = vmul.f32 %v33, %v2073
  %v2134 = vmul.f32 %v35, %v2087
  %v2135 = vadd.f32 %v2133, %v2134
  %v2136 = vmul.f32 %v37, %v2101
  %v2137 = vadd.f32 %v2135, %v2136
  %v2138 = vmul.f32 %v33, %v2067
  %v2139 = vmul.f32 %v35, %v2081
  %v2140 = vadd.f32 %v2138, %v2139
  %v2141 = vmul.f32 %v37, %v2095
  %v2142 = vadd.f32 %v2140, %v2141
  %v2143 = vadd.f32 %v2142, %v39
  %v2144 = vmul.f32 %v41, %v2061
  %v2145 = vmul.f32 %v43, %v2075
  %v2146 = vadd.f32 %v2144, %v2145
  %v2147 = vmul.f32 %v45, %v2089
  %v2148 = vadd.f32 %v2146, %v2147
  %v2149 = vmul.f32 %v41, %v2070
  %v2150 = vmul.f32 %v43, %v2084
  %v2151 = vadd.f32 %v2149, %v2150
  %v2152 = vmul.f32 %v45, %v2098
  %v2153 = vadd.f32 %v2151, %v2152
  %v2154 = vmul.f32 %v41, %v2073
  %v2155 = vmul.f32 %v43, %v2087
  %v2156 = vadd.f32 %v2154, %v2155
  %v2157 = vmul.f32 %v45, %v2101
  %v2158 = vadd.f32 %v2156, %v2157
  %v2159 = vmul.f32 %v41, %v2067
  %v2160 = vmul.f32 %v43, %v2081
  %v2161 = vadd.f32 %v2159, %v2160
  %v2162 = vmul.f32 %v45, %v2095
  %v2163 = vadd.f32 %v2161, %v2162
  %v2164 = vadd.f32 %v2163, %v47
  %s2165 = scalar_lea.vmem %s6, 512
  %2166 = vst [vmem:[%s2165] sm:$0xff] %v2106
  %s2167 = scalar_lea.vmem %s6, 520
  %2168 = vst [vmem:[%s2167] sm:$0xff] %v2111
  %s2169 = scalar_lea.vmem %s6, 528
  %2170 = vst [vmem:[%s2169] sm:$0xff] %v2116
  %s2171 = scalar_lea.vmem %s6, 536
  %2172 = vst [vmem:[%s2171] sm:$0xff] %v2122
  %s2173 = scalar_lea.vmem %s6, 544
  %2174 = vst [vmem:[%s2173] sm:$0xff] %v2127
  %s2175 = scalar_lea.vmem %s6, 552
  %2176 = vst [vmem:[%s2175] sm:$0xff] %v2132
  %s2177 = scalar_lea.vmem %s6, 560
  %2178 = vst [vmem:[%s2177] sm:$0xff] %v2137
  %s2179 = scalar_lea.vmem %s6, 568
  %2180 = vst [vmem:[%s2179] sm:$0xff] %v2143
  %s2181 = scalar_lea.vmem %s6, 576
  %2182 = vst [vmem:[%s2181] sm:$0xff] %v2148
  %s2183 = scalar_lea.vmem %s6, 584
  %2184 = vst [vmem:[%s2183] sm:$0xff] %v2153
  %s2185 = scalar_lea.vmem %s6, 592
  %2186 = vst [vmem:[%s2185] sm:$0xff] %v2158
  %s2187 = scalar_lea.vmem %s6, 600
  %2188 = vst [vmem:[%s2187] sm:$0xff] %v2164
  %s2189 = scalar_lea.vmem %s6, 608
  %2190 = vst [vmem:[%s2189] sm:$0xff] 0.0
  %s2191 = scalar_lea.vmem %s6, 616
  %2192 = vst [vmem:[%s2191] sm:$0xff] 0.0
  %s2193 = scalar_lea.vmem %s6, 624
  %2194 = vst [vmem:[%s2193] sm:$0xff] 0.0
  %s2195 = scalar_lea.vmem %s6, 632
  %2196 = vst [vmem:[%s2195] sm:$0xff] 1.0
  %s2197 = scalar_lea.vmem %s3, 448
  %v2198 = vld [vmem:[%s2197] sm:$0xff]
  %v2199 = vld [vmem:[%s2197 + $0x8] sm:$0xff]
  %v2200 = vld [vmem:[%s2197 + $0x10] sm:$0xff]
  %v2201 = vld [vmem:[%s2197 + $0x18] sm:$0xff]
  %v2202 = vld [vmem:[%s2197 + $0x20] sm:$0xff]
  %v2203 = vld [vmem:[%s2197 + $0x28] sm:$0xff]
  %v2204 = vld [vmem:[%s2197 + $0x30] sm:$0xff]
  %v2205 = vld [vmem:[%s2197 + $0x38] sm:$0xff]
  %v2206 = vld [vmem:[%s2197 + $0x40] sm:$0xff]
  %v2207 = vld [vmem:[%s2197 + $0x48] sm:$0xff]
  %v2208 = vld [vmem:[%s2197 + $0x50] sm:$0xff]
  %v2209 = vld [vmem:[%s2197 + $0x58] sm:$0xff]
  %v2210 = vld [vmem:[%s2197 + $0x60] sm:$0xff]
  %v2211 = vld [vmem:[%s2197 + $0x68] sm:$0xff]
  %v2212 = vmul.f32 %v2106, %v48
  %v2213 = vmul.f32 %v2106, %v49
  %v2214 = vmul.f32 %v2106, %v50
  %v2215 = vmul.f32 %v2106, %v51
  %v2216 = vmul.f32 %v2106, %v52
  %v2217 = vmul.f32 %v2106, %v53
  %v2218 = vmul.f32 %v2106, %v54
  %v2219 = vmul.f32 %v2106, %v55
  %v2220 = vmul.f32 %v2106, %v56
  %v2221 = vmul.f32 %v2106, %v57
  %v2222 = vmul.f32 %v2106, %v58
  %v2223 = vmul.f32 %v2106, %v59
  %v2224 = vmul.f32 %v2106, %v60
  %v2225 = vmul.f32 %v2106, %v61
  %v2226 = vmul.f32 %v2111, %v63
  %v2227 = vmul.f32 %v2111, %v64
  %v2228 = vmul.f32 %v2111, %v65
  %v2229 = vmul.f32 %v2111, %v66
  %v2230 = vmul.f32 %v2111, %v67
  %v2231 = vmul.f32 %v2111, %v68
  %v2232 = vmul.f32 %v2111, %v69
  %v2233 = vmul.f32 %v2111, %v70
  %v2234 = vmul.f32 %v2111, %v71
  %v2235 = vmul.f32 %v2111, %v72
  %v2236 = vmul.f32 %v2111, %v73
  %v2237 = vmul.f32 %v2111, %v74
  %v2238 = vmul.f32 %v2111, %v75
  %v2239 = vmul.f32 %v2111, %v76
  %v2240 = vadd.f32 %v2212, %v2226
  %v2241 = vadd.f32 %v2213, %v2227
  %v2242 = vadd.f32 %v2214, %v2228
  %v2243 = vadd.f32 %v2215, %v2229
  %v2244 = vadd.f32 %v2216, %v2230
  %v2245 = vadd.f32 %v2217, %v2231
  %v2246 = vadd.f32 %v2218, %v2232
  %v2247 = vadd.f32 %v2219, %v2233
  %v2248 = vadd.f32 %v2220, %v2234
  %v2249 = vadd.f32 %v2221, %v2235
  %v2250 = vadd.f32 %v2222, %v2236
  %v2251 = vadd.f32 %v2223, %v2237
  %v2252 = vadd.f32 %v2224, %v2238
  %v2253 = vadd.f32 %v2225, %v2239
  %v2254 = vmul.f32 %v2116, %v78
  %v2255 = vmul.f32 %v2116, %v79
  %v2256 = vmul.f32 %v2116, %v80
  %v2257 = vmul.f32 %v2116, %v81
  %v2258 = vmul.f32 %v2116, %v82
  %v2259 = vmul.f32 %v2116, %v83
  %v2260 = vmul.f32 %v2116, %v84
  %v2261 = vmul.f32 %v2116, %v85
  %v2262 = vmul.f32 %v2116, %v86
  %v2263 = vmul.f32 %v2116, %v87
  %v2264 = vmul.f32 %v2116, %v88
  %v2265 = vmul.f32 %v2116, %v89
  %v2266 = vmul.f32 %v2116, %v90
  %v2267 = vmul.f32 %v2116, %v91
  %v2268 = vadd.f32 %v2240, %v2254
  %v2269 = vadd.f32 %v2241, %v2255
  %v2270 = vadd.f32 %v2242, %v2256
  %v2271 = vadd.f32 %v2243, %v2257
  %v2272 = vadd.f32 %v2244, %v2258
  %v2273 = vadd.f32 %v2245, %v2259
  %v2274 = vadd.f32 %v2246, %v2260
  %v2275 = vadd.f32 %v2247, %v2261
  %v2276 = vadd.f32 %v2248, %v2262
  %v2277 = vadd.f32 %v2249, %v2263
  %v2278 = vadd.f32 %v2250, %v2264
  %v2279 = vadd.f32 %v2251, %v2265
  %v2280 = vadd.f32 %v2252, %v2266
  %v2281 = vadd.f32 %v2253, %v2267
  %v2282 = vadd.f32 %v2268, %v2122
  %v2283 = vadd.f32 %v2269, %v2122
  %v2284 = vadd.f32 %v2270, %v2122
  %v2285 = vadd.f32 %v2271, %v2122
  %v2286 = vadd.f32 %v2272, %v2122
  %v2287 = vadd.f32 %v2273, %v2122
  %v2288 = vadd.f32 %v2274, %v2122
  %v2289 = vadd.f32 %v2275, %v2122
  %v2290 = vadd.f32 %v2276, %v2122
  %v2291 = vadd.f32 %v2277, %v2122
  %v2292 = vadd.f32 %v2278, %v2122
  %v2293 = vadd.f32 %v2279, %v2122
  %v2294 = vadd.f32 %v2280, %v2122
  %v2295 = vadd.f32 %v2281, %v2122
  %v2296 = vmul.f32 %v2198, %v2282
  %v2297 = vmul.f32 %v2199, %v2283
  %v2298 = vmul.f32 %v2200, %v2284
  %v2299 = vmul.f32 %v2201, %v2285
  %v2300 = vmul.f32 %v2202, %v2286
  %v2301 = vmul.f32 %v2203, %v2287
  %v2302 = vmul.f32 %v2204, %v2288
  %v2303 = vmul.f32 %v2205, %v2289
  %v2304 = vmul.f32 %v2206, %v2290
  %v2305 = vmul.f32 %v2207, %v2291
  %v2306 = vmul.f32 %v2208, %v2292
  %v2307 = vmul.f32 %v2209, %v2293
  %v2308 = vmul.f32 %v2210, %v2294
  %v2309 = vmul.f32 %v2211, %v2295
  %v2310 = vadd.f32 %v1818, %v2296
  %v2311 = vadd.f32 %v1819, %v2297
  %v2312 = vadd.f32 %v1820, %v2298
  %v2313 = vadd.f32 %v1821, %v2299
  %v2314 = vadd.f32 %v1822, %v2300
  %v2315 = vadd.f32 %v1823, %v2301
  %v2316 = vadd.f32 %v1824, %v2302
  %v2317 = vadd.f32 %v1825, %v2303
  %v2318 = vadd.f32 %v1826, %v2304
  %v2319 = vadd.f32 %v1827, %v2305
  %v2320 = vadd.f32 %v1828, %v2306
  %v2321 = vadd.f32 %v1829, %v2307
  %v2322 = vadd.f32 %v1830, %v2308
  %v2323 = vadd.f32 %v1831, %v2309
  %v2324 = vmul.f32 %v2127, %v48
  %v2325 = vmul.f32 %v2127, %v49
  %v2326 = vmul.f32 %v2127, %v50
  %v2327 = vmul.f32 %v2127, %v51
  %v2328 = vmul.f32 %v2127, %v52
  %v2329 = vmul.f32 %v2127, %v53
  %v2330 = vmul.f32 %v2127, %v54
  %v2331 = vmul.f32 %v2127, %v55
  %v2332 = vmul.f32 %v2127, %v56
  %v2333 = vmul.f32 %v2127, %v57
  %v2334 = vmul.f32 %v2127, %v58
  %v2335 = vmul.f32 %v2127, %v59
  %v2336 = vmul.f32 %v2127, %v60
  %v2337 = vmul.f32 %v2127, %v61
  %v2338 = vmul.f32 %v2132, %v63
  %v2339 = vmul.f32 %v2132, %v64
  %v2340 = vmul.f32 %v2132, %v65
  %v2341 = vmul.f32 %v2132, %v66
  %v2342 = vmul.f32 %v2132, %v67
  %v2343 = vmul.f32 %v2132, %v68
  %v2344 = vmul.f32 %v2132, %v69
  %v2345 = vmul.f32 %v2132, %v70
  %v2346 = vmul.f32 %v2132, %v71
  %v2347 = vmul.f32 %v2132, %v72
  %v2348 = vmul.f32 %v2132, %v73
  %v2349 = vmul.f32 %v2132, %v74
  %v2350 = vmul.f32 %v2132, %v75
  %v2351 = vmul.f32 %v2132, %v76
  %v2352 = vadd.f32 %v2324, %v2338
  %v2353 = vadd.f32 %v2325, %v2339
  %v2354 = vadd.f32 %v2326, %v2340
  %v2355 = vadd.f32 %v2327, %v2341
  %v2356 = vadd.f32 %v2328, %v2342
  %v2357 = vadd.f32 %v2329, %v2343
  %v2358 = vadd.f32 %v2330, %v2344
  %v2359 = vadd.f32 %v2331, %v2345
  %v2360 = vadd.f32 %v2332, %v2346
  %v2361 = vadd.f32 %v2333, %v2347
  %v2362 = vadd.f32 %v2334, %v2348
  %v2363 = vadd.f32 %v2335, %v2349
  %v2364 = vadd.f32 %v2336, %v2350
  %v2365 = vadd.f32 %v2337, %v2351
  %v2366 = vmul.f32 %v2137, %v78
  %v2367 = vmul.f32 %v2137, %v79
  %v2368 = vmul.f32 %v2137, %v80
  %v2369 = vmul.f32 %v2137, %v81
  %v2370 = vmul.f32 %v2137, %v82
  %v2371 = vmul.f32 %v2137, %v83
  %v2372 = vmul.f32 %v2137, %v84
  %v2373 = vmul.f32 %v2137, %v85
  %v2374 = vmul.f32 %v2137, %v86
  %v2375 = vmul.f32 %v2137, %v87
  %v2376 = vmul.f32 %v2137, %v88
  %v2377 = vmul.f32 %v2137, %v89
  %v2378 = vmul.f32 %v2137, %v90
  %v2379 = vmul.f32 %v2137, %v91
  %v2380 = vadd.f32 %v2352, %v2366
  %v2381 = vadd.f32 %v2353, %v2367
  %v2382 = vadd.f32 %v2354, %v2368
  %v2383 = vadd.f32 %v2355, %v2369
  %v2384 = vadd.f32 %v2356, %v2370
  %v2385 = vadd.f32 %v2357, %v2371
  %v2386 = vadd.f32 %v2358, %v2372
  %v2387 = vadd.f32 %v2359, %v2373
  %v2388 = vadd.f32 %v2360, %v2374
  %v2389 = vadd.f32 %v2361, %v2375
  %v2390 = vadd.f32 %v2362, %v2376
  %v2391 = vadd.f32 %v2363, %v2377
  %v2392 = vadd.f32 %v2364, %v2378
  %v2393 = vadd.f32 %v2365, %v2379
  %v2394 = vadd.f32 %v2380, %v2143
  %v2395 = vadd.f32 %v2381, %v2143
  %v2396 = vadd.f32 %v2382, %v2143
  %v2397 = vadd.f32 %v2383, %v2143
  %v2398 = vadd.f32 %v2384, %v2143
  %v2399 = vadd.f32 %v2385, %v2143
  %v2400 = vadd.f32 %v2386, %v2143
  %v2401 = vadd.f32 %v2387, %v2143
  %v2402 = vadd.f32 %v2388, %v2143
  %v2403 = vadd.f32 %v2389, %v2143
  %v2404 = vadd.f32 %v2390, %v2143
  %v2405 = vadd.f32 %v2391, %v2143
  %v2406 = vadd.f32 %v2392, %v2143
  %v2407 = vadd.f32 %v2393, %v2143
  %v2408 = vmul.f32 %v2198, %v2394
  %v2409 = vmul.f32 %v2199, %v2395
  %v2410 = vmul.f32 %v2200, %v2396
  %v2411 = vmul.f32 %v2201, %v2397
  %v2412 = vmul.f32 %v2202, %v2398
  %v2413 = vmul.f32 %v2203, %v2399
  %v2414 = vmul.f32 %v2204, %v2400
  %v2415 = vmul.f32 %v2205, %v2401
  %v2416 = vmul.f32 %v2206, %v2402
  %v2417 = vmul.f32 %v2207, %v2403
  %v2418 = vmul.f32 %v2208, %v2404
  %v2419 = vmul.f32 %v2209, %v2405
  %v2420 = vmul.f32 %v2210, %v2406
  %v2421 = vmul.f32 %v2211, %v2407
  %v2422 = vadd.f32 %v1930, %v2408
  %v2423 = vadd.f32 %v1931, %v2409
  %v2424 = vadd.f32 %v1932, %v2410
  %v2425 = vadd.f32 %v1933, %v2411
  %v2426 = vadd.f32 %v1934, %v2412
  %v2427 = vadd.f32 %v1935, %v2413
  %v2428 = vadd.f32 %v1936, %v2414
  %v2429 = vadd.f32 %v1937, %v2415
  %v2430 = vadd.f32 %v1938, %v2416
  %v2431 = vadd.f32 %v1939, %v2417
  %v2432 = vadd.f32 %v1940, %v2418
  %v2433 = vadd.f32 %v1941, %v2419
  %v2434 = vadd.f32 %v1942, %v2420
  %v2435 = vadd.f32 %v1943, %v2421
  %v2436 = vmul.f32 %v2148, %v48
  %v2437 = vmul.f32 %v2148, %v49
  %v2438 = vmul.f32 %v2148, %v50
  %v2439 = vmul.f32 %v2148, %v51
  %v2440 = vmul.f32 %v2148, %v52
  %v2441 = vmul.f32 %v2148, %v53
  %v2442 = vmul.f32 %v2148, %v54
  %v2443 = vmul.f32 %v2148, %v55
  %v2444 = vmul.f32 %v2148, %v56
  %v2445 = vmul.f32 %v2148, %v57
  %v2446 = vmul.f32 %v2148, %v58
  %v2447 = vmul.f32 %v2148, %v59
  %v2448 = vmul.f32 %v2148, %v60
  %v2449 = vmul.f32 %v2148, %v61
  %v2450 = vmul.f32 %v2153, %v63
  %v2451 = vmul.f32 %v2153, %v64
  %v2452 = vmul.f32 %v2153, %v65
  %v2453 = vmul.f32 %v2153, %v66
  %v2454 = vmul.f32 %v2153, %v67
  %v2455 = vmul.f32 %v2153, %v68
  %v2456 = vmul.f32 %v2153, %v69
  %v2457 = vmul.f32 %v2153, %v70
  %v2458 = vmul.f32 %v2153, %v71
  %v2459 = vmul.f32 %v2153, %v72
  %v2460 = vmul.f32 %v2153, %v73
  %v2461 = vmul.f32 %v2153, %v74
  %v2462 = vmul.f32 %v2153, %v75
  %v2463 = vmul.f32 %v2153, %v76
  %v2464 = vadd.f32 %v2436, %v2450
  %v2465 = vadd.f32 %v2437, %v2451
  %v2466 = vadd.f32 %v2438, %v2452
  %v2467 = vadd.f32 %v2439, %v2453
  %v2468 = vadd.f32 %v2440, %v2454
  %v2469 = vadd.f32 %v2441, %v2455
  %v2470 = vadd.f32 %v2442, %v2456
  %v2471 = vadd.f32 %v2443, %v2457
  %v2472 = vadd.f32 %v2444, %v2458
  %v2473 = vadd.f32 %v2445, %v2459
  %v2474 = vadd.f32 %v2446, %v2460
  %v2475 = vadd.f32 %v2447, %v2461
  %v2476 = vadd.f32 %v2448, %v2462
  %v2477 = vadd.f32 %v2449, %v2463
  %v2478 = vmul.f32 %v2158, %v78
  %v2479 = vmul.f32 %v2158, %v79
  %v2480 = vmul.f32 %v2158, %v80
  %v2481 = vmul.f32 %v2158, %v81
  %v2482 = vmul.f32 %v2158, %v82
  %v2483 = vmul.f32 %v2158, %v83
  %v2484 = vmul.f32 %v2158, %v84
  %v2485 = vmul.f32 %v2158, %v85
  %v2486 = vmul.f32 %v2158, %v86
  %v2487 = vmul.f32 %v2158, %v87
  %v2488 = vmul.f32 %v2158, %v88
  %v2489 = vmul.f32 %v2158, %v89
  %v2490 = vmul.f32 %v2158, %v90
  %v2491 = vmul.f32 %v2158, %v91
  %v2492 = vadd.f32 %v2464, %v2478
  %v2493 = vadd.f32 %v2465, %v2479
  %v2494 = vadd.f32 %v2466, %v2480
  %v2495 = vadd.f32 %v2467, %v2481
  %v2496 = vadd.f32 %v2468, %v2482
  %v2497 = vadd.f32 %v2469, %v2483
  %v2498 = vadd.f32 %v2470, %v2484
  %v2499 = vadd.f32 %v2471, %v2485
  %v2500 = vadd.f32 %v2472, %v2486
  %v2501 = vadd.f32 %v2473, %v2487
  %v2502 = vadd.f32 %v2474, %v2488
  %v2503 = vadd.f32 %v2475, %v2489
  %v2504 = vadd.f32 %v2476, %v2490
  %v2505 = vadd.f32 %v2477, %v2491
  %v2506 = vadd.f32 %v2492, %v2164
  %v2507 = vadd.f32 %v2493, %v2164
  %v2508 = vadd.f32 %v2494, %v2164
  %v2509 = vadd.f32 %v2495, %v2164
  %v2510 = vadd.f32 %v2496, %v2164
  %v2511 = vadd.f32 %v2497, %v2164
  %v2512 = vadd.f32 %v2498, %v2164
  %v2513 = vadd.f32 %v2499, %v2164
  %v2514 = vadd.f32 %v2500, %v2164
  %v2515 = vadd.f32 %v2501, %v2164
  %v2516 = vadd.f32 %v2502, %v2164
  %v2517 = vadd.f32 %v2503, %v2164
  %v2518 = vadd.f32 %v2504, %v2164
  %v2519 = vadd.f32 %v2505, %v2164
  %v2520 = vmul.f32 %v2198, %v2506
  %v2521 = vmul.f32 %v2199, %v2507
  %v2522 = vmul.f32 %v2200, %v2508
  %v2523 = vmul.f32 %v2201, %v2509
  %v2524 = vmul.f32 %v2202, %v2510
  %v2525 = vmul.f32 %v2203, %v2511
  %v2526 = vmul.f32 %v2204, %v2512
  %v2527 = vmul.f32 %v2205, %v2513
  %v2528 = vmul.f32 %v2206, %v2514
  %v2529 = vmul.f32 %v2207, %v2515
  %v2530 = vmul.f32 %v2208, %v2516
  %v2531 = vmul.f32 %v2209, %v2517
  %v2532 = vmul.f32 %v2210, %v2518
  %v2533 = vmul.f32 %v2211, %v2519
  %v2534 = vadd.f32 %v2042, %v2520
  %v2535 = vadd.f32 %v2043, %v2521
  %v2536 = vadd.f32 %v2044, %v2522
  %v2537 = vadd.f32 %v2045, %v2523
  %v2538 = vadd.f32 %v2046, %v2524
  %v2539 = vadd.f32 %v2047, %v2525
  %v2540 = vadd.f32 %v2048, %v2526
  %v2541 = vadd.f32 %v2049, %v2527
  %v2542 = vadd.f32 %v2050, %v2528
  %v2543 = vadd.f32 %v2051, %v2529
  %v2544 = vadd.f32 %v2052, %v2530
  %v2545 = vadd.f32 %v2053, %v2531
  %v2546 = vadd.f32 %v2054, %v2532
  %v2547 = vadd.f32 %v2055, %v2533
  %s2548 = scalar_lea.vmem %s1, 80
  %v2549 = vld [vmem:[%s2548] sm:$0xff]
  %s2550 = scalar_lea.vmem %s1, 88
  %v2551 = vld [vmem:[%s2550] sm:$0xff]
  %s2552 = scalar_lea.vmem %s0, 480
  %v2553 = vld [vmem:[%s2552] sm:$0xff]
  %s2554 = scalar_lea.vmem %s0, 488
  %v2555 = vld [vmem:[%s2554] sm:$0xff]
  %s2556 = scalar_lea.vmem %s0, 496
  %v2557 = vld [vmem:[%s2556] sm:$0xff]
  %s2558 = scalar_lea.vmem %s0, 504
  %v2559 = vld [vmem:[%s2558] sm:$0xff]
  %v2560 = vmul.f32 %v2551, %v2555
  %v2561 = vmul.f32 %v2549, %v2557
  %v2562 = vadd.f32 %v2560, %v2561
  %v2563 = vmul.f32 %v2551, %v2557
  %v2564 = vmul.f32 %v2549, %v2555
  %v2565 = vsub.f32 %v2563, %v2564
  %s2566 = scalar_lea.vmem %s0, 512
  %v2567 = vld [vmem:[%s2566] sm:$0xff]
  %s2568 = scalar_lea.vmem %s0, 520
  %v2569 = vld [vmem:[%s2568] sm:$0xff]
  %s2570 = scalar_lea.vmem %s0, 528
  %v2571 = vld [vmem:[%s2570] sm:$0xff]
  %s2572 = scalar_lea.vmem %s0, 536
  %v2573 = vld [vmem:[%s2572] sm:$0xff]
  %v2574 = vmul.f32 %v2551, %v2569
  %v2575 = vmul.f32 %v2549, %v2571
  %v2576 = vadd.f32 %v2574, %v2575
  %v2577 = vmul.f32 %v2551, %v2571
  %v2578 = vmul.f32 %v2549, %v2569
  %v2579 = vsub.f32 %v2577, %v2578
  %s2580 = scalar_lea.vmem %s0, 544
  %v2581 = vld [vmem:[%s2580] sm:$0xff]
  %s2582 = scalar_lea.vmem %s0, 552
  %v2583 = vld [vmem:[%s2582] sm:$0xff]
  %s2584 = scalar_lea.vmem %s0, 560
  %v2585 = vld [vmem:[%s2584] sm:$0xff]
  %s2586 = scalar_lea.vmem %s0, 568
  %v2587 = vld [vmem:[%s2586] sm:$0xff]
  %v2588 = vmul.f32 %v2551, %v2583
  %v2589 = vmul.f32 %v2549, %v2585
  %v2590 = vadd.f32 %v2588, %v2589
  %v2591 = vmul.f32 %v2551, %v2585
  %v2592 = vmul.f32 %v2549, %v2583
  %v2593 = vsub.f32 %v2591, %v2592
  %v2594 = vmul.f32 %v2061, %v2553
  %v2595 = vmul.f32 %v2070, %v2567
  %v2596 = vadd.f32 %v2594, %v2595
  %v2597 = vmul.f32 %v2073, %v2581
  %v2598 = vadd.f32 %v2596, %v2597
  %v2599 = vmul.f32 %v2061, %v2562
  %v2600 = vmul.f32 %v2070, %v2576
  %v2601 = vadd.f32 %v2599, %v2600
  %v2602 = vmul.f32 %v2073, %v2590
  %v2603 = vadd.f32 %v2601, %v2602
  %v2604 = vmul.f32 %v2061, %v2565
  %v2605 = vmul.f32 %v2070, %v2579
  %v2606 = vadd.f32 %v2604, %v2605
  %v2607 = vmul.f32 %v2073, %v2593
  %v2608 = vadd.f32 %v2606, %v2607
  %v2609 = vmul.f32 %v2061, %v2559
  %v2610 = vmul.f32 %v2070, %v2573
  %v2611 = vadd.f32 %v2609, %v2610
  %v2612 = vmul.f32 %v2073, %v2587
  %v2613 = vadd.f32 %v2611, %v2612
  %v2614 = vadd.f32 %v2613, %v2067
  %v2615 = vmul.f32 %v2075, %v2553
  %v2616 = vmul.f32 %v2084, %v2567
  %v2617 = vadd.f32 %v2615, %v2616
  %v2618 = vmul.f32 %v2087, %v2581
  %v2619 = vadd.f32 %v2617, %v2618
  %v2620 = vmul.f32 %v2075, %v2562
  %v2621 = vmul.f32 %v2084, %v2576
  %v2622 = vadd.f32 %v2620, %v2621
  %v2623 = vmul.f32 %v2087, %v2590
  %v2624 = vadd.f32 %v2622, %v2623
  %v2625 = vmul.f32 %v2075, %v2565
  %v2626 = vmul.f32 %v2084, %v2579
  %v2627 = vadd.f32 %v2625, %v2626
  %v2628 = vmul.f32 %v2087, %v2593
  %v2629 = vadd.f32 %v2627, %v2628
  %v2630 = vmul.f32 %v2075, %v2559
  %v2631 = vmul.f32 %v2084, %v2573
  %v2632 = vadd.f32 %v2630, %v2631
  %v2633 = vmul.f32 %v2087, %v2587
  %v2634 = vadd.f32 %v2632, %v2633
  %v2635 = vadd.f32 %v2634, %v2081
  %v2636 = vmul.f32 %v2089, %v2553
  %v2637 = vmul.f32 %v2098, %v2567
  %v2638 = vadd.f32 %v2636, %v2637
  %v2639 = vmul.f32 %v2101, %v2581
  %v2640 = vadd.f32 %v2638, %v2639
  %v2641 = vmul.f32 %v2089, %v2562
  %v2642 = vmul.f32 %v2098, %v2576
  %v2643 = vadd.f32 %v2641, %v2642
  %v2644 = vmul.f32 %v2101, %v2590
  %v2645 = vadd.f32 %v2643, %v2644
  %v2646 = vmul.f32 %v2089, %v2565
  %v2647 = vmul.f32 %v2098, %v2579
  %v2648 = vadd.f32 %v2646, %v2647
  %v2649 = vmul.f32 %v2101, %v2593
  %v2650 = vadd.f32 %v2648, %v2649
  %v2651 = vmul.f32 %v2089, %v2559
  %v2652 = vmul.f32 %v2098, %v2573
  %v2653 = vadd.f32 %v2651, %v2652
  %v2654 = vmul.f32 %v2101, %v2587
  %v2655 = vadd.f32 %v2653, %v2654
  %v2656 = vadd.f32 %v2655, %v2095
  %v2657 = vmul.f32 %v25, %v2598
  %v2658 = vmul.f32 %v27, %v2619
  %v2659 = vadd.f32 %v2657, %v2658
  %v2660 = vmul.f32 %v29, %v2640
  %v2661 = vadd.f32 %v2659, %v2660
  %v2662 = vmul.f32 %v25, %v2603
  %v2663 = vmul.f32 %v27, %v2624
  %v2664 = vadd.f32 %v2662, %v2663
  %v2665 = vmul.f32 %v29, %v2645
  %v2666 = vadd.f32 %v2664, %v2665
  %v2667 = vmul.f32 %v25, %v2608
  %v2668 = vmul.f32 %v27, %v2629
  %v2669 = vadd.f32 %v2667, %v2668
  %v2670 = vmul.f32 %v29, %v2650
  %v2671 = vadd.f32 %v2669, %v2670
  %v2672 = vmul.f32 %v25, %v2614
  %v2673 = vmul.f32 %v27, %v2635
  %v2674 = vadd.f32 %v2672, %v2673
  %v2675 = vmul.f32 %v29, %v2656
  %v2676 = vadd.f32 %v2674, %v2675
  %v2677 = vadd.f32 %v2676, %v31
  %v2678 = vmul.f32 %v33, %v2598
  %v2679 = vmul.f32 %v35, %v2619
  %v2680 = vadd.f32 %v2678, %v2679
  %v2681 = vmul.f32 %v37, %v2640
  %v2682 = vadd.f32 %v2680, %v2681
  %v2683 = vmul.f32 %v33, %v2603
  %v2684 = vmul.f32 %v35, %v2624
  %v2685 = vadd.f32 %v2683, %v2684
  %v2686 = vmul.f32 %v37, %v2645
  %v2687 = vadd.f32 %v2685, %v2686
  %v2688 = vmul.f32 %v33, %v2608
  %v2689 = vmul.f32 %v35, %v2629
  %v2690 = vadd.f32 %v2688, %v2689
  %v2691 = vmul.f32 %v37, %v2650
  %v2692 = vadd.f32 %v2690, %v2691
  %v2693 = vmul.f32 %v33, %v2614
  %v2694 = vmul.f32 %v35, %v2635
  %v2695 = vadd.f32 %v2693, %v2694
  %v2696 = vmul.f32 %v37, %v2656
  %v2697 = vadd.f32 %v2695, %v2696
  %v2698 = vadd.f32 %v2697, %v39
  %v2699 = vmul.f32 %v41, %v2598
  %v2700 = vmul.f32 %v43, %v2619
  %v2701 = vadd.f32 %v2699, %v2700
  %v2702 = vmul.f32 %v45, %v2640
  %v2703 = vadd.f32 %v2701, %v2702
  %v2704 = vmul.f32 %v41, %v2603
  %v2705 = vmul.f32 %v43, %v2624
  %v2706 = vadd.f32 %v2704, %v2705
  %v2707 = vmul.f32 %v45, %v2645
  %v2708 = vadd.f32 %v2706, %v2707
  %v2709 = vmul.f32 %v41, %v2608
  %v2710 = vmul.f32 %v43, %v2629
  %v2711 = vadd.f32 %v2709, %v2710
  %v2712 = vmul.f32 %v45, %v2650
  %v2713 = vadd.f32 %v2711, %v2712
  %v2714 = vmul.f32 %v41, %v2614
  %v2715 = vmul.f32 %v43, %v2635
  %v2716 = vadd.f32 %v2714, %v2715
  %v2717 = vmul.f32 %v45, %v2656
  %v2718 = vadd.f32 %v2716, %v2717
  %v2719 = vadd.f32 %v2718, %v47
  %s2720 = scalar_lea.vmem %s6, 640
  %2721 = vst [vmem:[%s2720] sm:$0xff] %v2661
  %s2722 = scalar_lea.vmem %s6, 648
  %2723 = vst [vmem:[%s2722] sm:$0xff] %v2666
  %s2724 = scalar_lea.vmem %s6, 656
  %2725 = vst [vmem:[%s2724] sm:$0xff] %v2671
  %s2726 = scalar_lea.vmem %s6, 664
  %2727 = vst [vmem:[%s2726] sm:$0xff] %v2677
  %s2728 = scalar_lea.vmem %s6, 672
  %2729 = vst [vmem:[%s2728] sm:$0xff] %v2682
  %s2730 = scalar_lea.vmem %s6, 680
  %2731 = vst [vmem:[%s2730] sm:$0xff] %v2687
  %s2732 = scalar_lea.vmem %s6, 688
  %2733 = vst [vmem:[%s2732] sm:$0xff] %v2692
  %s2734 = scalar_lea.vmem %s6, 696
  %2735 = vst [vmem:[%s2734] sm:$0xff] %v2698
  %s2736 = scalar_lea.vmem %s6, 704
  %2737 = vst [vmem:[%s2736] sm:$0xff] %v2703
  %s2738 = scalar_lea.vmem %s6, 712
  %2739 = vst [vmem:[%s2738] sm:$0xff] %v2708
  %s2740 = scalar_lea.vmem %s6, 720
  %2741 = vst [vmem:[%s2740] sm:$0xff] %v2713
  %s2742 = scalar_lea.vmem %s6, 728
  %2743 = vst [vmem:[%s2742] sm:$0xff] %v2719
  %s2744 = scalar_lea.vmem %s6, 736
  %2745 = vst [vmem:[%s2744] sm:$0xff] 0.0
  %s2746 = scalar_lea.vmem %s6, 744
  %2747 = vst [vmem:[%s2746] sm:$0xff] 0.0
  %s2748 = scalar_lea.vmem %s6, 752
  %2749 = vst [vmem:[%s2748] sm:$0xff] 0.0
  %s2750 = scalar_lea.vmem %s6, 760
  %2751 = vst [vmem:[%s2750] sm:$0xff] 1.0
  %s2752 = scalar_lea.vmem %s3, 560
  %v2753 = vld [vmem:[%s2752] sm:$0xff]
  %v2754 = vld [vmem:[%s2752 + $0x8] sm:$0xff]
  %v2755 = vld [vmem:[%s2752 + $0x10] sm:$0xff]
  %v2756 = vld [vmem:[%s2752 + $0x18] sm:$0xff]
  %v2757 = vld [vmem:[%s2752 + $0x20] sm:$0xff]
  %v2758 = vld [vmem:[%s2752 + $0x28] sm:$0xff]
  %v2759 = vld [vmem:[%s2752 + $0x30] sm:$0xff]
  %v2760 = vld [vmem:[%s2752 + $0x38] sm:$0xff]
  %v2761 = vld [vmem:[%s2752 + $0x40] sm:$0xff]
  %v2762 = vld [vmem:[%s2752 + $0x48] sm:$0xff]
  %v2763 = vld [vmem:[%s2752 + $0x50] sm:$0xff]
  %v2764 = vld [vmem:[%s2752 + $0x58] sm:$0xff]
  %v2765 = vld [vmem:[%s2752 + $0x60] sm:$0xff]
  %v2766 = vld [vmem:[%s2752 + $0x68] sm:$0xff]
  %v2767 = vmul.f32 %v2661, %v48
  %v2768 = vmul.f32 %v2661, %v49
  %v2769 = vmul.f32 %v2661, %v50
  %v2770 = vmul.f32 %v2661, %v51
  %v2771 = vmul.f32 %v2661, %v52
  %v2772 = vmul.f32 %v2661, %v53
  %v2773 = vmul.f32 %v2661, %v54
  %v2774 = vmul.f32 %v2661, %v55
  %v2775 = vmul.f32 %v2661, %v56
  %v2776 = vmul.f32 %v2661, %v57
  %v2777 = vmul.f32 %v2661, %v58
  %v2778 = vmul.f32 %v2661, %v59
  %v2779 = vmul.f32 %v2661, %v60
  %v2780 = vmul.f32 %v2661, %v61
  %v2781 = vmul.f32 %v2666, %v63
  %v2782 = vmul.f32 %v2666, %v64
  %v2783 = vmul.f32 %v2666, %v65
  %v2784 = vmul.f32 %v2666, %v66
  %v2785 = vmul.f32 %v2666, %v67
  %v2786 = vmul.f32 %v2666, %v68
  %v2787 = vmul.f32 %v2666, %v69
  %v2788 = vmul.f32 %v2666, %v70
  %v2789 = vmul.f32 %v2666, %v71
  %v2790 = vmul.f32 %v2666, %v72
  %v2791 = vmul.f32 %v2666, %v73
  %v2792 = vmul.f32 %v2666, %v74
  %v2793 = vmul.f32 %v2666, %v75
  %v2794 = vmul.f32 %v2666, %v76
  %v2795 = vadd.f32 %v2767, %v2781
  %v2796 = vadd.f32 %v2768, %v2782
  %v2797 = vadd.f32 %v2769, %v2783
  %v2798 = vadd.f32 %v2770, %v2784
  %v2799 = vadd.f32 %v2771, %v2785
  %v2800 = vadd.f32 %v2772, %v2786
  %v2801 = vadd.f32 %v2773, %v2787
  %v2802 = vadd.f32 %v2774, %v2788
  %v2803 = vadd.f32 %v2775, %v2789
  %v2804 = vadd.f32 %v2776, %v2790
  %v2805 = vadd.f32 %v2777, %v2791
  %v2806 = vadd.f32 %v2778, %v2792
  %v2807 = vadd.f32 %v2779, %v2793
  %v2808 = vadd.f32 %v2780, %v2794
  %v2809 = vmul.f32 %v2671, %v78
  %v2810 = vmul.f32 %v2671, %v79
  %v2811 = vmul.f32 %v2671, %v80
  %v2812 = vmul.f32 %v2671, %v81
  %v2813 = vmul.f32 %v2671, %v82
  %v2814 = vmul.f32 %v2671, %v83
  %v2815 = vmul.f32 %v2671, %v84
  %v2816 = vmul.f32 %v2671, %v85
  %v2817 = vmul.f32 %v2671, %v86
  %v2818 = vmul.f32 %v2671, %v87
  %v2819 = vmul.f32 %v2671, %v88
  %v2820 = vmul.f32 %v2671, %v89
  %v2821 = vmul.f32 %v2671, %v90
  %v2822 = vmul.f32 %v2671, %v91
  %v2823 = vadd.f32 %v2795, %v2809
  %v2824 = vadd.f32 %v2796, %v2810
  %v2825 = vadd.f32 %v2797, %v2811
  %v2826 = vadd.f32 %v2798, %v2812
  %v2827 = vadd.f32 %v2799, %v2813
  %v2828 = vadd.f32 %v2800, %v2814
  %v2829 = vadd.f32 %v2801, %v2815
  %v2830 = vadd.f32 %v2802, %v2816
  %v2831 = vadd.f32 %v2803, %v2817
  %v2832 = vadd.f32 %v2804, %v2818
  %v2833 = vadd.f32 %v2805, %v2819
  %v2834 = vadd.f32 %v2806, %v2820
  %v2835 = vadd.f32 %v2807, %v2821
  %v2836 = vadd.f32 %v2808, %v2822
  %v2837 = vadd.f32 %v2823, %v2677
  %v2838 = vadd.f32 %v2824, %v2677
  %v2839 = vadd.f32 %v2825, %v2677
  %v2840 = vadd.f32 %v2826, %v2677
  %v2841 = vadd.f32 %v2827, %v2677
  %v2842 = vadd.f32 %v2828, %v2677
  %v2843 = vadd.f32 %v2829, %v2677
  %v2844 = vadd.f32 %v2830, %v2677
  %v2845 = vadd.f32 %v2831, %v2677
  %v2846 = vadd.f32 %v2832, %v2677
  %v2847 = vadd.f32 %v2833, %v2677
  %v2848 = vadd.f32 %v2834, %v2677
  %v2849 = vadd.f32 %v2835, %v2677
  %v2850 = vadd.f32 %v2836, %v2677
  %v2851 = vmul.f32 %v2753, %v2837
  %v2852 = vmul.f32 %v2754, %v2838
  %v2853 = vmul.f32 %v2755, %v2839
  %v2854 = vmul.f32 %v2756, %v2840
  %v2855 = vmul.f32 %v2757, %v2841
  %v2856 = vmul.f32 %v2758, %v2842
  %v2857 = vmul.f32 %v2759, %v2843
  %v2858 = vmul.f32 %v2760, %v2844
  %v2859 = vmul.f32 %v2761, %v2845
  %v2860 = vmul.f32 %v2762, %v2846
  %v2861 = vmul.f32 %v2763, %v2847
  %v2862 = vmul.f32 %v2764, %v2848
  %v2863 = vmul.f32 %v2765, %v2849
  %v2864 = vmul.f32 %v2766, %v2850
  %v2865 = vadd.f32 %v2310, %v2851
  %v2866 = vadd.f32 %v2311, %v2852
  %v2867 = vadd.f32 %v2312, %v2853
  %v2868 = vadd.f32 %v2313, %v2854
  %v2869 = vadd.f32 %v2314, %v2855
  %v2870 = vadd.f32 %v2315, %v2856
  %v2871 = vadd.f32 %v2316, %v2857
  %v2872 = vadd.f32 %v2317, %v2858
  %v2873 = vadd.f32 %v2318, %v2859
  %v2874 = vadd.f32 %v2319, %v2860
  %v2875 = vadd.f32 %v2320, %v2861
  %v2876 = vadd.f32 %v2321, %v2862
  %v2877 = vadd.f32 %v2322, %v2863
  %v2878 = vadd.f32 %v2323, %v2864
  %v2879 = vmul.f32 %v2682, %v48
  %v2880 = vmul.f32 %v2682, %v49
  %v2881 = vmul.f32 %v2682, %v50
  %v2882 = vmul.f32 %v2682, %v51
  %v2883 = vmul.f32 %v2682, %v52
  %v2884 = vmul.f32 %v2682, %v53
  %v2885 = vmul.f32 %v2682, %v54
  %v2886 = vmul.f32 %v2682, %v55
  %v2887 = vmul.f32 %v2682, %v56
  %v2888 = vmul.f32 %v2682, %v57
  %v2889 = vmul.f32 %v2682, %v58
  %v2890 = vmul.f32 %v2682, %v59
  %v2891 = vmul.f32 %v2682, %v60
  %v2892 = vmul.f32 %v2682, %v61
  %v2893 = vmul.f32 %v2687, %v63
  %v2894 = vmul.f32 %v2687, %v64
  %v2895 = vmul.f32 %v2687, %v65
  %v2896 = vmul.f32 %v2687, %v66
  %v2897 = vmul.f32 %v2687, %v67
  %v2898 = vmul.f32 %v2687, %v68
  %v2899 = vmul.f32 %v2687, %v69
  %v2900 = vmul.f32 %v2687, %v70
  %v2901 = vmul.f32 %v2687, %v71
  %v2902 = vmul.f32 %v2687, %v72
  %v2903 = vmul.f32 %v2687, %v73
  %v2904 = vmul.f32 %v2687, %v74
  %v2905 = vmul.f32 %v2687, %v75
  %v2906 = vmul.f32 %v2687, %v76
  %v2907 = vadd.f32 %v2879, %v2893
  %v2908 = vadd.f32 %v2880, %v2894
  %v2909 = vadd.f32 %v2881, %v2895
  %v2910 = vadd.f32 %v2882, %v2896
  %v2911 = vadd.f32 %v2883, %v2897
  %v2912 = vadd.f32 %v2884, %v2898
  %v2913 = vadd.f32 %v2885, %v2899
  %v2914 = vadd.f32 %v2886, %v2900
  %v2915 = vadd.f32 %v2887, %v2901
  %v2916 = vadd.f32 %v2888, %v2902
  %v2917 = vadd.f32 %v2889, %v2903
  %v2918 = vadd.f32 %v2890, %v2904
  %v2919 = vadd.f32 %v2891, %v2905
  %v2920 = vadd.f32 %v2892, %v2906
  %v2921 = vmul.f32 %v2692, %v78
  %v2922 = vmul.f32 %v2692, %v79
  %v2923 = vmul.f32 %v2692, %v80
  %v2924 = vmul.f32 %v2692, %v81
  %v2925 = vmul.f32 %v2692, %v82
  %v2926 = vmul.f32 %v2692, %v83
  %v2927 = vmul.f32 %v2692, %v84
  %v2928 = vmul.f32 %v2692, %v85
  %v2929 = vmul.f32 %v2692, %v86
  %v2930 = vmul.f32 %v2692, %v87
  %v2931 = vmul.f32 %v2692, %v88
  %v2932 = vmul.f32 %v2692, %v89
  %v2933 = vmul.f32 %v2692, %v90
  %v2934 = vmul.f32 %v2692, %v91
  %v2935 = vadd.f32 %v2907, %v2921
  %v2936 = vadd.f32 %v2908, %v2922
  %v2937 = vadd.f32 %v2909, %v2923
  %v2938 = vadd.f32 %v2910, %v2924
  %v2939 = vadd.f32 %v2911, %v2925
  %v2940 = vadd.f32 %v2912, %v2926
  %v2941 = vadd.f32 %v2913, %v2927
  %v2942 = vadd.f32 %v2914, %v2928
  %v2943 = vadd.f32 %v2915, %v2929
  %v2944 = vadd.f32 %v2916, %v2930
  %v2945 = vadd.f32 %v2917, %v2931
  %v2946 = vadd.f32 %v2918, %v2932
  %v2947 = vadd.f32 %v2919, %v2933
  %v2948 = vadd.f32 %v2920, %v2934
  %v2949 = vadd.f32 %v2935, %v2698
  %v2950 = vadd.f32 %v2936, %v2698
  %v2951 = vadd.f32 %v2937, %v2698
  %v2952 = vadd.f32 %v2938, %v2698
  %v2953 = vadd.f32 %v2939, %v2698
  %v2954 = vadd.f32 %v2940, %v2698
  %v2955 = vadd.f32 %v2941, %v2698
  %v2956 = vadd.f32 %v2942, %v2698
  %v2957 = vadd.f32 %v2943, %v2698
  %v2958 = vadd.f32 %v2944, %v2698
  %v2959 = vadd.f32 %v2945, %v2698
  %v2960 = vadd.f32 %v2946, %v2698
  %v2961 = vadd.f32 %v2947, %v2698
  %v2962 = vadd.f32 %v2948, %v2698
  %v2963 = vmul.f32 %v2753, %v2949
  %v2964 = vmul.f32 %v2754, %v2950
  %v2965 = vmul.f32 %v2755, %v2951
  %v2966 = vmul.f32 %v2756, %v2952
  %v2967 = vmul.f32 %v2757, %v2953
  %v2968 = vmul.f32 %v2758, %v2954
  %v2969 = vmul.f32 %v2759, %v2955
  %v2970 = vmul.f32 %v2760, %v2956
  %v2971 = vmul.f32 %v2761, %v2957
  %v2972 = vmul.f32 %v2762, %v2958
  %v2973 = vmul.f32 %v2763, %v2959
  %v2974 = vmul.f32 %v2764, %v2960
  %v2975 = vmul.f32 %v2765, %v2961
  %v2976 = vmul.f32 %v2766, %v2962
  %v2977 = vadd.f32 %v2422, %v2963
  %v2978 = vadd.f32 %v2423, %v2964
  %v2979 = vadd.f32 %v2424, %v2965
  %v2980 = vadd.f32 %v2425, %v2966
  %v2981 = vadd.f32 %v2426, %v2967
  %v2982 = vadd.f32 %v2427, %v2968
  %v2983 = vadd.f32 %v2428, %v2969
  %v2984 = vadd.f32 %v2429, %v2970
  %v2985 = vadd.f32 %v2430, %v2971
  %v2986 = vadd.f32 %v2431, %v2972
  %v2987 = vadd.f32 %v2432, %v2973
  %v2988 = vadd.f32 %v2433, %v2974
  %v2989 = vadd.f32 %v2434, %v2975
  %v2990 = vadd.f32 %v2435, %v2976
  %v2991 = vmul.f32 %v2703, %v48
  %v2992 = vmul.f32 %v2703, %v49
  %v2993 = vmul.f32 %v2703, %v50
  %v2994 = vmul.f32 %v2703, %v51
  %v2995 = vmul.f32 %v2703, %v52
  %v2996 = vmul.f32 %v2703, %v53
  %v2997 = vmul.f32 %v2703, %v54
  %v2998 = vmul.f32 %v2703, %v55
  %v2999 = vmul.f32 %v2703, %v56
  %v3000 = vmul.f32 %v2703, %v57
  %v3001 = vmul.f32 %v2703, %v58
  %v3002 = vmul.f32 %v2703, %v59
  %v3003 = vmul.f32 %v2703, %v60
  %v3004 = vmul.f32 %v2703, %v61
  %v3005 = vmul.f32 %v2708, %v63
  %v3006 = vmul.f32 %v2708, %v64
  %v3007 = vmul.f32 %v2708, %v65
  %v3008 = vmul.f32 %v2708, %v66
  %v3009 = vmul.f32 %v2708, %v67
  %v3010 = vmul.f32 %v2708, %v68
  %v3011 = vmul.f32 %v2708, %v69
  %v3012 = vmul.f32 %v2708, %v70
  %v3013 = vmul.f32 %v2708, %v71
  %v3014 = vmul.f32 %v2708, %v72
  %v3015 = vmul.f32 %v2708, %v73
  %v3016 = vmul.f32 %v2708, %v74
  %v3017 = vmul.f32 %v2708, %v75
  %v3018 = vmul.f32 %v2708, %v76
  %v3019 = vadd.f32 %v2991, %v3005
  %v3020 = vadd.f32 %v2992, %v3006
  %v3021 = vadd.f32 %v2993, %v3007
  %v3022 = vadd.f32 %v2994, %v3008
  %v3023 = vadd.f32 %v2995, %v3009
  %v3024 = vadd.f32 %v2996, %v3010
  %v3025 = vadd.f32 %v2997, %v3011
  %v3026 = vadd.f32 %v2998, %v3012
  %v3027 = vadd.f32 %v2999, %v3013
  %v3028 = vadd.f32 %v3000, %v3014
  %v3029 = vadd.f32 %v3001, %v3015
  %v3030 = vadd.f32 %v3002, %v3016
  %v3031 = vadd.f32 %v3003, %v3017
  %v3032 = vadd.f32 %v3004, %v3018
  %v3033 = vmul.f32 %v2713, %v78
  %v3034 = vmul.f32 %v2713, %v79
  %v3035 = vmul.f32 %v2713, %v80
  %v3036 = vmul.f32 %v2713, %v81
  %v3037 = vmul.f32 %v2713, %v82
  %v3038 = vmul.f32 %v2713, %v83
  %v3039 = vmul.f32 %v2713, %v84
  %v3040 = vmul.f32 %v2713, %v85
  %v3041 = vmul.f32 %v2713, %v86
  %v3042 = vmul.f32 %v2713, %v87
  %v3043 = vmul.f32 %v2713, %v88
  %v3044 = vmul.f32 %v2713, %v89
  %v3045 = vmul.f32 %v2713, %v90
  %v3046 = vmul.f32 %v2713, %v91
  %v3047 = vadd.f32 %v3019, %v3033
  %v3048 = vadd.f32 %v3020, %v3034
  %v3049 = vadd.f32 %v3021, %v3035
  %v3050 = vadd.f32 %v3022, %v3036
  %v3051 = vadd.f32 %v3023, %v3037
  %v3052 = vadd.f32 %v3024, %v3038
  %v3053 = vadd.f32 %v3025, %v3039
  %v3054 = vadd.f32 %v3026, %v3040
  %v3055 = vadd.f32 %v3027, %v3041
  %v3056 = vadd.f32 %v3028, %v3042
  %v3057 = vadd.f32 %v3029, %v3043
  %v3058 = vadd.f32 %v3030, %v3044
  %v3059 = vadd.f32 %v3031, %v3045
  %v3060 = vadd.f32 %v3032, %v3046
  %v3061 = vadd.f32 %v3047, %v2719
  %v3062 = vadd.f32 %v3048, %v2719
  %v3063 = vadd.f32 %v3049, %v2719
  %v3064 = vadd.f32 %v3050, %v2719
  %v3065 = vadd.f32 %v3051, %v2719
  %v3066 = vadd.f32 %v3052, %v2719
  %v3067 = vadd.f32 %v3053, %v2719
  %v3068 = vadd.f32 %v3054, %v2719
  %v3069 = vadd.f32 %v3055, %v2719
  %v3070 = vadd.f32 %v3056, %v2719
  %v3071 = vadd.f32 %v3057, %v2719
  %v3072 = vadd.f32 %v3058, %v2719
  %v3073 = vadd.f32 %v3059, %v2719
  %v3074 = vadd.f32 %v3060, %v2719
  %v3075 = vmul.f32 %v2753, %v3061
  %v3076 = vmul.f32 %v2754, %v3062
  %v3077 = vmul.f32 %v2755, %v3063
  %v3078 = vmul.f32 %v2756, %v3064
  %v3079 = vmul.f32 %v2757, %v3065
  %v3080 = vmul.f32 %v2758, %v3066
  %v3081 = vmul.f32 %v2759, %v3067
  %v3082 = vmul.f32 %v2760, %v3068
  %v3083 = vmul.f32 %v2761, %v3069
  %v3084 = vmul.f32 %v2762, %v3070
  %v3085 = vmul.f32 %v2763, %v3071
  %v3086 = vmul.f32 %v2764, %v3072
  %v3087 = vmul.f32 %v2765, %v3073
  %v3088 = vmul.f32 %v2766, %v3074
  %v3089 = vadd.f32 %v2534, %v3075
  %v3090 = vadd.f32 %v2535, %v3076
  %v3091 = vadd.f32 %v2536, %v3077
  %v3092 = vadd.f32 %v2537, %v3078
  %v3093 = vadd.f32 %v2538, %v3079
  %v3094 = vadd.f32 %v2539, %v3080
  %v3095 = vadd.f32 %v2540, %v3081
  %v3096 = vadd.f32 %v2541, %v3082
  %v3097 = vadd.f32 %v2542, %v3083
  %v3098 = vadd.f32 %v2543, %v3084
  %v3099 = vadd.f32 %v2544, %v3085
  %v3100 = vadd.f32 %v2545, %v3086
  %v3101 = vadd.f32 %v2546, %v3087
  %v3102 = vadd.f32 %v2547, %v3088
  %s3103 = scalar_lea.vmem %s1, 96
  %v3104 = vld [vmem:[%s3103] sm:$0xff]
  %s3105 = scalar_lea.vmem %s1, 104
  %v3106 = vld [vmem:[%s3105] sm:$0xff]
  %s3107 = scalar_lea.vmem %s0, 576
  %v3108 = vld [vmem:[%s3107] sm:$0xff]
  %s3109 = scalar_lea.vmem %s0, 584
  %v3110 = vld [vmem:[%s3109] sm:$0xff]
  %s3111 = scalar_lea.vmem %s0, 592
  %v3112 = vld [vmem:[%s3111] sm:$0xff]
  %s3113 = scalar_lea.vmem %s0, 600
  %v3114 = vld [vmem:[%s3113] sm:$0xff]
  %v3115 = vmul.f32 %v3106, %v3110
  %v3116 = vmul.f32 %v3104, %v3112
  %v3117 = vadd.f32 %v3115, %v3116
  %v3118 = vmul.f32 %v3106, %v3112
  %v3119 = vmul.f32 %v3104, %v3110
  %v3120 = vsub.f32 %v3118, %v3119
  %s3121 = scalar_lea.vmem %s0, 608
  %v3122 = vld [vmem:[%s3121] sm:$0xff]
  %s3123 = scalar_lea.vmem %s0, 616
  %v3124 = vld [vmem:[%s3123] sm:$0xff]
  %s3125 = scalar_lea.vmem %s0, 624
  %v3126 = vld [vmem:[%s3125] sm:$0xff]
  %s3127 = scalar_lea.vmem %s0, 632
  %v3128 = vld [vmem:[%s3127] sm:$0xff]
  %v3129 = vmul.f32 %v3106, %v3124
  %v3130 = vmul.f32 %v3104, %v3126
  %v3131 = vadd.f32 %v3129, %v3130
  %v3132 = vmul.f32 %v3106, %v3126
  %v3133 = vmul.f32 %v3104, %v3124
  %v3134 = vsub.f32 %v3132, %v3133
  %s3135 = scalar_lea.vmem %s0, 640
  %v3136 = vld [vmem:[%s3135] sm:$0xff]
  %s3137 = scalar_lea.vmem %s0, 648
  %v3138 = vld [vmem:[%s3137] sm:$0xff]
  %s3139 = scalar_lea.vmem %s0, 656
  %v3140 = vld [vmem:[%s3139] sm:$0xff]
  %s3141 = scalar_lea.vmem %s0, 664
  %v3142 = vld [vmem:[%s3141] sm:$0xff]
  %v3143 = vmul.f32 %v3106, %v3138
  %v3144 = vmul.f32 %v3104, %v3140
  %v3145 = vadd.f32 %v3143, %v3144
  %v3146 = vmul.f32 %v3106, %v3140
  %v3147 = vmul.f32 %v3104, %v3138
  %v3148 = vsub.f32 %v3146, %v3147
  %v3149 = vmul.f32 %v2598, %v3108
  %v3150 = vmul.f32 %v2603, %v3122
  %v3151 = vadd.f32 %v3149, %v3150
  %v3152 = vmul.f32 %v2608, %v3136
  %v3153 = vadd.f32 %v3151, %v3152
  %v3154 = vmul.f32 %v2598, %v3117
  %v3155 = vmul.f32 %v2603, %v3131
  %v3156 = vadd.f32 %v3154, %v3155
  %v3157 = vmul.f32 %v2608, %v3145
  %v3158 = vadd.f32 %v3156, %v3157
  %v3159 = vmul.f32 %v2598, %v3120
  %v3160 = vmul.f32 %v2603, %v3134
  %v3161 = vadd.f32 %v3159, %v3160
  %v3162 = vmul.f32 %v2608, %v3148
  %v3163 = vadd.f32 %v3161, %v3162
  %v3164 = vmul.f32 %v2598, %v3114
  %v3165 = vmul.f32 %v2603, %v3128
  %v3166 = vadd.f32 %v3164, %v3165
  %v3167 = vmul.f32 %v2608, %v3142
  %v3168 = vadd.f32 %v3166, %v3167
  %v3169 = vadd.f32 %v3168, %v2614
  %v3170 = vmul.f32 %v2619, %v3108
  %v3171 = vmul.f32 %v2624, %v3122
  %v3172 = vadd.f32 %v3170, %v3171
  %v3173 = vmul.f32 %v2629, %v3136
  %v3174 = vadd.f32 %v3172, %v3173
  %v3175 = vmul.f32 %v2619, %v3117
  %v3176 = vmul.f32 %v2624, %v3131
  %v3177 = vadd.f32 %v3175, %v3176
  %v3178 = vmul.f32 %v2629, %v3145
  %v3179 = vadd.f32 %v3177, %v3178
  %v3180 = vmul.f32 %v2619, %v3120
  %v3181 = vmul.f32 %v2624, %v3134
  %v3182 = vadd.f32 %v3180, %v3181
  %v3183 = vmul.f32 %v2629, %v3148
  %v3184 = vadd.f32 %v3182, %v3183
  %v3185 = vmul.f32 %v2619, %v3114
  %v3186 = vmul.f32 %v2624, %v3128
  %v3187 = vadd.f32 %v3185, %v3186
  %v3188 = vmul.f32 %v2629, %v3142
  %v3189 = vadd.f32 %v3187, %v3188
  %v3190 = vadd.f32 %v3189, %v2635
  %v3191 = vmul.f32 %v2640, %v3108
  %v3192 = vmul.f32 %v2645, %v3122
  %v3193 = vadd.f32 %v3191, %v3192
  %v3194 = vmul.f32 %v2650, %v3136
  %v3195 = vadd.f32 %v3193, %v3194
  %v3196 = vmul.f32 %v2640, %v3117
  %v3197 = vmul.f32 %v2645, %v3131
  %v3198 = vadd.f32 %v3196, %v3197
  %v3199 = vmul.f32 %v2650, %v3145
  %v3200 = vadd.f32 %v3198, %v3199
  %v3201 = vmul.f32 %v2640, %v3120
  %v3202 = vmul.f32 %v2645, %v3134
  %v3203 = vadd.f32 %v3201, %v3202
  %v3204 = vmul.f32 %v2650, %v3148
  %v3205 = vadd.f32 %v3203, %v3204
  %v3206 = vmul.f32 %v2640, %v3114
  %v3207 = vmul.f32 %v2645, %v3128
  %v3208 = vadd.f32 %v3206, %v3207
  %v3209 = vmul.f32 %v2650, %v3142
  %v3210 = vadd.f32 %v3208, %v3209
  %v3211 = vadd.f32 %v3210, %v2656
  %v3212 = vmul.f32 %v25, %v3153
  %v3213 = vmul.f32 %v27, %v3174
  %v3214 = vadd.f32 %v3212, %v3213
  %v3215 = vmul.f32 %v29, %v3195
  %v3216 = vadd.f32 %v3214, %v3215
  %v3217 = vmul.f32 %v25, %v3158
  %v3218 = vmul.f32 %v27, %v3179
  %v3219 = vadd.f32 %v3217, %v3218
  %v3220 = vmul.f32 %v29, %v3200
  %v3221 = vadd.f32 %v3219, %v3220
  %v3222 = vmul.f32 %v25, %v3163
  %v3223 = vmul.f32 %v27, %v3184
  %v3224 = vadd.f32 %v3222, %v3223
  %v3225 = vmul.f32 %v29, %v3205
  %v3226 = vadd.f32 %v3224, %v3225
  %v3227 = vmul.f32 %v25, %v3169
  %v3228 = vmul.f32 %v27, %v3190
  %v3229 = vadd.f32 %v3227, %v3228
  %v3230 = vmul.f32 %v29, %v3211
  %v3231 = vadd.f32 %v3229, %v3230
  %v3232 = vadd.f32 %v3231, %v31
  %v3233 = vmul.f32 %v33, %v3153
  %v3234 = vmul.f32 %v35, %v3174
  %v3235 = vadd.f32 %v3233, %v3234
  %v3236 = vmul.f32 %v37, %v3195
  %v3237 = vadd.f32 %v3235, %v3236
  %v3238 = vmul.f32 %v33, %v3158
  %v3239 = vmul.f32 %v35, %v3179
  %v3240 = vadd.f32 %v3238, %v3239
  %v3241 = vmul.f32 %v37, %v3200
  %v3242 = vadd.f32 %v3240, %v3241
  %v3243 = vmul.f32 %v33, %v3163
  %v3244 = vmul.f32 %v35, %v3184
  %v3245 = vadd.f32 %v3243, %v3244
  %v3246 = vmul.f32 %v37, %v3205
  %v3247 = vadd.f32 %v3245, %v3246
  %v3248 = vmul.f32 %v33, %v3169
  %v3249 = vmul.f32 %v35, %v3190
  %v3250 = vadd.f32 %v3248, %v3249
  %v3251 = vmul.f32 %v37, %v3211
  %v3252 = vadd.f32 %v3250, %v3251
  %v3253 = vadd.f32 %v3252, %v39
  %v3254 = vmul.f32 %v41, %v3153
  %v3255 = vmul.f32 %v43, %v3174
  %v3256 = vadd.f32 %v3254, %v3255
  %v3257 = vmul.f32 %v45, %v3195
  %v3258 = vadd.f32 %v3256, %v3257
  %v3259 = vmul.f32 %v41, %v3158
  %v3260 = vmul.f32 %v43, %v3179
  %v3261 = vadd.f32 %v3259, %v3260
  %v3262 = vmul.f32 %v45, %v3200
  %v3263 = vadd.f32 %v3261, %v3262
  %v3264 = vmul.f32 %v41, %v3163
  %v3265 = vmul.f32 %v43, %v3184
  %v3266 = vadd.f32 %v3264, %v3265
  %v3267 = vmul.f32 %v45, %v3205
  %v3268 = vadd.f32 %v3266, %v3267
  %v3269 = vmul.f32 %v41, %v3169
  %v3270 = vmul.f32 %v43, %v3190
  %v3271 = vadd.f32 %v3269, %v3270
  %v3272 = vmul.f32 %v45, %v3211
  %v3273 = vadd.f32 %v3271, %v3272
  %v3274 = vadd.f32 %v3273, %v47
  %s3275 = scalar_lea.vmem %s6, 768
  %3276 = vst [vmem:[%s3275] sm:$0xff] %v3216
  %s3277 = scalar_lea.vmem %s6, 776
  %3278 = vst [vmem:[%s3277] sm:$0xff] %v3221
  %s3279 = scalar_lea.vmem %s6, 784
  %3280 = vst [vmem:[%s3279] sm:$0xff] %v3226
  %s3281 = scalar_lea.vmem %s6, 792
  %3282 = vst [vmem:[%s3281] sm:$0xff] %v3232
  %s3283 = scalar_lea.vmem %s6, 800
  %3284 = vst [vmem:[%s3283] sm:$0xff] %v3237
  %s3285 = scalar_lea.vmem %s6, 808
  %3286 = vst [vmem:[%s3285] sm:$0xff] %v3242
  %s3287 = scalar_lea.vmem %s6, 816
  %3288 = vst [vmem:[%s3287] sm:$0xff] %v3247
  %s3289 = scalar_lea.vmem %s6, 824
  %3290 = vst [vmem:[%s3289] sm:$0xff] %v3253
  %s3291 = scalar_lea.vmem %s6, 832
  %3292 = vst [vmem:[%s3291] sm:$0xff] %v3258
  %s3293 = scalar_lea.vmem %s6, 840
  %3294 = vst [vmem:[%s3293] sm:$0xff] %v3263
  %s3295 = scalar_lea.vmem %s6, 848
  %3296 = vst [vmem:[%s3295] sm:$0xff] %v3268
  %s3297 = scalar_lea.vmem %s6, 856
  %3298 = vst [vmem:[%s3297] sm:$0xff] %v3274
  %s3299 = scalar_lea.vmem %s6, 864
  %3300 = vst [vmem:[%s3299] sm:$0xff] 0.0
  %s3301 = scalar_lea.vmem %s6, 872
  %3302 = vst [vmem:[%s3301] sm:$0xff] 0.0
  %s3303 = scalar_lea.vmem %s6, 880
  %3304 = vst [vmem:[%s3303] sm:$0xff] 0.0
  %s3305 = scalar_lea.vmem %s6, 888
  %3306 = vst [vmem:[%s3305] sm:$0xff] 1.0
  %s3307 = scalar_lea.vmem %s3, 672
  %v3308 = vld [vmem:[%s3307] sm:$0xff]
  %v3309 = vld [vmem:[%s3307 + $0x8] sm:$0xff]
  %v3310 = vld [vmem:[%s3307 + $0x10] sm:$0xff]
  %v3311 = vld [vmem:[%s3307 + $0x18] sm:$0xff]
  %v3312 = vld [vmem:[%s3307 + $0x20] sm:$0xff]
  %v3313 = vld [vmem:[%s3307 + $0x28] sm:$0xff]
  %v3314 = vld [vmem:[%s3307 + $0x30] sm:$0xff]
  %v3315 = vld [vmem:[%s3307 + $0x38] sm:$0xff]
  %v3316 = vld [vmem:[%s3307 + $0x40] sm:$0xff]
  %v3317 = vld [vmem:[%s3307 + $0x48] sm:$0xff]
  %v3318 = vld [vmem:[%s3307 + $0x50] sm:$0xff]
  %v3319 = vld [vmem:[%s3307 + $0x58] sm:$0xff]
  %v3320 = vld [vmem:[%s3307 + $0x60] sm:$0xff]
  %v3321 = vld [vmem:[%s3307 + $0x68] sm:$0xff]
  %v3322 = vmul.f32 %v3216, %v48
  %v3323 = vmul.f32 %v3216, %v49
  %v3324 = vmul.f32 %v3216, %v50
  %v3325 = vmul.f32 %v3216, %v51
  %v3326 = vmul.f32 %v3216, %v52
  %v3327 = vmul.f32 %v3216, %v53
  %v3328 = vmul.f32 %v3216, %v54
  %v3329 = vmul.f32 %v3216, %v55
  %v3330 = vmul.f32 %v3216, %v56
  %v3331 = vmul.f32 %v3216, %v57
  %v3332 = vmul.f32 %v3216, %v58
  %v3333 = vmul.f32 %v3216, %v59
  %v3334 = vmul.f32 %v3216, %v60
  %v3335 = vmul.f32 %v3216, %v61
  %v3336 = vmul.f32 %v3221, %v63
  %v3337 = vmul.f32 %v3221, %v64
  %v3338 = vmul.f32 %v3221, %v65
  %v3339 = vmul.f32 %v3221, %v66
  %v3340 = vmul.f32 %v3221, %v67
  %v3341 = vmul.f32 %v3221, %v68
  %v3342 = vmul.f32 %v3221, %v69
  %v3343 = vmul.f32 %v3221, %v70
  %v3344 = vmul.f32 %v3221, %v71
  %v3345 = vmul.f32 %v3221, %v72
  %v3346 = vmul.f32 %v3221, %v73
  %v3347 = vmul.f32 %v3221, %v74
  %v3348 = vmul.f32 %v3221, %v75
  %v3349 = vmul.f32 %v3221, %v76
  %v3350 = vadd.f32 %v3322, %v3336
  %v3351 = vadd.f32 %v3323, %v3337
  %v3352 = vadd.f32 %v3324, %v3338
  %v3353 = vadd.f32 %v3325, %v3339
  %v3354 = vadd.f32 %v3326, %v3340
  %v3355 = vadd.f32 %v3327, %v3341
  %v3356 = vadd.f32 %v3328, %v3342
  %v3357 = vadd.f32 %v3329, %v3343
  %v3358 = vadd.f32 %v3330, %v3344
  %v3359 = vadd.f32 %v3331, %v3345
  %v3360 = vadd.f32 %v3332, %v3346
  %v3361 = vadd.f32 %v3333, %v3347
  %v3362 = vadd.f32 %v3334, %v3348
  %v3363 = vadd.f32 %v3335, %v3349
  %v3364 = vmul.f32 %v3226, %v78
  %v3365 = vmul.f32 %v3226, %v79
  %v3366 = vmul.f32 %v3226, %v80
  %v3367 = vmul.f32 %v3226, %v81
  %v3368 = vmul.f32 %v3226, %v82
  %v3369 = vmul.f32 %v3226, %v83
  %v3370 = vmul.f32 %v3226, %v84
  %v3371 = vmul.f32 %v3226, %v85
  %v3372 = vmul.f32 %v3226, %v86
  %v3373 = vmul.f32 %v3226, %v87
  %v3374 = vmul.f32 %v3226, %v88
  %v3375 = vmul.f32 %v3226, %v89
  %v3376 = vmul.f32 %v3226, %v90
  %v3377 = vmul.f32 %v3226, %v91
  %v3378 = vadd.f32 %v3350, %v3364
  %v3379 = vadd.f32 %v3351, %v3365
  %v3380 = vadd.f32 %v3352, %v3366
  %v3381 = vadd.f32 %v3353, %v3367
  %v3382 = vadd.f32 %v3354, %v3368
  %v3383 = vadd.f32 %v3355, %v3369
  %v3384 = vadd.f32 %v3356, %v3370
  %v3385 = vadd.f32 %v3357, %v3371
  %v3386 = vadd.f32 %v3358, %v3372
  %v3387 = vadd.f32 %v3359, %v3373
  %v3388 = vadd.f32 %v3360, %v3374
  %v3389 = vadd.f32 %v3361, %v3375
  %v3390 = vadd.f32 %v3362, %v3376
  %v3391 = vadd.f32 %v3363, %v3377
  %v3392 = vadd.f32 %v3378, %v3232
  %v3393 = vadd.f32 %v3379, %v3232
  %v3394 = vadd.f32 %v3380, %v3232
  %v3395 = vadd.f32 %v3381, %v3232
  %v3396 = vadd.f32 %v3382, %v3232
  %v3397 = vadd.f32 %v3383, %v3232
  %v3398 = vadd.f32 %v3384, %v3232
  %v3399 = vadd.f32 %v3385, %v3232
  %v3400 = vadd.f32 %v3386, %v3232
  %v3401 = vadd.f32 %v3387, %v3232
  %v3402 = vadd.f32 %v3388, %v3232
  %v3403 = vadd.f32 %v3389, %v3232
  %v3404 = vadd.f32 %v3390, %v3232
  %v3405 = vadd.f32 %v3391, %v3232
  %v3406 = vmul.f32 %v3308, %v3392
  %v3407 = vmul.f32 %v3309, %v3393
  %v3408 = vmul.f32 %v3310, %v3394
  %v3409 = vmul.f32 %v3311, %v3395
  %v3410 = vmul.f32 %v3312, %v3396
  %v3411 = vmul.f32 %v3313, %v3397
  %v3412 = vmul.f32 %v3314, %v3398
  %v3413 = vmul.f32 %v3315, %v3399
  %v3414 = vmul.f32 %v3316, %v3400
  %v3415 = vmul.f32 %v3317, %v3401
  %v3416 = vmul.f32 %v3318, %v3402
  %v3417 = vmul.f32 %v3319, %v3403
  %v3418 = vmul.f32 %v3320, %v3404
  %v3419 = vmul.f32 %v3321, %v3405
  %v3420 = vadd.f32 %v2865, %v3406
  %v3421 = vadd.f32 %v2866, %v3407
  %v3422 = vadd.f32 %v2867, %v3408
  %v3423 = vadd.f32 %v2868, %v3409
  %v3424 = vadd.f32 %v2869, %v3410
  %v3425 = vadd.f32 %v2870, %v3411
  %v3426 = vadd.f32 %v2871, %v3412
  %v3427 = vadd.f32 %v2872, %v3413
  %v3428 = vadd.f32 %v2873, %v3414
  %v3429 = vadd.f32 %v2874, %v3415
  %v3430 = vadd.f32 %v2875, %v3416
  %v3431 = vadd.f32 %v2876, %v3417
  %v3432 = vadd.f32 %v2877, %v3418
  %v3433 = vadd.f32 %v2878, %v3419
  %v3434 = vmul.f32 %v3237, %v48
  %v3435 = vmul.f32 %v3237, %v49
  %v3436 = vmul.f32 %v3237, %v50
  %v3437 = vmul.f32 %v3237, %v51
  %v3438 = vmul.f32 %v3237, %v52
  %v3439 = vmul.f32 %v3237, %v53
  %v3440 = vmul.f32 %v3237, %v54
  %v3441 = vmul.f32 %v3237, %v55
  %v3442 = vmul.f32 %v3237, %v56
  %v3443 = vmul.f32 %v3237, %v57
  %v3444 = vmul.f32 %v3237, %v58
  %v3445 = vmul.f32 %v3237, %v59
  %v3446 = vmul.f32 %v3237, %v60
  %v3447 = vmul.f32 %v3237, %v61
  %v3448 = vmul.f32 %v3242, %v63
  %v3449 = vmul.f32 %v3242, %v64
  %v3450 = vmul.f32 %v3242, %v65
  %v3451 = vmul.f32 %v3242, %v66
  %v3452 = vmul.f32 %v3242, %v67
  %v3453 = vmul.f32 %v3242, %v68
  %v3454 = vmul.f32 %v3242, %v69
  %v3455 = vmul.f32 %v3242, %v70
  %v3456 = vmul.f32 %v3242, %v71
  %v3457 = vmul.f32 %v3242, %v72
  %v3458 = vmul.f32 %v3242, %v73
  %v3459 = vmul.f32 %v3242, %v74
  %v3460 = vmul.f32 %v3242, %v75
  %v3461 = vmul.f32 %v3242, %v76
  %v3462 = vadd.f32 %v3434, %v3448
  %v3463 = vadd.f32 %v3435, %v3449
  %v3464 = vadd.f32 %v3436, %v3450
  %v3465 = vadd.f32 %v3437, %v3451
  %v3466 = vadd.f32 %v3438, %v3452
  %v3467 = vadd.f32 %v3439, %v3453
  %v3468 = vadd.f32 %v3440, %v3454
  %v3469 = vadd.f32 %v3441, %v3455
  %v3470 = vadd.f32 %v3442, %v3456
  %v3471 = vadd.f32 %v3443, %v3457
  %v3472 = vadd.f32 %v3444, %v3458
  %v3473 = vadd.f32 %v3445, %v3459
  %v3474 = vadd.f32 %v3446, %v3460
  %v3475 = vadd.f32 %v3447, %v3461
  %v3476 = vmul.f32 %v3247, %v78
  %v3477 = vmul.f32 %v3247, %v79
  %v3478 = vmul.f32 %v3247, %v80
  %v3479 = vmul.f32 %v3247, %v81
  %v3480 = vmul.f32 %v3247, %v82
  %v3481 = vmul.f32 %v3247, %v83
  %v3482 = vmul.f32 %v3247, %v84
  %v3483 = vmul.f32 %v3247, %v85
  %v3484 = vmul.f32 %v3247, %v86
  %v3485 = vmul.f32 %v3247, %v87
  %v3486 = vmul.f32 %v3247, %v88
  %v3487 = vmul.f32 %v3247, %v89
  %v3488 = vmul.f32 %v3247, %v90
  %v3489 = vmul.f32 %v3247, %v91
  %v3490 = vadd.f32 %v3462, %v3476
  %v3491 = vadd.f32 %v3463, %v3477
  %v3492 = vadd.f32 %v3464, %v3478
  %v3493 = vadd.f32 %v3465, %v3479
  %v3494 = vadd.f32 %v3466, %v3480
  %v3495 = vadd.f32 %v3467, %v3481
  %v3496 = vadd.f32 %v3468, %v3482
  %v3497 = vadd.f32 %v3469, %v3483
  %v3498 = vadd.f32 %v3470, %v3484
  %v3499 = vadd.f32 %v3471, %v3485
  %v3500 = vadd.f32 %v3472, %v3486
  %v3501 = vadd.f32 %v3473, %v3487
  %v3502 = vadd.f32 %v3474, %v3488
  %v3503 = vadd.f32 %v3475, %v3489
  %v3504 = vadd.f32 %v3490, %v3253
  %v3505 = vadd.f32 %v3491, %v3253
  %v3506 = vadd.f32 %v3492, %v3253
  %v3507 = vadd.f32 %v3493, %v3253
  %v3508 = vadd.f32 %v3494, %v3253
  %v3509 = vadd.f32 %v3495, %v3253
  %v3510 = vadd.f32 %v3496, %v3253
  %v3511 = vadd.f32 %v3497, %v3253
  %v3512 = vadd.f32 %v3498, %v3253
  %v3513 = vadd.f32 %v3499, %v3253
  %v3514 = vadd.f32 %v3500, %v3253
  %v3515 = vadd.f32 %v3501, %v3253
  %v3516 = vadd.f32 %v3502, %v3253
  %v3517 = vadd.f32 %v3503, %v3253
  %v3518 = vmul.f32 %v3308, %v3504
  %v3519 = vmul.f32 %v3309, %v3505
  %v3520 = vmul.f32 %v3310, %v3506
  %v3521 = vmul.f32 %v3311, %v3507
  %v3522 = vmul.f32 %v3312, %v3508
  %v3523 = vmul.f32 %v3313, %v3509
  %v3524 = vmul.f32 %v3314, %v3510
  %v3525 = vmul.f32 %v3315, %v3511
  %v3526 = vmul.f32 %v3316, %v3512
  %v3527 = vmul.f32 %v3317, %v3513
  %v3528 = vmul.f32 %v3318, %v3514
  %v3529 = vmul.f32 %v3319, %v3515
  %v3530 = vmul.f32 %v3320, %v3516
  %v3531 = vmul.f32 %v3321, %v3517
  %v3532 = vadd.f32 %v2977, %v3518
  %v3533 = vadd.f32 %v2978, %v3519
  %v3534 = vadd.f32 %v2979, %v3520
  %v3535 = vadd.f32 %v2980, %v3521
  %v3536 = vadd.f32 %v2981, %v3522
  %v3537 = vadd.f32 %v2982, %v3523
  %v3538 = vadd.f32 %v2983, %v3524
  %v3539 = vadd.f32 %v2984, %v3525
  %v3540 = vadd.f32 %v2985, %v3526
  %v3541 = vadd.f32 %v2986, %v3527
  %v3542 = vadd.f32 %v2987, %v3528
  %v3543 = vadd.f32 %v2988, %v3529
  %v3544 = vadd.f32 %v2989, %v3530
  %v3545 = vadd.f32 %v2990, %v3531
  %v3546 = vmul.f32 %v3258, %v48
  %v3547 = vmul.f32 %v3258, %v49
  %v3548 = vmul.f32 %v3258, %v50
  %v3549 = vmul.f32 %v3258, %v51
  %v3550 = vmul.f32 %v3258, %v52
  %v3551 = vmul.f32 %v3258, %v53
  %v3552 = vmul.f32 %v3258, %v54
  %v3553 = vmul.f32 %v3258, %v55
  %v3554 = vmul.f32 %v3258, %v56
  %v3555 = vmul.f32 %v3258, %v57
  %v3556 = vmul.f32 %v3258, %v58
  %v3557 = vmul.f32 %v3258, %v59
  %v3558 = vmul.f32 %v3258, %v60
  %v3559 = vmul.f32 %v3258, %v61
  %v3560 = vmul.f32 %v3263, %v63
  %v3561 = vmul.f32 %v3263, %v64
  %v3562 = vmul.f32 %v3263, %v65
  %v3563 = vmul.f32 %v3263, %v66
  %v3564 = vmul.f32 %v3263, %v67
  %v3565 = vmul.f32 %v3263, %v68
  %v3566 = vmul.f32 %v3263, %v69
  %v3567 = vmul.f32 %v3263, %v70
  %v3568 = vmul.f32 %v3263, %v71
  %v3569 = vmul.f32 %v3263, %v72
  %v3570 = vmul.f32 %v3263, %v73
  %v3571 = vmul.f32 %v3263, %v74
  %v3572 = vmul.f32 %v3263, %v75
  %v3573 = vmul.f32 %v3263, %v76
  %v3574 = vadd.f32 %v3546, %v3560
  %v3575 = vadd.f32 %v3547, %v3561
  %v3576 = vadd.f32 %v3548, %v3562
  %v3577 = vadd.f32 %v3549, %v3563
  %v3578 = vadd.f32 %v3550, %v3564
  %v3579 = vadd.f32 %v3551, %v3565
  %v3580 = vadd.f32 %v3552, %v3566
  %v3581 = vadd.f32 %v3553, %v3567
  %v3582 = vadd.f32 %v3554, %v3568
  %v3583 = vadd.f32 %v3555, %v3569
  %v3584 = vadd.f32 %v3556, %v3570
  %v3585 = vadd.f32 %v3557, %v3571
  %v3586 = vadd.f32 %v3558, %v3572
  %v3587 = vadd.f32 %v3559, %v3573
  %v3588 = vmul.f32 %v3268, %v78
  %v3589 = vmul.f32 %v3268, %v79
  %v3590 = vmul.f32 %v3268, %v80
  %v3591 = vmul.f32 %v3268, %v81
  %v3592 = vmul.f32 %v3268, %v82
  %v3593 = vmul.f32 %v3268, %v83
  %v3594 = vmul.f32 %v3268, %v84
  %v3595 = vmul.f32 %v3268, %v85
  %v3596 = vmul.f32 %v3268, %v86
  %v3597 = vmul.f32 %v3268, %v87
  %v3598 = vmul.f32 %v3268, %v88
  %v3599 = vmul.f32 %v3268, %v89
  %v3600 = vmul.f32 %v3268, %v90
  %v3601 = vmul.f32 %v3268, %v91
  %v3602 = vadd.f32 %v3574, %v3588
  %v3603 = vadd.f32 %v3575, %v3589
  %v3604 = vadd.f32 %v3576, %v3590
  %v3605 = vadd.f32 %v3577, %v3591
  %v3606 = vadd.f32 %v3578, %v3592
  %v3607 = vadd.f32 %v3579, %v3593
  %v3608 = vadd.f32 %v3580, %v3594
  %v3609 = vadd.f32 %v3581, %v3595
  %v3610 = vadd.f32 %v3582, %v3596
  %v3611 = vadd.f32 %v3583, %v3597
  %v3612 = vadd.f32 %v3584, %v3598
  %v3613 = vadd.f32 %v3585, %v3599
  %v3614 = vadd.f32 %v3586, %v3600
  %v3615 = vadd.f32 %v3587, %v3601
  %v3616 = vadd.f32 %v3602, %v3274
  %v3617 = vadd.f32 %v3603, %v3274
  %v3618 = vadd.f32 %v3604, %v3274
  %v3619 = vadd.f32 %v3605, %v3274
  %v3620 = vadd.f32 %v3606, %v3274
  %v3621 = vadd.f32 %v3607, %v3274
  %v3622 = vadd.f32 %v3608, %v3274
  %v3623 = vadd.f32 %v3609, %v3274
  %v3624 = vadd.f32 %v3610, %v3274
  %v3625 = vadd.f32 %v3611, %v3274
  %v3626 = vadd.f32 %v3612, %v3274
  %v3627 = vadd.f32 %v3613, %v3274
  %v3628 = vadd.f32 %v3614, %v3274
  %v3629 = vadd.f32 %v3615, %v3274
  %v3630 = vmul.f32 %v3308, %v3616
  %v3631 = vmul.f32 %v3309, %v3617
  %v3632 = vmul.f32 %v3310, %v3618
  %v3633 = vmul.f32 %v3311, %v3619
  %v3634 = vmul.f32 %v3312, %v3620
  %v3635 = vmul.f32 %v3313, %v3621
  %v3636 = vmul.f32 %v3314, %v3622
  %v3637 = vmul.f32 %v3315, %v3623
  %v3638 = vmul.f32 %v3316, %v3624
  %v3639 = vmul.f32 %v3317, %v3625
  %v3640 = vmul.f32 %v3318, %v3626
  %v3641 = vmul.f32 %v3319, %v3627
  %v3642 = vmul.f32 %v3320, %v3628
  %v3643 = vmul.f32 %v3321, %v3629
  %v3644 = vadd.f32 %v3089, %v3630
  %v3645 = vadd.f32 %v3090, %v3631
  %v3646 = vadd.f32 %v3091, %v3632
  %v3647 = vadd.f32 %v3092, %v3633
  %v3648 = vadd.f32 %v3093, %v3634
  %v3649 = vadd.f32 %v3094, %v3635
  %v3650 = vadd.f32 %v3095, %v3636
  %v3651 = vadd.f32 %v3096, %v3637
  %v3652 = vadd.f32 %v3097, %v3638
  %v3653 = vadd.f32 %v3098, %v3639
  %v3654 = vadd.f32 %v3099, %v3640
  %v3655 = vadd.f32 %v3100, %v3641
  %v3656 = vadd.f32 %v3101, %v3642
  %v3657 = vadd.f32 %v3102, %v3643
  %s3658 = scalar_lea.vmem %s1, 112
  %v3659 = vld [vmem:[%s3658] sm:$0xff]
  %s3660 = scalar_lea.vmem %s1, 120
  %v3661 = vld [vmem:[%s3660] sm:$0xff]
  %s3662 = scalar_lea.vmem %s0, 672
  %v3663 = vld [vmem:[%s3662] sm:$0xff]
  %s3664 = scalar_lea.vmem %s0, 680
  %v3665 = vld [vmem:[%s3664] sm:$0xff]
  %s3666 = scalar_lea.vmem %s0, 688
  %v3667 = vld [vmem:[%s3666] sm:$0xff]
  %s3668 = scalar_lea.vmem %s0, 696
  %v3669 = vld [vmem:[%s3668] sm:$0xff]
  %v3670 = vmul.f32 %v3661, %v3665
  %v3671 = vmul.f32 %v3659, %v3667
  %v3672 = vadd.f32 %v3670, %v3671
  %v3673 = vmul.f32 %v3661, %v3667
  %v3674 = vmul.f32 %v3659, %v3665
  %v3675 = vsub.f32 %v3673, %v3674
  %s3676 = scalar_lea.vmem %s0, 704
  %v3677 = vld [vmem:[%s3676] sm:$0xff]
  %s3678 = scalar_lea.vmem %s0, 712
  %v3679 = vld [vmem:[%s3678] sm:$0xff]
  %s3680 = scalar_lea.vmem %s0, 720
  %v3681 = vld [vmem:[%s3680] sm:$0xff]
  %s3682 = scalar_lea.vmem %s0, 728
  %v3683 = vld [vmem:[%s3682] sm:$0xff]
  %v3684 = vmul.f32 %v3661, %v3679
  %v3685 = vmul.f32 %v3659, %v3681
  %v3686 = vadd.f32 %v3684, %v3685
  %v3687 = vmul.f32 %v3661, %v3681
  %v3688 = vmul.f32 %v3659, %v3679
  %v3689 = vsub.f32 %v3687, %v3688
  %s3690 = scalar_lea.vmem %s0, 736
  %v3691 = vld [vmem:[%s3690] sm:$0xff]
  %s3692 = scalar_lea.vmem %s0, 744
  %v3693 = vld [vmem:[%s3692] sm:$0xff]
  %s3694 = scalar_lea.vmem %s0, 752
  %v3695 = vld [vmem:[%s3694] sm:$0xff]
  %s3696 = scalar_lea.vmem %s0, 760
  %v3697 = vld [vmem:[%s3696] sm:$0xff]
  %v3698 = vmul.f32 %v3661, %v3693
  %v3699 = vmul.f32 %v3659, %v3695
  %v3700 = vadd.f32 %v3698, %v3699
  %v3701 = vmul.f32 %v3661, %v3695
  %v3702 = vmul.f32 %v3659, %v3693
  %v3703 = vsub.f32 %v3701, %v3702
  %v3704 = vmul.f32 %v3153, %v3663
  %v3705 = vmul.f32 %v3158, %v3677
  %v3706 = vadd.f32 %v3704, %v3705
  %v3707 = vmul.f32 %v3163, %v3691
  %v3708 = vadd.f32 %v3706, %v3707
  %v3709 = vmul.f32 %v3153, %v3672
  %v3710 = vmul.f32 %v3158, %v3686
  %v3711 = vadd.f32 %v3709, %v3710
  %v3712 = vmul.f32 %v3163, %v3700
  %v3713 = vadd.f32 %v3711, %v3712
  %v3714 = vmul.f32 %v3153, %v3675
  %v3715 = vmul.f32 %v3158, %v3689
  %v3716 = vadd.f32 %v3714, %v3715
  %v3717 = vmul.f32 %v3163, %v3703
  %v3718 = vadd.f32 %v3716, %v3717
  %v3719 = vmul.f32 %v3153, %v3669
  %v3720 = vmul.f32 %v3158, %v3683
  %v3721 = vadd.f32 %v3719, %v3720
  %v3722 = vmul.f32 %v3163, %v3697
  %v3723 = vadd.f32 %v3721, %v3722
  %v3724 = vadd.f32 %v3723, %v3169
  %v3725 = vmul.f32 %v3174, %v3663
  %v3726 = vmul.f32 %v3179, %v3677
  %v3727 = vadd.f32 %v3725, %v3726
  %v3728 = vmul.f32 %v3184, %v3691
  %v3729 = vadd.f32 %v3727, %v3728
  %v3730 = vmul.f32 %v3174, %v3672
  %v3731 = vmul.f32 %v3179, %v3686
  %v3732 = vadd.f32 %v3730, %v3731
  %v3733 = vmul.f32 %v3184, %v3700
  %v3734 = vadd.f32 %v3732, %v3733
  %v3735 = vmul.f32 %v3174, %v3675
  %v3736 = vmul.f32 %v3179, %v3689
  %v3737 = vadd.f32 %v3735, %v3736
  %v3738 = vmul.f32 %v3184, %v3703
  %v3739 = vadd.f32 %v3737, %v3738
  %v3740 = vmul.f32 %v3174, %v3669
  %v3741 = vmul.f32 %v3179, %v3683
  %v3742 = vadd.f32 %v3740, %v3741
  %v3743 = vmul.f32 %v3184, %v3697
  %v3744 = vadd.f32 %v3742, %v3743
  %v3745 = vadd.f32 %v3744, %v3190
  %v3746 = vmul.f32 %v3195, %v3663
  %v3747 = vmul.f32 %v3200, %v3677
  %v3748 = vadd.f32 %v3746, %v3747
  %v3749 = vmul.f32 %v3205, %v3691
  %v3750 = vadd.f32 %v3748, %v3749
  %v3751 = vmul.f32 %v3195, %v3672
  %v3752 = vmul.f32 %v3200, %v3686
  %v3753 = vadd.f32 %v3751, %v3752
  %v3754 = vmul.f32 %v3205, %v3700
  %v3755 = vadd.f32 %v3753, %v3754
  %v3756 = vmul.f32 %v3195, %v3675
  %v3757 = vmul.f32 %v3200, %v3689
  %v3758 = vadd.f32 %v3756, %v3757
  %v3759 = vmul.f32 %v3205, %v3703
  %v3760 = vadd.f32 %v3758, %v3759
  %v3761 = vmul.f32 %v3195, %v3669
  %v3762 = vmul.f32 %v3200, %v3683
  %v3763 = vadd.f32 %v3761, %v3762
  %v3764 = vmul.f32 %v3205, %v3697
  %v3765 = vadd.f32 %v3763, %v3764
  %v3766 = vadd.f32 %v3765, %v3211
  %v3767 = vmul.f32 %v25, %v3708
  %v3768 = vmul.f32 %v27, %v3729
  %v3769 = vadd.f32 %v3767, %v3768
  %v3770 = vmul.f32 %v29, %v3750
  %v3771 = vadd.f32 %v3769, %v3770
  %v3772 = vmul.f32 %v25, %v3713
  %v3773 = vmul.f32 %v27, %v3734
  %v3774 = vadd.f32 %v3772, %v3773
  %v3775 = vmul.f32 %v29, %v3755
  %v3776 = vadd.f32 %v3774, %v3775
  %v3777 = vmul.f32 %v25, %v3718
  %v3778 = vmul.f32 %v27, %v3739
  %v3779 = vadd.f32 %v3777, %v3778
  %v3780 = vmul.f32 %v29, %v3760
  %v3781 = vadd.f32 %v3779, %v3780
  %v3782 = vmul.f32 %v25, %v3724
  %v3783 = vmul.f32 %v27, %v3745
  %v3784 = vadd.f32 %v3782, %v3783
  %v3785 = vmul.f32 %v29, %v3766
  %v3786 = vadd.f32 %v3784, %v3785
  %v3787 = vadd.f32 %v3786, %v31
  %v3788 = vmul.f32 %v33, %v3708
  %v3789 = vmul.f32 %v35, %v3729
  %v3790 = vadd.f32 %v3788, %v3789
  %v3791 = vmul.f32 %v37, %v3750
  %v3792 = vadd.f32 %v3790, %v3791
  %v3793 = vmul.f32 %v33, %v3713
  %v3794 = vmul.f32 %v35, %v3734
  %v3795 = vadd.f32 %v3793, %v3794
  %v3796 = vmul.f32 %v37, %v3755
  %v3797 = vadd.f32 %v3795, %v3796
  %v3798 = vmul.f32 %v33, %v3718
  %v3799 = vmul.f32 %v35, %v3739
  %v3800 = vadd.f32 %v3798, %v3799
  %v3801 = vmul.f32 %v37, %v3760
  %v3802 = vadd.f32 %v3800, %v3801
  %v3803 = vmul.f32 %v33, %v3724
  %v3804 = vmul.f32 %v35, %v3745
  %v3805 = vadd.f32 %v3803, %v3804
  %v3806 = vmul.f32 %v37, %v3766
  %v3807 = vadd.f32 %v3805, %v3806
  %v3808 = vadd.f32 %v3807, %v39
  %v3809 = vmul.f32 %v41, %v3708
  %v3810 = vmul.f32 %v43, %v3729
  %v3811 = vadd.f32 %v3809, %v3810
  %v3812 = vmul.f32 %v45, %v3750
  %v3813 = vadd.f32 %v3811, %v3812
  %v3814 = vmul.f32 %v41, %v3713
  %v3815 = vmul.f32 %v43, %v3734
  %v3816 = vadd.f32 %v3814, %v3815
  %v3817 = vmul.f32 %v45, %v3755
  %v3818 = vadd.f32 %v3816, %v3817
  %v3819 = vmul.f32 %v41, %v3718
  %v3820 = vmul.f32 %v43, %v3739
  %v3821 = vadd.f32 %v3819, %v3820
  %v3822 = vmul.f32 %v45, %v3760
  %v3823 = vadd.f32 %v3821, %v3822
  %v3824 = vmul.f32 %v41, %v3724
  %v3825 = vmul.f32 %v43, %v3745
  %v3826 = vadd.f32 %v3824, %v3825
  %v3827 = vmul.f32 %v45, %v3766
  %v3828 = vadd.f32 %v3826, %v3827
  %v3829 = vadd.f32 %v3828, %v47
  %s3830 = scalar_lea.vmem %s6, 896
  %3831 = vst [vmem:[%s3830] sm:$0xff] %v3771
  %s3832 = scalar_lea.vmem %s6, 904
  %3833 = vst [vmem:[%s3832] sm:$0xff] %v3776
  %s3834 = scalar_lea.vmem %s6, 912
  %3835 = vst [vmem:[%s3834] sm:$0xff] %v3781
  %s3836 = scalar_lea.vmem %s6, 920
  %3837 = vst [vmem:[%s3836] sm:$0xff] %v3787
  %s3838 = scalar_lea.vmem %s6, 928
  %3839 = vst [vmem:[%s3838] sm:$0xff] %v3792
  %s3840 = scalar_lea.vmem %s6, 936
  %3841 = vst [vmem:[%s3840] sm:$0xff] %v3797
  %s3842 = scalar_lea.vmem %s6, 944
  %3843 = vst [vmem:[%s3842] sm:$0xff] %v3802
  %s3844 = scalar_lea.vmem %s6, 952
  %3845 = vst [vmem:[%s3844] sm:$0xff] %v3808
  %s3846 = scalar_lea.vmem %s6, 960
  %3847 = vst [vmem:[%s3846] sm:$0xff] %v3813
  %s3848 = scalar_lea.vmem %s6, 968
  %3849 = vst [vmem:[%s3848] sm:$0xff] %v3818
  %s3850 = scalar_lea.vmem %s6, 976
  %3851 = vst [vmem:[%s3850] sm:$0xff] %v3823
  %s3852 = scalar_lea.vmem %s6, 984
  %3853 = vst [vmem:[%s3852] sm:$0xff] %v3829
  %s3854 = scalar_lea.vmem %s6, 992
  %3855 = vst [vmem:[%s3854] sm:$0xff] 0.0
  %s3856 = scalar_lea.vmem %s6, 1000
  %3857 = vst [vmem:[%s3856] sm:$0xff] 0.0
  %s3858 = scalar_lea.vmem %s6, 1008
  %3859 = vst [vmem:[%s3858] sm:$0xff] 0.0
  %s3860 = scalar_lea.vmem %s6, 1016
  %3861 = vst [vmem:[%s3860] sm:$0xff] 1.0
  %s3862 = scalar_lea.vmem %s3, 784
  %v3863 = vld [vmem:[%s3862] sm:$0xff]
  %v3864 = vld [vmem:[%s3862 + $0x8] sm:$0xff]
  %v3865 = vld [vmem:[%s3862 + $0x10] sm:$0xff]
  %v3866 = vld [vmem:[%s3862 + $0x18] sm:$0xff]
  %v3867 = vld [vmem:[%s3862 + $0x20] sm:$0xff]
  %v3868 = vld [vmem:[%s3862 + $0x28] sm:$0xff]
  %v3869 = vld [vmem:[%s3862 + $0x30] sm:$0xff]
  %v3870 = vld [vmem:[%s3862 + $0x38] sm:$0xff]
  %v3871 = vld [vmem:[%s3862 + $0x40] sm:$0xff]
  %v3872 = vld [vmem:[%s3862 + $0x48] sm:$0xff]
  %v3873 = vld [vmem:[%s3862 + $0x50] sm:$0xff]
  %v3874 = vld [vmem:[%s3862 + $0x58] sm:$0xff]
  %v3875 = vld [vmem:[%s3862 + $0x60] sm:$0xff]
  %v3876 = vld [vmem:[%s3862 + $0x68] sm:$0xff]
  %v3877 = vmul.f32 %v3771, %v48
  %v3878 = vmul.f32 %v3771, %v49
  %v3879 = vmul.f32 %v3771, %v50
  %v3880 = vmul.f32 %v3771, %v51
  %v3881 = vmul.f32 %v3771, %v52
  %v3882 = vmul.f32 %v3771, %v53
  %v3883 = vmul.f32 %v3771, %v54
  %v3884 = vmul.f32 %v3771, %v55
  %v3885 = vmul.f32 %v3771, %v56
  %v3886 = vmul.f32 %v3771, %v57
  %v3887 = vmul.f32 %v3771, %v58
  %v3888 = vmul.f32 %v3771, %v59
  %v3889 = vmul.f32 %v3771, %v60
  %v3890 = vmul.f32 %v3771, %v61
  %v3891 = vmul.f32 %v3776, %v63
  %v3892 = vmul.f32 %v3776, %v64
  %v3893 = vmul.f32 %v3776, %v65
  %v3894 = vmul.f32 %v3776, %v66
  %v3895 = vmul.f32 %v3776, %v67
  %v3896 = vmul.f32 %v3776, %v68
  %v3897 = vmul.f32 %v3776, %v69
  %v3898 = vmul.f32 %v3776, %v70
  %v3899 = vmul.f32 %v3776, %v71
  %v3900 = vmul.f32 %v3776, %v72
  %v3901 = vmul.f32 %v3776, %v73
  %v3902 = vmul.f32 %v3776, %v74
  %v3903 = vmul.f32 %v3776, %v75
  %v3904 = vmul.f32 %v3776, %v76
  %v3905 = vadd.f32 %v3877, %v3891
  %v3906 = vadd.f32 %v3878, %v3892
  %v3907 = vadd.f32 %v3879, %v3893
  %v3908 = vadd.f32 %v3880, %v3894
  %v3909 = vadd.f32 %v3881, %v3895
  %v3910 = vadd.f32 %v3882, %v3896
  %v3911 = vadd.f32 %v3883, %v3897
  %v3912 = vadd.f32 %v3884, %v3898
  %v3913 = vadd.f32 %v3885, %v3899
  %v3914 = vadd.f32 %v3886, %v3900
  %v3915 = vadd.f32 %v3887, %v3901
  %v3916 = vadd.f32 %v3888, %v3902
  %v3917 = vadd.f32 %v3889, %v3903
  %v3918 = vadd.f32 %v3890, %v3904
  %v3919 = vmul.f32 %v3781, %v78
  %v3920 = vmul.f32 %v3781, %v79
  %v3921 = vmul.f32 %v3781, %v80
  %v3922 = vmul.f32 %v3781, %v81
  %v3923 = vmul.f32 %v3781, %v82
  %v3924 = vmul.f32 %v3781, %v83
  %v3925 = vmul.f32 %v3781, %v84
  %v3926 = vmul.f32 %v3781, %v85
  %v3927 = vmul.f32 %v3781, %v86
  %v3928 = vmul.f32 %v3781, %v87
  %v3929 = vmul.f32 %v3781, %v88
  %v3930 = vmul.f32 %v3781, %v89
  %v3931 = vmul.f32 %v3781, %v90
  %v3932 = vmul.f32 %v3781, %v91
  %v3933 = vadd.f32 %v3905, %v3919
  %v3934 = vadd.f32 %v3906, %v3920
  %v3935 = vadd.f32 %v3907, %v3921
  %v3936 = vadd.f32 %v3908, %v3922
  %v3937 = vadd.f32 %v3909, %v3923
  %v3938 = vadd.f32 %v3910, %v3924
  %v3939 = vadd.f32 %v3911, %v3925
  %v3940 = vadd.f32 %v3912, %v3926
  %v3941 = vadd.f32 %v3913, %v3927
  %v3942 = vadd.f32 %v3914, %v3928
  %v3943 = vadd.f32 %v3915, %v3929
  %v3944 = vadd.f32 %v3916, %v3930
  %v3945 = vadd.f32 %v3917, %v3931
  %v3946 = vadd.f32 %v3918, %v3932
  %v3947 = vadd.f32 %v3933, %v3787
  %v3948 = vadd.f32 %v3934, %v3787
  %v3949 = vadd.f32 %v3935, %v3787
  %v3950 = vadd.f32 %v3936, %v3787
  %v3951 = vadd.f32 %v3937, %v3787
  %v3952 = vadd.f32 %v3938, %v3787
  %v3953 = vadd.f32 %v3939, %v3787
  %v3954 = vadd.f32 %v3940, %v3787
  %v3955 = vadd.f32 %v3941, %v3787
  %v3956 = vadd.f32 %v3942, %v3787
  %v3957 = vadd.f32 %v3943, %v3787
  %v3958 = vadd.f32 %v3944, %v3787
  %v3959 = vadd.f32 %v3945, %v3787
  %v3960 = vadd.f32 %v3946, %v3787
  %v3961 = vmul.f32 %v3863, %v3947
  %v3962 = vmul.f32 %v3864, %v3948
  %v3963 = vmul.f32 %v3865, %v3949
  %v3964 = vmul.f32 %v3866, %v3950
  %v3965 = vmul.f32 %v3867, %v3951
  %v3966 = vmul.f32 %v3868, %v3952
  %v3967 = vmul.f32 %v3869, %v3953
  %v3968 = vmul.f32 %v3870, %v3954
  %v3969 = vmul.f32 %v3871, %v3955
  %v3970 = vmul.f32 %v3872, %v3956
  %v3971 = vmul.f32 %v3873, %v3957
  %v3972 = vmul.f32 %v3874, %v3958
  %v3973 = vmul.f32 %v3875, %v3959
  %v3974 = vmul.f32 %v3876, %v3960
  %v3975 = vadd.f32 %v3420, %v3961
  %v3976 = vadd.f32 %v3421, %v3962
  %v3977 = vadd.f32 %v3422, %v3963
  %v3978 = vadd.f32 %v3423, %v3964
  %v3979 = vadd.f32 %v3424, %v3965
  %v3980 = vadd.f32 %v3425, %v3966
  %v3981 = vadd.f32 %v3426, %v3967
  %v3982 = vadd.f32 %v3427, %v3968
  %v3983 = vadd.f32 %v3428, %v3969
  %v3984 = vadd.f32 %v3429, %v3970
  %v3985 = vadd.f32 %v3430, %v3971
  %v3986 = vadd.f32 %v3431, %v3972
  %v3987 = vadd.f32 %v3432, %v3973
  %v3988 = vadd.f32 %v3433, %v3974
  %v3989 = vmul.f32 %v3792, %v48
  %v3990 = vmul.f32 %v3792, %v49
  %v3991 = vmul.f32 %v3792, %v50
  %v3992 = vmul.f32 %v3792, %v51
  %v3993 = vmul.f32 %v3792, %v52
  %v3994 = vmul.f32 %v3792, %v53
  %v3995 = vmul.f32 %v3792, %v54
  %v3996 = vmul.f32 %v3792, %v55
  %v3997 = vmul.f32 %v3792, %v56
  %v3998 = vmul.f32 %v3792, %v57
  %v3999 = vmul.f32 %v3792, %v58
  %v4000 = vmul.f32 %v3792, %v59
  %v4001 = vmul.f32 %v3792, %v60
  %v4002 = vmul.f32 %v3792, %v61
  %v4003 = vmul.f32 %v3797, %v63
  %v4004 = vmul.f32 %v3797, %v64
  %v4005 = vmul.f32 %v3797, %v65
  %v4006 = vmul.f32 %v3797, %v66
  %v4007 = vmul.f32 %v3797, %v67
  %v4008 = vmul.f32 %v3797, %v68
  %v4009 = vmul.f32 %v3797, %v69
  %v4010 = vmul.f32 %v3797, %v70
  %v4011 = vmul.f32 %v3797, %v71
  %v4012 = vmul.f32 %v3797, %v72
  %v4013 = vmul.f32 %v3797, %v73
  %v4014 = vmul.f32 %v3797, %v74
  %v4015 = vmul.f32 %v3797, %v75
  %v4016 = vmul.f32 %v3797, %v76
  %v4017 = vadd.f32 %v3989, %v4003
  %v4018 = vadd.f32 %v3990, %v4004
  %v4019 = vadd.f32 %v3991, %v4005
  %v4020 = vadd.f32 %v3992, %v4006
  %v4021 = vadd.f32 %v3993, %v4007
  %v4022 = vadd.f32 %v3994, %v4008
  %v4023 = vadd.f32 %v3995, %v4009
  %v4024 = vadd.f32 %v3996, %v4010
  %v4025 = vadd.f32 %v3997, %v4011
  %v4026 = vadd.f32 %v3998, %v4012
  %v4027 = vadd.f32 %v3999, %v4013
  %v4028 = vadd.f32 %v4000, %v4014
  %v4029 = vadd.f32 %v4001, %v4015
  %v4030 = vadd.f32 %v4002, %v4016
  %v4031 = vmul.f32 %v3802, %v78
  %v4032 = vmul.f32 %v3802, %v79
  %v4033 = vmul.f32 %v3802, %v80
  %v4034 = vmul.f32 %v3802, %v81
  %v4035 = vmul.f32 %v3802, %v82
  %v4036 = vmul.f32 %v3802, %v83
  %v4037 = vmul.f32 %v3802, %v84
  %v4038 = vmul.f32 %v3802, %v85
  %v4039 = vmul.f32 %v3802, %v86
  %v4040 = vmul.f32 %v3802, %v87
  %v4041 = vmul.f32 %v3802, %v88
  %v4042 = vmul.f32 %v3802, %v89
  %v4043 = vmul.f32 %v3802, %v90
  %v4044 = vmul.f32 %v3802, %v91
  %v4045 = vadd.f32 %v4017, %v4031
  %v4046 = vadd.f32 %v4018, %v4032
  %v4047 = vadd.f32 %v4019, %v4033
  %v4048 = vadd.f32 %v4020, %v4034
  %v4049 = vadd.f32 %v4021, %v4035
  %v4050 = vadd.f32 %v4022, %v4036
  %v4051 = vadd.f32 %v4023, %v4037
  %v4052 = vadd.f32 %v4024, %v4038
  %v4053 = vadd.f32 %v4025, %v4039
  %v4054 = vadd.f32 %v4026, %v4040
  %v4055 = vadd.f32 %v4027, %v4041
  %v4056 = vadd.f32 %v4028, %v4042
  %v4057 = vadd.f32 %v4029, %v4043
  %v4058 = vadd.f32 %v4030, %v4044
  %v4059 = vadd.f32 %v4045, %v3808
  %v4060 = vadd.f32 %v4046, %v3808
  %v4061 = vadd.f32 %v4047, %v3808
  %v4062 = vadd.f32 %v4048, %v3808
  %v4063 = vadd.f32 %v4049, %v3808
  %v4064 = vadd.f32 %v4050, %v3808
  %v4065 = vadd.f32 %v4051, %v3808
  %v4066 = vadd.f32 %v4052, %v3808
  %v4067 = vadd.f32 %v4053, %v3808
  %v4068 = vadd.f32 %v4054, %v3808
  %v4069 = vadd.f32 %v4055, %v3808
  %v4070 = vadd.f32 %v4056, %v3808
  %v4071 = vadd.f32 %v4057, %v3808
  %v4072 = vadd.f32 %v4058, %v3808
  %v4073 = vmul.f32 %v3863, %v4059
  %v4074 = vmul.f32 %v3864, %v4060
  %v4075 = vmul.f32 %v3865, %v4061
  %v4076 = vmul.f32 %v3866, %v4062
  %v4077 = vmul.f32 %v3867, %v4063
  %v4078 = vmul.f32 %v3868, %v4064
  %v4079 = vmul.f32 %v3869, %v4065
  %v4080 = vmul.f32 %v3870, %v4066
  %v4081 = vmul.f32 %v3871, %v4067
  %v4082 = vmul.f32 %v3872, %v4068
  %v4083 = vmul.f32 %v3873, %v4069
  %v4084 = vmul.f32 %v3874, %v4070
  %v4085 = vmul.f32 %v3875, %v4071
  %v4086 = vmul.f32 %v3876, %v4072
  %v4087 = vadd.f32 %v3532, %v4073
  %v4088 = vadd.f32 %v3533, %v4074
  %v4089 = vadd.f32 %v3534, %v4075
  %v4090 = vadd.f32 %v3535, %v4076
  %v4091 = vadd.f32 %v3536, %v4077
  %v4092 = vadd.f32 %v3537, %v4078
  %v4093 = vadd.f32 %v3538, %v4079
  %v4094 = vadd.f32 %v3539, %v4080
  %v4095 = vadd.f32 %v3540, %v4081
  %v4096 = vadd.f32 %v3541, %v4082
  %v4097 = vadd.f32 %v3542, %v4083
  %v4098 = vadd.f32 %v3543, %v4084
  %v4099 = vadd.f32 %v3544, %v4085
  %v4100 = vadd.f32 %v3545, %v4086
  %v4101 = vmul.f32 %v3813, %v48
  %v4102 = vmul.f32 %v3813, %v49
  %v4103 = vmul.f32 %v3813, %v50
  %v4104 = vmul.f32 %v3813, %v51
  %v4105 = vmul.f32 %v3813, %v52
  %v4106 = vmul.f32 %v3813, %v53
  %v4107 = vmul.f32 %v3813, %v54
  %v4108 = vmul.f32 %v3813, %v55
  %v4109 = vmul.f32 %v3813, %v56
  %v4110 = vmul.f32 %v3813, %v57
  %v4111 = vmul.f32 %v3813, %v58
  %v4112 = vmul.f32 %v3813, %v59
  %v4113 = vmul.f32 %v3813, %v60
  %v4114 = vmul.f32 %v3813, %v61
  %v4115 = vmul.f32 %v3818, %v63
  %v4116 = vmul.f32 %v3818, %v64
  %v4117 = vmul.f32 %v3818, %v65
  %v4118 = vmul.f32 %v3818, %v66
  %v4119 = vmul.f32 %v3818, %v67
  %v4120 = vmul.f32 %v3818, %v68
  %v4121 = vmul.f32 %v3818, %v69
  %v4122 = vmul.f32 %v3818, %v70
  %v4123 = vmul.f32 %v3818, %v71
  %v4124 = vmul.f32 %v3818, %v72
  %v4125 = vmul.f32 %v3818, %v73
  %v4126 = vmul.f32 %v3818, %v74
  %v4127 = vmul.f32 %v3818, %v75
  %v4128 = vmul.f32 %v3818, %v76
  %v4129 = vadd.f32 %v4101, %v4115
  %v4130 = vadd.f32 %v4102, %v4116
  %v4131 = vadd.f32 %v4103, %v4117
  %v4132 = vadd.f32 %v4104, %v4118
  %v4133 = vadd.f32 %v4105, %v4119
  %v4134 = vadd.f32 %v4106, %v4120
  %v4135 = vadd.f32 %v4107, %v4121
  %v4136 = vadd.f32 %v4108, %v4122
  %v4137 = vadd.f32 %v4109, %v4123
  %v4138 = vadd.f32 %v4110, %v4124
  %v4139 = vadd.f32 %v4111, %v4125
  %v4140 = vadd.f32 %v4112, %v4126
  %v4141 = vadd.f32 %v4113, %v4127
  %v4142 = vadd.f32 %v4114, %v4128
  %v4143 = vmul.f32 %v3823, %v78
  %v4144 = vmul.f32 %v3823, %v79
  %v4145 = vmul.f32 %v3823, %v80
  %v4146 = vmul.f32 %v3823, %v81
  %v4147 = vmul.f32 %v3823, %v82
  %v4148 = vmul.f32 %v3823, %v83
  %v4149 = vmul.f32 %v3823, %v84
  %v4150 = vmul.f32 %v3823, %v85
  %v4151 = vmul.f32 %v3823, %v86
  %v4152 = vmul.f32 %v3823, %v87
  %v4153 = vmul.f32 %v3823, %v88
  %v4154 = vmul.f32 %v3823, %v89
  %v4155 = vmul.f32 %v3823, %v90
  %v4156 = vmul.f32 %v3823, %v91
  %v4157 = vadd.f32 %v4129, %v4143
  %v4158 = vadd.f32 %v4130, %v4144
  %v4159 = vadd.f32 %v4131, %v4145
  %v4160 = vadd.f32 %v4132, %v4146
  %v4161 = vadd.f32 %v4133, %v4147
  %v4162 = vadd.f32 %v4134, %v4148
  %v4163 = vadd.f32 %v4135, %v4149
  %v4164 = vadd.f32 %v4136, %v4150
  %v4165 = vadd.f32 %v4137, %v4151
  %v4166 = vadd.f32 %v4138, %v4152
  %v4167 = vadd.f32 %v4139, %v4153
  %v4168 = vadd.f32 %v4140, %v4154
  %v4169 = vadd.f32 %v4141, %v4155
  %v4170 = vadd.f32 %v4142, %v4156
  %v4171 = vadd.f32 %v4157, %v3829
  %v4172 = vadd.f32 %v4158, %v3829
  %v4173 = vadd.f32 %v4159, %v3829
  %v4174 = vadd.f32 %v4160, %v3829
  %v4175 = vadd.f32 %v4161, %v3829
  %v4176 = vadd.f32 %v4162, %v3829
  %v4177 = vadd.f32 %v4163, %v3829
  %v4178 = vadd.f32 %v4164, %v3829
  %v4179 = vadd.f32 %v4165, %v3829
  %v4180 = vadd.f32 %v4166, %v3829
  %v4181 = vadd.f32 %v4167, %v3829
  %v4182 = vadd.f32 %v4168, %v3829
  %v4183 = vadd.f32 %v4169, %v3829
  %v4184 = vadd.f32 %v4170, %v3829
  %v4185 = vmul.f32 %v3863, %v4171
  %v4186 = vmul.f32 %v3864, %v4172
  %v4187 = vmul.f32 %v3865, %v4173
  %v4188 = vmul.f32 %v3866, %v4174
  %v4189 = vmul.f32 %v3867, %v4175
  %v4190 = vmul.f32 %v3868, %v4176
  %v4191 = vmul.f32 %v3869, %v4177
  %v4192 = vmul.f32 %v3870, %v4178
  %v4193 = vmul.f32 %v3871, %v4179
  %v4194 = vmul.f32 %v3872, %v4180
  %v4195 = vmul.f32 %v3873, %v4181
  %v4196 = vmul.f32 %v3874, %v4182
  %v4197 = vmul.f32 %v3875, %v4183
  %v4198 = vmul.f32 %v3876, %v4184
  %v4199 = vadd.f32 %v3644, %v4185
  %v4200 = vadd.f32 %v3645, %v4186
  %v4201 = vadd.f32 %v3646, %v4187
  %v4202 = vadd.f32 %v3647, %v4188
  %v4203 = vadd.f32 %v3648, %v4189
  %v4204 = vadd.f32 %v3649, %v4190
  %v4205 = vadd.f32 %v3650, %v4191
  %v4206 = vadd.f32 %v3651, %v4192
  %v4207 = vadd.f32 %v3652, %v4193
  %v4208 = vadd.f32 %v3653, %v4194
  %v4209 = vadd.f32 %v3654, %v4195
  %v4210 = vadd.f32 %v3655, %v4196
  %v4211 = vadd.f32 %v3656, %v4197
  %v4212 = vadd.f32 %v3657, %v4198
  %v4213 = vld [vmem:[%s5] sm:$0xff]
  %v4214 = vld [vmem:[%s5 + $0x8] sm:$0xff]
  %v4215 = vld [vmem:[%s5 + $0x10] sm:$0xff]
  %v4216 = vld [vmem:[%s5 + $0x18] sm:$0xff]
  %v4217 = vld [vmem:[%s5 + $0x20] sm:$0xff]
  %v4218 = vld [vmem:[%s5 + $0x28] sm:$0xff]
  %v4219 = vld [vmem:[%s5 + $0x30] sm:$0xff]
  %v4220 = vld [vmem:[%s5 + $0x38] sm:$0xff]
  %v4221 = vld [vmem:[%s5 + $0x40] sm:$0xff]
  %v4222 = vld [vmem:[%s5 + $0x48] sm:$0xff]
  %v4223 = vld [vmem:[%s5 + $0x50] sm:$0xff]
  %v4224 = vld [vmem:[%s5 + $0x58] sm:$0xff]
  %v4225 = vld [vmem:[%s5 + $0x60] sm:$0xff]
  %v4226 = vld [vmem:[%s5 + $0x68] sm:$0xff]
  %v4227 = vmul.f32 %v3975, %v4213
  %v4228 = vmul.f32 %v3976, %v4214
  %v4229 = vmul.f32 %v3977, %v4215
  %v4230 = vmul.f32 %v3978, %v4216
  %v4231 = vmul.f32 %v3979, %v4217
  %v4232 = vmul.f32 %v3980, %v4218
  %v4233 = vmul.f32 %v3981, %v4219
  %v4234 = vmul.f32 %v3982, %v4220
  %v4235 = vmul.f32 %v3983, %v4221
  %v4236 = vmul.f32 %v3984, %v4222
  %v4237 = vmul.f32 %v3985, %v4223
  %v4238 = vmul.f32 %v3986, %v4224
  %v4239 = vmul.f32 %v3987, %v4225
  %v4240 = vmul.f32 %v3988, %v4226
  %4241 = vst [vmem:[%s7] sm:$0xff] %v4227
  %4242 = vst [vmem:[%s7 + $0x8] sm:$0xff] %v4228
  %4243 = vst [vmem:[%s7 + $0x10] sm:$0xff] %v4229
  %4244 = vst [vmem:[%s7 + $0x18] sm:$0xff] %v4230
  %4245 = vst [vmem:[%s7 + $0x20] sm:$0xff] %v4231
  %4246 = vst [vmem:[%s7 + $0x28] sm:$0xff] %v4232
  %4247 = vst [vmem:[%s7 + $0x30] sm:$0xff] %v4233
  %4248 = vst [vmem:[%s7 + $0x38] sm:$0xff] %v4234
  %4249 = vst [vmem:[%s7 + $0x40] sm:$0xff] %v4235
  %4250 = vst [vmem:[%s7 + $0x48] sm:$0xff] %v4236
  %4251 = vst [vmem:[%s7 + $0x50] sm:$0xff] %v4237
  %4252 = vst [vmem:[%s7 + $0x58] sm:$0xff] %v4238
  %4253 = vst [vmem:[%s7 + $0x60] sm:$0xff] %v4239
  %4254 = vst [vmem:[%s7 + $0x68] sm:$0xff] %v4240
  %v4255 = vmul.f32 %v4087, %v4213
  %v4256 = vmul.f32 %v4088, %v4214
  %v4257 = vmul.f32 %v4089, %v4215
  %v4258 = vmul.f32 %v4090, %v4216
  %v4259 = vmul.f32 %v4091, %v4217
  %v4260 = vmul.f32 %v4092, %v4218
  %v4261 = vmul.f32 %v4093, %v4219
  %v4262 = vmul.f32 %v4094, %v4220
  %v4263 = vmul.f32 %v4095, %v4221
  %v4264 = vmul.f32 %v4096, %v4222
  %v4265 = vmul.f32 %v4097, %v4223
  %v4266 = vmul.f32 %v4098, %v4224
  %v4267 = vmul.f32 %v4099, %v4225
  %v4268 = vmul.f32 %v4100, %v4226
  %s4269 = scalar_lea.vmem %s7, 112
  %4270 = vst [vmem:[%s4269] sm:$0xff] %v4255
  %4271 = vst [vmem:[%s4269 + $0x8] sm:$0xff] %v4256
  %4272 = vst [vmem:[%s4269 + $0x10] sm:$0xff] %v4257
  %4273 = vst [vmem:[%s4269 + $0x18] sm:$0xff] %v4258
  %4274 = vst [vmem:[%s4269 + $0x20] sm:$0xff] %v4259
  %4275 = vst [vmem:[%s4269 + $0x28] sm:$0xff] %v4260
  %4276 = vst [vmem:[%s4269 + $0x30] sm:$0xff] %v4261
  %4277 = vst [vmem:[%s4269 + $0x38] sm:$0xff] %v4262
  %4278 = vst [vmem:[%s4269 + $0x40] sm:$0xff] %v4263
  %4279 = vst [vmem:[%s4269 + $0x48] sm:$0xff] %v4264
  %4280 = vst [vmem:[%s4269 + $0x50] sm:$0xff] %v4265
  %4281 = vst [vmem:[%s4269 + $0x58] sm:$0xff] %v4266
  %4282 = vst [vmem:[%s4269 + $0x60] sm:$0xff] %v4267
  %4283 = vst [vmem:[%s4269 + $0x68] sm:$0xff] %v4268
  %v4284 = vmul.f32 %v4199, %v4213
  %v4285 = vmul.f32 %v4200, %v4214
  %v4286 = vmul.f32 %v4201, %v4215
  %v4287 = vmul.f32 %v4202, %v4216
  %v4288 = vmul.f32 %v4203, %v4217
  %v4289 = vmul.f32 %v4204, %v4218
  %v4290 = vmul.f32 %v4205, %v4219
  %v4291 = vmul.f32 %v4206, %v4220
  %v4292 = vmul.f32 %v4207, %v4221
  %v4293 = vmul.f32 %v4208, %v4222
  %v4294 = vmul.f32 %v4209, %v4223
  %v4295 = vmul.f32 %v4210, %v4224
  %v4296 = vmul.f32 %v4211, %v4225
  %v4297 = vmul.f32 %v4212, %v4226
  %s4298 = scalar_lea.vmem %s7, 224
  %4299 = vst [vmem:[%s4298] sm:$0xff] %v4284
  %4300 = vst [vmem:[%s4298 + $0x8] sm:$0xff] %v4285
  %4301 = vst [vmem:[%s4298 + $0x10] sm:$0xff] %v4286
  %4302 = vst [vmem:[%s4298 + $0x18] sm:$0xff] %v4287
  %4303 = vst [vmem:[%s4298 + $0x20] sm:$0xff] %v4288
  %4304 = vst [vmem:[%s4298 + $0x28] sm:$0xff] %v4289
  %4305 = vst [vmem:[%s4298 + $0x30] sm:$0xff] %v4290
  %4306 = vst [vmem:[%s4298 + $0x38] sm:$0xff] %v4291
  %4307 = vst [vmem:[%s4298 + $0x40] sm:$0xff] %v4292
  %4308 = vst [vmem:[%s4298 + $0x48] sm:$0xff] %v4293
  %4309 = vst [vmem:[%s4298 + $0x50] sm:$0xff] %v4294
  %4310 = vst [vmem:[%s4298 + $0x58] sm:$0xff] %v4295
  %4311 = vst [vmem:[%s4298 + $0x60] sm:$0xff] %v4296
  %4312 = vst [vmem:[%s4298 + $0x68] sm:$0xff] %v4297
  // Predicated region
  $region26: #{fold_net_forward.9} parent=0 // pred_check
    _
  $region27: #{fold_net_forward.9} parent=0 // pred_check_branch
    %4314 = sbr.rel (0) target = $region29
  $region28: #{fold_net_forward.9} parent=0 // pred_region
    _
  $region29: #{fold_net_forward.9} parent=0 // pred_fallthru
    _
  // Predicated region
  $region30: #{fold_net_forward.9} parent=0 // pred_check
    _
  $region31: #{fold_net_forward.9} parent=0 // pred_check_branch
    %4316 = sbr.rel (0) target = $region33
  $region32: #{fold_net_forward.9} parent=0 // pred_region
    _
  $region33: #{fold_net_forward.9} parent=0 // pred_fallthru
    _
  // Predicated region
  $region34: #{fold_net_forward.9} parent=0 // pred_check
    _
  $region35: #{fold_net_forward.9} parent=0 // pred_check_branch
    %4318 = sbr.rel (0) target = $region37
  $region36: #{fold_net_forward.9} parent=0 // pred_region
    _
  $region37: #{fold_net_forward.9} parent=0 // pred_fallthru
    _
  // Predicated region
  $region38: #{fold_net_forward.9} parent=0 // pred_check
    _
  $region39: #{fold_net_forward.9} parent=0 // pred_check_branch
    %4320 = sbr.rel (0) target = $region41
  $region40: #{fold_net_forward.9} parent=0 // pred_region
    _
  $region41: #{fold_net_forward.9} parent=0 // pred_fallthru
    _

</llo_original>
